<compile_context>
chip_gen: v7x
topology: tpu7x:2x2x1
jax: 0.10.0
libtpu: 0.0.40
codegen_flags: <defaults>
</compile_context>

<pallas_src>
import functools

import jax
import jax.numpy as jnp
from jax.experimental import pallas as pl
from jax.experimental.pallas import tpu as pltpu


# ----------------------------------------------------------------------------
# Layout helpers
# ----------------------------------------------------------------------------
def _round_up(x, k):
    return (x + k - 1) // k * k


def _layout(h, w):
    """Lane-dense layout constants for an (h, w) map (see module header)."""
    wp = w + 2
    m = _round_up(h * wp, 128)
    lp = _round_up(2 * wp + 2 + m, 128)
    return wp, m, lp


# ----------------------------------------------------------------------------
# Shared math helpers (used inside the Pallas kernels and in the reference)
# ----------------------------------------------------------------------------
def _apply_act(y, act):
    if act == "leaky_relu":                       # nn.LeakyReLU(0.2)
        return jnp.where(y >= 0.0, y, 0.2 * y)
    if act == "relu":                             # nn.ReLU
        return jnp.maximum(y, 0.0)
    if act == "sigmoid":                          # nn.Sigmoid
        return 1.0 / (1.0 + jnp.exp(-y))
    return y


def _conv3x3_acc(x, wf, wp, m):
    """3x3 pad-1 conv accumulator on a channel-major flattened padded slab.

    x : (cin, lp) bf16 value, lp >= 2*wp + 2 + m (so every tap slice is in bounds).
    wf: (cout, 9*cin) bf16 fused weight, column order (tap, cin).
    Returns f32 (cout, m).  im2col happens in VMEM via shifted slices; taps are
    fused into big-K MXU matmuls, chunked so each pass has K <= 128 (v5e-safe,
    <= 2 passes on v6e/v7x's 256-deep MXU).
    """
    cin, cout = x.shape[0], wf.shape[0]
    taps_per_chunk = max(1, 128 // cin)
    acc = jnp.zeros((cout, m), jnp.float32)
    t = 0
    while t < 9:
        nt = min(taps_per_chunk, 9 - t)
        slabs = []
        for tt in range(t, t + nt):
            off = (tt // 3) * wp + (tt % 3)
            slabs.append(x[:, off:off + m])
        imcol = slabs[0] if nt == 1 else jnp.concatenate(slabs, axis=0)
        acc = acc + jnp.dot(wf[:, t * cin:(t + nt) * cin], imcol,
                            preferred_element_type=jnp.float32)
        t += nt
    return acc


def _conv3x3(x, wf, b, wp, m, act):
    return _apply_act(_conv3x3_acc(x, wf, wp, m) + b, act)


# ----------------------------------------------------------------------------
# Pallas kernels
# ----------------------------------------------------------------------------
def _pre_refine_kernel(x_ref, w1_ref, b1_ref, w2_ref, b2_ref, mask_ref, o_ref,
                       pad_scr, *, w):
    """Fused pre_refine: Conv(4->20)+LReLU(0.2), Conv(20->20)+LReLU(0.2).

    Emits the result directly in the *padded* flattened layout (20, lp), so pooling
    and the final refine conv consume it without a strip -> re-pad HBM round trip.
    """
    wp = w + 2
    m = mask_ref.shape[1]
    mask = mask_ref[...]                               # (1, m) f32, 1 on valid cols
    # conv1 + LeakyReLU; junk columns zeroed so they act as padding below.
    a1 = _conv3x3(x_ref[...], w1_ref[...], b1_ref[...], wp, m, "leaky_relu") * mask
    # Re-pad entirely in VMEM: zeroed bf16 scratch, interior written at offset wp+1.
    pad_scr[...] = jnp.zeros(pad_scr.shape, pad_scr.dtype)
    pad_scr[:, wp + 1:wp + 1 + m] = a1.astype(pad_scr.dtype)
    # conv2 + LeakyReLU; output stored in the same padded flattened layout.
    a2 = _conv3x3(pad_scr[...], w2_ref[...], b2_ref[...], wp, m, "leaky_relu") * mask
    o_ref[...] = jnp.zeros(o_ref.shape, o_ref.dtype)
    o_ref[:, wp + 1:wp + 1 + m] = a2.astype(o_ref.dtype)


def _branch_kernel(*refs, geoms):
    """All four pyramid-branch Conv(20->1)+ReLU convs; one packed lane-dense output."""
    n = len(geoms)
    xs, ws, bs, o_ref = refs[:n], refs[n:2 * n], refs[2 * n:3 * n], refs[3 * n]
    for x_ref, w_ref, b_ref, (wp, m, off) in zip(xs, ws, bs, geoms):
        a = _conv3x3(x_ref[...], w_ref[...], b_ref[...], wp, m, "relu")
        o_ref[:, off:off + m] = a.astype(o_ref.dtype)


def _refine_kernel(x20_ref, x4_ref, wb_ref, wd_ref, b_ref, o_ref, *, w):
    """Final refine Conv(24->1)+Sigmoid fused over the 20-ch derain slab and the
    4-ch upsampled-branch slab (the 24-ch concat input is never materialized)."""
    wp = w + 2
    m = o_ref.shape[-1]
    acc = (_conv3x3_acc(x4_ref[...], wb_ref[...], wp, m)
           + _conv3x3_acc(x20_ref[...], wd_ref[...], wp, m)
           + b_ref[...])
    o_ref[...] = _apply_act(acc, "sigmoid").astype(o_ref.dtype)


# ----------------------------------------------------------------------------
# XLA glue (cheap O(HW*C) reshapes / pooling / nearest upsample)
# ----------------------------------------------------------------------------
def _pad_flatten(x, lp):
    """(B,C,H,W) -> (B,C,lp) bf16: zero spatial pad kept in place + zero tail."""
    b, c, h, w = x.shape
    xp = jnp.pad(x.astype(jnp.bfloat16), ((0, 0), (0, 0), (1, 1), (1, 1)))
    flat = xp.reshape(b, c, (h + 2) * (w + 2))
    return jnp.pad(flat, ((0, 0), (0, 0), (0, lp - (h + 2) * (w + 2))))


def _strip(y, h, w):
    """(B,C,>=h*(w+2)) lane-dense conv output -> (B,C,h,w) (drop junk columns)."""
    b, c, _ = y.shape
    wp = w + 2
    return y[:, :, :h * wp].reshape(b, c, h, wp)[:, :, :, :w]


def _avg_pool(x, k):
    b, c, h, w = x.shape
    return x.reshape(b, c, h // k, k, w // k, k).mean(axis=(3, 5))


# ----------------------------------------------------------------------------
# pallas_call wrappers
# ----------------------------------------------------------------------------
_COMPILER_PARAMS = pltpu.CompilerParams(
    dimension_semantics=("parallel",),          # batch axis -> core-parallel
    vmem_limit_bytes=32 * 1024 * 1024,          # safe on v5e/v6e/v7x for these blocks
)


def pre_refine(x4, w1, b1, w2, b2):
    """(B,4,H,W) -> (B,20,lp) bf16 slab in padded flattened layout."""
    bsz, cin, h, w = x4.shape
    c1, c2 = w1.shape[0], w2.shape[0]
    wp, m, lp = _layout(h, w)
    xin = _pad_flatten(x4, lp)
    col = jnp.arange(m, dtype=jnp.int32)
    mask = (((col % wp) < w) & (col < h * wp)).astype(jnp.float32).reshape(1, m)
    return pl.pallas_call(
        functools.partial(_pre_refine_kernel, w=w),
        out_shape=jax.ShapeDtypeStruct((bsz, c2, lp), jnp.bfloat16),
        grid=(bsz,),
        in_specs=[
            pl.BlockSpec((None, cin, lp), lambda i: (i, 0, 0)),
            pl.BlockSpec(w1.shape, lambda i: (0, 0)),
            pl.BlockSpec(b1.shape, lambda i: (0, 0)),
            pl.BlockSpec(w2.shape, lambda i: (0, 0)),
            pl.BlockSpec(b2.shape, lambda i: (0, 0)),
            pl.BlockSpec((1, m), lambda i: (0, 0)),
        ],
        out_specs=pl.BlockSpec((None, c2, lp), lambda i: (i, 0, 0)),
        scratch_shapes=[pltpu.VMEM((c1, lp), jnp.bfloat16)],
        compiler_params=_COMPILER_PARAMS,
    )(xin, w1, b1, w2, b2, mask)


def branch_convs(pooled_list, wks, bks):
    """Four pyramid branch Conv(20->1)+ReLU in one pallas_call, packed output."""
    bsz = pooled_list[0].shape[0]
    geoms, hw, in_specs, args = [], [], [], []
    total = 0
    for p in pooled_list:
        _, c, h, w = p.shape
        wp, m, lp = _layout(h, w)
        geoms.append((wp, m, total))
        hw.append((h, w))
        total += m
        in_specs.append(pl.BlockSpec((None, c, lp), lambda i: (i, 0, 0)))
        args.append(_pad_flatten(p, lp))
    for wk in wks:
        in_specs.append(pl.BlockSpec(wk.shape, lambda i: (0, 0)))
        args.append(wk)
    for bk in bks:
        in_specs.append(pl.BlockSpec(bk.shape, lambda i: (0, 0)))
        args.append(bk)
    packed = pl.pallas_call(
        functools.partial(_branch_kernel, geoms=tuple(geoms)),
        out_shape=jax.ShapeDtypeStruct((bsz, 1, total), jnp.bfloat16),
        grid=(bsz,),
        in_specs=in_specs,
        out_specs=pl.BlockSpec((None, 1, total), lambda i: (i, 0, 0)),
        compiler_params=_COMPILER_PARAMS,
    )(*args)
    return [_strip(packed[:, :, off:off + m], h, w)
            for (_, m, off), (h, w) in zip(geoms, hw)]


def refine_conv(x20_slab, x4_slab, wb, wd, bias, h, w):
    """Final Conv(24->1)+Sigmoid from the two padded slabs -> (B,1,H,W) f32."""
    bsz, c20, lp = x20_slab.shape
    c4 = x4_slab.shape[1]
    _, m, _ = _layout(h, w)
    out = pl.pallas_call(
        functools.partial(_refine_kernel, w=w),
        out_shape=jax.ShapeDtypeStruct((bsz, 1, m), jnp.float32),
        grid=(bsz,),
        in_specs=[
            pl.BlockSpec((None, c20, lp), lambda i: (i, 0, 0)),
            pl.BlockSpec((None, c4, lp), lambda i: (i, 0, 0)),
            pl.BlockSpec(wb.shape, lambda i: (0, 0)),
            pl.BlockSpec(wd.shape, lambda i: (0, 0)),
            pl.BlockSpec(bias.shape, lambda i: (0, 0)),
        ],
        out_specs=pl.BlockSpec((None, 1, m), lambda i: (i, 0, 0)),
        compiler_params=_COMPILER_PARAMS,
    )(x20_slab, x4_slab, wb, wd, bias)
    return _strip(out, h, w)


# ----------------------------------------------------------------------------
# RefineNet forward (3 pallas_calls + cheap XLA glue)
# ----------------------------------------------------------------------------
_POOL_SIZES = (32, 16, 8, 4)


def refine_net_forward(kparams, x, derain_inter):
    """x: (B,3,H,W) f32, derain_inter: (B,1,H,W) f32 -> (B,1,H,W) f32 (NCHW)."""
    bsz, _, h, w = x.shape
    wp, _, lp = _layout(h, w)
    derain_in = jnp.concatenate([derain_inter, x], axis=1)                # (B,4,H,W)
    slab20 = pre_refine(derain_in, kparams["w_pre1"], kparams["b_pre1"],
                        kparams["w_pre2"], kparams["b_pre2"])             # (B,20,lp)
    # Interior recovered once; hierarchical pooling reads the full-res map one time.
    interior = (slab20[:, :, :(h + 2) * wp]
                .reshape(bsz, slab20.shape[1], h + 2, wp)[:, :, 1:h + 1, 1:w + 1]
                .astype(jnp.float32))
    p4 = _avg_pool(interior, 4)
    p8 = _avg_pool(p4, 2)
    p16 = _avg_pool(p8, 2)
    p32 = _avg_pool(p16, 2)
    pooled = [p.astype(jnp.bfloat16) for p in (p32, p16, p8, p4)]
    wks = [kparams[n] for n in ("w1010", "w1020", "w1030", "w1040")]
    bks = [kparams[n] for n in ("b1010", "b1020", "b1030", "b1040")]
    small = branch_convs(pooled, wks, bks)                                # 4 x (B,1,hi,wi)
    ups = [jnp.repeat(jnp.repeat(s, k, axis=2), k, axis=3)
           for s, k in zip(small, _POOL_SIZES)]
    x4_slab = _pad_flatten(jnp.concatenate(ups, axis=1), lp)              # (B,4,lp)
    return refine_conv(slab20, x4_slab, kparams["w_refine_branch"],
                       kparams["w_refine_derain"], kparams["b_refine"], h, w)


# ----------------------------------------------------------------------------
# Pure-JAX reference (mirrors the PyTorch module; same bf16 rounding points)
# ----------------------------------------------------------------------------
def _conv_ref(x_bf, w_hwio_bf, b_f32, act):
    y = jax.lax.conv_general_dilated(
        x_bf, w_hwio_bf, window_strides=(1, 1), padding="SAME",
        dimension_numbers=("NCHW", "HWIO", "NCHW"),
        preferred_element_type=jnp.float32)
    return _apply_act(y + b_f32.reshape(1, -1, 1, 1), act)


def refine_net_reference(params, x, derain_inter):
    q = lambda v: v.astype(jnp.bfloat16)
    derain = q(jnp.concatenate([derain_inter, x], axis=1))
    derain = q(_conv_ref(derain, q(params["w_pre1"]), params["b_pre1"], "leaky_relu"))
    derain = q(_conv_ref(derain, q(params["w_pre2"]), params["b_pre2"], "leaky_relu"))
    branches = []
    for k, wn, bn in ((32, "w1010", "b1010"), (16, "w1020", "b1020"),
                      (8, "w1030", "b1030"), (4, "w1040", "b1040")):
        pooled = q(_avg_pool(derain.astype(jnp.float32), k))
        conv = q(_conv_ref(pooled, q(params[wn]), params[bn], "relu"))
        branches.append(jnp.repeat(jnp.repeat(conv, k, axis=2), k, axis=3))
    cat = jnp.concatenate(branches + [derain], axis=1)
    return _conv_ref(cat, q(params["w_refine"]), params["b_refine"], "sigmoid")


# ----------------------------------------------------------------------------
# Parameter init (f32, HWIO) + conversion to kernel layout (bf16, (Cout, 9*Cin))
# ----------------------------------------------------------------------------
_CONV_NAMES = (("w_pre1", "b_pre1", 4, 20), ("w_pre2", "b_pre2", 20, 20),
               ("w1010", "b1010", 20, 1), ("w1020", "b1020", 20, 1),
               ("w1030", "b1030", 20, 1), ("w1040", "b1040", 20, 1),
               ("w_refine", "b_refine", 24, 1))


def init_params(key):
    def conv_init(k, cin, cout):
        kw, kb = jax.random.split(k)
        scale = 1.0 / (3.0 * (cin ** 0.5))
        w = jax.random.normal(kw, (3, 3, cin, cout), jnp.float32) * scale
        b = jax.random.normal(kb, (cout,), jnp.float32) * 0.01
        return w, b

    keys = jax.random.split(key, len(_CONV_NAMES))
    p = {}
    for k, (wn, bn, cin, cout) in zip(keys, _CONV_NAMES):
        p[wn], p[bn] = conv_init(k, cin, cout)
    return p


def _fuse_weight(w):
    """HWIO (3,3,cin,cout) f32 -> (cout, 9*cin) bf16, column order (tap, cin)."""
    cout = w.shape[3]
    return jnp.transpose(w.astype(jnp.bfloat16), (3, 0, 1, 2)).reshape(cout, -1)


def prepare_params(params):
    kp = {}
    for wn, bn, _, cout in _CONV_NAMES:
        if wn == "w_refine":
            continue
        kp[wn] = _fuse_weight(params[wn])
        kp[bn] = params[bn].astype(jnp.float32).reshape(cout, 1)
    wr = params["w_refine"]            # (3,3,24,1); in-ch order: 4 branch, 20 derain
    kp["w_refine_branch"] = _fuse_weight(wr[:, :, :4, :])
    kp["w_refine_derain"] = _fuse_weight(wr[:, :, 4:, :])
    kp["b_refine"] = params["b_refine"].astype(jnp.float32).reshape(1, 1)
    return kp


if __name__ == "__main__":
    key = jax.random.PRNGKey(0)
    kx, kd, kp = jax.random.split(key, 3)
    # H, W must be >= 32 and divisible by 32 so avg_pool2d(derain, 32) is valid,
    # exactly as the PyTorch module requires.
    B, H, W = 2, 32, 32
    x = jax.random.normal(kx, (B, 3, H, W), jnp.float32)              # image (3 ch)
    derain_inter = jax.random.normal(kd, (B, 1, H, W), jnp.float32)   # intermediate (1 ch)
    params = init_params(kp)
    kparams = prepare_params(params)

    fwd = jax.jit(refine_net_forward)
    out = jax.block_until_ready(fwd(kparams, x, derain_inter))

    assert out.shape == (B, 1, H, W), out.shape
    assert bool(jnp.all(jnp.isfinite(out)))

    ref = jax.jit(refine_net_reference)(params, x, derain_inter)
    max_err = float(jnp.max(jnp.abs(out - ref)))
    assert max_err < 1e-2, f"mismatch vs reference: {max_err}"

    print("KERNEL_OK")
</pallas_src>

<mosaic_0001>
module attributes {stable_mosaic.version = 11 : i64} {
  func.func @_pre_refine_kernel(%arg0: i32, %arg1: memref<1x4x1280xbf16, #tpu.memory_space<vmem>>, %arg2: memref<20x36xbf16, #tpu.memory_space<vmem>>, %arg3: memref<20x1xf32, #tpu.memory_space<vmem>>, %arg4: memref<20x180xbf16, #tpu.memory_space<vmem>>, %arg5: memref<20x1xf32, #tpu.memory_space<vmem>>, %arg6: memref<1x1152xf32, #tpu.memory_space<vmem>>, %arg7: memref<1x20x1280xbf16, #tpu.memory_space<vmem>>, %arg8: memref<20x1280xbf16, #tpu.memory_space<vmem>>) attributes {dimension_semantics = [#tpu.dimension_semantics<parallel>], iteration_bounds = array<i64: 2>, scalar_prefetch = 0 : i64, scratch_operands = 1 : i64, tpu.core_type = #tpu.core_type<tc>, window_params = [{transform_indices = @transform_0, window_bounds = array<i64: 1, 4, 1280>}, {pipeline_mode = #tpu.pipeline_mode<synchronous>, transform_indices = @transform_1, window_bounds = array<i64: 20, 36>}, {pipeline_mode = #tpu.pipeline_mode<synchronous>, transform_indices = @transform_2, window_bounds = array<i64: 20, 1>}, {pipeline_mode = #tpu.pipeline_mode<synchronous>, transform_indices = @transform_3, window_bounds = array<i64: 20, 180>}, {pipeline_mode = #tpu.pipeline_mode<synchronous>, transform_indices = @transform_4, window_bounds = array<i64: 20, 1>}, {pipeline_mode = #tpu.pipeline_mode<synchronous>, transform_indices = @transform_5, window_bounds = array<i64: 1, 1152>}, {transform_indices = @transform_6, window_bounds = array<i64: 1, 20, 1280>}]} {
    %c0 = arith.constant 0 : index
    %c0_0 = arith.constant 0 : index
    %0 = vector.load %arg6[%c0, %c0_0] : memref<1x1152xf32, #tpu.memory_space<vmem>>, vector<1x1152xf32>
    %c0_1 = arith.constant 0 : index
    %c0_2 = arith.constant 0 : index
    %c0_3 = arith.constant 0 : index
    %1 = vector.load %arg1[%c0_1, %c0_2, %c0_3] : memref<1x4x1280xbf16, #tpu.memory_space<vmem>>, vector<1x4x1280xbf16>
    %2 = vector.shape_cast %1 : vector<1x4x1280xbf16> to vector<4x1280xbf16>
    %c0_4 = arith.constant 0 : index
    %c0_5 = arith.constant 0 : index
    %3 = vector.load %arg2[%c0_4, %c0_5] : memref<20x36xbf16, #tpu.memory_space<vmem>>, vector<20x36xbf16>
    %c0_6 = arith.constant 0 : index
    %c0_7 = arith.constant 0 : index
    %4 = vector.load %arg3[%c0_6, %c0_7] : memref<20x1xf32, #tpu.memory_space<vmem>>, vector<20x1xf32>
    %cst = arith.constant 0.000000e+00 : f32
    %5 = vector.broadcast %cst : f32 to vector<20x1152xf32>
    %6 = vector.extract_strided_slice %2 {offsets = [0, 0], sizes = [4, 1152], strides = [1, 1]} : vector<4x1280xbf16> to vector<4x1152xbf16>
    %7 = vector.extract_strided_slice %2 {offsets = [0, 1], sizes = [4, 1152], strides = [1, 1]} : vector<4x1280xbf16> to vector<4x1152xbf16>
    %8 = vector.extract_strided_slice %2 {offsets = [0, 2], sizes = [4, 1152], strides = [1, 1]} : vector<4x1280xbf16> to vector<4x1152xbf16>
    %9 = vector.extract_strided_slice %2 {offsets = [0, 34], sizes = [4, 1152], strides = [1, 1]} : vector<4x1280xbf16> to vector<4x1152xbf16>
    %10 = vector.extract_strided_slice %2 {offsets = [0, 35], sizes = [4, 1152], strides = [1, 1]} : vector<4x1280xbf16> to vector<4x1152xbf16>
    %11 = vector.extract_strided_slice %2 {offsets = [0, 36], sizes = [4, 1152], strides = [1, 1]} : vector<4x1280xbf16> to vector<4x1152xbf16>
    %12 = vector.extract_strided_slice %2 {offsets = [0, 68], sizes = [4, 1152], strides = [1, 1]} : vector<4x1280xbf16> to vector<4x1152xbf16>
    %13 = vector.extract_strided_slice %2 {offsets = [0, 69], sizes = [4, 1152], strides = [1, 1]} : vector<4x1280xbf16> to vector<4x1152xbf16>
    %14 = vector.extract_strided_slice %2 {offsets = [0, 70], sizes = [4, 1152], strides = [1, 1]} : vector<4x1280xbf16> to vector<4x1152xbf16>
    %15 = tpu.concatenate %6, %7, %8, %9, %10, %11, %12, %13, %14 in 0 : vector<4x1152xbf16>, vector<4x1152xbf16>, vector<4x1152xbf16>, vector<4x1152xbf16>, vector<4x1152xbf16>, vector<4x1152xbf16>, vector<4x1152xbf16>, vector<4x1152xbf16>, vector<4x1152xbf16> -> vector<36x1152xbf16>
    %cst_8 = arith.constant dense<0.000000e+00> : vector<20x1152xf32>
    %16 = tpu.matmul %3, %15, %cst_8 {dimension_numbers = #tpu.dot_dimension_numbers<[1], [0], [0], [1], [0, 0, 1, 1], [], []>} : vector<20x36xbf16>, vector<36x1152xbf16>, vector<20x1152xf32> -> vector<20x1152xf32>
    %17 = arith.addf %5, %16 : vector<20x1152xf32>
    %18 = vector.broadcast %4 : vector<20x1xf32> to vector<20x1152xf32>
    %19 = arith.addf %17, %18 : vector<20x1152xf32>
    %cst_9 = arith.constant 0.000000e+00 : f32
    %20 = vector.broadcast %cst_9 : f32 to vector<20x1152xf32>
    %21 = arith.cmpf oge, %19, %20 : vector<20x1152xf32>
    %cst_10 = arith.constant 2.000000e-01 : f32
    %22 = vector.broadcast %cst_10 : f32 to vector<20x1152xf32>
    %23 = arith.mulf %22, %19 : vector<20x1152xf32>
    %24 = arith.select %21, %19, %23 : vector<20x1152xi1>, vector<20x1152xf32>
    %25 = vector.broadcast %0 : vector<1x1152xf32> to vector<20x1152xf32>
    %26 = arith.mulf %24, %25 : vector<20x1152xf32>
    %cst_11 = arith.constant 0.000000e+00 : bf16
    %27 = vector.broadcast %cst_11 : bf16 to vector<20x1280xbf16>
    %c0_12 = arith.constant 0 : index
    %c0_13 = arith.constant 0 : index
    %28 = vector.load %arg8[%c0_12, %c0_13] : memref<20x1280xbf16, #tpu.memory_space<vmem>>, vector<20x1280xbf16>
    tpu.vector_store %arg8[%c0_12, %c0_13], %27 {strides = array<i32>} : memref<20x1280xbf16, #tpu.memory_space<vmem>>, vector<20x1280xbf16>,
    %29 = arith.truncf %26 : vector<20x1152xf32> to vector<20x1152xbf16>
    %c0_14 = arith.constant 0 : index
    %c35 = arith.constant 35 : index
    %30 = vector.load %arg8[%c0_14, %c35] : memref<20x1280xbf16, #tpu.memory_space<vmem>>, vector<20x1152xbf16>
    tpu.vector_store %arg8[%c0_14, %c35], %29 {strides = array<i32>} : memref<20x1280xbf16, #tpu.memory_space<vmem>>, vector<20x1152xbf16>,
    %c0_15 = arith.constant 0 : index
    %c0_16 = arith.constant 0 : index
    %31 = vector.load %arg8[%c0_15, %c0_16] : memref<20x1280xbf16, #tpu.memory_space<vmem>>, vector<20x1280xbf16>
    %c0_17 = arith.constant 0 : index
    %c0_18 = arith.constant 0 : index
    %32 = vector.load %arg4[%c0_17, %c0_18] : memref<20x180xbf16, #tpu.memory_space<vmem>>, vector<20x180xbf16>
    %c0_19 = arith.constant 0 : index
    %c0_20 = arith.constant 0 : index
    %33 = vector.load %arg5[%c0_19, %c0_20] : memref<20x1xf32, #tpu.memory_space<vmem>>, vector<20x1xf32>
    %cst_21 = arith.constant 0.000000e+00 : f32
    %34 = vector.broadcast %cst_21 : f32 to vector<20x1152xf32>
    %35 = vector.extract_strided_slice %31 {offsets = [0, 0], sizes = [20, 1152], strides = [1, 1]} : vector<20x1280xbf16> to vector<20x1152xbf16>
    %36 = vector.extract_strided_slice %31 {offsets = [0, 1], sizes = [20, 1152], strides = [1, 1]} : vector<20x1280xbf16> to vector<20x1152xbf16>
    %37 = vector.extract_strided_slice %31 {offsets = [0, 2], sizes = [20, 1152], strides = [1, 1]} : vector<20x1280xbf16> to vector<20x1152xbf16>
    %38 = vector.extract_strided_slice %31 {offsets = [0, 34], sizes = [20, 1152], strides = [1, 1]} : vector<20x1280xbf16> to vector<20x1152xbf16>
    %39 = vector.extract_strided_slice %31 {offsets = [0, 35], sizes = [20, 1152], strides = [1, 1]} : vector<20x1280xbf16> to vector<20x1152xbf16>
    %40 = vector.extract_strided_slice %31 {offsets = [0, 36], sizes = [20, 1152], strides = [1, 1]} : vector<20x1280xbf16> to vector<20x1152xbf16>
    %41 = tpu.concatenate %35, %36, %37, %38, %39, %40 in 0 : vector<20x1152xbf16>, vector<20x1152xbf16>, vector<20x1152xbf16>, vector<20x1152xbf16>, vector<20x1152xbf16>, vector<20x1152xbf16> -> vector<120x1152xbf16>
    %42 = vector.extract_strided_slice %32 {offsets = [0, 0], sizes = [20, 120], strides = [1, 1]} : vector<20x180xbf16> to vector<20x120xbf16>
    %cst_22 = arith.constant dense<0.000000e+00> : vector<20x1152xf32>
    %43 = tpu.matmul %42, %41, %cst_22 {dimension_numbers = #tpu.dot_dimension_numbers<[1], [0], [0], [1], [0, 0, 1, 1], [], []>} : vector<20x120xbf16>, vector<120x1152xbf16>, vector<20x1152xf32> -> vector<20x1152xf32>
    %44 = arith.addf %34, %43 : vector<20x1152xf32>
    %45 = vector.extract_strided_slice %31 {offsets = [0, 68], sizes = [20, 1152], strides = [1, 1]} : vector<20x1280xbf16> to vector<20x1152xbf16>
    %46 = vector.extract_strided_slice %31 {offsets = [0, 69], sizes = [20, 1152], strides = [1, 1]} : vector<20x1280xbf16> to vector<20x1152xbf16>
    %47 = vector.extract_strided_slice %31 {offsets = [0, 70], sizes = [20, 1152], strides = [1, 1]} : vector<20x1280xbf16> to vector<20x1152xbf16>
    %48 = tpu.concatenate %45, %46, %47 in 0 : vector<20x1152xbf16>, vector<20x1152xbf16>, vector<20x1152xbf16> -> vector<60x1152xbf16>
    %49 = vector.extract_strided_slice %32 {offsets = [0, 120], sizes = [20, 60], strides = [1, 1]} : vector<20x180xbf16> to vector<20x60xbf16>
    %cst_23 = arith.constant dense<0.000000e+00> : vector<20x1152xf32>
    %50 = tpu.matmul %49, %48, %cst_23 {dimension_numbers = #tpu.dot_dimension_numbers<[1], [0], [0], [1], [0, 0, 1, 1], [], []>} : vector<20x60xbf16>, vector<60x1152xbf16>, vector<20x1152xf32> -> vector<20x1152xf32>
    %51 = arith.addf %44, %50 : vector<20x1152xf32>
    %52 = vector.broadcast %33 : vector<20x1xf32> to vector<20x1152xf32>
    %53 = arith.addf %51, %52 : vector<20x1152xf32>
    %cst_24 = arith.constant 0.000000e+00 : f32
    %54 = vector.broadcast %cst_24 : f32 to vector<20x1152xf32>
    %55 = arith.cmpf oge, %53, %54 : vector<20x1152xf32>
    %cst_25 = arith.constant 2.000000e-01 : f32
    %56 = vector.broadcast %cst_25 : f32 to vector<20x1152xf32>
    %57 = arith.mulf %56, %53 : vector<20x1152xf32>
    %58 = arith.select %55, %53, %57 : vector<20x1152xi1>, vector<20x1152xf32>
    %59 = vector.broadcast %0 : vector<1x1152xf32> to vector<20x1152xf32>
    %60 = arith.mulf %58, %59 : vector<20x1152xf32>
    %cst_26 = arith.constant 0.000000e+00 : bf16
    %61 = vector.broadcast %cst_26 : bf16 to vector<20x1280xbf16>
    %c0_27 = arith.constant 0 : index
    %c0_28 = arith.constant 0 : index
    %c0_29 = arith.constant 0 : index
    %62 = vector.load %arg7[%c0_27, %c0_28, %c0_29] : memref<1x20x1280xbf16, #tpu.memory_space<vmem>>, vector<1x20x1280xbf16>
    %63 = vector.shape_cast %62 : vector<1x20x1280xbf16> to vector<20x1280xbf16>
    %64 = vector.shape_cast %61 : vector<20x1280xbf16> to vector<1x20x1280xbf16>
    tpu.vector_store %arg7[%c0_27, %c0_28, %c0_29], %64 {strides = array<i32>} : memref<1x20x1280xbf16, #tpu.memory_space<vmem>>, vector<1x20x1280xbf16>,
    %65 = arith.truncf %60 : vector<20x1152xf32> to vector<20x1152xbf16>
    %c0_30 = arith.constant 0 : index
    %c0_31 = arith.constant 0 : index
    %c35_32 = arith.constant 35 : index
    %66 = vector.load %arg7[%c0_30, %c0_31, %c35_32] : memref<1x20x1280xbf16, #tpu.memory_space<vmem>>, vector<1x20x1152xbf16>
    %67 = vector.shape_cast %66 : vector<1x20x1152xbf16> to vector<20x1152xbf16>
    %68 = vector.shape_cast %65 : vector<20x1152xbf16> to vector<1x20x1152xbf16>
    tpu.vector_store %arg7[%c0_30, %c0_31, %c35_32], %68 {strides = array<i32>} : memref<1x20x1280xbf16, #tpu.memory_space<vmem>>, vector<1x20x1152xbf16>,
    return
  }
  func.func @transform_0(%arg0: i32) -> (i32, i32, i32) {
    %c0_i32 = arith.constant 0 : i32
    %c0_i32_0 = arith.constant 0 : i32
    %c0_i32_1 = arith.constant 0 : i32
    return %arg0, %c0_i32, %c0_i32_0 : i32, i32, i32
  }
  func.func @transform_1(%arg0: i32) -> (i32, i32) {
    %c0_i32 = arith.constant 0 : i32
    %c0_i32_0 = arith.constant 0 : i32
    %c0_i32_1 = arith.constant 0 : i32
    return %c0_i32, %c0_i32_0 : i32, i32
  }
  func.func @transform_2(%arg0: i32) -> (i32, i32) {
    %c0_i32 = arith.constant 0 : i32
    %c0_i32_0 = arith.constant 0 : i32
    %c0_i32_1 = arith.constant 0 : i32
    return %c0_i32, %c0_i32_0 : i32, i32
  }
  func.func @transform_3(%arg0: i32) -> (i32, i32) {
    %c0_i32 = arith.constant 0 : i32
    %c0_i32_0 = arith.constant 0 : i32
    %c0_i32_1 = arith.constant 0 : i32
    return %c0_i32, %c0_i32_0 : i32, i32
  }
  func.func @transform_4(%arg0: i32) -> (i32, i32) {
    %c0_i32 = arith.constant 0 : i32
    %c0_i32_0 = arith.constant 0 : i32
    %c0_i32_1 = arith.constant 0 : i32
    return %c0_i32, %c0_i32_0 : i32, i32
  }
  func.func @transform_5(%arg0: i32) -> (i32, i32) {
    %c0_i32 = arith.constant 0 : i32
    %c0_i32_0 = arith.constant 0 : i32
    %c0_i32_1 = arith.constant 0 : i32
    return %c0_i32, %c0_i32_0 : i32, i32
  }
  func.func @transform_6(%arg0: i32) -> (i32, i32, i32) {
    %c0_i32 = arith.constant 0 : i32
    %c0_i32_0 = arith.constant 0 : i32
    %c0_i32_1 = arith.constant 0 : i32
    return %arg0, %c0_i32, %c0_i32_0 : i32, i32, i32
  }
}

module attributes {stable_mosaic.version = 11 : i64} {
  func.func @_branch_kernel(%arg0: i32, %arg1: memref<1x20x256xbf16, #tpu.memory_space<vmem>>, %arg2: memref<1x20x256xbf16, #tpu.memory_space<vmem>>, %arg3: memref<1x20x256xbf16, #tpu.memory_space<vmem>>, %arg4: memref<1x20x256xbf16, #tpu.memory_space<vmem>>, %arg5: memref<1x180xbf16, #tpu.memory_space<vmem>>, %arg6: memref<1x180xbf16, #tpu.memory_space<vmem>>, %arg7: memref<1x180xbf16, #tpu.memory_space<vmem>>, %arg8: memref<1x180xbf16, #tpu.memory_space<vmem>>, %arg9: memref<1x1xf32, #tpu.memory_space<vmem>>, %arg10: memref<1x1xf32, #tpu.memory_space<vmem>>, %arg11: memref<1x1xf32, #tpu.memory_space<vmem>>, %arg12: memref<1x1xf32, #tpu.memory_space<vmem>>, %arg13: memref<1x1x512xbf16, #tpu.memory_space<vmem>>) attributes {dimension_semantics = [#tpu.dimension_semantics<parallel>], iteration_bounds = array<i64: 2>, scalar_prefetch = 0 : i64, scratch_operands = 0 : i64, tpu.core_type = #tpu.core_type<tc>, window_params = [{transform_indices = @transform_0, window_bounds = array<i64: 1, 20, 256>}, {transform_indices = @transform_1, window_bounds = array<i64: 1, 20, 256>}, {transform_indices = @transform_2, window_bounds = array<i64: 1, 20, 256>}, {transform_indices = @transform_3, window_bounds = array<i64: 1, 20, 256>}, {pipeline_mode = #tpu.pipeline_mode<synchronous>, transform_indices = @transform_4, window_bounds = array<i64: 1, 180>}, {pipeline_mode = #tpu.pipeline_mode<synchronous>, transform_indices = @transform_5, window_bounds = array<i64: 1, 180>}, {pipeline_mode = #tpu.pipeline_mode<synchronous>, transform_indices = @transform_6, window_bounds = array<i64: 1, 180>}, {pipeline_mode = #tpu.pipeline_mode<synchronous>, transform_indices = @transform_7, window_bounds = array<i64: 1, 180>}, {pipeline_mode = #tpu.pipeline_mode<synchronous>, transform_indices = @transform_8, window_bounds = array<i64: 1, 1>}, {pipeline_mode = #tpu.pipeline_mode<synchronous>, transform_indices = @transform_9, window_bounds = array<i64: 1, 1>}, {pipeline_mode = #tpu.pipeline_mode<synchronous>, transform_indices = @transform_10, window_bounds = array<i64: 1, 1>}, {pipeline_mode = #tpu.pipeline_mode<synchronous>, transform_indices = @transform_11, window_bounds = array<i64: 1, 1>}, {transform_indices = @transform_12, window_bounds = array<i64: 1, 1, 512>}]} {
    %c0 = arith.constant 0 : index
    %c0_0 = arith.constant 0 : index
    %c0_1 = arith.constant 0 : index
    %0 = vector.load %arg1[%c0, %c0_0, %c0_1] : memref<1x20x256xbf16, #tpu.memory_space<vmem>>, vector<1x20x256xbf16>
    %1 = vector.shape_cast %0 : vector<1x20x256xbf16> to vector<20x256xbf16>
    %c0_2 = arith.constant 0 : index
    %c0_3 = arith.constant 0 : index
    %2 = vector.load %arg5[%c0_2, %c0_3] : memref<1x180xbf16, #tpu.memory_space<vmem>>, vector<1x180xbf16>
    %c0_4 = arith.constant 0 : index
    %c0_5 = arith.constant 0 : index
    %3 = vector.load %arg9[%c0_4, %c0_5] : memref<1x1xf32, #tpu.memory_space<vmem>>, vector<1x1xf32>
    %cst = arith.constant 0.000000e+00 : f32
    %4 = vector.broadcast %cst : f32 to vector<1x128xf32>
    %5 = vector.extract_strided_slice %1 {offsets = [0, 0], sizes = [20, 128], strides = [1, 1]} : vector<20x256xbf16> to vector<20x128xbf16>
    %6 = vector.extract_strided_slice %1 {offsets = [0, 1], sizes = [20, 128], strides = [1, 1]} : vector<20x256xbf16> to vector<20x128xbf16>
    %7 = vector.extract_strided_slice %1 {offsets = [0, 2], sizes = [20, 128], strides = [1, 1]} : vector<20x256xbf16> to vector<20x128xbf16>
    %8 = vector.extract_strided_slice %1 {offsets = [0, 3], sizes = [20, 128], strides = [1, 1]} : vector<20x256xbf16> to vector<20x128xbf16>
    %9 = vector.extract_strided_slice %1 {offsets = [0, 4], sizes = [20, 128], strides = [1, 1]} : vector<20x256xbf16> to vector<20x128xbf16>
    %10 = vector.extract_strided_slice %1 {offsets = [0, 5], sizes = [20, 128], strides = [1, 1]} : vector<20x256xbf16> to vector<20x128xbf16>
    %11 = tpu.concatenate %5, %6, %7, %8, %9, %10 in 0 : vector<20x128xbf16>, vector<20x128xbf16>, vector<20x128xbf16>, vector<20x128xbf16>, vector<20x128xbf16>, vector<20x128xbf16> -> vector<120x128xbf16>
    %12 = vector.extract_strided_slice %2 {offsets = [0, 0], sizes = [1, 120], strides = [1, 1]} : vector<1x180xbf16> to vector<1x120xbf16>
    %cst_6 = arith.constant dense<0.000000e+00> : vector<1x128xf32>
    %13 = tpu.matmul %12, %11, %cst_6 {dimension_numbers = #tpu.dot_dimension_numbers<[1], [0], [0], [1], [0, 0, 1, 1], [], []>} : vector<1x120xbf16>, vector<120x128xbf16>, vector<1x128xf32> -> vector<1x128xf32>
    %14 = arith.addf %4, %13 : vector<1x128xf32>
    %15 = vector.extract_strided_slice %1 {offsets = [0, 6], sizes = [20, 128], strides = [1, 1]} : vector<20x256xbf16> to vector<20x128xbf16>
    %16 = vector.extract_strided_slice %1 {offsets = [0, 7], sizes = [20, 128], strides = [1, 1]} : vector<20x256xbf16> to vector<20x128xbf16>
    %17 = vector.extract_strided_slice %1 {offsets = [0, 8], sizes = [20, 128], strides = [1, 1]} : vector<20x256xbf16> to vector<20x128xbf16>
    %18 = tpu.concatenate %15, %16, %17 in 0 : vector<20x128xbf16>, vector<20x128xbf16>, vector<20x128xbf16> -> vector<60x128xbf16>
    %19 = vector.extract_strided_slice %2 {offsets = [0, 120], sizes = [1, 60], strides = [1, 1]} : vector<1x180xbf16> to vector<1x60xbf16>
    %cst_7 = arith.constant dense<0.000000e+00> : vector<1x128xf32>
    %20 = tpu.matmul %19, %18, %cst_7 {dimension_numbers = #tpu.dot_dimension_numbers<[1], [0], [0], [1], [0, 0, 1, 1], [], []>} : vector<1x60xbf16>, vector<60x128xbf16>, vector<1x128xf32> -> vector<1x128xf32>
    %21 = arith.addf %14, %20 : vector<1x128xf32>
    %22 = vector.broadcast %3 : vector<1x1xf32> to vector<1x128xf32>
    %23 = arith.addf %21, %22 : vector<1x128xf32>
    %cst_8 = arith.constant 0.000000e+00 : f32
    %24 = vector.broadcast %cst_8 : f32 to vector<1x128xf32>
    %25 = arith.maximumf %23, %24 : vector<1x128xf32>
    %26 = arith.truncf %25 : vector<1x128xf32> to vector<1x128xbf16>
    %c0_9 = arith.constant 0 : index
    %c0_10 = arith.constant 0 : index
    %c0_11 = arith.constant 0 : index
    %27 = vector.load %arg13[%c0_9, %c0_10, %c0_11] : memref<1x1x512xbf16, #tpu.memory_space<vmem>>, vector<1x1x128xbf16>
    %28 = vector.shape_cast %27 : vector<1x1x128xbf16> to vector<1x128xbf16>
    %29 = vector.shape_cast %26 : vector<1x128xbf16> to vector<1x1x128xbf16>
    tpu.vector_store %arg13[%c0_9, %c0_10, %c0_11], %29 {strides = array<i32>} : memref<1x1x512xbf16, #tpu.memory_space<vmem>>, vector<1x1x128xbf16>,
    %c0_12 = arith.constant 0 : index
    %c0_13 = arith.constant 0 : index
    %c0_14 = arith.constant 0 : index
    %30 = vector.load %arg2[%c0_12, %c0_13, %c0_14] : memref<1x20x256xbf16, #tpu.memory_space<vmem>>, vector<1x20x256xbf16>
    %31 = vector.shape_cast %30 : vector<1x20x256xbf16> to vector<20x256xbf16>
    %c0_15 = arith.constant 0 : index
    %c0_16 = arith.constant 0 : index
    %32 = vector.load %arg6[%c0_15, %c0_16] : memref<1x180xbf16, #tpu.memory_space<vmem>>, vector<1x180xbf16>
    %c0_17 = arith.constant 0 : index
    %c0_18 = arith.constant 0 : index
    %33 = vector.load %arg10[%c0_17, %c0_18] : memref<1x1xf32, #tpu.memory_space<vmem>>, vector<1x1xf32>
    %cst_19 = arith.constant 0.000000e+00 : f32
    %34 = vector.broadcast %cst_19 : f32 to vector<1x128xf32>
    %35 = vector.extract_strided_slice %31 {offsets = [0, 0], sizes = [20, 128], strides = [1, 1]} : vector<20x256xbf16> to vector<20x128xbf16>
    %36 = vector.extract_strided_slice %31 {offsets = [0, 1], sizes = [20, 128], strides = [1, 1]} : vector<20x256xbf16> to vector<20x128xbf16>
    %37 = vector.extract_strided_slice %31 {offsets = [0, 2], sizes = [20, 128], strides = [1, 1]} : vector<20x256xbf16> to vector<20x128xbf16>
    %38 = vector.extract_strided_slice %31 {offsets = [0, 4], sizes = [20, 128], strides = [1, 1]} : vector<20x256xbf16> to vector<20x128xbf16>
    %39 = vector.extract_strided_slice %31 {offsets = [0, 5], sizes = [20, 128], strides = [1, 1]} : vector<20x256xbf16> to vector<20x128xbf16>
    %40 = vector.extract_strided_slice %31 {offsets = [0, 6], sizes = [20, 128], strides = [1, 1]} : vector<20x256xbf16> to vector<20x128xbf16>
    %41 = tpu.concatenate %35, %36, %37, %38, %39, %40 in 0 : vector<20x128xbf16>, vector<20x128xbf16>, vector<20x128xbf16>, vector<20x128xbf16>, vector<20x128xbf16>, vector<20x128xbf16> -> vector<120x128xbf16>
    %42 = vector.extract_strided_slice %32 {offsets = [0, 0], sizes = [1, 120], strides = [1, 1]} : vector<1x180xbf16> to vector<1x120xbf16>
    %cst_20 = arith.constant dense<0.000000e+00> : vector<1x128xf32>
    %43 = tpu.matmul %42, %41, %cst_20 {dimension_numbers = #tpu.dot_dimension_numbers<[1], [0], [0], [1], [0, 0, 1, 1], [], []>} : vector<1x120xbf16>, vector<120x128xbf16>, vector<1x128xf32> -> vector<1x128xf32>
    %44 = arith.addf %34, %43 : vector<1x128xf32>
    %45 = vector.extract_strided_slice %31 {offsets = [0, 8], sizes = [20, 128], strides = [1, 1]} : vector<20x256xbf16> to vector<20x128xbf16>
    %46 = vector.extract_strided_slice %31 {offsets = [0, 9], sizes = [20, 128], strides = [1, 1]} : vector<20x256xbf16> to vector<20x128xbf16>
    %47 = vector.extract_strided_slice %31 {offsets = [0, 10], sizes = [20, 128], strides = [1, 1]} : vector<20x256xbf16> to vector<20x128xbf16>
    %48 = tpu.concatenate %45, %46, %47 in 0 : vector<20x128xbf16>, vector<20x128xbf16>, vector<20x128xbf16> -> vector<60x128xbf16>
    %49 = vector.extract_strided_slice %32 {offsets = [0, 120], sizes = [1, 60], strides = [1, 1]} : vector<1x180xbf16> to vector<1x60xbf16>
    %cst_21 = arith.constant dense<0.000000e+00> : vector<1x128xf32>
    %50 = tpu.matmul %49, %48, %cst_21 {dimension_numbers = #tpu.dot_dimension_numbers<[1], [0], [0], [1], [0, 0, 1, 1], [], []>} : vector<1x60xbf16>, vector<60x128xbf16>, vector<1x128xf32> -> vector<1x128xf32>
    %51 = arith.addf %44, %50 : vector<1x128xf32>
    %52 = vector.broadcast %33 : vector<1x1xf32> to vector<1x128xf32>
    %53 = arith.addf %51, %52 : vector<1x128xf32>
    %cst_22 = arith.constant 0.000000e+00 : f32
    %54 = vector.broadcast %cst_22 : f32 to vector<1x128xf32>
    %55 = arith.maximumf %53, %54 : vector<1x128xf32>
    %56 = arith.truncf %55 : vector<1x128xf32> to vector<1x128xbf16>
    %c0_23 = arith.constant 0 : index
    %c0_24 = arith.constant 0 : index
    %c128 = arith.constant 128 : index
    %57 = vector.load %arg13[%c0_23, %c0_24, %c128] : memref<1x1x512xbf16, #tpu.memory_space<vmem>>, vector<1x1x128xbf16>
    %58 = vector.shape_cast %57 : vector<1x1x128xbf16> to vector<1x128xbf16>
    %59 = vector.shape_cast %56 : vector<1x128xbf16> to vector<1x1x128xbf16>
    tpu.vector_store %arg13[%c0_23, %c0_24, %c128], %59 {strides = array<i32>} : memref<1x1x512xbf16, #tpu.memory_space<vmem>>, vector<1x1x128xbf16>,
    %c0_25 = arith.constant 0 : index
    %c0_26 = arith.constant 0 : index
    %c0_27 = arith.constant 0 : index
    %60 = vector.load %arg3[%c0_25, %c0_26, %c0_27] : memref<1x20x256xbf16, #tpu.memory_space<vmem>>, vector<1x20x256xbf16>
    %61 = vector.shape_cast %60 : vector<1x20x256xbf16> to vector<20x256xbf16>
    %c0_28 = arith.constant 0 : index
    %c0_29 = arith.constant 0 : index
    %62 = vector.load %arg7[%c0_28, %c0_29] : memref<1x180xbf16, #tpu.memory_space<vmem>>, vector<1x180xbf16>
    %c0_30 = arith.constant 0 : index
    %c0_31 = arith.constant 0 : index
    %63 = vector.load %arg11[%c0_30, %c0_31] : memref<1x1xf32, #tpu.memory_space<vmem>>, vector<1x1xf32>
    %cst_32 = arith.constant 0.000000e+00 : f32
    %64 = vector.broadcast %cst_32 : f32 to vector<1x128xf32>
    %65 = vector.extract_strided_slice %61 {offsets = [0, 0], sizes = [20, 128], strides = [1, 1]} : vector<20x256xbf16> to vector<20x128xbf16>
    %66 = vector.extract_strided_slice %61 {offsets = [0, 1], sizes = [20, 128], strides = [1, 1]} : vector<20x256xbf16> to vector<20x128xbf16>
    %67 = vector.extract_strided_slice %61 {offsets = [0, 2], sizes = [20, 128], strides = [1, 1]} : vector<20x256xbf16> to vector<20x128xbf16>
    %68 = vector.extract_strided_slice %61 {offsets = [0, 6], sizes = [20, 128], strides = [1, 1]} : vector<20x256xbf16> to vector<20x128xbf16>
    %69 = vector.extract_strided_slice %61 {offsets = [0, 7], sizes = [20, 128], strides = [1, 1]} : vector<20x256xbf16> to vector<20x128xbf16>
    %70 = vector.extract_strided_slice %61 {offsets = [0, 8], sizes = [20, 128], strides = [1, 1]} : vector<20x256xbf16> to vector<20x128xbf16>
    %71 = tpu.concatenate %65, %66, %67, %68, %69, %70 in 0 : vector<20x128xbf16>, vector<20x128xbf16>, vector<20x128xbf16>, vector<20x128xbf16>, vector<20x128xbf16>, vector<20x128xbf16> -> vector<120x128xbf16>
    %72 = vector.extract_strided_slice %62 {offsets = [0, 0], sizes = [1, 120], strides = [1, 1]} : vector<1x180xbf16> to vector<1x120xbf16>
    %cst_33 = arith.constant dense<0.000000e+00> : vector<1x128xf32>
    %73 = tpu.matmul %72, %71, %cst_33 {dimension_numbers = #tpu.dot_dimension_numbers<[1], [0], [0], [1], [0, 0, 1, 1], [], []>} : vector<1x120xbf16>, vector<120x128xbf16>, vector<1x128xf32> -> vector<1x128xf32>
    %74 = arith.addf %64, %73 : vector<1x128xf32>
    %75 = vector.extract_strided_slice %61 {offsets = [0, 12], sizes = [20, 128], strides = [1, 1]} : vector<20x256xbf16> to vector<20x128xbf16>
    %76 = vector.extract_strided_slice %61 {offsets = [0, 13], sizes = [20, 128], strides = [1, 1]} : vector<20x256xbf16> to vector<20x128xbf16>
    %77 = vector.extract_strided_slice %61 {offsets = [0, 14], sizes = [20, 128], strides = [1, 1]} : vector<20x256xbf16> to vector<20x128xbf16>
    %78 = tpu.concatenate %75, %76, %77 in 0 : vector<20x128xbf16>, vector<20x128xbf16>, vector<20x128xbf16> -> vector<60x128xbf16>
    %79 = vector.extract_strided_slice %62 {offsets = [0, 120], sizes = [1, 60], strides = [1, 1]} : vector<1x180xbf16> to vector<1x60xbf16>
    %cst_34 = arith.constant dense<0.000000e+00> : vector<1x128xf32>
    %80 = tpu.matmul %79, %78, %cst_34 {dimension_numbers = #tpu.dot_dimension_numbers<[1], [0], [0], [1], [0, 0, 1, 1], [], []>} : vector<1x60xbf16>, vector<60x128xbf16>, vector<1x128xf32> -> vector<1x128xf32>
    %81 = arith.addf %74, %80 : vector<1x128xf32>
    %82 = vector.broadcast %63 : vector<1x1xf32> to vector<1x128xf32>
    %83 = arith.addf %81, %82 : vector<1x128xf32>
    %cst_35 = arith.constant 0.000000e+00 : f32
    %84 = vector.broadcast %cst_35 : f32 to vector<1x128xf32>
    %85 = arith.maximumf %83, %84 : vector<1x128xf32>
    %86 = arith.truncf %85 : vector<1x128xf32> to vector<1x128xbf16>
    %c0_36 = arith.constant 0 : index
    %c0_37 = arith.constant 0 : index
    %c256 = arith.constant 256 : index
    %87 = vector.load %arg13[%c0_36, %c0_37, %c256] : memref<1x1x512xbf16, #tpu.memory_space<vmem>>, vector<1x1x128xbf16>
    %88 = vector.shape_cast %87 : vector<1x1x128xbf16> to vector<1x128xbf16>
    %89 = vector.shape_cast %86 : vector<1x128xbf16> to vector<1x1x128xbf16>
    tpu.vector_store %arg13[%c0_36, %c0_37, %c256], %89 {strides = array<i32>} : memref<1x1x512xbf16, #tpu.memory_space<vmem>>, vector<1x1x128xbf16>,
    %c0_38 = arith.constant 0 : index
    %c0_39 = arith.constant 0 : index
    %c0_40 = arith.constant 0 : index
    %90 = vector.load %arg4[%c0_38, %c0_39, %c0_40] : memref<1x20x256xbf16, #tpu.memory_space<vmem>>, vector<1x20x256xbf16>
    %91 = vector.shape_cast %90 : vector<1x20x256xbf16> to vector<20x256xbf16>
    %c0_41 = arith.constant 0 : index
    %c0_42 = arith.constant 0 : index
    %92 = vector.load %arg8[%c0_41, %c0_42] : memref<1x180xbf16, #tpu.memory_space<vmem>>, vector<1x180xbf16>
    %c0_43 = arith.constant 0 : index
    %c0_44 = arith.constant 0 : index
    %93 = vector.load %arg12[%c0_43, %c0_44] : memref<1x1xf32, #tpu.memory_space<vmem>>, vector<1x1xf32>
    %cst_45 = arith.constant 0.000000e+00 : f32
    %94 = vector.broadcast %cst_45 : f32 to vector<1x128xf32>
    %95 = vector.extract_strided_slice %91 {offsets = [0, 0], sizes = [20, 128], strides = [1, 1]} : vector<20x256xbf16> to vector<20x128xbf16>
    %96 = vector.extract_strided_slice %91 {offsets = [0, 1], sizes = [20, 128], strides = [1, 1]} : vector<20x256xbf16> to vector<20x128xbf16>
    %97 = vector.extract_strided_slice %91 {offsets = [0, 2], sizes = [20, 128], strides = [1, 1]} : vector<20x256xbf16> to vector<20x128xbf16>
    %98 = vector.extract_strided_slice %91 {offsets = [0, 10], sizes = [20, 128], strides = [1, 1]} : vector<20x256xbf16> to vector<20x128xbf16>
    %99 = vector.extract_strided_slice %91 {offsets = [0, 11], sizes = [20, 128], strides = [1, 1]} : vector<20x256xbf16> to vector<20x128xbf16>
    %100 = vector.extract_strided_slice %91 {offsets = [0, 12], sizes = [20, 128], strides = [1, 1]} : vector<20x256xbf16> to vector<20x128xbf16>
    %101 = tpu.concatenate %95, %96, %97, %98, %99, %100 in 0 : vector<20x128xbf16>, vector<20x128xbf16>, vector<20x128xbf16>, vector<20x128xbf16>, vector<20x128xbf16>, vector<20x128xbf16> -> vector<120x128xbf16>
    %102 = vector.extract_strided_slice %92 {offsets = [0, 0], sizes = [1, 120], strides = [1, 1]} : vector<1x180xbf16> to vector<1x120xbf16>
    %cst_46 = arith.constant dense<0.000000e+00> : vector<1x128xf32>
    %103 = tpu.matmul %102, %101, %cst_46 {dimension_numbers = #tpu.dot_dimension_numbers<[1], [0], [0], [1], [0, 0, 1, 1], [], []>} : vector<1x120xbf16>, vector<120x128xbf16>, vector<1x128xf32> -> vector<1x128xf32>
    %104 = arith.addf %94, %103 : vector<1x128xf32>
    %105 = vector.extract_strided_slice %91 {offsets = [0, 20], sizes = [20, 128], strides = [1, 1]} : vector<20x256xbf16> to vector<20x128xbf16>
    %106 = vector.extract_strided_slice %91 {offsets = [0, 21], sizes = [20, 128], strides = [1, 1]} : vector<20x256xbf16> to vector<20x128xbf16>
    %107 = vector.extract_strided_slice %91 {offsets = [0, 22], sizes = [20, 128], strides = [1, 1]} : vector<20x256xbf16> to vector<20x128xbf16>
    %108 = tpu.concatenate %105, %106, %107 in 0 : vector<20x128xbf16>, vector<20x128xbf16>, vector<20x128xbf16> -> vector<60x128xbf16>
    %109 = vector.extract_strided_slice %92 {offsets = [0, 120], sizes = [1, 60], strides = [1, 1]} : vector<1x180xbf16> to vector<1x60xbf16>
    %cst_47 = arith.constant dense<0.000000e+00> : vector<1x128xf32>
    %110 = tpu.matmul %109, %108, %cst_47 {dimension_numbers = #tpu.dot_dimension_numbers<[1], [0], [0], [1], [0, 0, 1, 1], [], []>} : vector<1x60xbf16>, vector<60x128xbf16>, vector<1x128xf32> -> vector<1x128xf32>
    %111 = arith.addf %104, %110 : vector<1x128xf32>
    %112 = vector.broadcast %93 : vector<1x1xf32> to vector<1x128xf32>
    %113 = arith.addf %111, %112 : vector<1x128xf32>
    %cst_48 = arith.constant 0.000000e+00 : f32
    %114 = vector.broadcast %cst_48 : f32 to vector<1x128xf32>
    %115 = arith.maximumf %113, %114 : vector<1x128xf32>
    %116 = arith.truncf %115 : vector<1x128xf32> to vector<1x128xbf16>
    %c0_49 = arith.constant 0 : index
    %c0_50 = arith.constant 0 : index
    %c384 = arith.constant 384 : index
    %117 = vector.load %arg13[%c0_49, %c0_50, %c384] : memref<1x1x512xbf16, #tpu.memory_space<vmem>>, vector<1x1x128xbf16>
    %118 = vector.shape_cast %117 : vector<1x1x128xbf16> to vector<1x128xbf16>
    %119 = vector.shape_cast %116 : vector<1x128xbf16> to vector<1x1x128xbf16>
    tpu.vector_store %arg13[%c0_49, %c0_50, %c384], %119 {strides = array<i32>} : memref<1x1x512xbf16, #tpu.memory_space<vmem>>, vector<1x1x128xbf16>,
    return
  }
  func.func @transform_0(%arg0: i32) -> (i32, i32, i32) {
    %c0_i32 = arith.constant 0 : i32
    %c0_i32_0 = arith.constant 0 : i32
    %c0_i32_1 = arith.constant 0 : i32
    return %arg0, %c0_i32, %c0_i32_0 : i32, i32, i32
  }
  func.func @transform_1(%arg0: i32) -> (i32, i32, i32) {
    %c0_i32 = arith.constant 0 : i32
    %c0_i32_0 = arith.constant 0 : i32
    %c0_i32_1 = arith.constant 0 : i32
    return %arg0, %c0_i32, %c0_i32_0 : i32, i32, i32
  }
  func.func @transform_2(%arg0: i32) -> (i32, i32, i32) {
    %c0_i32 = arith.constant 0 : i32
    %c0_i32_0 = arith.constant 0 : i32
    %c0_i32_1 = arith.constant 0 : i32
    return %arg0, %c0_i32, %c0_i32_0 : i32, i32, i32
  }
  func.func @transform_3(%arg0: i32) -> (i32, i32, i32) {
    %c0_i32 = arith.constant 0 : i32
    %c0_i32_0 = arith.constant 0 : i32
    %c0_i32_1 = arith.constant 0 : i32
    return %arg0, %c0_i32, %c0_i32_0 : i32, i32, i32
  }
  func.func @transform_4(%arg0: i32) -> (i32, i32) {
    %c0_i32 = arith.constant 0 : i32
    %c0_i32_0 = arith.constant 0 : i32
    %c0_i32_1 = arith.constant 0 : i32
    return %c0_i32, %c0_i32_0 : i32, i32
  }
  func.func @transform_5(%arg0: i32) -> (i32, i32) {
    %c0_i32 = arith.constant 0 : i32
    %c0_i32_0 = arith.constant 0 : i32
    %c0_i32_1 = arith.constant 0 : i32
    return %c0_i32, %c0_i32_0 : i32, i32
  }
  func.func @transform_6(%arg0: i32) -> (i32, i32) {
    %c0_i32 = arith.constant 0 : i32
    %c0_i32_0 = arith.constant 0 : i32
    %c0_i32_1 = arith.constant 0 : i32
    return %c0_i32, %c0_i32_0 : i32, i32
  }
  func.func @transform_7(%arg0: i32) -> (i32, i32) {
    %c0_i32 = arith.constant 0 : i32
    %c0_i32_0 = arith.constant 0 : i32
    %c0_i32_1 = arith.constant 0 : i32
    return %c0_i32, %c0_i32_0 : i32, i32
  }
  func.func @transform_8(%arg0: i32) -> (i32, i32) {
    %c0_i32 = arith.constant 0 : i32
    %c0_i32_0 = arith.constant 0 : i32
    %c0_i32_1 = arith.constant 0 : i32
    return %c0_i32, %c0_i32_0 : i32, i32
  }
  func.func @transform_9(%arg0: i32) -> (i32, i32) {
    %c0_i32 = arith.constant 0 : i32
    %c0_i32_0 = arith.constant 0 : i32
    %c0_i32_1 = arith.constant 0 : i32
    return %c0_i32, %c0_i32_0 : i32, i32
  }
  func.func @transform_10(%arg0: i32) -> (i32, i32) {
    %c0_i32 = arith.constant 0 : i32
    %c0_i32_0 = arith.constant 0 : i32
    %c0_i32_1 = arith.constant 0 : i32
    return %c0_i32, %c0_i32_0 : i32, i32
  }
  func.func @transform_11(%arg0: i32) -> (i32, i32) {
    %c0_i32 = arith.constant 0 : i32
    %c0_i32_0 = arith.constant 0 : i32
    %c0_i32_1 = arith.constant 0 : i32
    return %c0_i32, %c0_i32_0 : i32, i32
  }
  func.func @transform_12(%arg0: i32) -> (i32, i32, i32) {
    %c0_i32 = arith.constant 0 : i32
    %c0_i32_0 = arith.constant 0 : i32
    %c0_i32_1 = arith.constant 0 : i32
    return %arg0, %c0_i32, %c0_i32_0 : i32, i32, i32
  }
}

module attributes {stable_mosaic.version = 11 : i64} {
  func.func @_refine_kernel(%arg0: i32, %arg1: memref<1x20x1280xbf16, #tpu.memory_space<vmem>>, %arg2: memref<1x4x1280xbf16, #tpu.memory_space<vmem>>, %arg3: memref<1x36xbf16, #tpu.memory_space<vmem>>, %arg4: memref<1x180xbf16, #tpu.memory_space<vmem>>, %arg5: memref<1x1xf32, #tpu.memory_space<vmem>>, %arg6: memref<1x1x1152xf32, #tpu.memory_space<vmem>>) attributes {dimension_semantics = [#tpu.dimension_semantics<parallel>], iteration_bounds = array<i64: 2>, scalar_prefetch = 0 : i64, scratch_operands = 0 : i64, tpu.core_type = #tpu.core_type<tc>, window_params = [{transform_indices = @transform_0, window_bounds = array<i64: 1, 20, 1280>}, {transform_indices = @transform_1, window_bounds = array<i64: 1, 4, 1280>}, {pipeline_mode = #tpu.pipeline_mode<synchronous>, transform_indices = @transform_2, window_bounds = array<i64: 1, 36>}, {pipeline_mode = #tpu.pipeline_mode<synchronous>, transform_indices = @transform_3, window_bounds = array<i64: 1, 180>}, {pipeline_mode = #tpu.pipeline_mode<synchronous>, transform_indices = @transform_4, window_bounds = array<i64: 1, 1>}, {transform_indices = @transform_5, window_bounds = array<i64: 1, 1, 1152>}]} {
    %c0 = arith.constant 0 : index
    %c0_0 = arith.constant 0 : index
    %c0_1 = arith.constant 0 : index
    %0 = vector.load %arg2[%c0, %c0_0, %c0_1] : memref<1x4x1280xbf16, #tpu.memory_space<vmem>>, vector<1x4x1280xbf16>
    %1 = vector.shape_cast %0 : vector<1x4x1280xbf16> to vector<4x1280xbf16>
    %c0_2 = arith.constant 0 : index
    %c0_3 = arith.constant 0 : index
    %2 = vector.load %arg3[%c0_2, %c0_3] : memref<1x36xbf16, #tpu.memory_space<vmem>>, vector<1x36xbf16>
    %cst = arith.constant 0.000000e+00 : f32
    %3 = vector.broadcast %cst : f32 to vector<1x1152xf32>
    %4 = vector.extract_strided_slice %1 {offsets = [0, 0], sizes = [4, 1152], strides = [1, 1]} : vector<4x1280xbf16> to vector<4x1152xbf16>
    %5 = vector.extract_strided_slice %1 {offsets = [0, 1], sizes = [4, 1152], strides = [1, 1]} : vector<4x1280xbf16> to vector<4x1152xbf16>
    %6 = vector.extract_strided_slice %1 {offsets = [0, 2], sizes = [4, 1152], strides = [1, 1]} : vector<4x1280xbf16> to vector<4x1152xbf16>
    %7 = vector.extract_strided_slice %1 {offsets = [0, 34], sizes = [4, 1152], strides = [1, 1]} : vector<4x1280xbf16> to vector<4x1152xbf16>
    %8 = vector.extract_strided_slice %1 {offsets = [0, 35], sizes = [4, 1152], strides = [1, 1]} : vector<4x1280xbf16> to vector<4x1152xbf16>
    %9 = vector.extract_strided_slice %1 {offsets = [0, 36], sizes = [4, 1152], strides = [1, 1]} : vector<4x1280xbf16> to vector<4x1152xbf16>
    %10 = vector.extract_strided_slice %1 {offsets = [0, 68], sizes = [4, 1152], strides = [1, 1]} : vector<4x1280xbf16> to vector<4x1152xbf16>
    %11 = vector.extract_strided_slice %1 {offsets = [0, 69], sizes = [4, 1152], strides = [1, 1]} : vector<4x1280xbf16> to vector<4x1152xbf16>
    %12 = vector.extract_strided_slice %1 {offsets = [0, 70], sizes = [4, 1152], strides = [1, 1]} : vector<4x1280xbf16> to vector<4x1152xbf16>
    %13 = tpu.concatenate %4, %5, %6, %7, %8, %9, %10, %11, %12 in 0 : vector<4x1152xbf16>, vector<4x1152xbf16>, vector<4x1152xbf16>, vector<4x1152xbf16>, vector<4x1152xbf16>, vector<4x1152xbf16>, vector<4x1152xbf16>, vector<4x1152xbf16>, vector<4x1152xbf16> -> vector<36x1152xbf16>
    %cst_4 = arith.constant dense<0.000000e+00> : vector<1x1152xf32>
    %14 = tpu.matmul %2, %13, %cst_4 {dimension_numbers = #tpu.dot_dimension_numbers<[1], [0], [0], [1], [0, 0, 1, 1], [], []>} : vector<1x36xbf16>, vector<36x1152xbf16>, vector<1x1152xf32> -> vector<1x1152xf32>
    %15 = arith.addf %3, %14 : vector<1x1152xf32>
    %c0_5 = arith.constant 0 : index
    %c0_6 = arith.constant 0 : index
    %c0_7 = arith.constant 0 : index
    %16 = vector.load %arg1[%c0_5, %c0_6, %c0_7] : memref<1x20x1280xbf16, #tpu.memory_space<vmem>>, vector<1x20x1280xbf16>
    %17 = vector.shape_cast %16 : vector<1x20x1280xbf16> to vector<20x1280xbf16>
    %c0_8 = arith.constant 0 : index
    %c0_9 = arith.constant 0 : index
    %18 = vector.load %arg4[%c0_8, %c0_9] : memref<1x180xbf16, #tpu.memory_space<vmem>>, vector<1x180xbf16>
    %cst_10 = arith.constant 0.000000e+00 : f32
    %19 = vector.broadcast %cst_10 : f32 to vector<1x1152xf32>
    %20 = vector.extract_strided_slice %17 {offsets = [0, 0], sizes = [20, 1152], strides = [1, 1]} : vector<20x1280xbf16> to vector<20x1152xbf16>
    %21 = vector.extract_strided_slice %17 {offsets = [0, 1], sizes = [20, 1152], strides = [1, 1]} : vector<20x1280xbf16> to vector<20x1152xbf16>
    %22 = vector.extract_strided_slice %17 {offsets = [0, 2], sizes = [20, 1152], strides = [1, 1]} : vector<20x1280xbf16> to vector<20x1152xbf16>
    %23 = vector.extract_strided_slice %17 {offsets = [0, 34], sizes = [20, 1152], strides = [1, 1]} : vector<20x1280xbf16> to vector<20x1152xbf16>
    %24 = vector.extract_strided_slice %17 {offsets = [0, 35], sizes = [20, 1152], strides = [1, 1]} : vector<20x1280xbf16> to vector<20x1152xbf16>
    %25 = vector.extract_strided_slice %17 {offsets = [0, 36], sizes = [20, 1152], strides = [1, 1]} : vector<20x1280xbf16> to vector<20x1152xbf16>
    %26 = tpu.concatenate %20, %21, %22, %23, %24, %25 in 0 : vector<20x1152xbf16>, vector<20x1152xbf16>, vector<20x1152xbf16>, vector<20x1152xbf16>, vector<20x1152xbf16>, vector<20x1152xbf16> -> vector<120x1152xbf16>
    %27 = vector.extract_strided_slice %18 {offsets = [0, 0], sizes = [1, 120], strides = [1, 1]} : vector<1x180xbf16> to vector<1x120xbf16>
    %cst_11 = arith.constant dense<0.000000e+00> : vector<1x1152xf32>
    %28 = tpu.matmul %27, %26, %cst_11 {dimension_numbers = #tpu.dot_dimension_numbers<[1], [0], [0], [1], [0, 0, 1, 1], [], []>} : vector<1x120xbf16>, vector<120x1152xbf16>, vector<1x1152xf32> -> vector<1x1152xf32>
    %29 = arith.addf %19, %28 : vector<1x1152xf32>
    %30 = vector.extract_strided_slice %17 {offsets = [0, 68], sizes = [20, 1152], strides = [1, 1]} : vector<20x1280xbf16> to vector<20x1152xbf16>
    %31 = vector.extract_strided_slice %17 {offsets = [0, 69], sizes = [20, 1152], strides = [1, 1]} : vector<20x1280xbf16> to vector<20x1152xbf16>
    %32 = vector.extract_strided_slice %17 {offsets = [0, 70], sizes = [20, 1152], strides = [1, 1]} : vector<20x1280xbf16> to vector<20x1152xbf16>
    %33 = tpu.concatenate %30, %31, %32 in 0 : vector<20x1152xbf16>, vector<20x1152xbf16>, vector<20x1152xbf16> -> vector<60x1152xbf16>
    %34 = vector.extract_strided_slice %18 {offsets = [0, 120], sizes = [1, 60], strides = [1, 1]} : vector<1x180xbf16> to vector<1x60xbf16>
    %cst_12 = arith.constant dense<0.000000e+00> : vector<1x1152xf32>
    %35 = tpu.matmul %34, %33, %cst_12 {dimension_numbers = #tpu.dot_dimension_numbers<[1], [0], [0], [1], [0, 0, 1, 1], [], []>} : vector<1x60xbf16>, vector<60x1152xbf16>, vector<1x1152xf32> -> vector<1x1152xf32>
    %36 = arith.addf %29, %35 : vector<1x1152xf32>
    %37 = arith.addf %15, %36 : vector<1x1152xf32>
    %c0_13 = arith.constant 0 : index
    %c0_14 = arith.constant 0 : index
    %38 = vector.load %arg5[%c0_13, %c0_14] : memref<1x1xf32, #tpu.memory_space<vmem>>, vector<1x1xf32>
    %39 = vector.broadcast %38 : vector<1x1xf32> to vector<1x1152xf32>
    %40 = arith.addf %37, %39 : vector<1x1152xf32>
    %cst_15 = arith.constant 0.000000e+00 : f32
    %41 = vector.broadcast %cst_15 : f32 to vector<1x1152xf32>
    %42 = arith.subf %41, %40 : vector<1x1152xf32>
    %43 = math.exp %42 : vector<1x1152xf32>
    %cst_16 = arith.constant 1.000000e+00 : f32
    %44 = vector.broadcast %cst_16 : f32 to vector<1x1152xf32>
    %45 = arith.addf %44, %43 : vector<1x1152xf32>
    %cst_17 = arith.constant 1.000000e+00 : f32
    %46 = vector.broadcast %cst_17 : f32 to vector<1x1152xf32>
    %47 = arith.divf %46, %45 : vector<1x1152xf32>
    %c0_18 = arith.constant 0 : index
    %c0_19 = arith.constant 0 : index
    %c0_20 = arith.constant 0 : index
    %48 = vector.load %arg6[%c0_18, %c0_19, %c0_20] : memref<1x1x1152xf32, #tpu.memory_space<vmem>>, vector<1x1x1152xf32>
    %49 = vector.shape_cast %48 : vector<1x1x1152xf32> to vector<1x1152xf32>
    %50 = vector.shape_cast %47 : vector<1x1152xf32> to vector<1x1x1152xf32>
    tpu.vector_store %arg6[%c0_18, %c0_19, %c0_20], %50 {strides = array<i32>} : memref<1x1x1152xf32, #tpu.memory_space<vmem>>, vector<1x1x1152xf32>,
    return
  }
  func.func @transform_0(%arg0: i32) -> (i32, i32, i32) {
    %c0_i32 = arith.constant 0 : i32
    %c0_i32_0 = arith.constant 0 : i32
    %c0_i32_1 = arith.constant 0 : i32
    return %arg0, %c0_i32, %c0_i32_0 : i32, i32, i32
  }
  func.func @transform_1(%arg0: i32) -> (i32, i32, i32) {
    %c0_i32 = arith.constant 0 : i32
    %c0_i32_0 = arith.constant 0 : i32
    %c0_i32_1 = arith.constant 0 : i32
    return %arg0, %c0_i32, %c0_i32_0 : i32, i32, i32
  }
  func.func @transform_2(%arg0: i32) -> (i32, i32) {
    %c0_i32 = arith.constant 0 : i32
    %c0_i32_0 = arith.constant 0 : i32
    %c0_i32_1 = arith.constant 0 : i32
    return %c0_i32, %c0_i32_0 : i32, i32
  }
  func.func @transform_3(%arg0: i32) -> (i32, i32) {
    %c0_i32 = arith.constant 0 : i32
    %c0_i32_0 = arith.constant 0 : i32
    %c0_i32_1 = arith.constant 0 : i32
    return %c0_i32, %c0_i32_0 : i32, i32
  }
  func.func @transform_4(%arg0: i32) -> (i32, i32) {
    %c0_i32 = arith.constant 0 : i32
    %c0_i32_0 = arith.constant 0 : i32
    %c0_i32_1 = arith.constant 0 : i32
    return %c0_i32, %c0_i32_0 : i32, i32
  }
  func.func @transform_5(%arg0: i32) -> (i32, i32, i32) {
    %c0_i32 = arith.constant 0 : i32
    %c0_i32_0 = arith.constant 0 : i32
    %c0_i32_1 = arith.constant 0 : i32
    return %arg0, %c0_i32, %c0_i32_0 : i32, i32, i32
  }
}

</mosaic_0001>

<llo_original>
// kernel: refine_net_forward.3
$region0: #{refine_net_forward.3}
  #allocation0 [shape = 'u32[]', space=smem, size = 0x4, offset = 0x4, fixed_abs, tag = 'smem constant byte address 0x4 - core index']
  #allocation1 [shape = 'u32[144,128]{1,0:T(1,128)}', space=vmem, size = 0x12000, scoped, tag = 'internal scratch']
  #allocation2 [shape = 'bf16[20,1280]{1,0:T(8,128)(2,1)}', space=vmem, size = 0xf000, scoped, tag = 'scratch operand']
  %s0 = inlined_call_operand.vmem [shape: bf16[2,4,1280], index: 0, kind: input, shape index: {}]
  %s1 = inlined_call_operand.vmem [shape: bf16[20,36], index: 1, kind: input, shape index: {}]
  %s2 = inlined_call_operand.vmem [shape: f32[20,1], index: 2, kind: input, shape index: {}]
  %s3 = inlined_call_operand.vmem [shape: bf16[20,180], index: 3, kind: input, shape index: {}]
  %s4 = inlined_call_operand.vmem [shape: f32[20,1], index: 4, kind: input, shape index: {}]
  %s5 = inlined_call_operand.vmem [shape: f32[1,1152], index: 5, kind: input, shape index: {}]
  %s6 = inlined_call_operand.vmem [shape: bf16[2,20,1280], index: 6, kind: output, shape index: {}]
  %s7 = sld [smem:[#allocation0]]
  $region57: #{refine_net_forward.3} parent=0
    _
  %s9 = ssub.s32 1, %s7
  %s10 = scalar_select 0, %s9, %s7
  loop: start=0, step=1, limit=4
  $region2: #{refine_net_forward.3} parent=0 // loop_pre_header
    _
  $region3: #{refine_net_forward.3} parent=0 // loop_header
    %s12 = sphi 0, %s16
    %p13 = scmp.ge.s32.totalorder %s12, 4
    %s22 = sphi 0, %s24
    %s25 = sphi 0, %s22
    %s26 = sphi 0, %s25
    %s42 = sphi 0, %s26
    %s46 = sphi 0, %s46
    %s48 = sphi 0, %s46
    %s49 = sphi 0, %s48
    %s63 = sphi 0, %s49
    %s67 = sphi 0, %s67
    %s69 = sphi 0, %s67
    %s70 = sphi 0, %s69
    %s84 = sphi 0, %s70
    %s88 = sphi 0, %s88
    %s90 = sphi 0, %s88
    %s91 = sphi 0, %s90
    %s105 = sphi 0, %s91
    %s109 = sphi 0, %s109
    %s111 = sphi 0, %s109
    %s112 = sphi 0, %s111
    %s126 = sphi 0, %s112
    %s130 = sphi 0, %s130
    %s132 = sphi 0, %s130
    %s133 = sphi 0, %s132
    %s147 = sphi 0, %s133
    %s153 = sphi 0, %s155
    %s156 = sphi 0, %s153
    %s157 = sphi 0, %s156
    %s173 = sphi 0, %s157
  $region4: #{refine_net_forward.3} parent=0 // loop_header_branch
    %15 = sbr.rel (%p13) target = $region8
  $region5: #{refine_net_forward.3} parent=0 // loop_body
    %s17 = ssub.s32 %s12, 1
    %s18 = ssub.s32 %s12, 2
    %s19 = sadd.s32 %s12, 1
    %s20 = ssub.s32 %s12, %s19
    %p21 = scmp.eq.s32.totalorder %s20, 0
    %s23 = sadd.s32 %s22, 1
    %s24 = scalar_select %p21, %s22, %s23
    %p27 = pneg %p21
    %p28 = scmp.eq.s32.totalorder %s12, 1
    %p29 = por %p27, %p28
    %p30 = scmp.ne.s32.totalorder %s22, %s25
    %p31 = scmp.eq.s32.totalorder %s12, 0
    %p32 = por %p30, %p31
    %p33 = scmp.ne.s32.totalorder %s22, %s25
    %p34 = scmp.eq.s32.totalorder %s17, 1
    %p35 = por %p33, %p34
    %p36 = scmp.ne.s32.totalorder %s25, %s26
    %p37 = scmp.eq.s32.totalorder %s17, 0
    %p38 = por %p36, %p37
    %p39 = scmp.ne.s32.totalorder %s25, %s26
    %p40 = scmp.eq.s32.totalorder %s18, 1
    %p41 = por %p39, %p40
    %p43 = scmp.ne.s32.totalorder %s26, %s42
    %p44 = scmp.eq.s32.totalorder %s18, 0
    %p45 = por %p43, %p44
    %s47 = sadd.s32 %s46, 1
    %p50 = scmp.eq.s32.totalorder %s12, 1
    %p51 = scmp.ne.s32.totalorder %s46, %s48
    %p52 = scmp.eq.s32.totalorder %s12, 0
    %p53 = por %p51, %p52
    %p54 = scmp.ne.s32.totalorder %s46, %s48
    %p55 = scmp.eq.s32.totalorder %s17, 1
    %p56 = por %p54, %p55
    %p57 = scmp.ne.s32.totalorder %s48, %s49
    %p58 = scmp.eq.s32.totalorder %s17, 0
    %p59 = por %p57, %p58
    %p60 = scmp.ne.s32.totalorder %s48, %s49
    %p61 = scmp.eq.s32.totalorder %s18, 1
    %p62 = por %p60, %p61
    %p64 = scmp.ne.s32.totalorder %s49, %s63
    %p65 = scmp.eq.s32.totalorder %s18, 0
    %p66 = por %p64, %p65
    %s68 = sadd.s32 %s67, 1
    %p71 = scmp.eq.s32.totalorder %s12, 1
    %p72 = scmp.ne.s32.totalorder %s67, %s69
    %p73 = scmp.eq.s32.totalorder %s12, 0
    %p74 = por %p72, %p73
    %p75 = scmp.ne.s32.totalorder %s67, %s69
    %p76 = scmp.eq.s32.totalorder %s17, 1
    %p77 = por %p75, %p76
    %p78 = scmp.ne.s32.totalorder %s69, %s70
    %p79 = scmp.eq.s32.totalorder %s17, 0
    %p80 = por %p78, %p79
    %p81 = scmp.ne.s32.totalorder %s69, %s70
    %p82 = scmp.eq.s32.totalorder %s18, 1
    %p83 = por %p81, %p82
    %p85 = scmp.ne.s32.totalorder %s70, %s84
    %p86 = scmp.eq.s32.totalorder %s18, 0
    %p87 = por %p85, %p86
    %s89 = sadd.s32 %s88, 1
    %p92 = scmp.eq.s32.totalorder %s12, 1
    %p93 = scmp.ne.s32.totalorder %s88, %s90
    %p94 = scmp.eq.s32.totalorder %s12, 0
    %p95 = por %p93, %p94
    %p96 = scmp.ne.s32.totalorder %s88, %s90
    %p97 = scmp.eq.s32.totalorder %s17, 1
    %p98 = por %p96, %p97
    %p99 = scmp.ne.s32.totalorder %s90, %s91
    %p100 = scmp.eq.s32.totalorder %s17, 0
    %p101 = por %p99, %p100
    %p102 = scmp.ne.s32.totalorder %s90, %s91
    %p103 = scmp.eq.s32.totalorder %s18, 1
    %p104 = por %p102, %p103
    %p106 = scmp.ne.s32.totalorder %s91, %s105
    %p107 = scmp.eq.s32.totalorder %s18, 0
    %p108 = por %p106, %p107
    %s110 = sadd.s32 %s109, 1
    %p113 = scmp.eq.s32.totalorder %s12, 1
    %p114 = scmp.ne.s32.totalorder %s109, %s111
    %p115 = scmp.eq.s32.totalorder %s12, 0
    %p116 = por %p114, %p115
    %p117 = scmp.ne.s32.totalorder %s109, %s111
    %p118 = scmp.eq.s32.totalorder %s17, 1
    %p119 = por %p117, %p118
    %p120 = scmp.ne.s32.totalorder %s111, %s112
    %p121 = scmp.eq.s32.totalorder %s17, 0
    %p122 = por %p120, %p121
    %p123 = scmp.ne.s32.totalorder %s111, %s112
    %p124 = scmp.eq.s32.totalorder %s18, 1
    %p125 = por %p123, %p124
    %p127 = scmp.ne.s32.totalorder %s112, %s126
    %p128 = scmp.eq.s32.totalorder %s18, 0
    %p129 = por %p127, %p128
    %s131 = sadd.s32 %s130, 1
    %p134 = scmp.eq.s32.totalorder %s12, 1
    %p135 = scmp.ne.s32.totalorder %s130, %s132
    %p136 = scmp.eq.s32.totalorder %s12, 0
    %p137 = por %p135, %p136
    %p138 = scmp.ne.s32.totalorder %s130, %s132
    %p139 = scmp.eq.s32.totalorder %s17, 1
    %p140 = por %p138, %p139
    %p141 = scmp.ne.s32.totalorder %s132, %s133
    %p142 = scmp.eq.s32.totalorder %s17, 0
    %p143 = por %p141, %p142
    %p144 = scmp.ne.s32.totalorder %s132, %s133
    %p145 = scmp.eq.s32.totalorder %s18, 1
    %p146 = por %p144, %p145
    %p148 = scmp.ne.s32.totalorder %s133, %s147
    %p149 = scmp.eq.s32.totalorder %s18, 0
    %p150 = por %p148, %p149
    %s151 = ssub.s32 %s12, %s19
    %p152 = scmp.eq.s32.totalorder %s151, 0
    %s154 = sadd.s32 %s153, 1
    %s155 = scalar_select %p152, %s153, %s154
    %p158 = pneg %p152
    %p159 = scmp.eq.s32.totalorder %s12, 1
    %p160 = por %p158, %p159
    %p161 = scmp.ne.s32.totalorder %s153, %s156
    %p162 = scmp.eq.s32.totalorder %s12, 0
    %p163 = por %p161, %p162
    %p164 = scmp.ne.s32.totalorder %s153, %s156
    %p165 = scmp.eq.s32.totalorder %s17, 1
    %p166 = por %p164, %p165
    %p167 = scmp.ne.s32.totalorder %s156, %s157
    %p168 = scmp.eq.s32.totalorder %s17, 0
    %p169 = por %p167, %p168
    %p170 = scmp.ne.s32.totalorder %s156, %s157
    %p171 = scmp.eq.s32.totalorder %s18, 1
    %p172 = por %p170, %p171
    %p174 = scmp.ne.s32.totalorder %s157, %s173
    %p175 = scmp.eq.s32.totalorder %s18, 0
    %p176 = por %p174, %p175
    %p177 = scmp.le.s32.totalorder 1, %s12
    %p178 = scmp.lt.s32.totalorder %s12, 3
    %p179 = pnand %p177, %p178
    %p180 = pneg %p179
    // Predicated region
    $region9: #{refine_net_forward.3} parent=5 // pred_check
      _
    $region10: #{refine_net_forward.3} parent=5 // pred_check_branch
      %182 = sbr.rel (%p179) target = $region12
    $region11: #{refine_net_forward.3} parent=5 // pred_region
      %s183 = ssub.s32 %s12, 1
      // Predicated region
      $region13: #{refine_net_forward.3} parent=11 // pred_check
        %p184 = pneg %p59
      $region14: #{refine_net_forward.3} parent=11 // pred_check_branch
        %186 = sbr.rel (%p184) target = $region16
      $region15: #{refine_net_forward.3} parent=11 // pred_region
        _
      $region16: #{refine_net_forward.3} parent=11 // pred_fallthru
        _
      // Predicated region
      $region17: #{refine_net_forward.3} parent=11 // pred_check
        %p187 = pneg %p80
      $region18: #{refine_net_forward.3} parent=11 // pred_check_branch
        %189 = sbr.rel (%p187) target = $region20
      $region19: #{refine_net_forward.3} parent=11 // pred_region
        _
      $region20: #{refine_net_forward.3} parent=11 // pred_fallthru
        _
      // Predicated region
      $region21: #{refine_net_forward.3} parent=11 // pred_check
        %p190 = pneg %p101
      $region22: #{refine_net_forward.3} parent=11 // pred_check_branch
        %192 = sbr.rel (%p190) target = $region24
      $region23: #{refine_net_forward.3} parent=11 // pred_region
        _
      $region24: #{refine_net_forward.3} parent=11 // pred_fallthru
        _
      // Predicated region
      $region25: #{refine_net_forward.3} parent=11 // pred_check
        %p193 = pneg %p122
      $region26: #{refine_net_forward.3} parent=11 // pred_check_branch
        %195 = sbr.rel (%p193) target = $region28
      $region27: #{refine_net_forward.3} parent=11 // pred_region
        _
      $region28: #{refine_net_forward.3} parent=11 // pred_fallthru
        _
      // Predicated region
      $region29: #{refine_net_forward.3} parent=11 // pred_check
        %p196 = pneg %p143
      $region30: #{refine_net_forward.3} parent=11 // pred_check_branch
        %198 = sbr.rel (%p196) target = $region32
      $region31: #{refine_net_forward.3} parent=11 // pred_region
        _
      $region32: #{refine_net_forward.3} parent=11 // pred_fallthru
        _
    $region12: #{refine_net_forward.3} parent=5 // pred_fallthru
      _
    %p199 = scmp.lt.s32.totalorder %s12, 2
    // Predicated region
    $region33: #{refine_net_forward.3} parent=5 // pred_check
      %p200 = pneg %p199
    $region34: #{refine_net_forward.3} parent=5 // pred_check_branch
      %202 = sbr.rel (%p200) target = $region36
    $region35: #{refine_net_forward.3} parent=5 // pred_region
      // Predicated region
      $region37: #{refine_net_forward.3} parent=35 // pred_check
        %p203 = pneg %p32
      $region38: #{refine_net_forward.3} parent=35 // pred_check_branch
        %205 = sbr.rel (%p203) target = $region40
      $region39: #{refine_net_forward.3} parent=35 // pred_region
        %p206 = scmp.lt.s32.totalorder %s12, 1
        %s207 = scalar_select %p206, %s12, 1
        %s208 = smul.addr %s207, 10
        %s209 = smul.addr %s208, 2
        %s210 = scalar_lea.vmem %s0, %s209
      $region40: #{refine_net_forward.3} parent=35 // pred_fallthru
        _
    $region36: #{refine_net_forward.3} parent=5 // pred_fallthru
      _
    %p211 = scmp.le.s32.totalorder 1, %s12
    %p212 = scmp.lt.s32.totalorder %s12, 3
    %p213 = pnand %p211, %p212
    %p214 = pneg %p213
    // Predicated region
    $region41: #{refine_net_forward.3} parent=5 // pred_check
      _
    $region42: #{refine_net_forward.3} parent=5 // pred_check_branch
      %216 = sbr.rel (%p213) target = $region44
    $region43: #{refine_net_forward.3} parent=5 // pred_region
      %s217 = ssub.s32 %s12, 1
      %p218 = scmp.lt.s32.totalorder %s17, 1
      %s219 = scalar_select %p218, %s17, 1
      %s220 = smul.addr %s219, 10
      %s221 = smul.addr %s220, 2
      %s222 = scalar_lea.vmem %s0, %s221
      %p223 = pneg %p38
      %p224 = pneg %p35
      %p225 = pneg %p59
      %p226 = pneg %p56
      %p227 = pneg %p80
      %p228 = pneg %p77
      %p229 = pneg %p101
      %p230 = pneg %p98
      %p231 = pneg %p122
      %p232 = pneg %p119
      %p233 = pneg %p143
      %p234 = pneg %p140
      %p235 = pneg %p169
      %p236 = pneg %p166
      %p237 = scmp.lt.s32.totalorder %s17, 1
      %s238 = scalar_select %p237, %s17, 1
      %s239 = smul.addr %s238, 30
      %s240 = smul.addr %s239, 4
      %s241 = scalar_lea.vmem %s6, %s240
      %p242 = scmp.lt.s32.totalorder %s17, 1
      %s243 = scalar_select %p242, %s17, 1
      %s244 = smul.addr %s243, 10
      %s245 = smul.addr %s244, 2
      %s246 = scalar_lea.vmem %s0, %s245
      %p247 = scmp.lt.s32.totalorder %s17, 1
      %s248 = scalar_select %p247, %s17, 1
      %s249 = smul.addr %s248, 30
      %s250 = smul.addr %s249, 4
      %s251 = scalar_lea.vmem %s6, %s250
      %v253 = vld [vmem:[%s5] sm:$0xff]
      %v254 = vld [vmem:[%s5 + $0x8] sm:$0x1]
      %v255 = vld [vmem:[%s246] sm:$0xff]
      %v256 = vld [vmem:[%s246 + $0x8] sm:$0xff]
      %v257 = vld [vmem:[%s246 + $0x10] sm:$0xf]
      %v258 = vld [vmem:[%s1] sm:$0xf]
      %v259 = vld [vmem:[%s1 + $0x4] sm:$0xf]
      %v260 = vld [vmem:[%s1 + $0x8] sm:$0x3]
      %v261 = vld [vmem:[%s2] sm:$0xff]
      %v262 = vld [vmem:[%s2 + $0x8] sm:$0xff]
      %v263 = vld [vmem:[%s2 + $0x10] sm:$0xf]
      %v267 = vcombine.high %v255, %v255
      %v269 = vunpack.c.l.s4 1983009808
      %v270 = vunpack.c.0.s8 %v269
      %v271 = vlaneseq
      %v272 = vshrl.u32 %v271, 7
      %v273 = vsub.s32 %v270, %v272
      %v274 = vrot.slane %v255, %v273
      %v276 = vunpack.c.l.s4 1983009808
      %v277 = vunpack.c.0.s8 %v276
      %v278 = vlaneseq
      %v279 = vshrl.u32 %v278, 7
      %v280 = vsub.s32 %v277, %v279
      %v281 = vrot.slane %v267, %v280
      %v282 = vcombine.high %v274, %v274
      %v283 = vcombine.high %v281, %v281
      %v284 = vcombine.high %v256, %v256
      %v286 = vunpack.c.l.s4 1983009808
      %v287 = vunpack.c.0.s8 %v286
      %v288 = vlaneseq
      %v289 = vshrl.u32 %v288, 7
      %v290 = vsub.s32 %v287, %v289
      %v291 = vrot.slane %v256, %v290
      %v293 = vunpack.c.l.s4 1983009808
      %v294 = vunpack.c.0.s8 %v293
      %v295 = vlaneseq
      %v296 = vshrl.u32 %v295, 7
      %v297 = vsub.s32 %v294, %v296
      %v298 = vrot.slane %v284, %v297
      %v299 = vcombine.high %v291, %v291
      %v300 = vcombine.high %v298, %v298
      %v302 = vunpack.c.l.s4 1983009808
      %v303 = vunpack.c.0.s8 %v302
      %v304 = vlaneseq
      %v305 = vshrl.u32 %v304, 7
      %v306 = vsub.s32 %v303, %v305
      %v307 = vrot.slane %v257, %v306
      %v308 = vcombine.low %v255, %v255
      %v310 = vunpack.c.l.s4 1983009808
      %v311 = vunpack.c.0.s8 %v310
      %v312 = vlaneseq
      %v313 = vshrl.u32 %v312, 7
      %v314 = vsub.s32 %v311, %v313
      %v315 = vrot.slane %v308, %v314
      %v316 = vcombine.high %v315, %v315
      %v317 = vcombine.low %v256, %v256
      %v319 = vunpack.c.l.s4 1983009808
      %v320 = vunpack.c.0.s8 %v319
      %v321 = vlaneseq
      %v322 = vshrl.u32 %v321, 7
      %v323 = vsub.s32 %v320, %v322
      %v324 = vrot.slane %v317, %v323
      %v325 = vcombine.high %v324, %v324
      %v326 = vcombine.low %v257, %v257
      %v328 = vunpack.c.l.s4 1983009808
      %v329 = vunpack.c.0.s8 %v328
      %v330 = vlaneseq
      %v331 = vshrl.u32 %v330, 7
      %v332 = vsub.s32 %v329, %v331
      %v333 = vrot.slane %v326, %v332
      %v334 = vcombine.high %v333, %v333
      %335 = vrot.lane.b32.xlu0 %v315, 127
      %v336 = vpop.permute.xlu0 %335
      %337 = vrot.lane.b32.xlu0 %v316, 127
      %v338 = vpop.permute.xlu0 %337
      %339 = vrot.lane.b32.xlu0 %v274, 127
      %v340 = vpop.permute.xlu0 %339
      %341 = vrot.lane.b32.xlu0 %v282, 127
      %v342 = vpop.permute.xlu0 %341
      %343 = vrot.lane.b32.xlu0 %v324, 127
      %v344 = vpop.permute.xlu0 %343
      %345 = vrot.lane.b32.xlu0 %v325, 127
      %v346 = vpop.permute.xlu0 %345
      %347 = vrot.lane.b32.xlu0 %v291, 127
      %v348 = vpop.permute.xlu0 %347
      %349 = vrot.lane.b32.xlu0 %v299, 127
      %v350 = vpop.permute.xlu0 %349
      %351 = vrot.lane.b32.xlu0 %v333, 127
      %v352 = vpop.permute.xlu0 %351
      %353 = vrot.lane.b32.xlu0 %v334, 127
      %v354 = vpop.permute.xlu0 %353
      %vm355 = vcmask 1039360
      %v356 = vsel %vm355, %v336, %v338
      %v357 = vsel %vm355, %v338, %v340
      %v358 = vsel %vm355, %v340, %v342
      %v359 = vsel %vm355, %v342, %v344
      %v360 = vsel %vm355, %v344, %v346
      %v361 = vsel %vm355, %v346, %v348
      %v362 = vsel %vm355, %v348, %v350
      %v363 = vsel %vm355, %v350, %v352
      %v364 = vsel %vm355, %v352, %v354
      %v365 = vcombine.low %v274, %v274
      %v366 = vcombine.low %v281, %v281
      %v367 = vcombine.low %v291, %v291
      %v368 = vcombine.low %v298, %v298
      %v369 = vcombine.low %v307, %v307
      %370 = vrot.lane.b32.xlu0 %v365, 126
      %v371 = vpop.permute.xlu0 %370
      %372 = vrot.lane.b32.xlu0 %v274, 126
      %v373 = vpop.permute.xlu0 %372
      %374 = vrot.lane.b32.xlu0 %v366, 126
      %v375 = vpop.permute.xlu0 %374
      %376 = vrot.lane.b32.xlu0 %v281, 126
      %v377 = vpop.permute.xlu0 %376
      %378 = vrot.lane.b32.xlu0 %v367, 126
      %v379 = vpop.permute.xlu0 %378
      %380 = vrot.lane.b32.xlu0 %v291, 126
      %v381 = vpop.permute.xlu0 %380
      %382 = vrot.lane.b32.xlu0 %v368, 126
      %v383 = vpop.permute.xlu0 %382
      %384 = vrot.lane.b32.xlu0 %v298, 126
      %v385 = vpop.permute.xlu0 %384
      %386 = vrot.lane.b32.xlu0 %v369, 126
      %v387 = vpop.permute.xlu0 %386
      %388 = vrot.lane.b32.xlu0 %v307, 126
      %v389 = vpop.permute.xlu0 %388
      %vm390 = vcmask 1031168
      %v391 = vsel %vm390, %v371, %v373
      %v392 = vsel %vm390, %v373, %v375
      %v393 = vsel %vm390, %v375, %v377
      %v394 = vsel %vm390, %v377, %v379
      %v395 = vsel %vm390, %v379, %v381
      %v396 = vsel %vm390, %v381, %v383
      %v397 = vsel %vm390, %v383, %v385
      %v398 = vsel %vm390, %v385, %v387
      %v399 = vsel %vm390, %v387, %v389
      %v400 = vcombine.low %v315, %v315
      %v401 = vcombine.low %v324, %v324
      %v402 = vcombine.low %v333, %v333
      %403 = vrot.lane.b32.xlu0 %v400, 94
      %v404 = vpop.permute.xlu0 %403
      %405 = vrot.lane.b32.xlu0 %v315, 94
      %v406 = vpop.permute.xlu0 %405
      %407 = vrot.lane.b32.xlu0 %v365, 94
      %v408 = vpop.permute.xlu0 %407
      %409 = vrot.lane.b32.xlu0 %v274, 94
      %v410 = vpop.permute.xlu0 %409
      %411 = vrot.lane.b32.xlu0 %v401, 94
      %v412 = vpop.permute.xlu0 %411
      %413 = vrot.lane.b32.xlu0 %v324, 94
      %v414 = vpop.permute.xlu0 %413
      %415 = vrot.lane.b32.xlu0 %v367, 94
      %v416 = vpop.permute.xlu0 %415
      %417 = vrot.lane.b32.xlu0 %v291, 94
      %v418 = vpop.permute.xlu0 %417
      %419 = vrot.lane.b32.xlu0 %v402, 94
      %v420 = vpop.permute.xlu0 %419
      %421 = vrot.lane.b32.xlu0 %v333, 94
      %v422 = vpop.permute.xlu0 %421
      %vm423 = vcmask 769024
      %v424 = vsel %vm423, %v404, %v406
      %v425 = vsel %vm423, %v406, %v408
      %v426 = vsel %vm423, %v408, %v410
      %v427 = vsel %vm423, %v410, %v412
      %v428 = vsel %vm423, %v412, %v414
      %v429 = vsel %vm423, %v414, %v416
      %v430 = vsel %vm423, %v416, %v418
      %v431 = vsel %vm423, %v418, %v420
      %v432 = vsel %vm423, %v420, %v422
      %v433 = vcombine.high %v307, %v307
      %434 = vrot.lane.b32.xlu0 %v274, 93
      %v435 = vpop.permute.xlu0 %434
      %436 = vrot.lane.b32.xlu0 %v282, 93
      %v437 = vpop.permute.xlu0 %436
      %438 = vrot.lane.b32.xlu0 %v281, 93
      %v439 = vpop.permute.xlu0 %438
      %440 = vrot.lane.b32.xlu0 %v283, 93
      %v441 = vpop.permute.xlu0 %440
      %442 = vrot.lane.b32.xlu0 %v291, 93
      %v443 = vpop.permute.xlu0 %442
      %444 = vrot.lane.b32.xlu0 %v299, 93
      %v445 = vpop.permute.xlu0 %444
      %446 = vrot.lane.b32.xlu0 %v298, 93
      %v447 = vpop.permute.xlu0 %446
      %448 = vrot.lane.b32.xlu0 %v300, 93
      %v449 = vpop.permute.xlu0 %448
      %450 = vrot.lane.b32.xlu0 %v307, 93
      %v451 = vpop.permute.xlu0 %450
      %452 = vrot.lane.b32.xlu0 %v433, 93
      %v453 = vpop.permute.xlu0 %452
      %vm454 = vcmask 760832
      %v455 = vsel %vm454, %v435, %v437
      %v456 = vsel %vm454, %v437, %v439
      %v457 = vsel %vm454, %v439, %v441
      %v458 = vsel %vm454, %v441, %v443
      %v459 = vsel %vm454, %v443, %v445
      %v460 = vsel %vm454, %v445, %v447
      %v461 = vsel %vm454, %v447, %v449
      %v462 = vsel %vm454, %v449, %v451
      %v463 = vsel %vm454, %v451, %v453
      %464 = vrot.lane.b32.xlu0 %v315, 92
      %v465 = vpop.permute.xlu0 %464
      %466 = vrot.lane.b32.xlu0 %v316, 92
      %v467 = vpop.permute.xlu0 %466
      %468 = vrot.lane.b32.xlu0 %v274, 92
      %v469 = vpop.permute.xlu0 %468
      %470 = vrot.lane.b32.xlu0 %v282, 92
      %v471 = vpop.permute.xlu0 %470
      %472 = vrot.lane.b32.xlu0 %v324, 92
      %v473 = vpop.permute.xlu0 %472
      %474 = vrot.lane.b32.xlu0 %v325, 92
      %v475 = vpop.permute.xlu0 %474
      %476 = vrot.lane.b32.xlu0 %v291, 92
      %v477 = vpop.permute.xlu0 %476
      %478 = vrot.lane.b32.xlu0 %v299, 92
      %v479 = vpop.permute.xlu0 %478
      %480 = vrot.lane.b32.xlu0 %v333, 92
      %v481 = vpop.permute.xlu0 %480
      %482 = vrot.lane.b32.xlu0 %v334, 92
      %v483 = vpop.permute.xlu0 %482
      %vm484 = vcmask 752640
      %v485 = vsel %vm484, %v465, %v467
      %v486 = vsel %vm484, %v467, %v469
      %v487 = vsel %vm484, %v469, %v471
      %v488 = vsel %vm484, %v471, %v473
      %v489 = vsel %vm484, %v473, %v475
      %v490 = vsel %vm484, %v475, %v477
      %v491 = vsel %vm484, %v477, %v479
      %v492 = vsel %vm484, %v479, %v481
      %v493 = vsel %vm484, %v481, %v483
      %494 = vrot.lane.b32.xlu0 %v365, 60
      %v495 = vpop.permute.xlu0 %494
      %496 = vrot.lane.b32.xlu0 %v274, 60
      %v497 = vpop.permute.xlu0 %496
      %498 = vrot.lane.b32.xlu0 %v366, 60
      %v499 = vpop.permute.xlu0 %498
      %500 = vrot.lane.b32.xlu0 %v281, 60
      %v501 = vpop.permute.xlu0 %500
      %502 = vrot.lane.b32.xlu0 %v367, 60
      %v503 = vpop.permute.xlu0 %502
      %504 = vrot.lane.b32.xlu0 %v291, 60
      %v505 = vpop.permute.xlu0 %504
      %506 = vrot.lane.b32.xlu0 %v368, 60
      %v507 = vpop.permute.xlu0 %506
      %508 = vrot.lane.b32.xlu0 %v298, 60
      %v509 = vpop.permute.xlu0 %508
      %510 = vrot.lane.b32.xlu0 %v369, 60
      %v511 = vpop.permute.xlu0 %510
      %512 = vrot.lane.b32.xlu0 %v307, 60
      %v513 = vpop.permute.xlu0 %512
      %vm514 = vcmask 490496
      %v515 = vsel %vm514, %v495, %v497
      %v516 = vsel %vm514, %v497, %v499
      %v517 = vsel %vm514, %v499, %v501
      %v518 = vsel %vm514, %v501, %v503
      %v519 = vsel %vm514, %v503, %v505
      %v520 = vsel %vm514, %v505, %v507
      %v521 = vsel %vm514, %v507, %v509
      %v522 = vsel %vm514, %v509, %v511
      %v523 = vsel %vm514, %v511, %v513
      %524 = vrot.lane.b32.xlu0 %v400, 59
      %v525 = vpop.permute.xlu0 %524
      %526 = vrot.lane.b32.xlu0 %v315, 59
      %v527 = vpop.permute.xlu0 %526
      %528 = vrot.lane.b32.xlu0 %v365, 59
      %v529 = vpop.permute.xlu0 %528
      %530 = vrot.lane.b32.xlu0 %v274, 59
      %v531 = vpop.permute.xlu0 %530
      %532 = vrot.lane.b32.xlu0 %v401, 59
      %v533 = vpop.permute.xlu0 %532
      %534 = vrot.lane.b32.xlu0 %v324, 59
      %v535 = vpop.permute.xlu0 %534
      %536 = vrot.lane.b32.xlu0 %v367, 59
      %v537 = vpop.permute.xlu0 %536
      %538 = vrot.lane.b32.xlu0 %v291, 59
      %v539 = vpop.permute.xlu0 %538
      %540 = vrot.lane.b32.xlu0 %v402, 59
      %v541 = vpop.permute.xlu0 %540
      %542 = vrot.lane.b32.xlu0 %v333, 59
      %v543 = vpop.permute.xlu0 %542
      %vm544 = vcmask 482304
      %v545 = vsel %vm544, %v525, %v527
      %v546 = vsel %vm544, %v527, %v529
      %v547 = vsel %vm544, %v529, %v531
      %v548 = vsel %vm544, %v531, %v533
      %v549 = vsel %vm544, %v533, %v535
      %v550 = vsel %vm544, %v535, %v537
      %v551 = vsel %vm544, %v537, %v539
      %v552 = vsel %vm544, %v539, %v541
      %v553 = vsel %vm544, %v541, %v543
      %554 = vrot.lane.b32.xlu0 %v274, 58
      %v555 = vpop.permute.xlu0 %554
      %556 = vrot.lane.b32.xlu0 %v282, 58
      %v557 = vpop.permute.xlu0 %556
      %558 = vrot.lane.b32.xlu0 %v281, 58
      %v559 = vpop.permute.xlu0 %558
      %560 = vrot.lane.b32.xlu0 %v283, 58
      %v561 = vpop.permute.xlu0 %560
      %562 = vrot.lane.b32.xlu0 %v291, 58
      %v563 = vpop.permute.xlu0 %562
      %564 = vrot.lane.b32.xlu0 %v299, 58
      %v565 = vpop.permute.xlu0 %564
      %566 = vrot.lane.b32.xlu0 %v298, 58
      %v567 = vpop.permute.xlu0 %566
      %568 = vrot.lane.b32.xlu0 %v300, 58
      %v569 = vpop.permute.xlu0 %568
      %570 = vrot.lane.b32.xlu0 %v307, 58
      %v571 = vpop.permute.xlu0 %570
      %572 = vrot.lane.b32.xlu0 %v433, 58
      %v573 = vpop.permute.xlu0 %572
      %vm574 = vcmask 474112
      %v575 = vsel %vm574, %v555, %v557
      %v576 = vsel %vm574, %v557, %v559
      %v577 = vsel %vm574, %v559, %v561
      %v578 = vsel %vm574, %v561, %v563
      %v579 = vsel %vm574, %v563, %v565
      %v580 = vsel %vm574, %v565, %v567
      %v581 = vsel %vm574, %v567, %v569
      %v582 = vsel %vm574, %v569, %v571
      %v583 = vsel %vm574, %v571, %v573
      %vm584 = vcmask 1041408
      %v587 = vsel %vm584, %v274, %v356
      %v590 = vsel %vm584, %v282, %v357
      %v593 = vsel %vm584, %v281, %v358
      %v596 = vsel %vm584, %v283, %v359
      %v599 = vsel %vm584, %v291, %v360
      %v602 = vsel %vm584, %v299, %v361
      %v605 = vsel %vm584, %v298, %v362
      %v608 = vsel %vm584, %v300, %v363
      %v611 = vsel %vm584, %v307, %v364
      %vm612 = vcmask 1043456
      %v614 = vsel %vm612, %v587, %v391
      %v616 = vsel %vm612, %v590, %v392
      %v618 = vsel %vm612, %v593, %v393
      %v620 = vsel %vm612, %v596, %v394
      %v622 = vsel %vm612, %v599, %v395
      %v624 = vsel %vm612, %v602, %v396
      %v626 = vsel %vm612, %v605, %v397
      %v628 = vsel %vm612, %v608, %v398
      %v630 = vsel %vm612, %v611, %v399
      %vm631 = vcmask 1045504
      %v633 = vsel %vm631, %v614, %v424
      %v636 = vsel %vm631, %v616, %v425
      %v639 = vsel %vm631, %v618, %v426
      %v642 = vsel %vm631, %v620, %v427
      %v645 = vsel %vm631, %v622, %v428
      %v648 = vsel %vm631, %v624, %v429
      %v651 = vsel %vm631, %v626, %v430
      %v654 = vsel %vm631, %v628, %v431
      %v657 = vsel %vm631, %v630, %v432
      %v661 = vsel %vm584, %v455, %v485
      %v664 = vsel %vm584, %v456, %v486
      %v667 = vsel %vm584, %v457, %v487
      %v670 = vsel %vm584, %v458, %v488
      %v673 = vsel %vm584, %v459, %v489
      %v676 = vsel %vm584, %v460, %v490
      %v679 = vsel %vm584, %v461, %v491
      %v682 = vsel %vm584, %v462, %v492
      %v685 = vsel %vm584, %v463, %v493
      %v687 = vsel %vm612, %v661, %v515
      %v689 = vsel %vm612, %v664, %v516
      %v691 = vsel %vm612, %v667, %v517
      %v693 = vsel %vm612, %v670, %v518
      %v695 = vsel %vm612, %v673, %v519
      %v697 = vsel %vm612, %v676, %v520
      %v699 = vsel %vm612, %v679, %v521
      %v701 = vsel %vm612, %v682, %v522
      %v703 = vsel %vm612, %v685, %v523
      %v705 = vsel %vm631, %v687, %v545
      %v708 = vsel %vm631, %v689, %v546
      %v711 = vsel %vm631, %v691, %v547
      %v714 = vsel %vm631, %v693, %v548
      %v717 = vsel %vm631, %v695, %v549
      %v720 = vsel %vm631, %v697, %v550
      %v723 = vsel %vm631, %v699, %v551
      %v726 = vsel %vm631, %v701, %v552
      %v729 = vsel %vm631, %v703, %v553
      %732 = vset.pattern.permute.xlu0 0
      %733 = vperm.xlu0 %732, %v261
      %v734 = vpop.permute.xlu0 %733
      %737 = vset.pattern.permute.xlu0 0
      %738 = vperm.xlu0 %737, %v262
      %v739 = vpop.permute.xlu0 %738
      %742 = vset.pattern.permute.xlu0 0
      %743 = vperm.xlu0 %742, %v263
      %v744 = vpop.permute.xlu0 %743
      %v749 = vunpack.c.l.b16 %v258
      %v750 = vunpack.c.l.b16 %v259
      %v751 = vunpack.c.l.b16 %v260
      %v752 = vpack.c.b16 %v750, %v749
      %v753 = vpack.c.b16 %v751, %v751
      %vm754 = vcmask 293888
      %v756 = vsel %vm754, %v752, 0
      %v759 = vsel %vm754, %v753, 0
      %v762 = vsel %vm584, %v575, 0
      %v765 = vsel %vm584, %v576, 0
      %v768 = vsel %vm584, %v577, 0
      %v771 = vsel %vm584, %v578, 0
      %v774 = vsel %vm584, %v579, 0
      %v777 = vsel %vm584, %v580, 0
      %v780 = vsel %vm584, %v581, 0
      %v783 = vsel %vm584, %v582, 0
      %v786 = vsel %vm584, %v583, 0
      %788 = vmatprep.subr.bf16.mxu0 %v636
      %789 = vmatpush1.bf16.msra.mxu0 %v633
      %790 = vmatprep.subr.bf16.mxu0 %v708
      %791 = vmatpush1.bf16.msra.mxu0 %v705
      %792 = vmatprep.subr.bf16.mxu0 %v765
      %793 = vmatpush1.bf16.msra.mxu0 %v762
      %794 = vmatprep.subr.bf16.mxu0 0
      %795 = vmatpush1.bf16.msra.mxu0 0
      %796 = vmatprep.subr.bf16.mxu0 0
      %797 = vmatpush1.bf16.msra.mxu0 0
      %798 = vmatprep.subr.bf16.mxu0 0
      %799 = vmatpush1.bf16.msra.mxu0 0
      %800 = vmatprep.subr.bf16.mxu0 0
      %801 = vmatpush1.bf16.msra.mxu0 0
      %802 = vmatprep.subr.bf16.mxu0 0
      %803 = vmatpush1.bf16.msra.mxu0 0
      %804 = vmatprep.subr.bf16.mxu0 0
      %805 = vmatpush1.bf16.msra.mxu0 0
      %806 = vmatprep.subr.bf16.mxu0 0
      %807 = vmatpush1.bf16.msra.mxu0 0
      %808 = vmatprep.subr.bf16.mxu0 0
      %809 = vmatpush1.bf16.msra.mxu0 0
      %810 = vmatprep.subr.bf16.mxu0 0
      %811 = vmatpush1.bf16.msra.mxu0 0
      %812 = vmatprep.subr.bf16.mxu0 0
      %813 = vmatpush1.bf16.msra.mxu0 0
      %814 = vmatprep.subr.bf16.mxu0 0
      %815 = vmatpush1.bf16.msra.mxu0 0
      %816 = vmatprep.subr.bf16.mxu0 0
      %817 = vmatpush1.bf16.msra.mxu0 0
      %818 = vmatprep.subr.bf16.mxu0 0
      %819 = vmatpush1.bf16.msra.mxu0 0
      %820 = vmatprep.mubr.bf16.mxu0 0
      %821 = vmatmul.mubr.bf16.gmra.mrb[0].mxu0 %v756
      %v822 = vpop.f32.mrb[0].mxu0
      %v823 = vadd.f32 %v734, %v822
      %v824 = vpop.f32.mrb[0].mxu0
      %v825 = vadd.f32 %v734, %v824
      %v826 = vpop.f32.mrb[0].mxu0
      %v827 = vadd.f32 %v739, %v826
      %v828 = vpop.f32.mrb[0].mxu0
      %v829 = vadd.f32 %v739, %v828
      %830 = vmatprep.mubr.bf16.mxu0 0
      %831 = vmatmul.mubr.bf16.gmra.mrb[0].mxu0 %v759
      %v832 = vpop.f32.mrb[0].mxu0
      %v833 = vadd.f32 %v744, %v832
      %v834 = vpop.f32.mrb[0].mxu0
      %v835 = vadd.f32 %v744, %v834
      %v836 = vpop.f32.mrb[0].mxu0
      %v837 = vpop.f32.mrb[0].mxu0
      %838 = vdwg.mxu0
      %839 = vmatprep.subr.bf16.mxu0 %v642
      %840 = vmatpush1.bf16.msra.mxu0 %v639
      %841 = vmatprep.subr.bf16.mxu0 %v714
      %842 = vmatpush1.bf16.msra.mxu0 %v711
      %843 = vmatprep.subr.bf16.mxu0 %v771
      %844 = vmatpush1.bf16.msra.mxu0 %v768
      %845 = vmatprep.subr.bf16.mxu0 0
      %846 = vmatpush1.bf16.msra.mxu0 0
      %847 = vmatprep.subr.bf16.mxu0 0
      %848 = vmatpush1.bf16.msra.mxu0 0
      %849 = vmatprep.subr.bf16.mxu0 0
      %850 = vmatpush1.bf16.msra.mxu0 0
      %851 = vmatprep.subr.bf16.mxu0 0
      %852 = vmatpush1.bf16.msra.mxu0 0
      %853 = vmatprep.subr.bf16.mxu0 0
      %854 = vmatpush1.bf16.msra.mxu0 0
      %855 = vmatprep.subr.bf16.mxu0 0
      %856 = vmatpush1.bf16.msra.mxu0 0
      %857 = vmatprep.subr.bf16.mxu0 0
      %858 = vmatpush1.bf16.msra.mxu0 0
      %859 = vmatprep.subr.bf16.mxu0 0
      %860 = vmatpush1.bf16.msra.mxu0 0
      %861 = vmatprep.subr.bf16.mxu0 0
      %862 = vmatpush1.bf16.msra.mxu0 0
      %863 = vmatprep.subr.bf16.mxu0 0
      %864 = vmatpush1.bf16.msra.mxu0 0
      %865 = vmatprep.subr.bf16.mxu0 0
      %866 = vmatpush1.bf16.msra.mxu0 0
      %867 = vmatprep.subr.bf16.mxu0 0
      %868 = vmatpush1.bf16.msra.mxu0 0
      %869 = vmatprep.subr.bf16.mxu0 0
      %870 = vmatpush1.bf16.msra.mxu0 0
      %871 = vmatprep.mubr.bf16.mxu0 0
      %872 = vmatmul.mubr.bf16.gmra.mrb[0].mxu0 %v756
      %v873 = vpop.f32.mrb[0].mxu0
      %v874 = vadd.f32 %v734, %v873
      %v875 = vpop.f32.mrb[0].mxu0
      %v876 = vadd.f32 %v734, %v875
      %v877 = vpop.f32.mrb[0].mxu0
      %v878 = vadd.f32 %v739, %v877
      %v879 = vpop.f32.mrb[0].mxu0
      %v880 = vadd.f32 %v739, %v879
      %881 = vmatprep.mubr.bf16.mxu0 0
      %882 = vmatmul.mubr.bf16.gmra.mrb[0].mxu0 %v759
      %v883 = vpop.f32.mrb[0].mxu0
      %v884 = vadd.f32 %v744, %v883
      %v885 = vpop.f32.mrb[0].mxu0
      %v886 = vadd.f32 %v744, %v885
      %v887 = vpop.f32.mrb[0].mxu0
      %v888 = vpop.f32.mrb[0].mxu0
      %889 = vdwg.mxu0
      %890 = vmatprep.subr.bf16.mxu0 %v648
      %891 = vmatpush1.bf16.msra.mxu0 %v645
      %892 = vmatprep.subr.bf16.mxu0 %v720
      %893 = vmatpush1.bf16.msra.mxu0 %v717
      %894 = vmatprep.subr.bf16.mxu0 %v777
      %895 = vmatpush1.bf16.msra.mxu0 %v774
      %896 = vmatprep.subr.bf16.mxu0 0
      %897 = vmatpush1.bf16.msra.mxu0 0
      %898 = vmatprep.subr.bf16.mxu0 0
      %899 = vmatpush1.bf16.msra.mxu0 0
      %900 = vmatprep.subr.bf16.mxu0 0
      %901 = vmatpush1.bf16.msra.mxu0 0
      %902 = vmatprep.subr.bf16.mxu0 0
      %903 = vmatpush1.bf16.msra.mxu0 0
      %904 = vmatprep.subr.bf16.mxu0 0
      %905 = vmatpush1.bf16.msra.mxu0 0
      %906 = vmatprep.subr.bf16.mxu0 0
      %907 = vmatpush1.bf16.msra.mxu0 0
      %908 = vmatprep.subr.bf16.mxu0 0
      %909 = vmatpush1.bf16.msra.mxu0 0
      %910 = vmatprep.subr.bf16.mxu0 0
      %911 = vmatpush1.bf16.msra.mxu0 0
      %912 = vmatprep.subr.bf16.mxu0 0
      %913 = vmatpush1.bf16.msra.mxu0 0
      %914 = vmatprep.subr.bf16.mxu0 0
      %915 = vmatpush1.bf16.msra.mxu0 0
      %916 = vmatprep.subr.bf16.mxu0 0
      %917 = vmatpush1.bf16.msra.mxu0 0
      %918 = vmatprep.subr.bf16.mxu0 0
      %919 = vmatpush1.bf16.msra.mxu0 0
      %920 = vmatprep.subr.bf16.mxu0 0
      %921 = vmatpush1.bf16.msra.mxu0 0
      %922 = vmatprep.mubr.bf16.mxu0 0
      %923 = vmatmul.mubr.bf16.gmra.mrb[0].mxu0 %v756
      %v924 = vpop.f32.mrb[0].mxu0
      %v925 = vadd.f32 %v734, %v924
      %v926 = vpop.f32.mrb[0].mxu0
      %v927 = vadd.f32 %v734, %v926
      %v928 = vpop.f32.mrb[0].mxu0
      %v929 = vadd.f32 %v739, %v928
      %v930 = vpop.f32.mrb[0].mxu0
      %v931 = vadd.f32 %v739, %v930
      %932 = vmatprep.mubr.bf16.mxu0 0
      %933 = vmatmul.mubr.bf16.gmra.mrb[0].mxu0 %v759
      %v934 = vpop.f32.mrb[0].mxu0
      %v935 = vadd.f32 %v744, %v934
      %v936 = vpop.f32.mrb[0].mxu0
      %v937 = vadd.f32 %v744, %v936
      %v938 = vpop.f32.mrb[0].mxu0
      %v939 = vpop.f32.mrb[0].mxu0
      %940 = vdwg.mxu0
      %941 = vmatprep.subr.bf16.mxu0 %v654
      %942 = vmatpush1.bf16.msra.mxu0 %v651
      %943 = vmatprep.subr.bf16.mxu0 %v726
      %944 = vmatpush1.bf16.msra.mxu0 %v723
      %945 = vmatprep.subr.bf16.mxu0 %v783
      %946 = vmatpush1.bf16.msra.mxu0 %v780
      %947 = vmatprep.subr.bf16.mxu0 0
      %948 = vmatpush1.bf16.msra.mxu0 0
      %949 = vmatprep.subr.bf16.mxu0 0
      %950 = vmatpush1.bf16.msra.mxu0 0
      %951 = vmatprep.subr.bf16.mxu0 0
      %952 = vmatpush1.bf16.msra.mxu0 0
      %953 = vmatprep.subr.bf16.mxu0 0
      %954 = vmatpush1.bf16.msra.mxu0 0
      %955 = vmatprep.subr.bf16.mxu0 0
      %956 = vmatpush1.bf16.msra.mxu0 0
      %957 = vmatprep.subr.bf16.mxu0 0
      %958 = vmatpush1.bf16.msra.mxu0 0
      %959 = vmatprep.subr.bf16.mxu0 0
      %960 = vmatpush1.bf16.msra.mxu0 0
      %961 = vmatprep.subr.bf16.mxu0 0
      %962 = vmatpush1.bf16.msra.mxu0 0
      %963 = vmatprep.subr.bf16.mxu0 0
      %964 = vmatpush1.bf16.msra.mxu0 0
      %965 = vmatprep.subr.bf16.mxu0 0
      %966 = vmatpush1.bf16.msra.mxu0 0
      %967 = vmatprep.subr.bf16.mxu0 0
      %968 = vmatpush1.bf16.msra.mxu0 0
      %969 = vmatprep.subr.bf16.mxu0 0
      %970 = vmatpush1.bf16.msra.mxu0 0
      %971 = vmatprep.subr.bf16.mxu0 0
      %972 = vmatpush1.bf16.msra.mxu0 0
      %973 = vmatprep.mubr.bf16.mxu0 0
      %974 = vmatmul.mubr.bf16.gmra.mrb[0].mxu0 %v756
      %v975 = vpop.f32.mrb[0].mxu0
      %v976 = vadd.f32 %v734, %v975
      %v977 = vpop.f32.mrb[0].mxu0
      %v978 = vadd.f32 %v734, %v977
      %v979 = vpop.f32.mrb[0].mxu0
      %v980 = vadd.f32 %v739, %v979
      %v981 = vpop.f32.mrb[0].mxu0
      %v982 = vadd.f32 %v739, %v981
      %983 = vmatprep.mubr.bf16.mxu0 0
      %984 = vmatmul.mubr.bf16.gmra.mrb[0].mxu0 %v759
      %v985 = vpop.f32.mrb[0].mxu0
      %v986 = vadd.f32 %v744, %v985
      %v987 = vpop.f32.mrb[0].mxu0
      %v988 = vadd.f32 %v744, %v987
      %v989 = vpop.f32.mrb[0].mxu0
      %v990 = vpop.f32.mrb[0].mxu0
      %991 = vdwg.mxu0
      %992 = vmatprep.subr.bf16.mxu0 0
      %993 = vmatpush1.bf16.msra.mxu0 %v657
      %994 = vmatprep.subr.bf16.mxu0 0
      %995 = vmatpush1.bf16.msra.mxu0 %v729
      %996 = vmatprep.subr.bf16.mxu0 0
      %997 = vmatpush1.bf16.msra.mxu0 %v786
      %998 = vmatprep.subr.bf16.mxu0 0
      %999 = vmatpush1.bf16.msra.mxu0 0
      %1000 = vmatprep.subr.bf16.mxu0 0
      %1001 = vmatpush1.bf16.msra.mxu0 0
      %1002 = vmatprep.subr.bf16.mxu0 0
      %1003 = vmatpush1.bf16.msra.mxu0 0
      %1004 = vmatprep.subr.bf16.mxu0 0
      %1005 = vmatpush1.bf16.msra.mxu0 0
      %1006 = vmatprep.subr.bf16.mxu0 0
      %1007 = vmatpush1.bf16.msra.mxu0 0
      %1008 = vmatprep.subr.bf16.mxu0 0
      %1009 = vmatpush1.bf16.msra.mxu0 0
      %1010 = vmatprep.subr.bf16.mxu0 0
      %1011 = vmatpush1.bf16.msra.mxu0 0
      %1012 = vmatprep.subr.bf16.mxu0 0
      %1013 = vmatpush1.bf16.msra.mxu0 0
      %1014 = vmatprep.subr.bf16.mxu0 0
      %1015 = vmatpush1.bf16.msra.mxu0 0
      %1016 = vmatprep.subr.bf16.mxu0 0
      %1017 = vmatpush1.bf16.msra.mxu0 0
      %1018 = vmatprep.subr.bf16.mxu0 0
      %1019 = vmatpush1.bf16.msra.mxu0 0
      %1020 = vmatprep.subr.bf16.mxu0 0
      %1021 = vmatpush1.bf16.msra.mxu0 0
      %1022 = vmatprep.subr.bf16.mxu0 0
      %1023 = vmatpush1.bf16.msra.mxu0 0
      %1024 = vmatprep.mubr.bf16.mxu0 0
      %1025 = vmatmul.mubr.bf16.gmra.mrb[0].mxu0 %v756
      %v1026 = vpop.f32.mrb[0].mxu0
      %v1027 = vadd.f32 %v734, %v1026
      %v1028 = vpop.f32.mrb[0].mxu0
      %v1029 = vpop.f32.mrb[0].mxu0
      %v1030 = vadd.f32 %v739, %v1029
      %v1031 = vpop.f32.mrb[0].mxu0
      %1032 = vmatprep.mubr.bf16.mxu0 0
      %1033 = vmatmul.mubr.bf16.gmra.mrb[0].mxu0 %v759
      %v1034 = vpop.f32.mrb[0].mxu0
      %v1035 = vadd.f32 %v744, %v1034
      %v1036 = vpop.f32.mrb[0].mxu0
      %v1037 = vpop.f32.mrb[0].mxu0
      %v1038 = vpop.f32.mrb[0].mxu0
      %1039 = vdwg.mxu0
      %vm1040 = vcmp.ge.f32.partialorder %v823, 0.0
      %vm1041 = vcmp.ge.f32.partialorder %v825, 0.0
      %vm1042 = vcmp.ge.f32.partialorder %v874, 0.0
      %vm1043 = vcmp.ge.f32.partialorder %v876, 0.0
      %vm1044 = vcmp.ge.f32.partialorder %v925, 0.0
      %vm1045 = vcmp.ge.f32.partialorder %v927, 0.0
      %vm1046 = vcmp.ge.f32.partialorder %v976, 0.0
      %vm1047 = vcmp.ge.f32.partialorder %v978, 0.0
      %vm1048 = vcmp.ge.f32.partialorder %v1027, 0.0
      %vm1049 = vcmp.ge.f32.partialorder %v827, 0.0
      %vm1050 = vcmp.ge.f32.partialorder %v829, 0.0
      %vm1051 = vcmp.ge.f32.partialorder %v878, 0.0
      %vm1052 = vcmp.ge.f32.partialorder %v880, 0.0
      %vm1053 = vcmp.ge.f32.partialorder %v929, 0.0
      %vm1054 = vcmp.ge.f32.partialorder %v931, 0.0
      %vm1055 = vcmp.ge.f32.partialorder %v980, 0.0
      %vm1056 = vcmp.ge.f32.partialorder %v982, 0.0
      %vm1057 = vcmp.ge.f32.partialorder %v1030, 0.0
      %vm1058 = vcmp.ge.f32.partialorder %v833, 0.0
      %vm1059 = vcmp.ge.f32.partialorder %v835, 0.0
      %vm1060 = vcmp.ge.f32.partialorder %v884, 0.0
      %vm1061 = vcmp.ge.f32.partialorder %v886, 0.0
      %vm1062 = vcmp.ge.f32.partialorder %v935, 0.0
      %vm1063 = vcmp.ge.f32.partialorder %v937, 0.0
      %vm1064 = vcmp.ge.f32.partialorder %v986, 0.0
      %vm1065 = vcmp.ge.f32.partialorder %v988, 0.0
      %vm1066 = vcmp.ge.f32.partialorder %v1035, 0.0
      %v1067 = vmul.f32 %v823, 0.2
      %v1068 = vmul.f32 %v825, 0.2
      %v1069 = vmul.f32 %v874, 0.2
      %v1070 = vmul.f32 %v876, 0.2
      %v1071 = vmul.f32 %v925, 0.2
      %v1072 = vmul.f32 %v927, 0.2
      %v1073 = vmul.f32 %v976, 0.2
      %v1074 = vmul.f32 %v978, 0.2
      %v1075 = vmul.f32 %v1027, 0.2
      %v1076 = vmul.f32 %v827, 0.2
      %v1077 = vmul.f32 %v829, 0.2
      %v1078 = vmul.f32 %v878, 0.2
      %v1079 = vmul.f32 %v880, 0.2
      %v1080 = vmul.f32 %v929, 0.2
      %v1081 = vmul.f32 %v931, 0.2
      %v1082 = vmul.f32 %v980, 0.2
      %v1083 = vmul.f32 %v982, 0.2
      %v1084 = vmul.f32 %v1030, 0.2
      %v1085 = vmul.f32 %v833, 0.2
      %v1086 = vmul.f32 %v835, 0.2
      %v1087 = vmul.f32 %v884, 0.2
      %v1088 = vmul.f32 %v886, 0.2
      %v1089 = vmul.f32 %v935, 0.2
      %v1090 = vmul.f32 %v937, 0.2
      %v1091 = vmul.f32 %v986, 0.2
      %v1092 = vmul.f32 %v988, 0.2
      %v1093 = vmul.f32 %v1035, 0.2
      %v1094 = vsel %vm1040, %v823, %v1067
      %v1095 = vsel %vm1041, %v825, %v1068
      %v1096 = vsel %vm1042, %v874, %v1069
      %v1097 = vsel %vm1043, %v876, %v1070
      %v1098 = vsel %vm1044, %v925, %v1071
      %v1099 = vsel %vm1045, %v927, %v1072
      %v1100 = vsel %vm1046, %v976, %v1073
      %v1101 = vsel %vm1047, %v978, %v1074
      %v1102 = vsel %vm1048, %v1027, %v1075
      %v1103 = vsel %vm1049, %v827, %v1076
      %v1104 = vsel %vm1050, %v829, %v1077
      %v1105 = vsel %vm1051, %v878, %v1078
      %v1106 = vsel %vm1052, %v880, %v1079
      %v1107 = vsel %vm1053, %v929, %v1080
      %v1108 = vsel %vm1054, %v931, %v1081
      %v1109 = vsel %vm1055, %v980, %v1082
      %v1110 = vsel %vm1056, %v982, %v1083
      %v1111 = vsel %vm1057, %v1030, %v1084
      %v1112 = vsel %vm1058, %v833, %v1085
      %v1113 = vsel %vm1059, %v835, %v1086
      %v1114 = vsel %vm1060, %v884, %v1087
      %v1115 = vsel %vm1061, %v886, %v1088
      %v1116 = vsel %vm1062, %v935, %v1089
      %v1117 = vsel %vm1063, %v937, %v1090
      %v1118 = vsel %vm1064, %v986, %v1091
      %v1119 = vsel %vm1065, %v988, %v1092
      %v1120 = vsel %vm1066, %v1035, %v1093
      %v1123 = vlaneseq
      %v1124 = vshrl.u32 %v1123, 7
      %v1125 = vsub.s32 0, %v1124
      %v1126 = vrot.slane %v253, %v1125
      %v1127 = vlaneseq
      %v1128 = vshrl.u32 %v1127, 7
      %v1129 = vsub.s32 1, %v1128
      %v1130 = vrot.slane %v253, %v1129
      %v1131 = vlaneseq
      %v1132 = vshrl.u32 %v1131, 7
      %v1133 = vsub.s32 2, %v1132
      %v1134 = vrot.slane %v253, %v1133
      %v1135 = vlaneseq
      %v1136 = vshrl.u32 %v1135, 7
      %v1137 = vsub.s32 3, %v1136
      %v1138 = vrot.slane %v253, %v1137
      %v1139 = vlaneseq
      %v1140 = vshrl.u32 %v1139, 7
      %v1141 = vsub.s32 4, %v1140
      %v1142 = vrot.slane %v253, %v1141
      %v1143 = vlaneseq
      %v1144 = vshrl.u32 %v1143, 7
      %v1145 = vsub.s32 5, %v1144
      %v1146 = vrot.slane %v253, %v1145
      %v1147 = vlaneseq
      %v1148 = vshrl.u32 %v1147, 7
      %v1149 = vsub.s32 6, %v1148
      %v1150 = vrot.slane %v253, %v1149
      %v1151 = vlaneseq
      %v1152 = vshrl.u32 %v1151, 7
      %v1153 = vsub.s32 7, %v1152
      %v1154 = vrot.slane %v253, %v1153
      %v1155 = vlaneseq
      %v1156 = vshrl.u32 %v1155, 7
      %v1157 = vsub.s32 0, %v1156
      %v1158 = vrot.slane %v254, %v1157
      %v1168 = vmul.f32 %v1094, %v1126
      %v1169 = vmul.f32 %v1095, %v1130
      %v1170 = vmul.f32 %v1096, %v1134
      %v1171 = vmul.f32 %v1097, %v1138
      %v1172 = vmul.f32 %v1098, %v1142
      %v1173 = vmul.f32 %v1099, %v1146
      %v1174 = vmul.f32 %v1100, %v1150
      %v1175 = vmul.f32 %v1101, %v1154
      %v1176 = vmul.f32 %v1102, %v1158
      %v1177 = vmul.f32 %v1103, %v1126
      %v1178 = vmul.f32 %v1104, %v1130
      %v1179 = vmul.f32 %v1105, %v1134
      %v1180 = vmul.f32 %v1106, %v1138
      %v1181 = vmul.f32 %v1107, %v1142
      %v1182 = vmul.f32 %v1108, %v1146
      %v1183 = vmul.f32 %v1109, %v1150
      %v1184 = vmul.f32 %v1110, %v1154
      %v1185 = vmul.f32 %v1111, %v1158
      %v1186 = vmul.f32 %v1112, %v1126
      %v1187 = vmul.f32 %v1113, %v1130
      %v1188 = vmul.f32 %v1114, %v1134
      %v1189 = vmul.f32 %v1115, %v1138
      %v1190 = vmul.f32 %v1116, %v1142
      %v1191 = vmul.f32 %v1117, %v1146
      %v1192 = vmul.f32 %v1118, %v1150
      %v1193 = vmul.f32 %v1119, %v1154
      %v1194 = vmul.f32 %v1120, %v1158
      %1195 = vst [vmem:[#allocation2] sm:$0xff] 0
      %1196 = vst [vmem:[#allocation2 + $0x8] sm:$0xff] 0
      %1197 = vst [vmem:[#allocation2 + $0x10] sm:$0xff] 0
      %1198 = vst [vmem:[#allocation2 + $0x18] sm:$0xff] 0
      %1199 = vst [vmem:[#allocation2 + $0x20] sm:$0xff] 0
      %1200 = vst [vmem:[#allocation2 + $0x28] sm:$0xff] 0
      %1201 = vst [vmem:[#allocation2 + $0x30] sm:$0xff] 0
      %1202 = vst [vmem:[#allocation2 + $0x38] sm:$0xff] 0
      %1203 = vst [vmem:[#allocation2 + $0x40] sm:$0xff] 0
      %1204 = vst [vmem:[#allocation2 + $0x48] sm:$0xff] 0
      %1205 = vst [vmem:[#allocation2 + $0x50] sm:$0x33] 0
      %1206 = vst [vmem:[#allocation2 + $0x58] sm:$0x33] 0
      %1207 = vst [vmem:[#allocation2 + $0x60] sm:$0x33] 0
      %1208 = vst [vmem:[#allocation2 + $0x68] sm:$0x33] 0
      %1209 = vst [vmem:[#allocation2 + $0x70] sm:$0x33] 0
      %v1210 = vpack.c.bf16 %v1177, %v1168
      %v1211 = vpack.c.bf16 %v1178, %v1169
      %v1212 = vpack.c.bf16 %v1179, %v1170
      %v1213 = vpack.c.bf16 %v1180, %v1171
      %v1214 = vpack.c.bf16 %v1181, %v1172
      %v1215 = vpack.c.bf16 %v1182, %v1173
      %v1216 = vpack.c.bf16 %v1183, %v1174
      %v1217 = vpack.c.bf16 %v1184, %v1175
      %v1218 = vpack.c.bf16 %v1185, %v1176
      %v1219 = vpack.c.bf16 %v1186, %v1186
      %v1220 = vpack.c.bf16 %v1187, %v1187
      %v1221 = vpack.c.bf16 %v1188, %v1188
      %v1222 = vpack.c.bf16 %v1189, %v1189
      %v1223 = vpack.c.bf16 %v1190, %v1190
      %v1224 = vpack.c.bf16 %v1191, %v1191
      %v1225 = vpack.c.bf16 %v1192, %v1192
      %v1226 = vpack.c.bf16 %v1193, %v1193
      %v1227 = vpack.c.bf16 %v1194, %v1194
      %v1246 = vunpack.c.l.b16 %v1210
      %v1247 = vunpack.c.l.b16 %v1211
      %v1248 = vunpack.c.l.b16 %v1212
      %v1249 = vunpack.c.l.b16 %v1213
      %v1250 = vunpack.c.l.b16 %v1214
      %v1251 = vunpack.c.l.b16 %v1215
      %v1252 = vunpack.c.l.b16 %v1216
      %v1253 = vunpack.c.l.b16 %v1217
      %v1254 = vunpack.c.l.b16 %v1218
      %v1255 = vunpack.c.h.b16 %v1210
      %v1256 = vunpack.c.h.b16 %v1211
      %v1257 = vunpack.c.h.b16 %v1212
      %v1258 = vunpack.c.h.b16 %v1213
      %v1259 = vunpack.c.h.b16 %v1214
      %v1260 = vunpack.c.h.b16 %v1215
      %v1261 = vunpack.c.h.b16 %v1216
      %v1262 = vunpack.c.h.b16 %v1217
      %v1263 = vunpack.c.h.b16 %v1218
      %v1264 = vunpack.c.l.b16 %v1219
      %v1265 = vunpack.c.l.b16 %v1220
      %v1266 = vunpack.c.l.b16 %v1221
      %v1267 = vunpack.c.l.b16 %v1222
      %v1268 = vunpack.c.l.b16 %v1223
      %v1269 = vunpack.c.l.b16 %v1224
      %v1270 = vunpack.c.l.b16 %v1225
      %v1271 = vunpack.c.l.b16 %v1226
      %v1272 = vunpack.c.l.b16 %v1227
      %v1273 = vpack.c.b16 %v1247, %v1246
      %v1274 = vpack.c.b16 %v1249, %v1248
      %v1275 = vpack.c.b16 %v1251, %v1250
      %v1276 = vpack.c.b16 %v1253, %v1252
      %v1277 = vpack.c.b16 %v1254, %v1254
      %v1278 = vpack.c.b16 %v1256, %v1255
      %v1279 = vpack.c.b16 %v1258, %v1257
      %v1280 = vpack.c.b16 %v1260, %v1259
      %v1281 = vpack.c.b16 %v1262, %v1261
      %v1282 = vpack.c.b16 %v1263, %v1263
      %v1283 = vpack.c.b16 %v1265, %v1264
      %v1284 = vpack.c.b16 %v1267, %v1266
      %v1285 = vpack.c.b16 %v1269, %v1268
      %v1286 = vpack.c.b16 %v1271, %v1270
      %v1287 = vpack.c.b16 %v1272, %v1272
      %1288 = vrot.lane.b32.xlu0 %v1273, 35
      %v1289 = vpop.permute.xlu0 %1288
      %1290 = vrot.lane.b32.xlu0 %v1274, 35
      %v1291 = vpop.permute.xlu0 %1290
      %1292 = vrot.lane.b32.xlu0 %v1275, 35
      %v1293 = vpop.permute.xlu0 %1292
      %1294 = vrot.lane.b32.xlu0 %v1276, 35
      %v1295 = vpop.permute.xlu0 %1294
      %1296 = vrot.lane.b32.xlu0 %v1277, 35
      %v1297 = vpop.permute.xlu0 %1296
      %1298 = vrot.lane.b32.xlu0 %v1278, 35
      %v1299 = vpop.permute.xlu0 %1298
      %1300 = vrot.lane.b32.xlu0 %v1279, 35
      %v1301 = vpop.permute.xlu0 %1300
      %1302 = vrot.lane.b32.xlu0 %v1280, 35
      %v1303 = vpop.permute.xlu0 %1302
      %1304 = vrot.lane.b32.xlu0 %v1281, 35
      %v1305 = vpop.permute.xlu0 %1304
      %1306 = vrot.lane.b32.xlu0 %v1282, 35
      %v1307 = vpop.permute.xlu0 %1306
      %1308 = vrot.lane.b32.xlu0 %v1283, 35
      %v1309 = vpop.permute.xlu0 %1308
      %1310 = vrot.lane.b32.xlu0 %v1284, 35
      %v1311 = vpop.permute.xlu0 %1310
      %1312 = vrot.lane.b32.xlu0 %v1285, 35
      %v1313 = vpop.permute.xlu0 %1312
      %1314 = vrot.lane.b32.xlu0 %v1286, 35
      %v1315 = vpop.permute.xlu0 %1314
      %1316 = vrot.lane.b32.xlu0 %v1287, 35
      %v1317 = vpop.permute.xlu0 %1316
      %v1318 = vrot.slane %v1289, 4
      %v1319 = vrot.slane %v1291, 4
      %v1320 = vrot.slane %v1293, 4
      %v1321 = vrot.slane %v1295, 4
      %v1322 = vrot.slane %v1297, 4
      %v1323 = vrot.slane %v1299, 4
      %v1324 = vrot.slane %v1301, 4
      %v1325 = vrot.slane %v1303, 4
      %v1326 = vrot.slane %v1305, 4
      %v1327 = vrot.slane %v1307, 4
      %v1328 = vrot.slane %v1309, 4
      %v1329 = vrot.slane %v1311, 4
      %v1330 = vrot.slane %v1313, 4
      %v1331 = vrot.slane %v1315, 4
      %v1332 = vrot.slane %v1317, 4
      %vm1333 = vcmask 285696
      %v1334 = vsel %vm1333, %v1318, %v1289
      %vm1335 = vcmask 1043456
      %v1336 = vsel %vm1335, %v1318, %v1319
      %v1337 = vsel %vm1333, %v1336, %v1291
      %v1338 = vsel %vm1335, %v1319, %v1320
      %v1339 = vsel %vm1333, %v1338, %v1293
      %v1340 = vsel %vm1335, %v1320, %v1321
      %v1341 = vsel %vm1333, %v1340, %v1295
      %v1342 = vsel %vm1335, %v1321, %v1322
      %v1343 = vsel %vm1333, %v1342, %v1297
      %v1344 = vsel %vm1333, %v1323, %v1299
      %v1345 = vsel %vm1335, %v1323, %v1324
      %v1346 = vsel %vm1333, %v1345, %v1301
      %v1347 = vsel %vm1335, %v1324, %v1325
      %v1348 = vsel %vm1333, %v1347, %v1303
      %v1349 = vsel %vm1335, %v1325, %v1326
      %v1350 = vsel %vm1333, %v1349, %v1305
      %v1351 = vsel %vm1335, %v1326, %v1327
      %v1352 = vsel %vm1333, %v1351, %v1307
      %v1353 = vsel %vm1333, %v1328, %v1309
      %v1354 = vsel %vm1335, %v1328, %v1329
      %v1355 = vsel %vm1333, %v1354, %v1311
      %v1356 = vsel %vm1335, %v1329, %v1330
      %v1357 = vsel %vm1333, %v1356, %v1313
      %v1358 = vsel %vm1335, %v1330, %v1331
      %v1359 = vsel %vm1333, %v1358, %v1315
      %v1360 = vsel %vm1335, %v1331, %v1332
      %v1361 = vsel %vm1333, %v1360, %v1317
      %vm1377 = vcmask 1043736
      %vm1378 = vcmask 1047556
      %vm1379 = vmor %vm1378, %vm1377
      %1380 = vst.msk [vmem:[#allocation2] sm:$0xff] %vm1379, %v1334
      %1381 = vst [vmem:[#allocation2 + $0x8] sm:$0xff] %v1337
      %1382 = vst [vmem:[#allocation2 + $0x10] sm:$0xff] %v1339
      %1383 = vst [vmem:[#allocation2 + $0x18] sm:$0xff] %v1341
      %vm1384 = vcmask 285700
      %vm1385 = vmor %vm1384, %vm612
      %1386 = vst.msk [vmem:[#allocation2 + $0x20] sm:$0xff] %vm1385, %v1343
      %1387 = vst.msk [vmem:[#allocation2 + $0x28] sm:$0xff] %vm1379, %v1344
      %1388 = vst [vmem:[#allocation2 + $0x30] sm:$0xff] %v1346
      %1389 = vst [vmem:[#allocation2 + $0x38] sm:$0xff] %v1348
      %1390 = vst [vmem:[#allocation2 + $0x40] sm:$0xff] %v1350
      %1391 = vst.msk [vmem:[#allocation2 + $0x48] sm:$0xff] %vm1385, %v1352
      %vm1392 = vcmask 1041688
      %vm1393 = vcmask 1045508
      %vm1394 = vmor %vm1393, %vm1392
      %1395 = vst.msk [vmem:[#allocation2 + $0x50] sm:$0x33] %vm1394, %v1353
      %1396 = vst [vmem:[#allocation2 + $0x58] sm:$0x33] %v1355
      %1397 = vst [vmem:[#allocation2 + $0x60] sm:$0x33] %v1357
      %1398 = vst [vmem:[#allocation2 + $0x68] sm:$0x33] %v1359
      %vm1399 = vcmask 283652
      %vm1400 = vmor %vm1399, %vm584
      %1401 = vst.msk [vmem:[#allocation2 + $0x70] sm:$0x33] %vm1400, %v1361
      %v1402 = vld [vmem:[#allocation2] sm:$0xff]
      %v1403 = vld [vmem:[#allocation2 + $0x8] sm:$0xff]
      %v1404 = vld [vmem:[#allocation2 + $0x10] sm:$0xff]
      %v1405 = vld [vmem:[#allocation2 + $0x18] sm:$0xff]
      %v1406 = vld [vmem:[#allocation2 + $0x20] sm:$0xff]
      %v1407 = vld [vmem:[#allocation2 + $0x28] sm:$0xff]
      %v1408 = vld [vmem:[#allocation2 + $0x30] sm:$0xff]
      %v1409 = vld [vmem:[#allocation2 + $0x38] sm:$0xff]
      %v1410 = vld [vmem:[#allocation2 + $0x40] sm:$0xff]
      %v1411 = vld [vmem:[#allocation2 + $0x48] sm:$0xff]
      %v1412 = vld [vmem:[#allocation2 + $0x50] sm:$0x33]
      %v1413 = vld [vmem:[#allocation2 + $0x58] sm:$0x33]
      %v1414 = vld [vmem:[#allocation2 + $0x60] sm:$0x33]
      %v1415 = vld [vmem:[#allocation2 + $0x68] sm:$0x33]
      %v1416 = vld [vmem:[#allocation2 + $0x70] sm:$0x33]
      %v1417 = vld [vmem:[%s3] sm:$0xff]
      %v1418 = vld [vmem:[%s3 + $0x8] sm:$0xff]
      %v1419 = vld [vmem:[%s3 + $0x10] sm:$0x33]
      %v1420 = vld [vmem:[%s4] sm:$0xff]
      %v1421 = vld [vmem:[%s4 + $0x8] sm:$0xff]
      %v1422 = vld [vmem:[%s4 + $0x10] sm:$0xf]
      %v1438 = vunpack.c.l.b16 %v1402
      %v1439 = vunpack.c.h.b16 %v1402
      %v1440 = vunpack.c.l.b16 %v1403
      %v1441 = vunpack.c.h.b16 %v1403
      %v1442 = vunpack.c.l.b16 %v1404
      %v1443 = vunpack.c.h.b16 %v1404
      %v1444 = vunpack.c.l.b16 %v1405
      %v1445 = vunpack.c.h.b16 %v1405
      %v1446 = vunpack.c.l.b16 %v1406
      %v1447 = vunpack.c.l.b16 %v1407
      %v1448 = vunpack.c.h.b16 %v1407
      %v1449 = vunpack.c.l.b16 %v1408
      %v1450 = vunpack.c.h.b16 %v1408
      %v1451 = vunpack.c.l.b16 %v1409
      %v1452 = vunpack.c.h.b16 %v1409
      %v1453 = vunpack.c.l.b16 %v1410
      %v1454 = vunpack.c.h.b16 %v1410
      %v1455 = vunpack.c.l.b16 %v1411
      %v1456 = vunpack.c.l.b16 %v1412
      %v1457 = vunpack.c.h.b16 %v1412
      %v1458 = vunpack.c.l.b16 %v1413
      %v1459 = vunpack.c.h.b16 %v1413
      %v1460 = vunpack.c.l.b16 %v1414
      %v1461 = vunpack.c.h.b16 %v1414
      %v1462 = vunpack.c.l.b16 %v1415
      %v1463 = vunpack.c.h.b16 %v1415
      %v1464 = vunpack.c.l.b16 %v1416
      %v1465 = vpack.c.b16 %v1447, %v1438
      %v1466 = vpack.c.b16 %v1448, %v1439
      %v1467 = vpack.c.b16 %v1449, %v1440
      %v1468 = vpack.c.b16 %v1450, %v1441
      %v1469 = vpack.c.b16 %v1451, %v1442
      %v1470 = vpack.c.b16 %v1452, %v1443
      %v1471 = vpack.c.b16 %v1453, %v1444
      %v1472 = vpack.c.b16 %v1454, %v1445
      %v1473 = vpack.c.b16 %v1455, %v1446
      %v1474 = vpack.c.b16 %v1456, %v1456
      %v1475 = vpack.c.b16 %v1457, %v1457
      %v1476 = vpack.c.b16 %v1458, %v1458
      %v1477 = vpack.c.b16 %v1459, %v1459
      %v1478 = vpack.c.b16 %v1460, %v1460
      %v1479 = vpack.c.b16 %v1461, %v1461
      %v1480 = vpack.c.b16 %v1462, %v1462
      %v1481 = vpack.c.b16 %v1463, %v1463
      %v1482 = vpack.c.b16 %v1464, %v1464
      %v1492 = vunpack.c.h.b16 %v1406
      %v1493 = vunpack.c.h.b16 %v1411
      %v1494 = vunpack.c.h.b16 %v1416
      %v1495 = vpack.c.b16 %v1493, %v1492
      %v1496 = vpack.c.b16 %v1494, %v1494
      %vm1497 = vcmask 1041408
      %v1498 = vrot.slane %v1465, 6
      %v1499 = vrot.slane %v1466, 6
      %v1500 = vrot.slane %v1467, 6
      %v1501 = vrot.slane %v1468, 6
      %v1502 = vrot.slane %v1469, 6
      %v1503 = vrot.slane %v1470, 6
      %v1504 = vrot.slane %v1471, 6
      %v1505 = vrot.slane %v1472, 6
      %v1506 = vrot.slane %v1473, 6
      %v1507 = vrot.slane %v1495, 6
      %v1508 = vrot.slane %v1474, 6
      %v1509 = vsel %vm1497, %v1498, %v1508
      %v1510 = vrot.slane %v1475, 6
      %v1511 = vsel %vm1497, %v1499, %v1510
      %v1512 = vrot.slane %v1476, 6
      %v1513 = vsel %vm1497, %v1500, %v1512
      %v1514 = vrot.slane %v1477, 6
      %v1515 = vsel %vm1497, %v1501, %v1514
      %v1516 = vrot.slane %v1478, 6
      %v1517 = vsel %vm1497, %v1502, %v1516
      %v1518 = vrot.slane %v1479, 6
      %v1519 = vsel %vm1497, %v1503, %v1518
      %v1520 = vrot.slane %v1480, 6
      %v1521 = vsel %vm1497, %v1504, %v1520
      %v1522 = vrot.slane %v1481, 6
      %v1523 = vsel %vm1497, %v1505, %v1522
      %v1524 = vrot.slane %v1482, 6
      %v1525 = vsel %vm1497, %v1506, %v1524
      %v1526 = vrot.slane %v1496, 6
      %v1527 = vsel %vm1497, %v1507, %v1526
      %1528 = vrot.lane.b32.xlu0 %v1498, 127
      %v1529 = vpop.permute.xlu0 %1528
      %1530 = vrot.lane.b32.xlu0 %v1499, 127
      %v1531 = vpop.permute.xlu0 %1530
      %1532 = vrot.lane.b32.xlu0 %v1500, 127
      %v1533 = vpop.permute.xlu0 %1532
      %1534 = vrot.lane.b32.xlu0 %v1501, 127
      %v1535 = vpop.permute.xlu0 %1534
      %1536 = vrot.lane.b32.xlu0 %v1502, 127
      %v1537 = vpop.permute.xlu0 %1536
      %1538 = vrot.lane.b32.xlu0 %v1503, 127
      %v1539 = vpop.permute.xlu0 %1538
      %1540 = vrot.lane.b32.xlu0 %v1504, 127
      %v1541 = vpop.permute.xlu0 %1540
      %1542 = vrot.lane.b32.xlu0 %v1505, 127
      %v1543 = vpop.permute.xlu0 %1542
      %1544 = vrot.lane.b32.xlu0 %v1506, 127
      %v1545 = vpop.permute.xlu0 %1544
      %1546 = vrot.lane.b32.xlu0 %v1507, 127
      %v1547 = vpop.permute.xlu0 %1546
      %1548 = vrot.lane.b32.xlu0 %v1509, 127
      %v1549 = vpop.permute.xlu0 %1548
      %1550 = vrot.lane.b32.xlu0 %v1511, 127
      %v1551 = vpop.permute.xlu0 %1550
      %1552 = vrot.lane.b32.xlu0 %v1513, 127
      %v1553 = vpop.permute.xlu0 %1552
      %1554 = vrot.lane.b32.xlu0 %v1515, 127
      %v1555 = vpop.permute.xlu0 %1554
      %1556 = vrot.lane.b32.xlu0 %v1517, 127
      %v1557 = vpop.permute.xlu0 %1556
      %1558 = vrot.lane.b32.xlu0 %v1519, 127
      %v1559 = vpop.permute.xlu0 %1558
      %1560 = vrot.lane.b32.xlu0 %v1521, 127
      %v1561 = vpop.permute.xlu0 %1560
      %1562 = vrot.lane.b32.xlu0 %v1523, 127
      %v1563 = vpop.permute.xlu0 %1562
      %1564 = vrot.lane.b32.xlu0 %v1525, 127
      %v1565 = vpop.permute.xlu0 %1564
      %1566 = vrot.lane.b32.xlu0 %v1527, 127
      %v1567 = vpop.permute.xlu0 %1566
      %v1568 = vsel %vm355, %v1529, %v1531
      %v1569 = vsel %vm355, %v1531, %v1533
      %v1570 = vsel %vm355, %v1533, %v1535
      %v1571 = vsel %vm355, %v1535, %v1537
      %v1572 = vsel %vm355, %v1537, %v1539
      %v1573 = vsel %vm355, %v1539, %v1541
      %v1574 = vsel %vm355, %v1541, %v1543
      %v1575 = vsel %vm355, %v1543, %v1545
      %v1576 = vsel %vm355, %v1545, %v1547
      %v1577 = vsel %vm355, %v1549, %v1551
      %v1578 = vsel %vm355, %v1551, %v1553
      %v1579 = vsel %vm355, %v1553, %v1555
      %v1580 = vsel %vm355, %v1555, %v1557
      %v1581 = vsel %vm355, %v1557, %v1559
      %v1582 = vsel %vm355, %v1559, %v1561
      %v1583 = vsel %vm355, %v1561, %v1563
      %v1584 = vsel %vm355, %v1563, %v1565
      %v1585 = vsel %vm355, %v1565, %v1567
      %v1586 = vpack.c.b16 %v1438, %v1438
      %v1587 = vpack.c.b16 %v1439, %v1439
      %v1588 = vpack.c.b16 %v1440, %v1440
      %v1589 = vpack.c.b16 %v1441, %v1441
      %v1590 = vpack.c.b16 %v1442, %v1442
      %v1591 = vpack.c.b16 %v1443, %v1443
      %v1592 = vpack.c.b16 %v1444, %v1444
      %v1593 = vpack.c.b16 %v1445, %v1445
      %v1594 = vpack.c.b16 %v1446, %v1446
      %v1595 = vpack.c.b16 %v1492, %v1492
      %v1596 = vpack.c.b16 %v1456, %v1447
      %v1597 = vpack.c.b16 %v1457, %v1448
      %v1598 = vpack.c.b16 %v1458, %v1449
      %v1599 = vpack.c.b16 %v1459, %v1450
      %v1600 = vpack.c.b16 %v1460, %v1451
      %v1601 = vpack.c.b16 %v1461, %v1452
      %v1602 = vpack.c.b16 %v1462, %v1453
      %v1603 = vpack.c.b16 %v1463, %v1454
      %v1604 = vpack.c.b16 %v1464, %v1455
      %v1605 = vpack.c.b16 %v1494, %v1493
      %1606 = vrot.lane.b32.xlu0 %v1586, 126
      %v1607 = vpop.permute.xlu0 %1606
      %1608 = vrot.lane.b32.xlu0 %v1587, 126
      %v1609 = vpop.permute.xlu0 %1608
      %1610 = vrot.lane.b32.xlu0 %v1588, 126
      %v1611 = vpop.permute.xlu0 %1610
      %1612 = vrot.lane.b32.xlu0 %v1589, 126
      %v1613 = vpop.permute.xlu0 %1612
      %1614 = vrot.lane.b32.xlu0 %v1590, 126
      %v1615 = vpop.permute.xlu0 %1614
      %1616 = vrot.lane.b32.xlu0 %v1591, 126
      %v1617 = vpop.permute.xlu0 %1616
      %1618 = vrot.lane.b32.xlu0 %v1592, 126
      %v1619 = vpop.permute.xlu0 %1618
      %1620 = vrot.lane.b32.xlu0 %v1593, 126
      %v1621 = vpop.permute.xlu0 %1620
      %1622 = vrot.lane.b32.xlu0 %v1594, 126
      %v1623 = vpop.permute.xlu0 %1622
      %1624 = vrot.lane.b32.xlu0 %v1595, 126
      %v1625 = vpop.permute.xlu0 %1624
      %1626 = vrot.lane.b32.xlu0 %v1596, 126
      %v1627 = vpop.permute.xlu0 %1626
      %1628 = vrot.lane.b32.xlu0 %v1597, 126
      %v1629 = vpop.permute.xlu0 %1628
      %1630 = vrot.lane.b32.xlu0 %v1598, 126
      %v1631 = vpop.permute.xlu0 %1630
      %1632 = vrot.lane.b32.xlu0 %v1599, 126
      %v1633 = vpop.permute.xlu0 %1632
      %1634 = vrot.lane.b32.xlu0 %v1600, 126
      %v1635 = vpop.permute.xlu0 %1634
      %1636 = vrot.lane.b32.xlu0 %v1601, 126
      %v1637 = vpop.permute.xlu0 %1636
      %1638 = vrot.lane.b32.xlu0 %v1602, 126
      %v1639 = vpop.permute.xlu0 %1638
      %1640 = vrot.lane.b32.xlu0 %v1603, 126
      %v1641 = vpop.permute.xlu0 %1640
      %1642 = vrot.lane.b32.xlu0 %v1604, 126
      %v1643 = vpop.permute.xlu0 %1642
      %1644 = vrot.lane.b32.xlu0 %v1605, 126
      %v1645 = vpop.permute.xlu0 %1644
      %v1646 = vsel %vm390, %v1607, %v1609
      %v1647 = vsel %vm390, %v1609, %v1611
      %v1648 = vsel %vm390, %v1611, %v1613
      %v1649 = vsel %vm390, %v1613, %v1615
      %v1650 = vsel %vm390, %v1615, %v1617
      %v1651 = vsel %vm390, %v1617, %v1619
      %v1652 = vsel %vm390, %v1619, %v1621
      %v1653 = vsel %vm390, %v1621, %v1623
      %v1654 = vsel %vm390, %v1623, %v1625
      %v1655 = vsel %vm390, %v1627, %v1629
      %v1656 = vsel %vm390, %v1629, %v1631
      %v1657 = vsel %vm390, %v1631, %v1633
      %v1658 = vsel %vm390, %v1633, %v1635
      %v1659 = vsel %vm390, %v1635, %v1637
      %v1660 = vsel %vm390, %v1637, %v1639
      %v1661 = vsel %vm390, %v1639, %v1641
      %v1662 = vsel %vm390, %v1641, %v1643
      %v1663 = vsel %vm390, %v1643, %v1645
      %vm1664 = vcmask 1045504
      %v1665 = vrot.slane %v1465, 2
      %v1666 = vrot.slane %v1466, 2
      %v1667 = vrot.slane %v1467, 2
      %v1668 = vrot.slane %v1468, 2
      %v1669 = vrot.slane %v1469, 2
      %v1670 = vrot.slane %v1470, 2
      %v1671 = vrot.slane %v1471, 2
      %v1672 = vrot.slane %v1472, 2
      %v1673 = vrot.slane %v1473, 2
      %v1674 = vrot.slane %v1495, 2
      %v1675 = vrot.slane %v1474, 2
      %v1676 = vsel %vm1664, %v1665, %v1675
      %v1677 = vrot.slane %v1475, 2
      %v1678 = vsel %vm1664, %v1666, %v1677
      %v1679 = vrot.slane %v1476, 2
      %v1680 = vsel %vm1664, %v1667, %v1679
      %v1681 = vrot.slane %v1477, 2
      %v1682 = vsel %vm1664, %v1668, %v1681
      %v1683 = vrot.slane %v1478, 2
      %v1684 = vsel %vm1664, %v1669, %v1683
      %v1685 = vrot.slane %v1479, 2
      %v1686 = vsel %vm1664, %v1670, %v1685
      %v1687 = vrot.slane %v1480, 2
      %v1688 = vsel %vm1664, %v1671, %v1687
      %v1689 = vrot.slane %v1481, 2
      %v1690 = vsel %vm1664, %v1672, %v1689
      %v1691 = vrot.slane %v1482, 2
      %v1692 = vsel %vm1664, %v1673, %v1691
      %v1693 = vrot.slane %v1496, 2
      %v1694 = vsel %vm1664, %v1674, %v1693
      %1695 = vrot.lane.b32.xlu0 %v1665, 94
      %v1696 = vpop.permute.xlu0 %1695
      %1697 = vrot.lane.b32.xlu0 %v1666, 94
      %v1698 = vpop.permute.xlu0 %1697
      %1699 = vrot.lane.b32.xlu0 %v1667, 94
      %v1700 = vpop.permute.xlu0 %1699
      %1701 = vrot.lane.b32.xlu0 %v1668, 94
      %v1702 = vpop.permute.xlu0 %1701
      %1703 = vrot.lane.b32.xlu0 %v1669, 94
      %v1704 = vpop.permute.xlu0 %1703
      %1705 = vrot.lane.b32.xlu0 %v1670, 94
      %v1706 = vpop.permute.xlu0 %1705
      %1707 = vrot.lane.b32.xlu0 %v1671, 94
      %v1708 = vpop.permute.xlu0 %1707
      %1709 = vrot.lane.b32.xlu0 %v1672, 94
      %v1710 = vpop.permute.xlu0 %1709
      %1711 = vrot.lane.b32.xlu0 %v1673, 94
      %v1712 = vpop.permute.xlu0 %1711
      %1713 = vrot.lane.b32.xlu0 %v1674, 94
      %v1714 = vpop.permute.xlu0 %1713
      %1715 = vrot.lane.b32.xlu0 %v1676, 94
      %v1716 = vpop.permute.xlu0 %1715
      %1717 = vrot.lane.b32.xlu0 %v1678, 94
      %v1718 = vpop.permute.xlu0 %1717
      %1719 = vrot.lane.b32.xlu0 %v1680, 94
      %v1720 = vpop.permute.xlu0 %1719
      %1721 = vrot.lane.b32.xlu0 %v1682, 94
      %v1722 = vpop.permute.xlu0 %1721
      %1723 = vrot.lane.b32.xlu0 %v1684, 94
      %v1724 = vpop.permute.xlu0 %1723
      %1725 = vrot.lane.b32.xlu0 %v1686, 94
      %v1726 = vpop.permute.xlu0 %1725
      %1727 = vrot.lane.b32.xlu0 %v1688, 94
      %v1728 = vpop.permute.xlu0 %1727
      %1729 = vrot.lane.b32.xlu0 %v1690, 94
      %v1730 = vpop.permute.xlu0 %1729
      %1731 = vrot.lane.b32.xlu0 %v1692, 94
      %v1732 = vpop.permute.xlu0 %1731
      %1733 = vrot.lane.b32.xlu0 %v1694, 94
      %v1734 = vpop.permute.xlu0 %1733
      %v1735 = vsel %vm423, %v1696, %v1698
      %v1736 = vsel %vm423, %v1698, %v1700
      %v1737 = vsel %vm423, %v1700, %v1702
      %v1738 = vsel %vm423, %v1702, %v1704
      %v1739 = vsel %vm423, %v1704, %v1706
      %v1740 = vsel %vm423, %v1706, %v1708
      %v1741 = vsel %vm423, %v1708, %v1710
      %v1742 = vsel %vm423, %v1710, %v1712
      %v1743 = vsel %vm423, %v1712, %v1714
      %v1744 = vsel %vm423, %v1716, %v1718
      %v1745 = vsel %vm423, %v1718, %v1720
      %v1746 = vsel %vm423, %v1720, %v1722
      %v1747 = vsel %vm423, %v1722, %v1724
      %v1748 = vsel %vm423, %v1724, %v1726
      %v1749 = vsel %vm423, %v1726, %v1728
      %v1750 = vsel %vm423, %v1728, %v1730
      %v1751 = vsel %vm423, %v1730, %v1732
      %v1752 = vsel %vm423, %v1732, %v1734
      %1762 = vrot.lane.b32.xlu0 %v1465, 93
      %v1763 = vpop.permute.xlu0 %1762
      %1764 = vrot.lane.b32.xlu0 %v1466, 93
      %v1765 = vpop.permute.xlu0 %1764
      %1766 = vrot.lane.b32.xlu0 %v1467, 93
      %v1767 = vpop.permute.xlu0 %1766
      %1768 = vrot.lane.b32.xlu0 %v1468, 93
      %v1769 = vpop.permute.xlu0 %1768
      %1770 = vrot.lane.b32.xlu0 %v1469, 93
      %v1771 = vpop.permute.xlu0 %1770
      %1772 = vrot.lane.b32.xlu0 %v1470, 93
      %v1773 = vpop.permute.xlu0 %1772
      %1774 = vrot.lane.b32.xlu0 %v1471, 93
      %v1775 = vpop.permute.xlu0 %1774
      %1776 = vrot.lane.b32.xlu0 %v1472, 93
      %v1777 = vpop.permute.xlu0 %1776
      %1778 = vrot.lane.b32.xlu0 %v1473, 93
      %v1779 = vpop.permute.xlu0 %1778
      %1780 = vrot.lane.b32.xlu0 %v1495, 93
      %v1781 = vpop.permute.xlu0 %1780
      %1782 = vrot.lane.b32.xlu0 %v1474, 93
      %v1783 = vpop.permute.xlu0 %1782
      %1784 = vrot.lane.b32.xlu0 %v1475, 93
      %v1785 = vpop.permute.xlu0 %1784
      %1786 = vrot.lane.b32.xlu0 %v1476, 93
      %v1787 = vpop.permute.xlu0 %1786
      %1788 = vrot.lane.b32.xlu0 %v1477, 93
      %v1789 = vpop.permute.xlu0 %1788
      %1790 = vrot.lane.b32.xlu0 %v1478, 93
      %v1791 = vpop.permute.xlu0 %1790
      %1792 = vrot.lane.b32.xlu0 %v1479, 93
      %v1793 = vpop.permute.xlu0 %1792
      %1794 = vrot.lane.b32.xlu0 %v1480, 93
      %v1795 = vpop.permute.xlu0 %1794
      %1796 = vrot.lane.b32.xlu0 %v1481, 93
      %v1797 = vpop.permute.xlu0 %1796
      %1798 = vrot.lane.b32.xlu0 %v1482, 93
      %v1799 = vpop.permute.xlu0 %1798
      %1800 = vrot.lane.b32.xlu0 %v1496, 93
      %v1801 = vpop.permute.xlu0 %1800
      %v1802 = vsel %vm454, %v1763, %v1765
      %v1803 = vsel %vm454, %v1765, %v1767
      %v1804 = vsel %vm454, %v1767, %v1769
      %v1805 = vsel %vm454, %v1769, %v1771
      %v1806 = vsel %vm454, %v1771, %v1773
      %v1807 = vsel %vm454, %v1773, %v1775
      %v1808 = vsel %vm454, %v1775, %v1777
      %v1809 = vsel %vm454, %v1777, %v1779
      %v1810 = vsel %vm454, %v1779, %v1781
      %v1811 = vsel %vm454, %v1783, %v1785
      %v1812 = vsel %vm454, %v1785, %v1787
      %v1813 = vsel %vm454, %v1787, %v1789
      %v1814 = vsel %vm454, %v1789, %v1791
      %v1815 = vsel %vm454, %v1791, %v1793
      %v1816 = vsel %vm454, %v1793, %v1795
      %v1817 = vsel %vm454, %v1795, %v1797
      %v1818 = vsel %vm454, %v1797, %v1799
      %v1819 = vsel %vm454, %v1799, %v1801
      %1829 = vrot.lane.b32.xlu0 %v1498, 92
      %v1830 = vpop.permute.xlu0 %1829
      %1831 = vrot.lane.b32.xlu0 %v1499, 92
      %v1832 = vpop.permute.xlu0 %1831
      %1833 = vrot.lane.b32.xlu0 %v1500, 92
      %v1834 = vpop.permute.xlu0 %1833
      %1835 = vrot.lane.b32.xlu0 %v1501, 92
      %v1836 = vpop.permute.xlu0 %1835
      %1837 = vrot.lane.b32.xlu0 %v1502, 92
      %v1838 = vpop.permute.xlu0 %1837
      %1839 = vrot.lane.b32.xlu0 %v1503, 92
      %v1840 = vpop.permute.xlu0 %1839
      %1841 = vrot.lane.b32.xlu0 %v1504, 92
      %v1842 = vpop.permute.xlu0 %1841
      %1843 = vrot.lane.b32.xlu0 %v1505, 92
      %v1844 = vpop.permute.xlu0 %1843
      %1845 = vrot.lane.b32.xlu0 %v1506, 92
      %v1846 = vpop.permute.xlu0 %1845
      %1847 = vrot.lane.b32.xlu0 %v1507, 92
      %v1848 = vpop.permute.xlu0 %1847
      %1849 = vrot.lane.b32.xlu0 %v1509, 92
      %v1850 = vpop.permute.xlu0 %1849
      %1851 = vrot.lane.b32.xlu0 %v1511, 92
      %v1852 = vpop.permute.xlu0 %1851
      %1853 = vrot.lane.b32.xlu0 %v1513, 92
      %v1854 = vpop.permute.xlu0 %1853
      %1855 = vrot.lane.b32.xlu0 %v1515, 92
      %v1856 = vpop.permute.xlu0 %1855
      %1857 = vrot.lane.b32.xlu0 %v1517, 92
      %v1858 = vpop.permute.xlu0 %1857
      %1859 = vrot.lane.b32.xlu0 %v1519, 92
      %v1860 = vpop.permute.xlu0 %1859
      %1861 = vrot.lane.b32.xlu0 %v1521, 92
      %v1862 = vpop.permute.xlu0 %1861
      %1863 = vrot.lane.b32.xlu0 %v1523, 92
      %v1864 = vpop.permute.xlu0 %1863
      %1865 = vrot.lane.b32.xlu0 %v1525, 92
      %v1866 = vpop.permute.xlu0 %1865
      %1867 = vrot.lane.b32.xlu0 %v1527, 92
      %v1868 = vpop.permute.xlu0 %1867
      %v1869 = vsel %vm484, %v1830, %v1832
      %v1870 = vsel %vm484, %v1832, %v1834
      %v1871 = vsel %vm484, %v1834, %v1836
      %v1872 = vsel %vm484, %v1836, %v1838
      %v1873 = vsel %vm484, %v1838, %v1840
      %v1874 = vsel %vm484, %v1840, %v1842
      %v1875 = vsel %vm484, %v1842, %v1844
      %v1876 = vsel %vm484, %v1844, %v1846
      %v1877 = vsel %vm484, %v1846, %v1848
      %v1878 = vsel %vm484, %v1850, %v1852
      %v1879 = vsel %vm484, %v1852, %v1854
      %v1880 = vsel %vm484, %v1854, %v1856
      %v1881 = vsel %vm484, %v1856, %v1858
      %v1882 = vsel %vm484, %v1858, %v1860
      %v1883 = vsel %vm484, %v1860, %v1862
      %v1884 = vsel %vm484, %v1862, %v1864
      %v1885 = vsel %vm484, %v1864, %v1866
      %v1886 = vsel %vm484, %v1866, %v1868
      %v1889 = vsel %vm584, %v1474, %v1568
      %v1893 = vsel %vm584, %v1475, %v1569
      %v1897 = vsel %vm584, %v1476, %v1570
      %v1901 = vsel %vm584, %v1477, %v1571
      %v1905 = vsel %vm584, %v1478, %v1572
      %v1909 = vsel %vm584, %v1479, %v1573
      %v1913 = vsel %vm584, %v1480, %v1574
      %v1917 = vsel %vm584, %v1481, %v1575
      %v1921 = vsel %vm584, %v1482, %v1576
      %v1925 = vsel %vm612, %v1577, %v1646
      %v1929 = vsel %vm612, %v1578, %v1647
      %v1933 = vsel %vm612, %v1579, %v1648
      %v1937 = vsel %vm612, %v1580, %v1649
      %v1941 = vsel %vm612, %v1581, %v1650
      %v1945 = vsel %vm612, %v1582, %v1651
      %v1949 = vsel %vm612, %v1583, %v1652
      %v1953 = vsel %vm612, %v1584, %v1653
      %v1957 = vsel %vm612, %v1585, %v1654
      %v1961 = vsel %vm631, %v1655, %v1735
      %v1965 = vsel %vm631, %v1656, %v1736
      %v1969 = vsel %vm631, %v1657, %v1737
      %v1973 = vsel %vm631, %v1658, %v1738
      %v1977 = vsel %vm631, %v1659, %v1739
      %v1981 = vsel %vm631, %v1660, %v1740
      %v1985 = vsel %vm631, %v1661, %v1741
      %v1989 = vsel %vm631, %v1662, %v1742
      %v1993 = vsel %vm631, %v1663, %v1743
      %v1997 = vsel %vm584, %v1811, %v1869
      %v2001 = vsel %vm584, %v1812, %v1870
      %v2005 = vsel %vm584, %v1813, %v1871
      %v2009 = vsel %vm584, %v1814, %v1872
      %v2013 = vsel %vm584, %v1815, %v1873
      %v2017 = vsel %vm584, %v1816, %v1874
      %v2021 = vsel %vm584, %v1817, %v1875
      %v2025 = vsel %vm584, %v1818, %v1876
      %v2029 = vsel %vm584, %v1819, %v1877
      %v2033 = vsel %vm584, %v1496, %v1547
      %v2036 = vsel %vm612, %v1567, %v1625
      %v2040 = vunpack.c.l.b16 %v1417
      %v2041 = vunpack.c.h.b16 %v1417
      %v2042 = vunpack.c.l.b16 %v1418
      %v2043 = vunpack.c.h.b16 %v1418
      %v2044 = vunpack.c.l.b16 %v1419
      %v2045 = vunpack.c.h.b16 %v1419
      %v2046 = vpack.c.b16 %v2042, %v2040
      %v2047 = vpack.c.b16 %v2043, %v2041
      %v2048 = vpack.c.b16 %v2044, %v2044
      %v2049 = vpack.c.b16 %v2045, %v2045
      %2050 = vrot.lane.b32.xlu0 %v2046, 8
      %v2051 = vpop.permute.xlu0 %2050
      %2052 = vrot.lane.b32.xlu0 %v2047, 8
      %v2053 = vpop.permute.xlu0 %2052
      %2054 = vrot.lane.b32.xlu0 %v2048, 8
      %v2055 = vpop.permute.xlu0 %2054
      %2056 = vrot.lane.b32.xlu0 %v2049, 8
      %v2057 = vpop.permute.xlu0 %2056
      %vm2058 = vcmask 64512
      %v2059 = vsel %vm2058, %v2051, %v2053
      %v2060 = vsel %vm2058, %v2055, %v2057
      %2081 = vrot.lane.b32.xlu0 %v1465, 60
      %v2082 = vpop.permute.xlu0 %2081
      %2083 = vrot.lane.b32.xlu0 %v1466, 60
      %v2084 = vpop.permute.xlu0 %2083
      %2085 = vrot.lane.b32.xlu0 %v1467, 60
      %v2086 = vpop.permute.xlu0 %2085
      %2087 = vrot.lane.b32.xlu0 %v1468, 60
      %v2088 = vpop.permute.xlu0 %2087
      %2089 = vrot.lane.b32.xlu0 %v1469, 60
      %v2090 = vpop.permute.xlu0 %2089
      %2091 = vrot.lane.b32.xlu0 %v1470, 60
      %v2092 = vpop.permute.xlu0 %2091
      %2093 = vrot.lane.b32.xlu0 %v1471, 60
      %v2094 = vpop.permute.xlu0 %2093
      %2095 = vrot.lane.b32.xlu0 %v1472, 60
      %v2096 = vpop.permute.xlu0 %2095
      %2097 = vrot.lane.b32.xlu0 %v1473, 60
      %v2098 = vpop.permute.xlu0 %2097
      %2099 = vrot.lane.b32.xlu0 %v1495, 60
      %v2100 = vpop.permute.xlu0 %2099
      %2101 = vrot.lane.b32.xlu0 %v1889, 60
      %v2102 = vpop.permute.xlu0 %2101
      %2103 = vrot.lane.b32.xlu0 %v1893, 60
      %v2104 = vpop.permute.xlu0 %2103
      %2105 = vrot.lane.b32.xlu0 %v1897, 60
      %v2106 = vpop.permute.xlu0 %2105
      %2107 = vrot.lane.b32.xlu0 %v1901, 60
      %v2108 = vpop.permute.xlu0 %2107
      %2109 = vrot.lane.b32.xlu0 %v1905, 60
      %v2110 = vpop.permute.xlu0 %2109
      %2111 = vrot.lane.b32.xlu0 %v1909, 60
      %v2112 = vpop.permute.xlu0 %2111
      %2113 = vrot.lane.b32.xlu0 %v1913, 60
      %v2114 = vpop.permute.xlu0 %2113
      %2115 = vrot.lane.b32.xlu0 %v1917, 60
      %v2116 = vpop.permute.xlu0 %2115
      %2117 = vrot.lane.b32.xlu0 %v1921, 60
      %v2118 = vpop.permute.xlu0 %2117
      %2119 = vrot.lane.b32.xlu0 %v2033, 60
      %v2120 = vpop.permute.xlu0 %2119
      %2121 = vrot.lane.b32.xlu0 %v1925, 60
      %v2122 = vpop.permute.xlu0 %2121
      %2123 = vrot.lane.b32.xlu0 %v1929, 60
      %v2124 = vpop.permute.xlu0 %2123
      %2125 = vrot.lane.b32.xlu0 %v1933, 60
      %v2126 = vpop.permute.xlu0 %2125
      %2127 = vrot.lane.b32.xlu0 %v1937, 60
      %v2128 = vpop.permute.xlu0 %2127
      %2129 = vrot.lane.b32.xlu0 %v1941, 60
      %v2130 = vpop.permute.xlu0 %2129
      %2131 = vrot.lane.b32.xlu0 %v1945, 60
      %v2132 = vpop.permute.xlu0 %2131
      %2133 = vrot.lane.b32.xlu0 %v1949, 60
      %v2134 = vpop.permute.xlu0 %2133
      %2135 = vrot.lane.b32.xlu0 %v1953, 60
      %v2136 = vpop.permute.xlu0 %2135
      %2137 = vrot.lane.b32.xlu0 %v1957, 60
      %v2138 = vpop.permute.xlu0 %2137
      %2139 = vrot.lane.b32.xlu0 %v2036, 60
      %v2140 = vpop.permute.xlu0 %2139
      %2141 = vrot.lane.b32.xlu0 %v1655, 60
      %v2142 = vpop.permute.xlu0 %2141
      %2143 = vrot.lane.b32.xlu0 %v1656, 60
      %v2144 = vpop.permute.xlu0 %2143
      %2145 = vrot.lane.b32.xlu0 %v1657, 60
      %v2146 = vpop.permute.xlu0 %2145
      %2147 = vrot.lane.b32.xlu0 %v1658, 60
      %v2148 = vpop.permute.xlu0 %2147
      %2149 = vrot.lane.b32.xlu0 %v1659, 60
      %v2150 = vpop.permute.xlu0 %2149
      %2151 = vrot.lane.b32.xlu0 %v1660, 60
      %v2152 = vpop.permute.xlu0 %2151
      %2153 = vrot.lane.b32.xlu0 %v1661, 60
      %v2154 = vpop.permute.xlu0 %2153
      %2155 = vrot.lane.b32.xlu0 %v1662, 60
      %v2156 = vpop.permute.xlu0 %2155
      %2157 = vrot.lane.b32.xlu0 %v1663, 60
      %v2158 = vpop.permute.xlu0 %2157
      %2159 = vrot.lane.b32.xlu0 %v1645, 60
      %v2160 = vpop.permute.xlu0 %2159
      %v2161 = vsel %vm514, %v2082, %v2084
      %v2162 = vsel %vm514, %v2084, %v2086
      %v2163 = vsel %vm514, %v2086, %v2088
      %v2164 = vsel %vm514, %v2088, %v2090
      %v2165 = vsel %vm514, %v2090, %v2092
      %v2166 = vsel %vm514, %v2092, %v2094
      %v2167 = vsel %vm514, %v2094, %v2096
      %v2168 = vsel %vm514, %v2096, %v2098
      %v2169 = vsel %vm514, %v2098, %v2100
      %v2170 = vsel %vm514, %v2102, %v2104
      %v2171 = vsel %vm514, %v2104, %v2106
      %v2172 = vsel %vm514, %v2106, %v2108
      %v2173 = vsel %vm514, %v2108, %v2110
      %v2174 = vsel %vm514, %v2110, %v2112
      %v2175 = vsel %vm514, %v2112, %v2114
      %v2176 = vsel %vm514, %v2114, %v2116
      %v2177 = vsel %vm514, %v2116, %v2118
      %v2178 = vsel %vm514, %v2118, %v2120
      %v2179 = vsel %vm514, %v2122, %v2124
      %v2180 = vsel %vm514, %v2124, %v2126
      %v2181 = vsel %vm514, %v2126, %v2128
      %v2182 = vsel %vm514, %v2128, %v2130
      %v2183 = vsel %vm514, %v2130, %v2132
      %v2184 = vsel %vm514, %v2132, %v2134
      %v2185 = vsel %vm514, %v2134, %v2136
      %v2186 = vsel %vm514, %v2136, %v2138
      %v2187 = vsel %vm514, %v2138, %v2140
      %v2188 = vsel %vm514, %v2142, %v2144
      %v2189 = vsel %vm514, %v2144, %v2146
      %v2190 = vsel %vm514, %v2146, %v2148
      %v2191 = vsel %vm514, %v2148, %v2150
      %v2192 = vsel %vm514, %v2150, %v2152
      %v2193 = vsel %vm514, %v2152, %v2154
      %v2194 = vsel %vm514, %v2154, %v2156
      %v2195 = vsel %vm514, %v2156, %v2158
      %v2196 = vsel %vm514, %v2158, %v2160
      %vm2224 = vcmask 490496
      %v2226 = vsel %vm2224, %v2059, 0
      %v2229 = vsel %vm2224, %v2060, 0
      %v2232 = vsel %vm631, %v2188, 0
      %v2235 = vsel %vm631, %v2189, 0
      %v2238 = vsel %vm631, %v2190, 0
      %v2241 = vsel %vm631, %v2191, 0
      %v2244 = vsel %vm631, %v2192, 0
      %v2247 = vsel %vm631, %v2193, 0
      %v2250 = vsel %vm631, %v2194, 0
      %v2253 = vsel %vm631, %v2195, 0
      %v2256 = vsel %vm631, %v2196, 0
      %2258 = vmatprep.subr.bf16.mxu0 %v2162
      %2259 = vmatpush1.bf16.msra.mxu0 %v2161
      %2260 = vmatprep.subr.bf16.mxu0 %v2171
      %2261 = vmatpush1.bf16.msra.mxu0 %v2170
      %2262 = vmatprep.subr.bf16.mxu0 %v2180
      %2263 = vmatpush1.bf16.msra.mxu0 %v2179
      %2264 = vmatprep.subr.bf16.mxu0 %v2235
      %2265 = vmatpush1.bf16.msra.mxu0 %v2232
      %2266 = vmatprep.subr.bf16.mxu0 0
      %2267 = vmatpush1.bf16.msra.mxu0 0
      %2268 = vmatprep.subr.bf16.mxu0 0
      %2269 = vmatpush1.bf16.msra.mxu0 0
      %2270 = vmatprep.subr.bf16.mxu0 0
      %2271 = vmatpush1.bf16.msra.mxu0 0
      %2272 = vmatprep.subr.bf16.mxu0 0
      %2273 = vmatpush1.bf16.msra.mxu0 0
      %2274 = vmatprep.subr.bf16.mxu0 0
      %2275 = vmatpush1.bf16.msra.mxu0 0
      %2276 = vmatprep.subr.bf16.mxu0 0
      %2277 = vmatpush1.bf16.msra.mxu0 0
      %2278 = vmatprep.subr.bf16.mxu0 0
      %2279 = vmatpush1.bf16.msra.mxu0 0
      %2280 = vmatprep.subr.bf16.mxu0 0
      %2281 = vmatpush1.bf16.msra.mxu0 0
      %2282 = vmatprep.subr.bf16.mxu0 0
      %2283 = vmatpush1.bf16.msra.mxu0 0
      %2284 = vmatprep.subr.bf16.mxu0 0
      %2285 = vmatpush1.bf16.msra.mxu0 0
      %2286 = vmatprep.subr.bf16.mxu0 0
      %2287 = vmatpush1.bf16.msra.mxu0 0
      %2288 = vmatprep.subr.bf16.mxu0 0
      %2289 = vmatpush1.bf16.msra.mxu0 0
      %2290 = vmatprep.mubr.bf16.mxu0 0
      %2291 = vmatmul.mubr.bf16.gmra.mrb[0].mxu0 %v2226
      %v2292 = vpop.f32.mrb[0].mxu0
      %v2293 = vadd.f32 0.0, %v2292
      %v2294 = vpop.f32.mrb[0].mxu0
      %v2295 = vadd.f32 0.0, %v2294
      %v2296 = vpop.f32.mrb[0].mxu0
      %v2297 = vadd.f32 0.0, %v2296
      %v2298 = vpop.f32.mrb[0].mxu0
      %v2299 = vadd.f32 0.0, %v2298
      %2300 = vmatprep.mubr.bf16.mxu0 0
      %2301 = vmatmul.mubr.bf16.gmra.mrb[0].mxu0 %v2229
      %v2302 = vpop.f32.mrb[0].mxu0
      %v2303 = vadd.f32 0.0, %v2302
      %v2304 = vpop.f32.mrb[0].mxu0
      %v2305 = vadd.f32 0.0, %v2304
      %v2306 = vpop.f32.mrb[0].mxu0
      %v2307 = vpop.f32.mrb[0].mxu0
      %2308 = vdwg.mxu0
      %2309 = vmatprep.subr.bf16.mxu0 %v2164
      %2310 = vmatpush1.bf16.msra.mxu0 %v2163
      %2311 = vmatprep.subr.bf16.mxu0 %v2173
      %2312 = vmatpush1.bf16.msra.mxu0 %v2172
      %2313 = vmatprep.subr.bf16.mxu0 %v2182
      %2314 = vmatpush1.bf16.msra.mxu0 %v2181
      %2315 = vmatprep.subr.bf16.mxu0 %v2241
      %2316 = vmatpush1.bf16.msra.mxu0 %v2238
      %2317 = vmatprep.subr.bf16.mxu0 0
      %2318 = vmatpush1.bf16.msra.mxu0 0
      %2319 = vmatprep.subr.bf16.mxu0 0
      %2320 = vmatpush1.bf16.msra.mxu0 0
      %2321 = vmatprep.subr.bf16.mxu0 0
      %2322 = vmatpush1.bf16.msra.mxu0 0
      %2323 = vmatprep.subr.bf16.mxu0 0
      %2324 = vmatpush1.bf16.msra.mxu0 0
      %2325 = vmatprep.subr.bf16.mxu0 0
      %2326 = vmatpush1.bf16.msra.mxu0 0
      %2327 = vmatprep.subr.bf16.mxu0 0
      %2328 = vmatpush1.bf16.msra.mxu0 0
      %2329 = vmatprep.subr.bf16.mxu0 0
      %2330 = vmatpush1.bf16.msra.mxu0 0
      %2331 = vmatprep.subr.bf16.mxu0 0
      %2332 = vmatpush1.bf16.msra.mxu0 0
      %2333 = vmatprep.subr.bf16.mxu0 0
      %2334 = vmatpush1.bf16.msra.mxu0 0
      %2335 = vmatprep.subr.bf16.mxu0 0
      %2336 = vmatpush1.bf16.msra.mxu0 0
      %2337 = vmatprep.subr.bf16.mxu0 0
      %2338 = vmatpush1.bf16.msra.mxu0 0
      %2339 = vmatprep.subr.bf16.mxu0 0
      %2340 = vmatpush1.bf16.msra.mxu0 0
      %2341 = vmatprep.mubr.bf16.mxu0 0
      %2342 = vmatmul.mubr.bf16.gmra.mrb[0].mxu0 %v2226
      %v2343 = vpop.f32.mrb[0].mxu0
      %v2344 = vadd.f32 0.0, %v2343
      %v2345 = vpop.f32.mrb[0].mxu0
      %v2346 = vadd.f32 0.0, %v2345
      %v2347 = vpop.f32.mrb[0].mxu0
      %v2348 = vadd.f32 0.0, %v2347
      %v2349 = vpop.f32.mrb[0].mxu0
      %v2350 = vadd.f32 0.0, %v2349
      %2351 = vmatprep.mubr.bf16.mxu0 0
      %2352 = vmatmul.mubr.bf16.gmra.mrb[0].mxu0 %v2229
      %v2353 = vpop.f32.mrb[0].mxu0
      %v2354 = vadd.f32 0.0, %v2353
      %v2355 = vpop.f32.mrb[0].mxu0
      %v2356 = vadd.f32 0.0, %v2355
      %v2357 = vpop.f32.mrb[0].mxu0
      %v2358 = vpop.f32.mrb[0].mxu0
      %2359 = vdwg.mxu0
      %2360 = vmatprep.subr.bf16.mxu0 %v2166
      %2361 = vmatpush1.bf16.msra.mxu0 %v2165
      %2362 = vmatprep.subr.bf16.mxu0 %v2175
      %2363 = vmatpush1.bf16.msra.mxu0 %v2174
      %2364 = vmatprep.subr.bf16.mxu0 %v2184
      %2365 = vmatpush1.bf16.msra.mxu0 %v2183
      %2366 = vmatprep.subr.bf16.mxu0 %v2247
      %2367 = vmatpush1.bf16.msra.mxu0 %v2244
      %2368 = vmatprep.subr.bf16.mxu0 0
      %2369 = vmatpush1.bf16.msra.mxu0 0
      %2370 = vmatprep.subr.bf16.mxu0 0
      %2371 = vmatpush1.bf16.msra.mxu0 0
      %2372 = vmatprep.subr.bf16.mxu0 0
      %2373 = vmatpush1.bf16.msra.mxu0 0
      %2374 = vmatprep.subr.bf16.mxu0 0
      %2375 = vmatpush1.bf16.msra.mxu0 0
      %2376 = vmatprep.subr.bf16.mxu0 0
      %2377 = vmatpush1.bf16.msra.mxu0 0
      %2378 = vmatprep.subr.bf16.mxu0 0
      %2379 = vmatpush1.bf16.msra.mxu0 0
      %2380 = vmatprep.subr.bf16.mxu0 0
      %2381 = vmatpush1.bf16.msra.mxu0 0
      %2382 = vmatprep.subr.bf16.mxu0 0
      %2383 = vmatpush1.bf16.msra.mxu0 0
      %2384 = vmatprep.subr.bf16.mxu0 0
      %2385 = vmatpush1.bf16.msra.mxu0 0
      %2386 = vmatprep.subr.bf16.mxu0 0
      %2387 = vmatpush1.bf16.msra.mxu0 0
      %2388 = vmatprep.subr.bf16.mxu0 0
      %2389 = vmatpush1.bf16.msra.mxu0 0
      %2390 = vmatprep.subr.bf16.mxu0 0
      %2391 = vmatpush1.bf16.msra.mxu0 0
      %2392 = vmatprep.mubr.bf16.mxu0 0
      %2393 = vmatmul.mubr.bf16.gmra.mrb[0].mxu0 %v2226
      %v2394 = vpop.f32.mrb[0].mxu0
      %v2395 = vadd.f32 0.0, %v2394
      %v2396 = vpop.f32.mrb[0].mxu0
      %v2397 = vadd.f32 0.0, %v2396
      %v2398 = vpop.f32.mrb[0].mxu0
      %v2399 = vadd.f32 0.0, %v2398
      %v2400 = vpop.f32.mrb[0].mxu0
      %v2401 = vadd.f32 0.0, %v2400
      %2402 = vmatprep.mubr.bf16.mxu0 0
      %2403 = vmatmul.mubr.bf16.gmra.mrb[0].mxu0 %v2229
      %v2404 = vpop.f32.mrb[0].mxu0
      %v2405 = vadd.f32 0.0, %v2404
      %v2406 = vpop.f32.mrb[0].mxu0
      %v2407 = vadd.f32 0.0, %v2406
      %v2408 = vpop.f32.mrb[0].mxu0
      %v2409 = vpop.f32.mrb[0].mxu0
      %2410 = vdwg.mxu0
      %2411 = vmatprep.subr.bf16.mxu0 %v2168
      %2412 = vmatpush1.bf16.msra.mxu0 %v2167
      %2413 = vmatprep.subr.bf16.mxu0 %v2177
      %2414 = vmatpush1.bf16.msra.mxu0 %v2176
      %2415 = vmatprep.subr.bf16.mxu0 %v2186
      %2416 = vmatpush1.bf16.msra.mxu0 %v2185
      %2417 = vmatprep.subr.bf16.mxu0 %v2253
      %2418 = vmatpush1.bf16.msra.mxu0 %v2250
      %2419 = vmatprep.subr.bf16.mxu0 0
      %2420 = vmatpush1.bf16.msra.mxu0 0
      %2421 = vmatprep.subr.bf16.mxu0 0
      %2422 = vmatpush1.bf16.msra.mxu0 0
      %2423 = vmatprep.subr.bf16.mxu0 0
      %2424 = vmatpush1.bf16.msra.mxu0 0
      %2425 = vmatprep.subr.bf16.mxu0 0
      %2426 = vmatpush1.bf16.msra.mxu0 0
      %2427 = vmatprep.subr.bf16.mxu0 0
      %2428 = vmatpush1.bf16.msra.mxu0 0
      %2429 = vmatprep.subr.bf16.mxu0 0
      %2430 = vmatpush1.bf16.msra.mxu0 0
      %2431 = vmatprep.subr.bf16.mxu0 0
      %2432 = vmatpush1.bf16.msra.mxu0 0
      %2433 = vmatprep.subr.bf16.mxu0 0
      %2434 = vmatpush1.bf16.msra.mxu0 0
      %2435 = vmatprep.subr.bf16.mxu0 0
      %2436 = vmatpush1.bf16.msra.mxu0 0
      %2437 = vmatprep.subr.bf16.mxu0 0
      %2438 = vmatpush1.bf16.msra.mxu0 0
      %2439 = vmatprep.subr.bf16.mxu0 0
      %2440 = vmatpush1.bf16.msra.mxu0 0
      %2441 = vmatprep.subr.bf16.mxu0 0
      %2442 = vmatpush1.bf16.msra.mxu0 0
      %2443 = vmatprep.mubr.bf16.mxu0 0
      %2444 = vmatmul.mubr.bf16.gmra.mrb[0].mxu0 %v2226
      %v2445 = vpop.f32.mrb[0].mxu0
      %v2446 = vadd.f32 0.0, %v2445
      %v2447 = vpop.f32.mrb[0].mxu0
      %v2448 = vadd.f32 0.0, %v2447
      %v2449 = vpop.f32.mrb[0].mxu0
      %v2450 = vadd.f32 0.0, %v2449
      %v2451 = vpop.f32.mrb[0].mxu0
      %v2452 = vadd.f32 0.0, %v2451
      %2453 = vmatprep.mubr.bf16.mxu0 0
      %2454 = vmatmul.mubr.bf16.gmra.mrb[0].mxu0 %v2229
      %v2455 = vpop.f32.mrb[0].mxu0
      %v2456 = vadd.f32 0.0, %v2455
      %v2457 = vpop.f32.mrb[0].mxu0
      %v2458 = vadd.f32 0.0, %v2457
      %v2459 = vpop.f32.mrb[0].mxu0
      %v2460 = vpop.f32.mrb[0].mxu0
      %2461 = vdwg.mxu0
      %2462 = vmatprep.subr.bf16.mxu0 0
      %2463 = vmatpush1.bf16.msra.mxu0 %v2169
      %2464 = vmatprep.subr.bf16.mxu0 0
      %2465 = vmatpush1.bf16.msra.mxu0 %v2178
      %2466 = vmatprep.subr.bf16.mxu0 0
      %2467 = vmatpush1.bf16.msra.mxu0 %v2187
      %2468 = vmatprep.subr.bf16.mxu0 0
      %2469 = vmatpush1.bf16.msra.mxu0 %v2256
      %2470 = vmatprep.subr.bf16.mxu0 0
      %2471 = vmatpush1.bf16.msra.mxu0 0
      %2472 = vmatprep.subr.bf16.mxu0 0
      %2473 = vmatpush1.bf16.msra.mxu0 0
      %2474 = vmatprep.subr.bf16.mxu0 0
      %2475 = vmatpush1.bf16.msra.mxu0 0
      %2476 = vmatprep.subr.bf16.mxu0 0
      %2477 = vmatpush1.bf16.msra.mxu0 0
      %2478 = vmatprep.subr.bf16.mxu0 0
      %2479 = vmatpush1.bf16.msra.mxu0 0
      %2480 = vmatprep.subr.bf16.mxu0 0
      %2481 = vmatpush1.bf16.msra.mxu0 0
      %2482 = vmatprep.subr.bf16.mxu0 0
      %2483 = vmatpush1.bf16.msra.mxu0 0
      %2484 = vmatprep.subr.bf16.mxu0 0
      %2485 = vmatpush1.bf16.msra.mxu0 0
      %2486 = vmatprep.subr.bf16.mxu0 0
      %2487 = vmatpush1.bf16.msra.mxu0 0
      %2488 = vmatprep.subr.bf16.mxu0 0
      %2489 = vmatpush1.bf16.msra.mxu0 0
      %2490 = vmatprep.subr.bf16.mxu0 0
      %2491 = vmatpush1.bf16.msra.mxu0 0
      %2492 = vmatprep.subr.bf16.mxu0 0
      %2493 = vmatpush1.bf16.msra.mxu0 0
      %2494 = vmatprep.mubr.bf16.mxu0 0
      %2495 = vmatmul.mubr.bf16.gmra.mrb[0].mxu0 %v2226
      %v2496 = vpop.f32.mrb[0].mxu0
      %v2497 = vadd.f32 0.0, %v2496
      %v2498 = vpop.f32.mrb[0].mxu0
      %v2499 = vpop.f32.mrb[0].mxu0
      %v2500 = vadd.f32 0.0, %v2499
      %v2501 = vpop.f32.mrb[0].mxu0
      %2502 = vmatprep.mubr.bf16.mxu0 0
      %2503 = vmatmul.mubr.bf16.gmra.mrb[0].mxu0 %v2229
      %v2504 = vpop.f32.mrb[0].mxu0
      %v2505 = vadd.f32 0.0, %v2504
      %v2506 = vpop.f32.mrb[0].mxu0
      %v2507 = vpop.f32.mrb[0].mxu0
      %v2508 = vpop.f32.mrb[0].mxu0
      %2509 = vdwg.mxu0
      %vm2510 = vcmask 982016
      %v2512 = vsel %vm2510, %v2046, 0
      %v2515 = vsel %vm2510, %v2048, 0
      %v2518 = vsel %vm612, %v1878, 0
      %v2521 = vsel %vm612, %v1879, 0
      %v2524 = vsel %vm612, %v1880, 0
      %v2527 = vsel %vm612, %v1881, 0
      %v2530 = vsel %vm612, %v1882, 0
      %v2533 = vsel %vm612, %v1883, 0
      %v2536 = vsel %vm612, %v1884, 0
      %v2539 = vsel %vm612, %v1885, 0
      %v2542 = vsel %vm612, %v1886, 0
      %2544 = vmatprep.subr.bf16.mxu0 %v1466
      %2545 = vmatpush1.bf16.msra.mxu0 %v1465
      %2546 = vmatprep.subr.bf16.mxu0 %v1893
      %2547 = vmatpush1.bf16.msra.mxu0 %v1889
      %2548 = vmatprep.subr.bf16.mxu0 %v1929
      %2549 = vmatpush1.bf16.msra.mxu0 %v1925
      %2550 = vmatprep.subr.bf16.mxu0 %v1965
      %2551 = vmatpush1.bf16.msra.mxu0 %v1961
      %2552 = vmatprep.subr.bf16.mxu0 %v1745
      %2553 = vmatpush1.bf16.msra.mxu0 %v1744
      %2554 = vmatprep.subr.bf16.mxu0 %v1803
      %2555 = vmatpush1.bf16.msra.mxu0 %v1802
      %2556 = vmatprep.subr.bf16.mxu0 %v2001
      %2557 = vmatpush1.bf16.msra.mxu0 %v1997
      %2558 = vmatprep.subr.bf16.mxu0 %v2521
      %2559 = vmatpush1.bf16.msra.mxu0 %v2518
      %2560 = vmatprep.subr.bf16.mxu0 0
      %2561 = vmatpush1.bf16.msra.mxu0 0
      %2562 = vmatprep.subr.bf16.mxu0 0
      %2563 = vmatpush1.bf16.msra.mxu0 0
      %2564 = vmatprep.subr.bf16.mxu0 0
      %2565 = vmatpush1.bf16.msra.mxu0 0
      %2566 = vmatprep.subr.bf16.mxu0 0
      %2567 = vmatpush1.bf16.msra.mxu0 0
      %2568 = vmatprep.subr.bf16.mxu0 0
      %2569 = vmatpush1.bf16.msra.mxu0 0
      %2570 = vmatprep.subr.bf16.mxu0 0
      %2571 = vmatpush1.bf16.msra.mxu0 0
      %2572 = vmatprep.subr.bf16.mxu0 0
      %2573 = vmatpush1.bf16.msra.mxu0 0
      %2574 = vmatprep.subr.bf16.mxu0 0
      %2575 = vmatpush1.bf16.msra.mxu0 0
      %2576 = vmatprep.mubr.bf16.mxu0 0
      %2577 = vmatmul.mubr.bf16.gmra.mrb[0].mxu0 %v2512
      %v2578 = vpop.f32.mrb[0].mxu0
      %v2579 = vadd.f32 %v2293, %v2578
      %v2580 = vpop.f32.mrb[0].mxu0
      %v2581 = vadd.f32 %v2295, %v2580
      %v2582 = vpop.f32.mrb[0].mxu0
      %v2583 = vadd.f32 %v2297, %v2582
      %v2584 = vpop.f32.mrb[0].mxu0
      %v2585 = vadd.f32 %v2299, %v2584
      %2586 = vmatprep.mubr.bf16.mxu0 0
      %2587 = vmatmul.mubr.bf16.gmra.mrb[0].mxu0 %v2515
      %v2588 = vpop.f32.mrb[0].mxu0
      %v2589 = vadd.f32 %v2303, %v2588
      %v2590 = vpop.f32.mrb[0].mxu0
      %v2591 = vadd.f32 %v2305, %v2590
      %v2592 = vpop.f32.mrb[0].mxu0
      %v2593 = vpop.f32.mrb[0].mxu0
      %2594 = vdwg.mxu0
      %2595 = vmatprep.subr.bf16.mxu0 %v1468
      %2596 = vmatpush1.bf16.msra.mxu0 %v1467
      %2597 = vmatprep.subr.bf16.mxu0 %v1901
      %2598 = vmatpush1.bf16.msra.mxu0 %v1897
      %2599 = vmatprep.subr.bf16.mxu0 %v1937
      %2600 = vmatpush1.bf16.msra.mxu0 %v1933
      %2601 = vmatprep.subr.bf16.mxu0 %v1973
      %2602 = vmatpush1.bf16.msra.mxu0 %v1969
      %2603 = vmatprep.subr.bf16.mxu0 %v1747
      %2604 = vmatpush1.bf16.msra.mxu0 %v1746
      %2605 = vmatprep.subr.bf16.mxu0 %v1805
      %2606 = vmatpush1.bf16.msra.mxu0 %v1804
      %2607 = vmatprep.subr.bf16.mxu0 %v2009
      %2608 = vmatpush1.bf16.msra.mxu0 %v2005
      %2609 = vmatprep.subr.bf16.mxu0 %v2527
      %2610 = vmatpush1.bf16.msra.mxu0 %v2524
      %2611 = vmatprep.subr.bf16.mxu0 0
      %2612 = vmatpush1.bf16.msra.mxu0 0
      %2613 = vmatprep.subr.bf16.mxu0 0
      %2614 = vmatpush1.bf16.msra.mxu0 0
      %2615 = vmatprep.subr.bf16.mxu0 0
      %2616 = vmatpush1.bf16.msra.mxu0 0
      %2617 = vmatprep.subr.bf16.mxu0 0
      %2618 = vmatpush1.bf16.msra.mxu0 0
      %2619 = vmatprep.subr.bf16.mxu0 0
      %2620 = vmatpush1.bf16.msra.mxu0 0
      %2621 = vmatprep.subr.bf16.mxu0 0
      %2622 = vmatpush1.bf16.msra.mxu0 0
      %2623 = vmatprep.subr.bf16.mxu0 0
      %2624 = vmatpush1.bf16.msra.mxu0 0
      %2625 = vmatprep.subr.bf16.mxu0 0
      %2626 = vmatpush1.bf16.msra.mxu0 0
      %2627 = vmatprep.mubr.bf16.mxu0 0
      %2628 = vmatmul.mubr.bf16.gmra.mrb[0].mxu0 %v2512
      %v2629 = vpop.f32.mrb[0].mxu0
      %v2630 = vadd.f32 %v2344, %v2629
      %v2631 = vpop.f32.mrb[0].mxu0
      %v2632 = vadd.f32 %v2346, %v2631
      %v2633 = vpop.f32.mrb[0].mxu0
      %v2634 = vadd.f32 %v2348, %v2633
      %v2635 = vpop.f32.mrb[0].mxu0
      %v2636 = vadd.f32 %v2350, %v2635
      %2637 = vmatprep.mubr.bf16.mxu0 0
      %2638 = vmatmul.mubr.bf16.gmra.mrb[0].mxu0 %v2515
      %v2639 = vpop.f32.mrb[0].mxu0
      %v2640 = vadd.f32 %v2354, %v2639
      %v2641 = vpop.f32.mrb[0].mxu0
      %v2642 = vadd.f32 %v2356, %v2641
      %v2643 = vpop.f32.mrb[0].mxu0
      %v2644 = vpop.f32.mrb[0].mxu0
      %2645 = vdwg.mxu0
      %2646 = vmatprep.subr.bf16.mxu0 %v1470
      %2647 = vmatpush1.bf16.msra.mxu0 %v1469
      %2648 = vmatprep.subr.bf16.mxu0 %v1909
      %2649 = vmatpush1.bf16.msra.mxu0 %v1905
      %2650 = vmatprep.subr.bf16.mxu0 %v1945
      %2651 = vmatpush1.bf16.msra.mxu0 %v1941
      %2652 = vmatprep.subr.bf16.mxu0 %v1981
      %2653 = vmatpush1.bf16.msra.mxu0 %v1977
      %2654 = vmatprep.subr.bf16.mxu0 %v1749
      %2655 = vmatpush1.bf16.msra.mxu0 %v1748
      %2656 = vmatprep.subr.bf16.mxu0 %v1807
      %2657 = vmatpush1.bf16.msra.mxu0 %v1806
      %2658 = vmatprep.subr.bf16.mxu0 %v2017
      %2659 = vmatpush1.bf16.msra.mxu0 %v2013
      %2660 = vmatprep.subr.bf16.mxu0 %v2533
      %2661 = vmatpush1.bf16.msra.mxu0 %v2530
      %2662 = vmatprep.subr.bf16.mxu0 0
      %2663 = vmatpush1.bf16.msra.mxu0 0
      %2664 = vmatprep.subr.bf16.mxu0 0
      %2665 = vmatpush1.bf16.msra.mxu0 0
      %2666 = vmatprep.subr.bf16.mxu0 0
      %2667 = vmatpush1.bf16.msra.mxu0 0
      %2668 = vmatprep.subr.bf16.mxu0 0
      %2669 = vmatpush1.bf16.msra.mxu0 0
      %2670 = vmatprep.subr.bf16.mxu0 0
      %2671 = vmatpush1.bf16.msra.mxu0 0
      %2672 = vmatprep.subr.bf16.mxu0 0
      %2673 = vmatpush1.bf16.msra.mxu0 0
      %2674 = vmatprep.subr.bf16.mxu0 0
      %2675 = vmatpush1.bf16.msra.mxu0 0
      %2676 = vmatprep.subr.bf16.mxu0 0
      %2677 = vmatpush1.bf16.msra.mxu0 0
      %2678 = vmatprep.mubr.bf16.mxu0 0
      %2679 = vmatmul.mubr.bf16.gmra.mrb[0].mxu0 %v2512
      %v2680 = vpop.f32.mrb[0].mxu0
      %v2681 = vadd.f32 %v2395, %v2680
      %v2682 = vpop.f32.mrb[0].mxu0
      %v2683 = vadd.f32 %v2397, %v2682
      %v2684 = vpop.f32.mrb[0].mxu0
      %v2685 = vadd.f32 %v2399, %v2684
      %v2686 = vpop.f32.mrb[0].mxu0
      %v2687 = vadd.f32 %v2401, %v2686
      %2688 = vmatprep.mubr.bf16.mxu0 0
      %2689 = vmatmul.mubr.bf16.gmra.mrb[0].mxu0 %v2515
      %v2690 = vpop.f32.mrb[0].mxu0
      %v2691 = vadd.f32 %v2405, %v2690
      %v2692 = vpop.f32.mrb[0].mxu0
      %v2693 = vadd.f32 %v2407, %v2692
      %v2694 = vpop.f32.mrb[0].mxu0
      %v2695 = vpop.f32.mrb[0].mxu0
      %2696 = vdwg.mxu0
      %2697 = vmatprep.subr.bf16.mxu0 %v1472
      %2698 = vmatpush1.bf16.msra.mxu0 %v1471
      %2699 = vmatprep.subr.bf16.mxu0 %v1917
      %2700 = vmatpush1.bf16.msra.mxu0 %v1913
      %2701 = vmatprep.subr.bf16.mxu0 %v1953
      %2702 = vmatpush1.bf16.msra.mxu0 %v1949
      %2703 = vmatprep.subr.bf16.mxu0 %v1989
      %2704 = vmatpush1.bf16.msra.mxu0 %v1985
      %2705 = vmatprep.subr.bf16.mxu0 %v1751
      %2706 = vmatpush1.bf16.msra.mxu0 %v1750
      %2707 = vmatprep.subr.bf16.mxu0 %v1809
      %2708 = vmatpush1.bf16.msra.mxu0 %v1808
      %2709 = vmatprep.subr.bf16.mxu0 %v2025
      %2710 = vmatpush1.bf16.msra.mxu0 %v2021
      %2711 = vmatprep.subr.bf16.mxu0 %v2539
      %2712 = vmatpush1.bf16.msra.mxu0 %v2536
      %2713 = vmatprep.subr.bf16.mxu0 0
      %2714 = vmatpush1.bf16.msra.mxu0 0
      %2715 = vmatprep.subr.bf16.mxu0 0
      %2716 = vmatpush1.bf16.msra.mxu0 0
      %2717 = vmatprep.subr.bf16.mxu0 0
      %2718 = vmatpush1.bf16.msra.mxu0 0
      %2719 = vmatprep.subr.bf16.mxu0 0
      %2720 = vmatpush1.bf16.msra.mxu0 0
      %2721 = vmatprep.subr.bf16.mxu0 0
      %2722 = vmatpush1.bf16.msra.mxu0 0
      %2723 = vmatprep.subr.bf16.mxu0 0
      %2724 = vmatpush1.bf16.msra.mxu0 0
      %2725 = vmatprep.subr.bf16.mxu0 0
      %2726 = vmatpush1.bf16.msra.mxu0 0
      %2727 = vmatprep.subr.bf16.mxu0 0
      %2728 = vmatpush1.bf16.msra.mxu0 0
      %2729 = vmatprep.mubr.bf16.mxu0 0
      %2730 = vmatmul.mubr.bf16.gmra.mrb[0].mxu0 %v2512
      %v2731 = vpop.f32.mrb[0].mxu0
      %v2732 = vadd.f32 %v2446, %v2731
      %v2733 = vpop.f32.mrb[0].mxu0
      %v2734 = vadd.f32 %v2448, %v2733
      %v2735 = vpop.f32.mrb[0].mxu0
      %v2736 = vadd.f32 %v2450, %v2735
      %v2737 = vpop.f32.mrb[0].mxu0
      %v2738 = vadd.f32 %v2452, %v2737
      %2739 = vmatprep.mubr.bf16.mxu0 0
      %2740 = vmatmul.mubr.bf16.gmra.mrb[0].mxu0 %v2515
      %v2741 = vpop.f32.mrb[0].mxu0
      %v2742 = vadd.f32 %v2456, %v2741
      %v2743 = vpop.f32.mrb[0].mxu0
      %v2744 = vadd.f32 %v2458, %v2743
      %v2745 = vpop.f32.mrb[0].mxu0
      %v2746 = vpop.f32.mrb[0].mxu0
      %2747 = vdwg.mxu0
      %2748 = vmatprep.subr.bf16.mxu0 0
      %2749 = vmatpush1.bf16.msra.mxu0 %v1473
      %2750 = vmatprep.subr.bf16.mxu0 0
      %2751 = vmatpush1.bf16.msra.mxu0 %v1921
      %2752 = vmatprep.subr.bf16.mxu0 0
      %2753 = vmatpush1.bf16.msra.mxu0 %v1957
      %2754 = vmatprep.subr.bf16.mxu0 0
      %2755 = vmatpush1.bf16.msra.mxu0 %v1993
      %2756 = vmatprep.subr.bf16.mxu0 0
      %2757 = vmatpush1.bf16.msra.mxu0 %v1752
      %2758 = vmatprep.subr.bf16.mxu0 0
      %2759 = vmatpush1.bf16.msra.mxu0 %v1810
      %2760 = vmatprep.subr.bf16.mxu0 0
      %2761 = vmatpush1.bf16.msra.mxu0 %v2029
      %2762 = vmatprep.subr.bf16.mxu0 0
      %2763 = vmatpush1.bf16.msra.mxu0 %v2542
      %2764 = vmatprep.subr.bf16.mxu0 0
      %2765 = vmatpush1.bf16.msra.mxu0 0
      %2766 = vmatprep.subr.bf16.mxu0 0
      %2767 = vmatpush1.bf16.msra.mxu0 0
      %2768 = vmatprep.subr.bf16.mxu0 0
      %2769 = vmatpush1.bf16.msra.mxu0 0
      %2770 = vmatprep.subr.bf16.mxu0 0
      %2771 = vmatpush1.bf16.msra.mxu0 0
      %2772 = vmatprep.subr.bf16.mxu0 0
      %2773 = vmatpush1.bf16.msra.mxu0 0
      %2774 = vmatprep.subr.bf16.mxu0 0
      %2775 = vmatpush1.bf16.msra.mxu0 0
      %2776 = vmatprep.subr.bf16.mxu0 0
      %2777 = vmatpush1.bf16.msra.mxu0 0
      %2778 = vmatprep.subr.bf16.mxu0 0
      %2779 = vmatpush1.bf16.msra.mxu0 0
      %2780 = vmatprep.mubr.bf16.mxu0 0
      %2781 = vmatmul.mubr.bf16.gmra.mrb[0].mxu0 %v2512
      %v2782 = vpop.f32.mrb[0].mxu0
      %v2783 = vadd.f32 %v2497, %v2782
      %v2784 = vpop.f32.mrb[0].mxu0
      %v2785 = vpop.f32.mrb[0].mxu0
      %v2786 = vadd.f32 %v2500, %v2785
      %v2787 = vpop.f32.mrb[0].mxu0
      %2788 = vmatprep.mubr.bf16.mxu0 0
      %2789 = vmatmul.mubr.bf16.gmra.mrb[0].mxu0 %v2515
      %v2790 = vpop.f32.mrb[0].mxu0
      %v2791 = vadd.f32 %v2505, %v2790
      %v2792 = vpop.f32.mrb[0].mxu0
      %v2793 = vpop.f32.mrb[0].mxu0
      %v2794 = vpop.f32.mrb[0].mxu0
      %2795 = vdwg.mxu0
      %2797 = vset.pattern.permute.xlu0 0
      %2798 = vperm.xlu0 %2797, %v1420
      %v2799 = vpop.permute.xlu0 %2798
      %2802 = vset.pattern.permute.xlu0 0
      %2803 = vperm.xlu0 %2802, %v1421
      %v2804 = vpop.permute.xlu0 %2803
      %2807 = vset.pattern.permute.xlu0 0
      %2808 = vperm.xlu0 %2807, %v1422
      %v2809 = vpop.permute.xlu0 %2808
      %v2811 = vadd.f32 %v2579, %v2799
      %v2812 = vadd.f32 %v2581, %v2799
      %v2813 = vadd.f32 %v2630, %v2799
      %v2814 = vadd.f32 %v2632, %v2799
      %v2815 = vadd.f32 %v2681, %v2799
      %v2816 = vadd.f32 %v2683, %v2799
      %v2817 = vadd.f32 %v2732, %v2799
      %v2818 = vadd.f32 %v2734, %v2799
      %v2819 = vadd.f32 %v2783, %v2799
      %v2820 = vadd.f32 %v2583, %v2804
      %v2821 = vadd.f32 %v2585, %v2804
      %v2822 = vadd.f32 %v2634, %v2804
      %v2823 = vadd.f32 %v2636, %v2804
      %v2824 = vadd.f32 %v2685, %v2804
      %v2825 = vadd.f32 %v2687, %v2804
      %v2826 = vadd.f32 %v2736, %v2804
      %v2827 = vadd.f32 %v2738, %v2804
      %v2828 = vadd.f32 %v2786, %v2804
      %v2829 = vadd.f32 %v2589, %v2809
      %v2830 = vadd.f32 %v2591, %v2809
      %v2831 = vadd.f32 %v2640, %v2809
      %v2832 = vadd.f32 %v2642, %v2809
      %v2833 = vadd.f32 %v2691, %v2809
      %v2834 = vadd.f32 %v2693, %v2809
      %v2835 = vadd.f32 %v2742, %v2809
      %v2836 = vadd.f32 %v2744, %v2809
      %v2837 = vadd.f32 %v2791, %v2809
      %vm2838 = vcmp.ge.f32.partialorder %v2811, 0.0
      %vm2839 = vcmp.ge.f32.partialorder %v2812, 0.0
      %vm2840 = vcmp.ge.f32.partialorder %v2813, 0.0
      %vm2841 = vcmp.ge.f32.partialorder %v2814, 0.0
      %vm2842 = vcmp.ge.f32.partialorder %v2815, 0.0
      %vm2843 = vcmp.ge.f32.partialorder %v2816, 0.0
      %vm2844 = vcmp.ge.f32.partialorder %v2817, 0.0
      %vm2845 = vcmp.ge.f32.partialorder %v2818, 0.0
      %vm2846 = vcmp.ge.f32.partialorder %v2819, 0.0
      %vm2847 = vcmp.ge.f32.partialorder %v2820, 0.0
      %vm2848 = vcmp.ge.f32.partialorder %v2821, 0.0
      %vm2849 = vcmp.ge.f32.partialorder %v2822, 0.0
      %vm2850 = vcmp.ge.f32.partialorder %v2823, 0.0
      %vm2851 = vcmp.ge.f32.partialorder %v2824, 0.0
      %vm2852 = vcmp.ge.f32.partialorder %v2825, 0.0
      %vm2853 = vcmp.ge.f32.partialorder %v2826, 0.0
      %vm2854 = vcmp.ge.f32.partialorder %v2827, 0.0
      %vm2855 = vcmp.ge.f32.partialorder %v2828, 0.0
      %vm2856 = vcmp.ge.f32.partialorder %v2829, 0.0
      %vm2857 = vcmp.ge.f32.partialorder %v2830, 0.0
      %vm2858 = vcmp.ge.f32.partialorder %v2831, 0.0
      %vm2859 = vcmp.ge.f32.partialorder %v2832, 0.0
      %vm2860 = vcmp.ge.f32.partialorder %v2833, 0.0
      %vm2861 = vcmp.ge.f32.partialorder %v2834, 0.0
      %vm2862 = vcmp.ge.f32.partialorder %v2835, 0.0
      %vm2863 = vcmp.ge.f32.partialorder %v2836, 0.0
      %vm2864 = vcmp.ge.f32.partialorder %v2837, 0.0
      %v2865 = vmul.f32 %v2811, 0.2
      %v2866 = vmul.f32 %v2812, 0.2
      %v2867 = vmul.f32 %v2813, 0.2
      %v2868 = vmul.f32 %v2814, 0.2
      %v2869 = vmul.f32 %v2815, 0.2
      %v2870 = vmul.f32 %v2816, 0.2
      %v2871 = vmul.f32 %v2817, 0.2
      %v2872 = vmul.f32 %v2818, 0.2
      %v2873 = vmul.f32 %v2819, 0.2
      %v2874 = vmul.f32 %v2820, 0.2
      %v2875 = vmul.f32 %v2821, 0.2
      %v2876 = vmul.f32 %v2822, 0.2
      %v2877 = vmul.f32 %v2823, 0.2
      %v2878 = vmul.f32 %v2824, 0.2
      %v2879 = vmul.f32 %v2825, 0.2
      %v2880 = vmul.f32 %v2826, 0.2
      %v2881 = vmul.f32 %v2827, 0.2
      %v2882 = vmul.f32 %v2828, 0.2
      %v2883 = vmul.f32 %v2829, 0.2
      %v2884 = vmul.f32 %v2830, 0.2
      %v2885 = vmul.f32 %v2831, 0.2
      %v2886 = vmul.f32 %v2832, 0.2
      %v2887 = vmul.f32 %v2833, 0.2
      %v2888 = vmul.f32 %v2834, 0.2
      %v2889 = vmul.f32 %v2835, 0.2
      %v2890 = vmul.f32 %v2836, 0.2
      %v2891 = vmul.f32 %v2837, 0.2
      %v2892 = vsel %vm2838, %v2811, %v2865
      %v2893 = vsel %vm2839, %v2812, %v2866
      %v2894 = vsel %vm2840, %v2813, %v2867
      %v2895 = vsel %vm2841, %v2814, %v2868
      %v2896 = vsel %vm2842, %v2815, %v2869
      %v2897 = vsel %vm2843, %v2816, %v2870
      %v2898 = vsel %vm2844, %v2817, %v2871
      %v2899 = vsel %vm2845, %v2818, %v2872
      %v2900 = vsel %vm2846, %v2819, %v2873
      %v2901 = vsel %vm2847, %v2820, %v2874
      %v2902 = vsel %vm2848, %v2821, %v2875
      %v2903 = vsel %vm2849, %v2822, %v2876
      %v2904 = vsel %vm2850, %v2823, %v2877
      %v2905 = vsel %vm2851, %v2824, %v2878
      %v2906 = vsel %vm2852, %v2825, %v2879
      %v2907 = vsel %vm2853, %v2826, %v2880
      %v2908 = vsel %vm2854, %v2827, %v2881
      %v2909 = vsel %vm2855, %v2828, %v2882
      %v2910 = vsel %vm2856, %v2829, %v2883
      %v2911 = vsel %vm2857, %v2830, %v2884
      %v2912 = vsel %vm2858, %v2831, %v2885
      %v2913 = vsel %vm2859, %v2832, %v2886
      %v2914 = vsel %vm2860, %v2833, %v2887
      %v2915 = vsel %vm2861, %v2834, %v2888
      %v2916 = vsel %vm2862, %v2835, %v2889
      %v2917 = vsel %vm2863, %v2836, %v2890
      %v2918 = vsel %vm2864, %v2837, %v2891
      %v2919 = vmul.f32 %v2892, %v1126
      %v2920 = vmul.f32 %v2893, %v1130
      %v2921 = vmul.f32 %v2894, %v1134
      %v2922 = vmul.f32 %v2895, %v1138
      %v2923 = vmul.f32 %v2896, %v1142
      %v2924 = vmul.f32 %v2897, %v1146
      %v2925 = vmul.f32 %v2898, %v1150
      %v2926 = vmul.f32 %v2899, %v1154
      %v2927 = vmul.f32 %v2900, %v1158
      %v2928 = vmul.f32 %v2901, %v1126
      %v2929 = vmul.f32 %v2902, %v1130
      %v2930 = vmul.f32 %v2903, %v1134
      %v2931 = vmul.f32 %v2904, %v1138
      %v2932 = vmul.f32 %v2905, %v1142
      %v2933 = vmul.f32 %v2906, %v1146
      %v2934 = vmul.f32 %v2907, %v1150
      %v2935 = vmul.f32 %v2908, %v1154
      %v2936 = vmul.f32 %v2909, %v1158
      %v2937 = vmul.f32 %v2910, %v1126
      %v2938 = vmul.f32 %v2911, %v1130
      %v2939 = vmul.f32 %v2912, %v1134
      %v2940 = vmul.f32 %v2913, %v1138
      %v2941 = vmul.f32 %v2914, %v1142
      %v2942 = vmul.f32 %v2915, %v1146
      %v2943 = vmul.f32 %v2916, %v1150
      %v2944 = vmul.f32 %v2917, %v1154
      %v2945 = vmul.f32 %v2918, %v1158
      %2946 = vst [vmem:[%s251] sm:$0xff] 0
      %2947 = vst [vmem:[%s251 + $0x8] sm:$0xff] 0
      %2948 = vst [vmem:[%s251 + $0x10] sm:$0xff] 0
      %2949 = vst [vmem:[%s251 + $0x18] sm:$0xff] 0
      %2950 = vst [vmem:[%s251 + $0x20] sm:$0xff] 0
      %2951 = vst [vmem:[%s251 + $0x28] sm:$0xff] 0
      %2952 = vst [vmem:[%s251 + $0x30] sm:$0xff] 0
      %2953 = vst [vmem:[%s251 + $0x38] sm:$0xff] 0
      %2954 = vst [vmem:[%s251 + $0x40] sm:$0xff] 0
      %2955 = vst [vmem:[%s251 + $0x48] sm:$0xff] 0
      %2956 = vst [vmem:[%s251 + $0x50] sm:$0x33] 0
      %2957 = vst [vmem:[%s251 + $0x58] sm:$0x33] 0
      %2958 = vst [vmem:[%s251 + $0x60] sm:$0x33] 0
      %2959 = vst [vmem:[%s251 + $0x68] sm:$0x33] 0
      %2960 = vst [vmem:[%s251 + $0x70] sm:$0x33] 0
      %v2961 = vpack.c.bf16 %v2928, %v2919
      %v2962 = vpack.c.bf16 %v2929, %v2920
      %v2963 = vpack.c.bf16 %v2930, %v2921
      %v2964 = vpack.c.bf16 %v2931, %v2922
      %v2965 = vpack.c.bf16 %v2932, %v2923
      %v2966 = vpack.c.bf16 %v2933, %v2924
      %v2967 = vpack.c.bf16 %v2934, %v2925
      %v2968 = vpack.c.bf16 %v2935, %v2926
      %v2969 = vpack.c.bf16 %v2936, %v2927
      %v2970 = vpack.c.bf16 %v2937, %v2937
      %v2971 = vpack.c.bf16 %v2938, %v2938
      %v2972 = vpack.c.bf16 %v2939, %v2939
      %v2973 = vpack.c.bf16 %v2940, %v2940
      %v2974 = vpack.c.bf16 %v2941, %v2941
      %v2975 = vpack.c.bf16 %v2942, %v2942
      %v2976 = vpack.c.bf16 %v2943, %v2943
      %v2977 = vpack.c.bf16 %v2944, %v2944
      %v2978 = vpack.c.bf16 %v2945, %v2945
      %v2997 = vunpack.c.l.b16 %v2961
      %v2998 = vunpack.c.l.b16 %v2962
      %v2999 = vunpack.c.l.b16 %v2963
      %v3000 = vunpack.c.l.b16 %v2964
      %v3001 = vunpack.c.l.b16 %v2965
      %v3002 = vunpack.c.l.b16 %v2966
      %v3003 = vunpack.c.l.b16 %v2967
      %v3004 = vunpack.c.l.b16 %v2968
      %v3005 = vunpack.c.l.b16 %v2969
      %v3006 = vunpack.c.h.b16 %v2961
      %v3007 = vunpack.c.h.b16 %v2962
      %v3008 = vunpack.c.h.b16 %v2963
      %v3009 = vunpack.c.h.b16 %v2964
      %v3010 = vunpack.c.h.b16 %v2965
      %v3011 = vunpack.c.h.b16 %v2966
      %v3012 = vunpack.c.h.b16 %v2967
      %v3013 = vunpack.c.h.b16 %v2968
      %v3014 = vunpack.c.h.b16 %v2969
      %v3015 = vunpack.c.l.b16 %v2970
      %v3016 = vunpack.c.l.b16 %v2971
      %v3017 = vunpack.c.l.b16 %v2972
      %v3018 = vunpack.c.l.b16 %v2973
      %v3019 = vunpack.c.l.b16 %v2974
      %v3020 = vunpack.c.l.b16 %v2975
      %v3021 = vunpack.c.l.b16 %v2976
      %v3022 = vunpack.c.l.b16 %v2977
      %v3023 = vunpack.c.l.b16 %v2978
      %v3024 = vpack.c.b16 %v2998, %v2997
      %v3025 = vpack.c.b16 %v3000, %v2999
      %v3026 = vpack.c.b16 %v3002, %v3001
      %v3027 = vpack.c.b16 %v3004, %v3003
      %v3028 = vpack.c.b16 %v3005, %v3005
      %v3029 = vpack.c.b16 %v3007, %v3006
      %v3030 = vpack.c.b16 %v3009, %v3008
      %v3031 = vpack.c.b16 %v3011, %v3010
      %v3032 = vpack.c.b16 %v3013, %v3012
      %v3033 = vpack.c.b16 %v3014, %v3014
      %v3034 = vpack.c.b16 %v3016, %v3015
      %v3035 = vpack.c.b16 %v3018, %v3017
      %v3036 = vpack.c.b16 %v3020, %v3019
      %v3037 = vpack.c.b16 %v3022, %v3021
      %v3038 = vpack.c.b16 %v3023, %v3023
      %3039 = vrot.lane.b32.xlu0 %v3024, 35
      %v3040 = vpop.permute.xlu0 %3039
      %3041 = vrot.lane.b32.xlu0 %v3025, 35
      %v3042 = vpop.permute.xlu0 %3041
      %3043 = vrot.lane.b32.xlu0 %v3026, 35
      %v3044 = vpop.permute.xlu0 %3043
      %3045 = vrot.lane.b32.xlu0 %v3027, 35
      %v3046 = vpop.permute.xlu0 %3045
      %3047 = vrot.lane.b32.xlu0 %v3028, 35
      %v3048 = vpop.permute.xlu0 %3047
      %3049 = vrot.lane.b32.xlu0 %v3029, 35
      %v3050 = vpop.permute.xlu0 %3049
      %3051 = vrot.lane.b32.xlu0 %v3030, 35
      %v3052 = vpop.permute.xlu0 %3051
      %3053 = vrot.lane.b32.xlu0 %v3031, 35
      %v3054 = vpop.permute.xlu0 %3053
      %3055 = vrot.lane.b32.xlu0 %v3032, 35
      %v3056 = vpop.permute.xlu0 %3055
      %3057 = vrot.lane.b32.xlu0 %v3033, 35
      %v3058 = vpop.permute.xlu0 %3057
      %3059 = vrot.lane.b32.xlu0 %v3034, 35
      %v3060 = vpop.permute.xlu0 %3059
      %3061 = vrot.lane.b32.xlu0 %v3035, 35
      %v3062 = vpop.permute.xlu0 %3061
      %3063 = vrot.lane.b32.xlu0 %v3036, 35
      %v3064 = vpop.permute.xlu0 %3063
      %3065 = vrot.lane.b32.xlu0 %v3037, 35
      %v3066 = vpop.permute.xlu0 %3065
      %3067 = vrot.lane.b32.xlu0 %v3038, 35
      %v3068 = vpop.permute.xlu0 %3067
      %v3069 = vrot.slane %v3040, 4
      %v3070 = vrot.slane %v3042, 4
      %v3071 = vrot.slane %v3044, 4
      %v3072 = vrot.slane %v3046, 4
      %v3073 = vrot.slane %v3048, 4
      %v3074 = vrot.slane %v3050, 4
      %v3075 = vrot.slane %v3052, 4
      %v3076 = vrot.slane %v3054, 4
      %v3077 = vrot.slane %v3056, 4
      %v3078 = vrot.slane %v3058, 4
      %v3079 = vrot.slane %v3060, 4
      %v3080 = vrot.slane %v3062, 4
      %v3081 = vrot.slane %v3064, 4
      %v3082 = vrot.slane %v3066, 4
      %v3083 = vrot.slane %v3068, 4
      %v3084 = vsel %vm1333, %v3069, %v3040
      %v3085 = vsel %vm1335, %v3069, %v3070
      %v3086 = vsel %vm1333, %v3085, %v3042
      %v3087 = vsel %vm1335, %v3070, %v3071
      %v3088 = vsel %vm1333, %v3087, %v3044
      %v3089 = vsel %vm1335, %v3071, %v3072
      %v3090 = vsel %vm1333, %v3089, %v3046
      %v3091 = vsel %vm1335, %v3072, %v3073
      %v3092 = vsel %vm1333, %v3091, %v3048
      %v3093 = vsel %vm1333, %v3074, %v3050
      %v3094 = vsel %vm1335, %v3074, %v3075
      %v3095 = vsel %vm1333, %v3094, %v3052
      %v3096 = vsel %vm1335, %v3075, %v3076
      %v3097 = vsel %vm1333, %v3096, %v3054
      %v3098 = vsel %vm1335, %v3076, %v3077
      %v3099 = vsel %vm1333, %v3098, %v3056
      %v3100 = vsel %vm1335, %v3077, %v3078
      %v3101 = vsel %vm1333, %v3100, %v3058
      %v3102 = vsel %vm1333, %v3079, %v3060
      %v3103 = vsel %vm1335, %v3079, %v3080
      %v3104 = vsel %vm1333, %v3103, %v3062
      %v3105 = vsel %vm1335, %v3080, %v3081
      %v3106 = vsel %vm1333, %v3105, %v3064
      %v3107 = vsel %vm1335, %v3081, %v3082
      %v3108 = vsel %vm1333, %v3107, %v3066
      %v3109 = vsel %vm1335, %v3082, %v3083
      %v3110 = vsel %vm1333, %v3109, %v3068
      %3126 = vst.msk [vmem:[%s251] sm:$0xff] %vm1379, %v3084
      %3127 = vst [vmem:[%s251 + $0x8] sm:$0xff] %v3086
      %3128 = vst [vmem:[%s251 + $0x10] sm:$0xff] %v3088
      %3129 = vst [vmem:[%s251 + $0x18] sm:$0xff] %v3090
      %3130 = vst.msk [vmem:[%s251 + $0x20] sm:$0xff] %vm1385, %v3092
      %3131 = vst.msk [vmem:[%s251 + $0x28] sm:$0xff] %vm1379, %v3093
      %3132 = vst [vmem:[%s251 + $0x30] sm:$0xff] %v3095
      %3133 = vst [vmem:[%s251 + $0x38] sm:$0xff] %v3097
      %3134 = vst [vmem:[%s251 + $0x40] sm:$0xff] %v3099
      %3135 = vst.msk [vmem:[%s251 + $0x48] sm:$0xff] %vm1385, %v3101
      %3136 = vst.msk [vmem:[%s251 + $0x50] sm:$0x33] %vm1394, %v3102
      %3137 = vst [vmem:[%s251 + $0x58] sm:$0x33] %v3104
      %3138 = vst [vmem:[%s251 + $0x60] sm:$0x33] %v3106
      %3139 = vst [vmem:[%s251 + $0x68] sm:$0x33] %v3108
      %3140 = vst.msk [vmem:[%s251 + $0x70] sm:$0x33] %vm1400, %v3110
      %p3141 = scmp.lt.s32.totalorder %s17, 1
      %s3142 = scalar_select %p3141, %s17, 1
      %s3143 = smul.addr %s3142, 30
      %s3144 = smul.addr %s3143, 4
      %s3145 = scalar_lea.vmem %s6, %s3144
      // Predicated region
      $region45: #{refine_net_forward.3} parent=43 // pred_check
        %p3146 = pneg %p166
      $region46: #{refine_net_forward.3} parent=43 // pred_check_branch
        %3148 = sbr.rel (%p3146) target = $region48
      $region47: #{refine_net_forward.3} parent=43 // pred_region
        _
      $region48: #{refine_net_forward.3} parent=43 // pred_fallthru
        _
    $region44: #{refine_net_forward.3} parent=5 // pred_fallthru
      _
    %p3149 = scmp.le.s32.totalorder 2, %s12
    // Predicated region
    $region49: #{refine_net_forward.3} parent=5 // pred_check
      %p3150 = pneg %p3149
    $region50: #{refine_net_forward.3} parent=5 // pred_check_branch
      %3152 = sbr.rel (%p3150) target = $region52
    $region51: #{refine_net_forward.3} parent=5 // pred_region
      %s3153 = ssub.s32 %s12, 2
      // Predicated region
      $region53: #{refine_net_forward.3} parent=51 // pred_check
        %p3154 = pneg %p172
      $region54: #{refine_net_forward.3} parent=51 // pred_check_branch
        %3156 = sbr.rel (%p3154) target = $region56
      $region55: #{refine_net_forward.3} parent=51 // pred_region
        %p3157 = scmp.lt.s32.totalorder %s18, 1
        %s3158 = scalar_select %p3157, %s18, 1
        %s3159 = smul.addr %s3158, 30
        %s3160 = smul.addr %s3159, 4
        %s3161 = scalar_lea.vmem %s6, %s3160
      $region56: #{refine_net_forward.3} parent=51 // pred_fallthru
        _
    $region52: #{refine_net_forward.3} parent=5 // pred_fallthru
      _
  $region6: #{refine_net_forward.3} parent=0 // loop_footer
    %s16 = sadd.s32 1, %s12
  $region7: #{refine_net_forward.3} parent=0 // loop_footer_branch
    %11 = sbr.rel target = $region3
  $region8: #{refine_net_forward.3} parent=0 // loop_exit
    _

// kernel: refine_net_forward.4
$region0: #{refine_net_forward.4}
  #allocation0 [shape = 'u32[]', space=smem, size = 0x4, offset = 0x4, fixed_abs, tag = 'smem constant byte address 0x4 - core index']
  #allocation1 [shape = 'u32[144,128]{1,0:T(1,128)}', space=vmem, size = 0x12000, scoped, tag = 'internal scratch']
  #allocation2 [shape = 'f32[1,1]{1,0:T(1,128)S(1)}', space=vmem, size = 0x200, scoped, tag = 'scoped memory for refine_net_forward.4']
  #allocation3 [shape = 'f32[1,1]{1,0:T(1,128)S(1)}', space=vmem, size = 0x200, scoped, tag = 'scoped memory for refine_net_forward.4']
  #allocation4 [shape = 'f32[1,1]{1,0:T(1,128)S(1)}', space=vmem, size = 0x200, scoped, tag = 'scoped memory for refine_net_forward.4']
  #allocation5 [shape = 'f32[1,1]{1,0:T(1,128)S(1)}', space=vmem, size = 0x200, scoped, tag = 'scoped memory for refine_net_forward.4']
  %s0 = inlined_call_operand.vmem [shape: bf16[2,20,256], index: 0, kind: input, shape index: {}]
  %s1 = inlined_call_operand.vmem [shape: bf16[2,20,256], index: 1, kind: input, shape index: {}]
  %s2 = inlined_call_operand.vmem [shape: bf16[2,20,256], index: 2, kind: input, shape index: {}]
  %s3 = inlined_call_operand.vmem [shape: bf16[2,20,256], index: 3, kind: input, shape index: {}]
  %s4 = inlined_call_operand.vmem [shape: bf16[1,180], index: 4, kind: input, shape index: {}]
  %s5 = inlined_call_operand.vmem [shape: bf16[1,180], index: 5, kind: input, shape index: {}]
  %s6 = inlined_call_operand.vmem [shape: bf16[1,180], index: 6, kind: input, shape index: {}]
  %s7 = inlined_call_operand.vmem [shape: bf16[1,180], index: 7, kind: input, shape index: {}]
  %s8 = inlined_call_operand.<no memory space> [shape: f32[1,1], index: 8, kind: input, shape index: {}]
  %s9 = inlined_call_operand.<no memory space> [shape: f32[1,1], index: 9, kind: input, shape index: {}]
  %s10 = inlined_call_operand.<no memory space> [shape: f32[1,1], index: 10, kind: input, shape index: {}]
  %s11 = inlined_call_operand.<no memory space> [shape: f32[1,1], index: 11, kind: input, shape index: {}]
  %s12 = inlined_call_operand.vmem [shape: bf16[2,1,512], index: 12, kind: output, shape index: {}]
  %s13 = sld [smem:[#allocation0]]
  $region81: #{refine_net_forward.4} parent=0
    _
  %s15 = ssub.s32 1, %s13
  %s16 = scalar_select 0, %s15, %s13
  %v17 = vstv %s8
  %18 = vst [vmem:[#allocation2] sm:$0x1] %v17
  %v19 = vstv %s9
  %20 = vst [vmem:[#allocation3] sm:$0x1] %v19
  %v21 = vstv %s10
  %22 = vst [vmem:[#allocation4] sm:$0x1] %v21
  %v23 = vstv %s11
  %24 = vst [vmem:[#allocation5] sm:$0x1] %v23
  loop: start=0, step=1, limit=4
  $region2: #{refine_net_forward.4} parent=0 // loop_pre_header
    _
  $region3: #{refine_net_forward.4} parent=0 // loop_header
    %s26 = sphi 0, %s30
    %p27 = scmp.ge.s32.totalorder %s26, 4
    %s36 = sphi 0, %s38
    %s39 = sphi 0, %s36
    %s40 = sphi 0, %s39
    %s56 = sphi 0, %s40
    %s62 = sphi 0, %s64
    %s65 = sphi 0, %s62
    %s66 = sphi 0, %s65
    %s82 = sphi 0, %s66
    %s88 = sphi 0, %s90
    %s91 = sphi 0, %s88
    %s92 = sphi 0, %s91
    %s108 = sphi 0, %s92
    %s114 = sphi 0, %s116
    %s117 = sphi 0, %s114
    %s118 = sphi 0, %s117
    %s134 = sphi 0, %s118
    %s138 = sphi 0, %s138
    %s140 = sphi 0, %s138
    %s141 = sphi 0, %s140
    %s155 = sphi 0, %s141
    %s159 = sphi 0, %s159
    %s161 = sphi 0, %s159
    %s162 = sphi 0, %s161
    %s176 = sphi 0, %s162
    %s180 = sphi 0, %s180
    %s182 = sphi 0, %s180
    %s183 = sphi 0, %s182
    %s197 = sphi 0, %s183
    %s201 = sphi 0, %s201
    %s203 = sphi 0, %s201
    %s204 = sphi 0, %s203
    %s218 = sphi 0, %s204
    %s222 = sphi 0, %s222
    %s224 = sphi 0, %s222
    %s225 = sphi 0, %s224
    %s239 = sphi 0, %s225
    %s243 = sphi 0, %s243
    %s245 = sphi 0, %s243
    %s246 = sphi 0, %s245
    %s260 = sphi 0, %s246
    %s264 = sphi 0, %s264
    %s266 = sphi 0, %s264
    %s267 = sphi 0, %s266
    %s281 = sphi 0, %s267
    %s285 = sphi 0, %s285
    %s287 = sphi 0, %s285
    %s288 = sphi 0, %s287
    %s302 = sphi 0, %s288
    %s308 = sphi 0, %s310
    %s311 = sphi 0, %s308
    %s312 = sphi 0, %s311
    %s328 = sphi 0, %s312
  $region4: #{refine_net_forward.4} parent=0 // loop_header_branch
    %29 = sbr.rel (%p27) target = $region8
  $region5: #{refine_net_forward.4} parent=0 // loop_body
    %s31 = ssub.s32 %s26, 1
    %s32 = ssub.s32 %s26, 2
    %s33 = sadd.s32 %s26, 1
    %s34 = ssub.s32 %s26, %s33
    %p35 = scmp.eq.s32.totalorder %s34, 0
    %s37 = sadd.s32 %s36, 1
    %s38 = scalar_select %p35, %s36, %s37
    %p41 = pneg %p35
    %p42 = scmp.eq.s32.totalorder %s26, 1
    %p43 = por %p41, %p42
    %p44 = scmp.ne.s32.totalorder %s36, %s39
    %p45 = scmp.eq.s32.totalorder %s26, 0
    %p46 = por %p44, %p45
    %p47 = scmp.ne.s32.totalorder %s36, %s39
    %p48 = scmp.eq.s32.totalorder %s31, 1
    %p49 = por %p47, %p48
    %p50 = scmp.ne.s32.totalorder %s39, %s40
    %p51 = scmp.eq.s32.totalorder %s31, 0
    %p52 = por %p50, %p51
    %p53 = scmp.ne.s32.totalorder %s39, %s40
    %p54 = scmp.eq.s32.totalorder %s32, 1
    %p55 = por %p53, %p54
    %p57 = scmp.ne.s32.totalorder %s40, %s56
    %p58 = scmp.eq.s32.totalorder %s32, 0
    %p59 = por %p57, %p58
    %s60 = ssub.s32 %s26, %s33
    %p61 = scmp.eq.s32.totalorder %s60, 0
    %s63 = sadd.s32 %s62, 1
    %s64 = scalar_select %p61, %s62, %s63
    %p67 = pneg %p61
    %p68 = scmp.eq.s32.totalorder %s26, 1
    %p69 = por %p67, %p68
    %p70 = scmp.ne.s32.totalorder %s62, %s65
    %p71 = scmp.eq.s32.totalorder %s26, 0
    %p72 = por %p70, %p71
    %p73 = scmp.ne.s32.totalorder %s62, %s65
    %p74 = scmp.eq.s32.totalorder %s31, 1
    %p75 = por %p73, %p74
    %p76 = scmp.ne.s32.totalorder %s65, %s66
    %p77 = scmp.eq.s32.totalorder %s31, 0
    %p78 = por %p76, %p77
    %p79 = scmp.ne.s32.totalorder %s65, %s66
    %p80 = scmp.eq.s32.totalorder %s32, 1
    %p81 = por %p79, %p80
    %p83 = scmp.ne.s32.totalorder %s66, %s82
    %p84 = scmp.eq.s32.totalorder %s32, 0
    %p85 = por %p83, %p84
    %s86 = ssub.s32 %s26, %s33
    %p87 = scmp.eq.s32.totalorder %s86, 0
    %s89 = sadd.s32 %s88, 1
    %s90 = scalar_select %p87, %s88, %s89
    %p93 = pneg %p87
    %p94 = scmp.eq.s32.totalorder %s26, 1
    %p95 = por %p93, %p94
    %p96 = scmp.ne.s32.totalorder %s88, %s91
    %p97 = scmp.eq.s32.totalorder %s26, 0
    %p98 = por %p96, %p97
    %p99 = scmp.ne.s32.totalorder %s88, %s91
    %p100 = scmp.eq.s32.totalorder %s31, 1
    %p101 = por %p99, %p100
    %p102 = scmp.ne.s32.totalorder %s91, %s92
    %p103 = scmp.eq.s32.totalorder %s31, 0
    %p104 = por %p102, %p103
    %p105 = scmp.ne.s32.totalorder %s91, %s92
    %p106 = scmp.eq.s32.totalorder %s32, 1
    %p107 = por %p105, %p106
    %p109 = scmp.ne.s32.totalorder %s92, %s108
    %p110 = scmp.eq.s32.totalorder %s32, 0
    %p111 = por %p109, %p110
    %s112 = ssub.s32 %s26, %s33
    %p113 = scmp.eq.s32.totalorder %s112, 0
    %s115 = sadd.s32 %s114, 1
    %s116 = scalar_select %p113, %s114, %s115
    %p119 = pneg %p113
    %p120 = scmp.eq.s32.totalorder %s26, 1
    %p121 = por %p119, %p120
    %p122 = scmp.ne.s32.totalorder %s114, %s117
    %p123 = scmp.eq.s32.totalorder %s26, 0
    %p124 = por %p122, %p123
    %p125 = scmp.ne.s32.totalorder %s114, %s117
    %p126 = scmp.eq.s32.totalorder %s31, 1
    %p127 = por %p125, %p126
    %p128 = scmp.ne.s32.totalorder %s117, %s118
    %p129 = scmp.eq.s32.totalorder %s31, 0
    %p130 = por %p128, %p129
    %p131 = scmp.ne.s32.totalorder %s117, %s118
    %p132 = scmp.eq.s32.totalorder %s32, 1
    %p133 = por %p131, %p132
    %p135 = scmp.ne.s32.totalorder %s118, %s134
    %p136 = scmp.eq.s32.totalorder %s32, 0
    %p137 = por %p135, %p136
    %s139 = sadd.s32 %s138, 1
    %p142 = scmp.eq.s32.totalorder %s26, 1
    %p143 = scmp.ne.s32.totalorder %s138, %s140
    %p144 = scmp.eq.s32.totalorder %s26, 0
    %p145 = por %p143, %p144
    %p146 = scmp.ne.s32.totalorder %s138, %s140
    %p147 = scmp.eq.s32.totalorder %s31, 1
    %p148 = por %p146, %p147
    %p149 = scmp.ne.s32.totalorder %s140, %s141
    %p150 = scmp.eq.s32.totalorder %s31, 0
    %p151 = por %p149, %p150
    %p152 = scmp.ne.s32.totalorder %s140, %s141
    %p153 = scmp.eq.s32.totalorder %s32, 1
    %p154 = por %p152, %p153
    %p156 = scmp.ne.s32.totalorder %s141, %s155
    %p157 = scmp.eq.s32.totalorder %s32, 0
    %p158 = por %p156, %p157
    %s160 = sadd.s32 %s159, 1
    %p163 = scmp.eq.s32.totalorder %s26, 1
    %p164 = scmp.ne.s32.totalorder %s159, %s161
    %p165 = scmp.eq.s32.totalorder %s26, 0
    %p166 = por %p164, %p165
    %p167 = scmp.ne.s32.totalorder %s159, %s161
    %p168 = scmp.eq.s32.totalorder %s31, 1
    %p169 = por %p167, %p168
    %p170 = scmp.ne.s32.totalorder %s161, %s162
    %p171 = scmp.eq.s32.totalorder %s31, 0
    %p172 = por %p170, %p171
    %p173 = scmp.ne.s32.totalorder %s161, %s162
    %p174 = scmp.eq.s32.totalorder %s32, 1
    %p175 = por %p173, %p174
    %p177 = scmp.ne.s32.totalorder %s162, %s176
    %p178 = scmp.eq.s32.totalorder %s32, 0
    %p179 = por %p177, %p178
    %s181 = sadd.s32 %s180, 1
    %p184 = scmp.eq.s32.totalorder %s26, 1
    %p185 = scmp.ne.s32.totalorder %s180, %s182
    %p186 = scmp.eq.s32.totalorder %s26, 0
    %p187 = por %p185, %p186
    %p188 = scmp.ne.s32.totalorder %s180, %s182
    %p189 = scmp.eq.s32.totalorder %s31, 1
    %p190 = por %p188, %p189
    %p191 = scmp.ne.s32.totalorder %s182, %s183
    %p192 = scmp.eq.s32.totalorder %s31, 0
    %p193 = por %p191, %p192
    %p194 = scmp.ne.s32.totalorder %s182, %s183
    %p195 = scmp.eq.s32.totalorder %s32, 1
    %p196 = por %p194, %p195
    %p198 = scmp.ne.s32.totalorder %s183, %s197
    %p199 = scmp.eq.s32.totalorder %s32, 0
    %p200 = por %p198, %p199
    %s202 = sadd.s32 %s201, 1
    %p205 = scmp.eq.s32.totalorder %s26, 1
    %p206 = scmp.ne.s32.totalorder %s201, %s203
    %p207 = scmp.eq.s32.totalorder %s26, 0
    %p208 = por %p206, %p207
    %p209 = scmp.ne.s32.totalorder %s201, %s203
    %p210 = scmp.eq.s32.totalorder %s31, 1
    %p211 = por %p209, %p210
    %p212 = scmp.ne.s32.totalorder %s203, %s204
    %p213 = scmp.eq.s32.totalorder %s31, 0
    %p214 = por %p212, %p213
    %p215 = scmp.ne.s32.totalorder %s203, %s204
    %p216 = scmp.eq.s32.totalorder %s32, 1
    %p217 = por %p215, %p216
    %p219 = scmp.ne.s32.totalorder %s204, %s218
    %p220 = scmp.eq.s32.totalorder %s32, 0
    %p221 = por %p219, %p220
    %s223 = sadd.s32 %s222, 1
    %p226 = scmp.eq.s32.totalorder %s26, 1
    %p227 = scmp.ne.s32.totalorder %s222, %s224
    %p228 = scmp.eq.s32.totalorder %s26, 0
    %p229 = por %p227, %p228
    %p230 = scmp.ne.s32.totalorder %s222, %s224
    %p231 = scmp.eq.s32.totalorder %s31, 1
    %p232 = por %p230, %p231
    %p233 = scmp.ne.s32.totalorder %s224, %s225
    %p234 = scmp.eq.s32.totalorder %s31, 0
    %p235 = por %p233, %p234
    %p236 = scmp.ne.s32.totalorder %s224, %s225
    %p237 = scmp.eq.s32.totalorder %s32, 1
    %p238 = por %p236, %p237
    %p240 = scmp.ne.s32.totalorder %s225, %s239
    %p241 = scmp.eq.s32.totalorder %s32, 0
    %p242 = por %p240, %p241
    %s244 = sadd.s32 %s243, 1
    %p247 = scmp.eq.s32.totalorder %s26, 1
    %p248 = scmp.ne.s32.totalorder %s243, %s245
    %p249 = scmp.eq.s32.totalorder %s26, 0
    %p250 = por %p248, %p249
    %p251 = scmp.ne.s32.totalorder %s243, %s245
    %p252 = scmp.eq.s32.totalorder %s31, 1
    %p253 = por %p251, %p252
    %p254 = scmp.ne.s32.totalorder %s245, %s246
    %p255 = scmp.eq.s32.totalorder %s31, 0
    %p256 = por %p254, %p255
    %p257 = scmp.ne.s32.totalorder %s245, %s246
    %p258 = scmp.eq.s32.totalorder %s32, 1
    %p259 = por %p257, %p258
    %p261 = scmp.ne.s32.totalorder %s246, %s260
    %p262 = scmp.eq.s32.totalorder %s32, 0
    %p263 = por %p261, %p262
    %s265 = sadd.s32 %s264, 1
    %p268 = scmp.eq.s32.totalorder %s26, 1
    %p269 = scmp.ne.s32.totalorder %s264, %s266
    %p270 = scmp.eq.s32.totalorder %s26, 0
    %p271 = por %p269, %p270
    %p272 = scmp.ne.s32.totalorder %s264, %s266
    %p273 = scmp.eq.s32.totalorder %s31, 1
    %p274 = por %p272, %p273
    %p275 = scmp.ne.s32.totalorder %s266, %s267
    %p276 = scmp.eq.s32.totalorder %s31, 0
    %p277 = por %p275, %p276
    %p278 = scmp.ne.s32.totalorder %s266, %s267
    %p279 = scmp.eq.s32.totalorder %s32, 1
    %p280 = por %p278, %p279
    %p282 = scmp.ne.s32.totalorder %s267, %s281
    %p283 = scmp.eq.s32.totalorder %s32, 0
    %p284 = por %p282, %p283
    %s286 = sadd.s32 %s285, 1
    %p289 = scmp.eq.s32.totalorder %s26, 1
    %p290 = scmp.ne.s32.totalorder %s285, %s287
    %p291 = scmp.eq.s32.totalorder %s26, 0
    %p292 = por %p290, %p291
    %p293 = scmp.ne.s32.totalorder %s285, %s287
    %p294 = scmp.eq.s32.totalorder %s31, 1
    %p295 = por %p293, %p294
    %p296 = scmp.ne.s32.totalorder %s287, %s288
    %p297 = scmp.eq.s32.totalorder %s31, 0
    %p298 = por %p296, %p297
    %p299 = scmp.ne.s32.totalorder %s287, %s288
    %p300 = scmp.eq.s32.totalorder %s32, 1
    %p301 = por %p299, %p300
    %p303 = scmp.ne.s32.totalorder %s288, %s302
    %p304 = scmp.eq.s32.totalorder %s32, 0
    %p305 = por %p303, %p304
    %s306 = ssub.s32 %s26, %s33
    %p307 = scmp.eq.s32.totalorder %s306, 0
    %s309 = sadd.s32 %s308, 1
    %s310 = scalar_select %p307, %s308, %s309
    %p313 = pneg %p307
    %p314 = scmp.eq.s32.totalorder %s26, 1
    %p315 = por %p313, %p314
    %p316 = scmp.ne.s32.totalorder %s308, %s311
    %p317 = scmp.eq.s32.totalorder %s26, 0
    %p318 = por %p316, %p317
    %p319 = scmp.ne.s32.totalorder %s308, %s311
    %p320 = scmp.eq.s32.totalorder %s31, 1
    %p321 = por %p319, %p320
    %p322 = scmp.ne.s32.totalorder %s311, %s312
    %p323 = scmp.eq.s32.totalorder %s31, 0
    %p324 = por %p322, %p323
    %p325 = scmp.ne.s32.totalorder %s311, %s312
    %p326 = scmp.eq.s32.totalorder %s32, 1
    %p327 = por %p325, %p326
    %p329 = scmp.ne.s32.totalorder %s312, %s328
    %p330 = scmp.eq.s32.totalorder %s32, 0
    %p331 = por %p329, %p330
    %p332 = scmp.le.s32.totalorder 1, %s26
    %p333 = scmp.lt.s32.totalorder %s26, 3
    %p334 = pnand %p332, %p333
    %p335 = pneg %p334
    // Predicated region
    $region9: #{refine_net_forward.4} parent=5 // pred_check
      _
    $region10: #{refine_net_forward.4} parent=5 // pred_check_branch
      %337 = sbr.rel (%p334) target = $region12
    $region11: #{refine_net_forward.4} parent=5 // pred_region
      %s338 = ssub.s32 %s26, 1
      // Predicated region
      $region13: #{refine_net_forward.4} parent=11 // pred_check
        %p339 = pneg %p151
      $region14: #{refine_net_forward.4} parent=11 // pred_check_branch
        %341 = sbr.rel (%p339) target = $region16
      $region15: #{refine_net_forward.4} parent=11 // pred_region
        _
      $region16: #{refine_net_forward.4} parent=11 // pred_fallthru
        _
      // Predicated region
      $region17: #{refine_net_forward.4} parent=11 // pred_check
        %p342 = pneg %p172
      $region18: #{refine_net_forward.4} parent=11 // pred_check_branch
        %344 = sbr.rel (%p342) target = $region20
      $region19: #{refine_net_forward.4} parent=11 // pred_region
        _
      $region20: #{refine_net_forward.4} parent=11 // pred_fallthru
        _
      // Predicated region
      $region21: #{refine_net_forward.4} parent=11 // pred_check
        %p345 = pneg %p193
      $region22: #{refine_net_forward.4} parent=11 // pred_check_branch
        %347 = sbr.rel (%p345) target = $region24
      $region23: #{refine_net_forward.4} parent=11 // pred_region
        _
      $region24: #{refine_net_forward.4} parent=11 // pred_fallthru
        _
      // Predicated region
      $region25: #{refine_net_forward.4} parent=11 // pred_check
        %p348 = pneg %p214
      $region26: #{refine_net_forward.4} parent=11 // pred_check_branch
        %350 = sbr.rel (%p348) target = $region28
      $region27: #{refine_net_forward.4} parent=11 // pred_region
        _
      $region28: #{refine_net_forward.4} parent=11 // pred_fallthru
        _
      // Predicated region
      $region29: #{refine_net_forward.4} parent=11 // pred_check
        %p351 = pneg %p235
      $region30: #{refine_net_forward.4} parent=11 // pred_check_branch
        %353 = sbr.rel (%p351) target = $region32
      $region31: #{refine_net_forward.4} parent=11 // pred_region
        _
      $region32: #{refine_net_forward.4} parent=11 // pred_fallthru
        _
      // Predicated region
      $region33: #{refine_net_forward.4} parent=11 // pred_check
        %p354 = pneg %p256
      $region34: #{refine_net_forward.4} parent=11 // pred_check_branch
        %356 = sbr.rel (%p354) target = $region36
      $region35: #{refine_net_forward.4} parent=11 // pred_region
        _
      $region36: #{refine_net_forward.4} parent=11 // pred_fallthru
        _
      // Predicated region
      $region37: #{refine_net_forward.4} parent=11 // pred_check
        %p357 = pneg %p277
      $region38: #{refine_net_forward.4} parent=11 // pred_check_branch
        %359 = sbr.rel (%p357) target = $region40
      $region39: #{refine_net_forward.4} parent=11 // pred_region
        _
      $region40: #{refine_net_forward.4} parent=11 // pred_fallthru
        _
      // Predicated region
      $region41: #{refine_net_forward.4} parent=11 // pred_check
        %p360 = pneg %p298
      $region42: #{refine_net_forward.4} parent=11 // pred_check_branch
        %362 = sbr.rel (%p360) target = $region44
      $region43: #{refine_net_forward.4} parent=11 // pred_region
        _
      $region44: #{refine_net_forward.4} parent=11 // pred_fallthru
        _
    $region12: #{refine_net_forward.4} parent=5 // pred_fallthru
      _
    %p363 = scmp.lt.s32.totalorder %s26, 2
    // Predicated region
    $region45: #{refine_net_forward.4} parent=5 // pred_check
      %p364 = pneg %p363
    $region46: #{refine_net_forward.4} parent=5 // pred_check_branch
      %366 = sbr.rel (%p364) target = $region48
    $region47: #{refine_net_forward.4} parent=5 // pred_region
      // Predicated region
      $region49: #{refine_net_forward.4} parent=47 // pred_check
        %p367 = pneg %p46
      $region50: #{refine_net_forward.4} parent=47 // pred_check_branch
        %369 = sbr.rel (%p367) target = $region52
      $region51: #{refine_net_forward.4} parent=47 // pred_region
        %p370 = scmp.lt.s32.totalorder %s26, 1
        %s371 = scalar_select %p370, %s26, 1
        %s372 = smul.addr %s371, 6
        %s373 = smul.addr %s372, 4
        %s374 = scalar_lea.vmem %s0, %s373
      $region52: #{refine_net_forward.4} parent=47 // pred_fallthru
        _
      // Predicated region
      $region53: #{refine_net_forward.4} parent=47 // pred_check
        %p375 = pneg %p72
      $region54: #{refine_net_forward.4} parent=47 // pred_check_branch
        %377 = sbr.rel (%p375) target = $region56
      $region55: #{refine_net_forward.4} parent=47 // pred_region
        %p378 = scmp.lt.s32.totalorder %s26, 1
        %s379 = scalar_select %p378, %s26, 1
        %s380 = smul.addr %s379, 6
        %s381 = smul.addr %s380, 4
        %s382 = scalar_lea.vmem %s1, %s381
      $region56: #{refine_net_forward.4} parent=47 // pred_fallthru
        _
      // Predicated region
      $region57: #{refine_net_forward.4} parent=47 // pred_check
        %p383 = pneg %p98
      $region58: #{refine_net_forward.4} parent=47 // pred_check_branch
        %385 = sbr.rel (%p383) target = $region60
      $region59: #{refine_net_forward.4} parent=47 // pred_region
        %p386 = scmp.lt.s32.totalorder %s26, 1
        %s387 = scalar_select %p386, %s26, 1
        %s388 = smul.addr %s387, 6
        %s389 = smul.addr %s388, 4
        %s390 = scalar_lea.vmem %s2, %s389
      $region60: #{refine_net_forward.4} parent=47 // pred_fallthru
        _
      // Predicated region
      $region61: #{refine_net_forward.4} parent=47 // pred_check
        %p391 = pneg %p124
      $region62: #{refine_net_forward.4} parent=47 // pred_check_branch
        %393 = sbr.rel (%p391) target = $region64
      $region63: #{refine_net_forward.4} parent=47 // pred_region
        %p394 = scmp.lt.s32.totalorder %s26, 1
        %s395 = scalar_select %p394, %s26, 1
        %s396 = smul.addr %s395, 6
        %s397 = smul.addr %s396, 4
        %s398 = scalar_lea.vmem %s3, %s397
      $region64: #{refine_net_forward.4} parent=47 // pred_fallthru
        _
    $region48: #{refine_net_forward.4} parent=5 // pred_fallthru
      _
    %p399 = scmp.le.s32.totalorder 1, %s26
    %p400 = scmp.lt.s32.totalorder %s26, 3
    %p401 = pnand %p399, %p400
    %p402 = pneg %p401
    // Predicated region
    $region65: #{refine_net_forward.4} parent=5 // pred_check
      _
    $region66: #{refine_net_forward.4} parent=5 // pred_check_branch
      %404 = sbr.rel (%p401) target = $region68
    $region67: #{refine_net_forward.4} parent=5 // pred_region
      %s405 = ssub.s32 %s26, 1
      %p406 = scmp.lt.s32.totalorder %s31, 1
      %s407 = scalar_select %p406, %s31, 1
      %s408 = smul.addr %s407, 6
      %s409 = smul.addr %s408, 4
      %s410 = scalar_lea.vmem %s0, %s409
      %p411 = pneg %p52
      %p412 = pneg %p49
      %p413 = scmp.lt.s32.totalorder %s31, 1
      %s414 = scalar_select %p413, %s31, 1
      %s415 = smul.addr %s414, 6
      %s416 = smul.addr %s415, 4
      %s417 = scalar_lea.vmem %s1, %s416
      %p418 = pneg %p78
      %p419 = pneg %p75
      %p420 = scmp.lt.s32.totalorder %s31, 1
      %s421 = scalar_select %p420, %s31, 1
      %s422 = smul.addr %s421, 6
      %s423 = smul.addr %s422, 4
      %s424 = scalar_lea.vmem %s2, %s423
      %p425 = pneg %p104
      %p426 = pneg %p101
      %p427 = scmp.lt.s32.totalorder %s31, 1
      %s428 = scalar_select %p427, %s31, 1
      %s429 = smul.addr %s428, 6
      %s430 = smul.addr %s429, 4
      %s431 = scalar_lea.vmem %s3, %s430
      %p432 = pneg %p130
      %p433 = pneg %p127
      %p434 = pneg %p151
      %p435 = pneg %p148
      %p436 = pneg %p172
      %p437 = pneg %p169
      %p438 = pneg %p193
      %p439 = pneg %p190
      %p440 = pneg %p214
      %p441 = pneg %p211
      %p442 = pneg %p235
      %p443 = pneg %p232
      %p444 = pneg %p256
      %p445 = pneg %p253
      %p446 = pneg %p277
      %p447 = pneg %p274
      %p448 = pneg %p298
      %p449 = pneg %p295
      %p450 = pneg %p324
      %p451 = pneg %p321
      %p452 = scmp.lt.s32.totalorder %s31, 1
      %s453 = scalar_select %p452, %s31, 1
      %s454 = smul.addr %s453, 4
      %s455 = scalar_lea.vmem %s12, %s454
      %p456 = scmp.lt.s32.totalorder %s31, 1
      %s457 = scalar_select %p456, %s31, 1
      %s458 = smul.addr %s457, 6
      %s459 = smul.addr %s458, 4
      %s460 = scalar_lea.vmem %s0, %s459
      %p461 = scmp.lt.s32.totalorder %s31, 1
      %s462 = scalar_select %p461, %s31, 1
      %s463 = smul.addr %s462, 6
      %s464 = smul.addr %s463, 4
      %s465 = scalar_lea.vmem %s1, %s464
      %p466 = scmp.lt.s32.totalorder %s31, 1
      %s467 = scalar_select %p466, %s31, 1
      %s468 = smul.addr %s467, 6
      %s469 = smul.addr %s468, 4
      %s470 = scalar_lea.vmem %s2, %s469
      %p471 = scmp.lt.s32.totalorder %s31, 1
      %s472 = scalar_select %p471, %s31, 1
      %s473 = smul.addr %s472, 6
      %s474 = smul.addr %s473, 4
      %s475 = scalar_lea.vmem %s3, %s474
      %p476 = scmp.lt.s32.totalorder %s31, 1
      %s477 = scalar_select %p476, %s31, 1
      %s478 = smul.addr %s477, 4
      %s479 = scalar_lea.vmem %s12, %s478
      %v481 = vld [vmem:[%s460] sm:$0xff]
      %v482 = vld [vmem:[%s460 + $0x8] sm:$0xff]
      %v483 = vld [vmem:[%s460 + $0x10] sm:$0x33]
      %v484 = vld [vmem:[%s4] sm:$0x3]
      %v485 = vld [vmem:[#allocation2] sm:$0x1]
      %v489 = vunpack.c.l.b16 %v481
      %v490 = vunpack.c.l.b16 %v482
      %v491 = vunpack.c.l.b16 %v483
      %v492 = vpack.c.b16 %v490, %v489
      %v493 = vpack.c.b16 %v491, %v491
      %v495 = vunpack.c.h.b16 %v481
      %v496 = vunpack.c.h.b16 %v482
      %v497 = vunpack.c.h.b16 %v483
      %v498 = vpack.c.b16 %v496, %v495
      %v499 = vpack.c.b16 %v497, %v497
      %vm500 = vcmask 1041408
      %v501 = vrot.slane %v492, 6
      %v502 = vrot.slane %v498, 6
      %v503 = vrot.slane %v493, 6
      %v504 = vsel %vm500, %v501, %v503
      %v505 = vrot.slane %v499, 6
      %v506 = vsel %vm500, %v502, %v505
      %507 = vrot.lane.b32.xlu0 %v501, 127
      %v508 = vpop.permute.xlu0 %507
      %509 = vrot.lane.b32.xlu0 %v502, 127
      %v510 = vpop.permute.xlu0 %509
      %511 = vrot.lane.b32.xlu0 %v504, 127
      %v512 = vpop.permute.xlu0 %511
      %513 = vrot.lane.b32.xlu0 %v506, 127
      %v514 = vpop.permute.xlu0 %513
      %vm515 = vcmask 1039360
      %v516 = vsel %vm515, %v508, %v510
      %v517 = vsel %vm515, %v512, %v514
      %v518 = vpack.c.b16 %v489, %v489
      %v519 = vpack.c.b16 %v495, %v495
      %v520 = vpack.c.b16 %v491, %v490
      %v521 = vpack.c.b16 %v497, %v496
      %522 = vrot.lane.b32.xlu0 %v518, 126
      %v523 = vpop.permute.xlu0 %522
      %524 = vrot.lane.b32.xlu0 %v519, 126
      %v525 = vpop.permute.xlu0 %524
      %526 = vrot.lane.b32.xlu0 %v520, 126
      %v527 = vpop.permute.xlu0 %526
      %528 = vrot.lane.b32.xlu0 %v521, 126
      %v529 = vpop.permute.xlu0 %528
      %vm530 = vcmask 1031168
      %v531 = vsel %vm530, %v523, %v525
      %v532 = vsel %vm530, %v527, %v529
      %vm533 = vcmask 1045504
      %v534 = vrot.slane %v492, 2
      %v535 = vrot.slane %v498, 2
      %v536 = vrot.slane %v493, 2
      %v537 = vsel %vm533, %v534, %v536
      %v538 = vrot.slane %v499, 2
      %v539 = vsel %vm533, %v535, %v538
      %540 = vrot.lane.b32.xlu0 %v534, 125
      %v541 = vpop.permute.xlu0 %540
      %542 = vrot.lane.b32.xlu0 %v535, 125
      %v543 = vpop.permute.xlu0 %542
      %544 = vrot.lane.b32.xlu0 %v537, 125
      %v545 = vpop.permute.xlu0 %544
      %546 = vrot.lane.b32.xlu0 %v539, 125
      %v547 = vpop.permute.xlu0 %546
      %vm548 = vcmask 1022976
      %v549 = vsel %vm548, %v541, %v543
      %v550 = vsel %vm548, %v545, %v547
      %552 = vrot.lane.b32.xlu0 %v492, 124
      %v553 = vpop.permute.xlu0 %552
      %554 = vrot.lane.b32.xlu0 %v498, 124
      %v555 = vpop.permute.xlu0 %554
      %556 = vrot.lane.b32.xlu0 %v493, 124
      %v557 = vpop.permute.xlu0 %556
      %558 = vrot.lane.b32.xlu0 %v499, 124
      %v559 = vpop.permute.xlu0 %558
      %vm560 = vcmask 1014784
      %v561 = vsel %vm560, %v553, %v555
      %v562 = vsel %vm560, %v557, %v559
      %564 = vrot.lane.b32.xlu0 %v501, 123
      %v565 = vpop.permute.xlu0 %564
      %566 = vrot.lane.b32.xlu0 %v502, 123
      %v567 = vpop.permute.xlu0 %566
      %568 = vrot.lane.b32.xlu0 %v504, 123
      %v569 = vpop.permute.xlu0 %568
      %570 = vrot.lane.b32.xlu0 %v506, 123
      %v571 = vpop.permute.xlu0 %570
      %vm572 = vcmask 1006592
      %v573 = vsel %vm572, %v565, %v567
      %v574 = vsel %vm572, %v569, %v571
      %vm575 = vcmask 1041408
      %v578 = vsel %vm575, %v493, %v516
      %vm580 = vcmask 1043456
      %v583 = vsel %vm580, %v517, %v531
      %vm585 = vcmask 1045504
      %v588 = vsel %vm585, %v532, %v549
      %v592 = vsel %vm575, %v562, %v573
      %v596 = vsel %vm575, %v499, %v510
      %v599 = vsel %vm580, %v514, %v525
      %v602 = vunpack.c.l.s4 1966171168
      %v603 = vunpack.c.0.s8 %v602
      %v604 = vlaneseq
      %v605 = vshrl.u32 %v604, 7
      %v606 = vsub.s32 %v603, %v605
      %v607 = vrot.slane %v484, %v606
      %v608 = vcombine.high %v607, %v607
      %v610 = vunpack.c.l.s4 1966171168
      %v611 = vunpack.c.0.s8 %v610
      %v612 = vlaneseq
      %v613 = vshrl.u32 %v612, 7
      %v614 = vsub.s32 %v611, %v613
      %v615 = vrot.slane %v607, %v614
      %v617 = vunpack.c.l.s4 1966171168
      %v618 = vunpack.c.0.s8 %v617
      %v619 = vlaneseq
      %v620 = vshrl.u32 %v619, 7
      %v621 = vsub.s32 %v618, %v620
      %v622 = vrot.slane %v608, %v621
      %623 = vrot.lane.b32.xlu0 %v615, 8
      %v624 = vpop.permute.xlu0 %623
      %625 = vrot.lane.b32.xlu0 %v622, 8
      %v626 = vpop.permute.xlu0 %625
      %vm627 = vcmask 64512
      %v628 = vsel %vm627, %v624, %v626
      %633 = vrot.lane.b32.xlu0 %v492, 122
      %v634 = vpop.permute.xlu0 %633
      %635 = vrot.lane.b32.xlu0 %v498, 122
      %v636 = vpop.permute.xlu0 %635
      %637 = vrot.lane.b32.xlu0 %v578, 122
      %v638 = vpop.permute.xlu0 %637
      %639 = vrot.lane.b32.xlu0 %v596, 122
      %v640 = vpop.permute.xlu0 %639
      %641 = vrot.lane.b32.xlu0 %v583, 122
      %v642 = vpop.permute.xlu0 %641
      %643 = vrot.lane.b32.xlu0 %v599, 122
      %v644 = vpop.permute.xlu0 %643
      %645 = vrot.lane.b32.xlu0 %v532, 122
      %v646 = vpop.permute.xlu0 %645
      %647 = vrot.lane.b32.xlu0 %v529, 122
      %v648 = vpop.permute.xlu0 %647
      %vm649 = vcmask 998400
      %v650 = vsel %vm649, %v634, %v636
      %v651 = vsel %vm649, %v638, %v640
      %v652 = vsel %vm649, %v642, %v644
      %v653 = vsel %vm649, %v646, %v648
      %vm657 = vcmask 490496
      %v659 = vsel %vm657, %v628, 0
      %v662 = vsel %vm585, %v653, 0
      %664 = vmatprep.subr.bf16.mxu0 0
      %665 = vmatpush1.bf16.msra.mxu0 %v650
      %666 = vmatprep.subr.bf16.mxu0 0
      %667 = vmatpush1.bf16.msra.mxu0 %v651
      %668 = vmatprep.subr.bf16.mxu0 0
      %669 = vmatpush1.bf16.msra.mxu0 %v652
      %670 = vmatprep.subr.bf16.mxu0 0
      %671 = vmatpush1.bf16.msra.mxu0 %v662
      %672 = vmatprep.subr.bf16.mxu0 0
      %673 = vmatpush1.bf16.msra.mxu0 0
      %674 = vmatprep.subr.bf16.mxu0 0
      %675 = vmatpush1.bf16.msra.mxu0 0
      %676 = vmatprep.subr.bf16.mxu0 0
      %677 = vmatpush1.bf16.msra.mxu0 0
      %678 = vmatprep.subr.bf16.mxu0 0
      %679 = vmatpush1.bf16.msra.mxu0 0
      %680 = vmatprep.subr.bf16.mxu0 0
      %681 = vmatpush1.bf16.msra.mxu0 0
      %682 = vmatprep.subr.bf16.mxu0 0
      %683 = vmatpush1.bf16.msra.mxu0 0
      %684 = vmatprep.subr.bf16.mxu0 0
      %685 = vmatpush1.bf16.msra.mxu0 0
      %686 = vmatprep.subr.bf16.mxu0 0
      %687 = vmatpush1.bf16.msra.mxu0 0
      %688 = vmatprep.subr.bf16.mxu0 0
      %689 = vmatpush1.bf16.msra.mxu0 0
      %690 = vmatprep.subr.bf16.mxu0 0
      %691 = vmatpush1.bf16.msra.mxu0 0
      %692 = vmatprep.subr.bf16.mxu0 0
      %693 = vmatpush1.bf16.msra.mxu0 0
      %694 = vmatprep.subr.bf16.mxu0 0
      %695 = vmatpush1.bf16.msra.mxu0 0
      %696 = vmatprep.mubr.bf16.mxu0 0
      %697 = vmatmul.mubr.bf16.gmra.mrb[0].mxu0 %v659
      %v698 = vpop.f32.mrb[0].mxu0
      %v699 = vadd.f32 0.0, %v698
      %v700 = vpop.f32.mrb[0].mxu0
      %v701 = vpop.f32.mrb[0].mxu0
      %v702 = vpop.f32.mrb[0].mxu0
      %703 = vdwg.mxu0
      %vm704 = vcmask 982016
      %v706 = vsel %vm704, %v484, 0
      %v709 = vsel %vm580, %v574, 0
      %711 = vmatprep.subr.bf16.mxu0 0
      %712 = vmatpush1.bf16.msra.mxu0 %v492
      %713 = vmatprep.subr.bf16.mxu0 0
      %714 = vmatpush1.bf16.msra.mxu0 %v578
      %715 = vmatprep.subr.bf16.mxu0 0
      %716 = vmatpush1.bf16.msra.mxu0 %v583
      %717 = vmatprep.subr.bf16.mxu0 0
      %718 = vmatpush1.bf16.msra.mxu0 %v588
      %719 = vmatprep.subr.bf16.mxu0 0
      %720 = vmatpush1.bf16.msra.mxu0 %v550
      %721 = vmatprep.subr.bf16.mxu0 0
      %722 = vmatpush1.bf16.msra.mxu0 %v561
      %723 = vmatprep.subr.bf16.mxu0 0
      %724 = vmatpush1.bf16.msra.mxu0 %v592
      %725 = vmatprep.subr.bf16.mxu0 0
      %726 = vmatpush1.bf16.msra.mxu0 %v709
      %727 = vmatprep.subr.bf16.mxu0 0
      %728 = vmatpush1.bf16.msra.mxu0 0
      %729 = vmatprep.subr.bf16.mxu0 0
      %730 = vmatpush1.bf16.msra.mxu0 0
      %731 = vmatprep.subr.bf16.mxu0 0
      %732 = vmatpush1.bf16.msra.mxu0 0
      %733 = vmatprep.subr.bf16.mxu0 0
      %734 = vmatpush1.bf16.msra.mxu0 0
      %735 = vmatprep.subr.bf16.mxu0 0
      %736 = vmatpush1.bf16.msra.mxu0 0
      %737 = vmatprep.subr.bf16.mxu0 0
      %738 = vmatpush1.bf16.msra.mxu0 0
      %739 = vmatprep.subr.bf16.mxu0 0
      %740 = vmatpush1.bf16.msra.mxu0 0
      %741 = vmatprep.subr.bf16.mxu0 0
      %742 = vmatpush1.bf16.msra.mxu0 0
      %743 = vmatprep.mubr.bf16.mxu0 0
      %744 = vmatmul.mubr.bf16.gmra.mrb[0].mxu0 %v706
      %v745 = vpop.f32.mrb[0].mxu0
      %v746 = vadd.f32 %v699, %v745
      %v747 = vpop.f32.mrb[0].mxu0
      %v748 = vpop.f32.mrb[0].mxu0
      %v749 = vpop.f32.mrb[0].mxu0
      %750 = vdwg.mxu0
      %752 = vset.pattern.permute.xlu0 0
      %753 = vperm.xlu0 %752, %v485
      %v754 = vpop.permute.xlu0 %753
      %v756 = vlaneseq
      %v757 = vshrl.u32 %v756, 7
      %v758 = vsub.s32 0, %v757
      %v759 = vrot.slane %v754, %v758
      %v760 = vadd.f32 %v746, %v759
      %v761 = vmax.f32 %v760, 0.0
      %v762 = vpack.c.bf16 %v761, %v761
      %vm763 = vcmask 1040384
      %vm764 = vsmask.f32 256
      %vm765 = vmand %vm763, %vm764
      %v766 = vld [vmem:[%s479] sm:$0x1]
      %v767 = vsel %vm765, %v762, %v766
      %768 = vst [vmem:[%s479] sm:$0x1] %v767
      %v769 = vld [vmem:[%s465] sm:$0xff]
      %v770 = vld [vmem:[%s465 + $0x8] sm:$0xff]
      %v771 = vld [vmem:[%s465 + $0x10] sm:$0x33]
      %v772 = vld [vmem:[%s5] sm:$0x3]
      %v773 = vld [vmem:[#allocation3] sm:$0x1]
      %v777 = vunpack.c.l.b16 %v769
      %v778 = vunpack.c.l.b16 %v770
      %v779 = vunpack.c.l.b16 %v771
      %v780 = vpack.c.b16 %v778, %v777
      %v781 = vpack.c.b16 %v779, %v779
      %v783 = vunpack.c.h.b16 %v769
      %v784 = vunpack.c.h.b16 %v770
      %v785 = vunpack.c.h.b16 %v771
      %v786 = vpack.c.b16 %v784, %v783
      %v787 = vpack.c.b16 %v785, %v785
      %v788 = vrot.slane %v780, 6
      %v789 = vrot.slane %v786, 6
      %v790 = vrot.slane %v781, 6
      %v791 = vsel %vm500, %v788, %v790
      %v792 = vrot.slane %v787, 6
      %v793 = vsel %vm500, %v789, %v792
      %794 = vrot.lane.b32.xlu0 %v788, 127
      %v795 = vpop.permute.xlu0 %794
      %796 = vrot.lane.b32.xlu0 %v789, 127
      %v797 = vpop.permute.xlu0 %796
      %798 = vrot.lane.b32.xlu0 %v791, 127
      %v799 = vpop.permute.xlu0 %798
      %800 = vrot.lane.b32.xlu0 %v793, 127
      %v801 = vpop.permute.xlu0 %800
      %v802 = vsel %vm515, %v795, %v797
      %v803 = vsel %vm515, %v799, %v801
      %v804 = vpack.c.b16 %v777, %v777
      %v805 = vpack.c.b16 %v783, %v783
      %v806 = vpack.c.b16 %v779, %v778
      %v807 = vpack.c.b16 %v785, %v784
      %808 = vrot.lane.b32.xlu0 %v804, 126
      %v809 = vpop.permute.xlu0 %808
      %810 = vrot.lane.b32.xlu0 %v805, 126
      %v811 = vpop.permute.xlu0 %810
      %812 = vrot.lane.b32.xlu0 %v806, 126
      %v813 = vpop.permute.xlu0 %812
      %814 = vrot.lane.b32.xlu0 %v807, 126
      %v815 = vpop.permute.xlu0 %814
      %v816 = vsel %vm530, %v809, %v811
      %v817 = vsel %vm530, %v813, %v815
      %v818 = vrot.slane %v780, 2
      %v819 = vrot.slane %v786, 2
      %v820 = vrot.slane %v781, 2
      %v821 = vsel %vm533, %v818, %v820
      %v822 = vrot.slane %v787, 2
      %v823 = vsel %vm533, %v819, %v822
      %824 = vrot.lane.b32.xlu0 %v818, 124
      %v825 = vpop.permute.xlu0 %824
      %826 = vrot.lane.b32.xlu0 %v819, 124
      %v827 = vpop.permute.xlu0 %826
      %828 = vrot.lane.b32.xlu0 %v821, 124
      %v829 = vpop.permute.xlu0 %828
      %830 = vrot.lane.b32.xlu0 %v823, 124
      %v831 = vpop.permute.xlu0 %830
      %v832 = vsel %vm560, %v825, %v827
      %v833 = vsel %vm560, %v829, %v831
      %835 = vrot.lane.b32.xlu0 %v780, 123
      %v836 = vpop.permute.xlu0 %835
      %837 = vrot.lane.b32.xlu0 %v786, 123
      %v838 = vpop.permute.xlu0 %837
      %839 = vrot.lane.b32.xlu0 %v781, 123
      %v840 = vpop.permute.xlu0 %839
      %841 = vrot.lane.b32.xlu0 %v787, 123
      %v842 = vpop.permute.xlu0 %841
      %v843 = vsel %vm572, %v836, %v838
      %v844 = vsel %vm572, %v840, %v842
      %846 = vrot.lane.b32.xlu0 %v788, 122
      %v847 = vpop.permute.xlu0 %846
      %848 = vrot.lane.b32.xlu0 %v789, 122
      %v849 = vpop.permute.xlu0 %848
      %850 = vrot.lane.b32.xlu0 %v791, 122
      %v851 = vpop.permute.xlu0 %850
      %852 = vrot.lane.b32.xlu0 %v793, 122
      %v853 = vpop.permute.xlu0 %852
      %v854 = vsel %vm649, %v847, %v849
      %v855 = vsel %vm649, %v851, %v853
      %v858 = vsel %vm575, %v781, %v802
      %v862 = vsel %vm580, %v803, %v816
      %v866 = vsel %vm585, %v817, %v832
      %v870 = vsel %vm575, %v844, %v854
      %v874 = vsel %vm575, %v787, %v797
      %v877 = vsel %vm580, %v801, %v811
      %v880 = vunpack.c.l.s4 1966171168
      %v881 = vunpack.c.0.s8 %v880
      %v882 = vlaneseq
      %v883 = vshrl.u32 %v882, 7
      %v884 = vsub.s32 %v881, %v883
      %v885 = vrot.slane %v772, %v884
      %v886 = vcombine.high %v885, %v885
      %v888 = vunpack.c.l.s4 1966171168
      %v889 = vunpack.c.0.s8 %v888
      %v890 = vlaneseq
      %v891 = vshrl.u32 %v890, 7
      %v892 = vsub.s32 %v889, %v891
      %v893 = vrot.slane %v885, %v892
      %v895 = vunpack.c.l.s4 1966171168
      %v896 = vunpack.c.0.s8 %v895
      %v897 = vlaneseq
      %v898 = vshrl.u32 %v897, 7
      %v899 = vsub.s32 %v896, %v898
      %v900 = vrot.slane %v886, %v899
      %901 = vrot.lane.b32.xlu0 %v893, 8
      %v902 = vpop.permute.xlu0 %901
      %903 = vrot.lane.b32.xlu0 %v900, 8
      %v904 = vpop.permute.xlu0 %903
      %v905 = vsel %vm627, %v902, %v904
      %910 = vrot.lane.b32.xlu0 %v780, 120
      %v911 = vpop.permute.xlu0 %910
      %912 = vrot.lane.b32.xlu0 %v786, 120
      %v913 = vpop.permute.xlu0 %912
      %914 = vrot.lane.b32.xlu0 %v858, 120
      %v915 = vpop.permute.xlu0 %914
      %916 = vrot.lane.b32.xlu0 %v874, 120
      %v917 = vpop.permute.xlu0 %916
      %918 = vrot.lane.b32.xlu0 %v862, 120
      %v919 = vpop.permute.xlu0 %918
      %920 = vrot.lane.b32.xlu0 %v877, 120
      %v921 = vpop.permute.xlu0 %920
      %922 = vrot.lane.b32.xlu0 %v817, 120
      %v923 = vpop.permute.xlu0 %922
      %924 = vrot.lane.b32.xlu0 %v815, 120
      %v925 = vpop.permute.xlu0 %924
      %vm926 = vcmask 982016
      %v927 = vsel %vm926, %v911, %v913
      %v928 = vsel %vm926, %v915, %v917
      %v929 = vsel %vm926, %v919, %v921
      %v930 = vsel %vm926, %v923, %v925
      %v935 = vsel %vm657, %v905, 0
      %v938 = vsel %vm585, %v930, 0
      %940 = vmatprep.subr.bf16.mxu0 0
      %941 = vmatpush1.bf16.msra.mxu0 %v927
      %942 = vmatprep.subr.bf16.mxu0 0
      %943 = vmatpush1.bf16.msra.mxu0 %v928
      %944 = vmatprep.subr.bf16.mxu0 0
      %945 = vmatpush1.bf16.msra.mxu0 %v929
      %946 = vmatprep.subr.bf16.mxu0 0
      %947 = vmatpush1.bf16.msra.mxu0 %v938
      %948 = vmatprep.subr.bf16.mxu0 0
      %949 = vmatpush1.bf16.msra.mxu0 0
      %950 = vmatprep.subr.bf16.mxu0 0
      %951 = vmatpush1.bf16.msra.mxu0 0
      %952 = vmatprep.subr.bf16.mxu0 0
      %953 = vmatpush1.bf16.msra.mxu0 0
      %954 = vmatprep.subr.bf16.mxu0 0
      %955 = vmatpush1.bf16.msra.mxu0 0
      %956 = vmatprep.subr.bf16.mxu0 0
      %957 = vmatpush1.bf16.msra.mxu0 0
      %958 = vmatprep.subr.bf16.mxu0 0
      %959 = vmatpush1.bf16.msra.mxu0 0
      %960 = vmatprep.subr.bf16.mxu0 0
      %961 = vmatpush1.bf16.msra.mxu0 0
      %962 = vmatprep.subr.bf16.mxu0 0
      %963 = vmatpush1.bf16.msra.mxu0 0
      %964 = vmatprep.subr.bf16.mxu0 0
      %965 = vmatpush1.bf16.msra.mxu0 0
      %966 = vmatprep.subr.bf16.mxu0 0
      %967 = vmatpush1.bf16.msra.mxu0 0
      %968 = vmatprep.subr.bf16.mxu0 0
      %969 = vmatpush1.bf16.msra.mxu0 0
      %970 = vmatprep.subr.bf16.mxu0 0
      %971 = vmatpush1.bf16.msra.mxu0 0
      %972 = vmatprep.mubr.bf16.mxu0 0
      %973 = vmatmul.mubr.bf16.gmra.mrb[0].mxu0 %v935
      %v974 = vpop.f32.mrb[0].mxu0
      %v975 = vadd.f32 0.0, %v974
      %v976 = vpop.f32.mrb[0].mxu0
      %v977 = vpop.f32.mrb[0].mxu0
      %v978 = vpop.f32.mrb[0].mxu0
      %979 = vdwg.mxu0
      %v981 = vsel %vm704, %v772, 0
      %v984 = vsel %vm580, %v855, 0
      %986 = vmatprep.subr.bf16.mxu0 0
      %987 = vmatpush1.bf16.msra.mxu0 %v780
      %988 = vmatprep.subr.bf16.mxu0 0
      %989 = vmatpush1.bf16.msra.mxu0 %v858
      %990 = vmatprep.subr.bf16.mxu0 0
      %991 = vmatpush1.bf16.msra.mxu0 %v862
      %992 = vmatprep.subr.bf16.mxu0 0
      %993 = vmatpush1.bf16.msra.mxu0 %v866
      %994 = vmatprep.subr.bf16.mxu0 0
      %995 = vmatpush1.bf16.msra.mxu0 %v833
      %996 = vmatprep.subr.bf16.mxu0 0
      %997 = vmatpush1.bf16.msra.mxu0 %v843
      %998 = vmatprep.subr.bf16.mxu0 0
      %999 = vmatpush1.bf16.msra.mxu0 %v870
      %1000 = vmatprep.subr.bf16.mxu0 0
      %1001 = vmatpush1.bf16.msra.mxu0 %v984
      %1002 = vmatprep.subr.bf16.mxu0 0
      %1003 = vmatpush1.bf16.msra.mxu0 0
      %1004 = vmatprep.subr.bf16.mxu0 0
      %1005 = vmatpush1.bf16.msra.mxu0 0
      %1006 = vmatprep.subr.bf16.mxu0 0
      %1007 = vmatpush1.bf16.msra.mxu0 0
      %1008 = vmatprep.subr.bf16.mxu0 0
      %1009 = vmatpush1.bf16.msra.mxu0 0
      %1010 = vmatprep.subr.bf16.mxu0 0
      %1011 = vmatpush1.bf16.msra.mxu0 0
      %1012 = vmatprep.subr.bf16.mxu0 0
      %1013 = vmatpush1.bf16.msra.mxu0 0
      %1014 = vmatprep.subr.bf16.mxu0 0
      %1015 = vmatpush1.bf16.msra.mxu0 0
      %1016 = vmatprep.subr.bf16.mxu0 0
      %1017 = vmatpush1.bf16.msra.mxu0 0
      %1018 = vmatprep.mubr.bf16.mxu0 0
      %1019 = vmatmul.mubr.bf16.gmra.mrb[0].mxu0 %v981
      %v1020 = vpop.f32.mrb[0].mxu0
      %v1021 = vadd.f32 %v975, %v1020
      %v1022 = vpop.f32.mrb[0].mxu0
      %v1023 = vpop.f32.mrb[0].mxu0
      %v1024 = vpop.f32.mrb[0].mxu0
      %1025 = vdwg.mxu0
      %1027 = vset.pattern.permute.xlu0 0
      %1028 = vperm.xlu0 %1027, %v773
      %v1029 = vpop.permute.xlu0 %1028
      %v1031 = vlaneseq
      %v1032 = vshrl.u32 %v1031, 7
      %v1033 = vsub.s32 0, %v1032
      %v1034 = vrot.slane %v1029, %v1033
      %v1035 = vadd.f32 %v1021, %v1034
      %v1036 = vmax.f32 %v1035, 0.0
      %v1037 = vpack.c.bf16 %v1036, %v1036
      %v1038 = vld [vmem:[%s479 + $0x1] sm:$0x1]
      %v1039 = vsel %vm765, %v1037, %v1038
      %1040 = vst [vmem:[%s479 + $0x1] sm:$0x1] %v1039
      %v1041 = vld [vmem:[%s470] sm:$0xff]
      %v1042 = vld [vmem:[%s470 + $0x8] sm:$0xff]
      %v1043 = vld [vmem:[%s470 + $0x10] sm:$0x33]
      %v1044 = vld [vmem:[%s6] sm:$0x3]
      %v1045 = vld [vmem:[#allocation4] sm:$0x1]
      %v1049 = vunpack.c.l.b16 %v1041
      %v1050 = vunpack.c.l.b16 %v1042
      %v1051 = vunpack.c.l.b16 %v1043
      %v1052 = vpack.c.b16 %v1050, %v1049
      %v1053 = vpack.c.b16 %v1051, %v1051
      %v1055 = vunpack.c.h.b16 %v1041
      %v1056 = vunpack.c.h.b16 %v1042
      %v1057 = vunpack.c.h.b16 %v1043
      %v1058 = vpack.c.b16 %v1056, %v1055
      %v1059 = vpack.c.b16 %v1057, %v1057
      %v1060 = vrot.slane %v1052, 6
      %v1061 = vrot.slane %v1058, 6
      %v1062 = vrot.slane %v1053, 6
      %v1063 = vsel %vm500, %v1060, %v1062
      %v1064 = vrot.slane %v1059, 6
      %v1065 = vsel %vm500, %v1061, %v1064
      %1066 = vrot.lane.b32.xlu0 %v1060, 127
      %v1067 = vpop.permute.xlu0 %1066
      %1068 = vrot.lane.b32.xlu0 %v1061, 127
      %v1069 = vpop.permute.xlu0 %1068
      %1070 = vrot.lane.b32.xlu0 %v1063, 127
      %v1071 = vpop.permute.xlu0 %1070
      %1072 = vrot.lane.b32.xlu0 %v1065, 127
      %v1073 = vpop.permute.xlu0 %1072
      %v1074 = vsel %vm515, %v1067, %v1069
      %v1075 = vsel %vm515, %v1071, %v1073
      %v1076 = vpack.c.b16 %v1049, %v1049
      %v1077 = vpack.c.b16 %v1055, %v1055
      %v1078 = vpack.c.b16 %v1051, %v1050
      %v1079 = vpack.c.b16 %v1057, %v1056
      %1080 = vrot.lane.b32.xlu0 %v1076, 126
      %v1081 = vpop.permute.xlu0 %1080
      %1082 = vrot.lane.b32.xlu0 %v1077, 126
      %v1083 = vpop.permute.xlu0 %1082
      %1084 = vrot.lane.b32.xlu0 %v1078, 126
      %v1085 = vpop.permute.xlu0 %1084
      %1086 = vrot.lane.b32.xlu0 %v1079, 126
      %v1087 = vpop.permute.xlu0 %1086
      %v1088 = vsel %vm530, %v1081, %v1083
      %v1089 = vsel %vm530, %v1085, %v1087
      %v1090 = vrot.slane %v1052, 2
      %v1091 = vrot.slane %v1058, 2
      %v1092 = vrot.slane %v1053, 2
      %v1093 = vsel %vm533, %v1090, %v1092
      %v1094 = vrot.slane %v1059, 2
      %v1095 = vsel %vm533, %v1091, %v1094
      %1096 = vrot.lane.b32.xlu0 %v1090, 122
      %v1097 = vpop.permute.xlu0 %1096
      %1098 = vrot.lane.b32.xlu0 %v1091, 122
      %v1099 = vpop.permute.xlu0 %1098
      %1100 = vrot.lane.b32.xlu0 %v1093, 122
      %v1101 = vpop.permute.xlu0 %1100
      %1102 = vrot.lane.b32.xlu0 %v1095, 122
      %v1103 = vpop.permute.xlu0 %1102
      %v1104 = vsel %vm649, %v1097, %v1099
      %v1105 = vsel %vm649, %v1101, %v1103
      %1107 = vrot.lane.b32.xlu0 %v1052, 121
      %v1108 = vpop.permute.xlu0 %1107
      %1109 = vrot.lane.b32.xlu0 %v1058, 121
      %v1110 = vpop.permute.xlu0 %1109
      %1111 = vrot.lane.b32.xlu0 %v1053, 121
      %v1112 = vpop.permute.xlu0 %1111
      %1113 = vrot.lane.b32.xlu0 %v1059, 121
      %v1114 = vpop.permute.xlu0 %1113
      %vm1115 = vcmask 990208
      %v1116 = vsel %vm1115, %v1108, %v1110
      %v1117 = vsel %vm1115, %v1112, %v1114
      %1119 = vrot.lane.b32.xlu0 %v1060, 120
      %v1120 = vpop.permute.xlu0 %1119
      %1121 = vrot.lane.b32.xlu0 %v1061, 120
      %v1122 = vpop.permute.xlu0 %1121
      %1123 = vrot.lane.b32.xlu0 %v1063, 120
      %v1124 = vpop.permute.xlu0 %1123
      %1125 = vrot.lane.b32.xlu0 %v1065, 120
      %v1126 = vpop.permute.xlu0 %1125
      %v1127 = vsel %vm926, %v1120, %v1122
      %v1128 = vsel %vm926, %v1124, %v1126
      %v1131 = vsel %vm575, %v1053, %v1074
      %v1135 = vsel %vm580, %v1075, %v1088
      %v1139 = vsel %vm585, %v1089, %v1104
      %v1143 = vsel %vm575, %v1117, %v1127
      %v1147 = vsel %vm575, %v1059, %v1069
      %v1150 = vsel %vm580, %v1073, %v1083
      %v1153 = vunpack.c.l.s4 1966171168
      %v1154 = vunpack.c.0.s8 %v1153
      %v1155 = vlaneseq
      %v1156 = vshrl.u32 %v1155, 7
      %v1157 = vsub.s32 %v1154, %v1156
      %v1158 = vrot.slane %v1044, %v1157
      %v1159 = vcombine.high %v1158, %v1158
      %v1161 = vunpack.c.l.s4 1966171168
      %v1162 = vunpack.c.0.s8 %v1161
      %v1163 = vlaneseq
      %v1164 = vshrl.u32 %v1163, 7
      %v1165 = vsub.s32 %v1162, %v1164
      %v1166 = vrot.slane %v1158, %v1165
      %v1168 = vunpack.c.l.s4 1966171168
      %v1169 = vunpack.c.0.s8 %v1168
      %v1170 = vlaneseq
      %v1171 = vshrl.u32 %v1170, 7
      %v1172 = vsub.s32 %v1169, %v1171
      %v1173 = vrot.slane %v1159, %v1172
      %1174 = vrot.lane.b32.xlu0 %v1166, 8
      %v1175 = vpop.permute.xlu0 %1174
      %1176 = vrot.lane.b32.xlu0 %v1173, 8
      %v1177 = vpop.permute.xlu0 %1176
      %v1178 = vsel %vm627, %v1175, %v1177
      %1183 = vrot.lane.b32.xlu0 %v1052, 116
      %v1184 = vpop.permute.xlu0 %1183
      %1185 = vrot.lane.b32.xlu0 %v1058, 116
      %v1186 = vpop.permute.xlu0 %1185
      %1187 = vrot.lane.b32.xlu0 %v1131, 116
      %v1188 = vpop.permute.xlu0 %1187
      %1189 = vrot.lane.b32.xlu0 %v1147, 116
      %v1190 = vpop.permute.xlu0 %1189
      %1191 = vrot.lane.b32.xlu0 %v1135, 116
      %v1192 = vpop.permute.xlu0 %1191
      %1193 = vrot.lane.b32.xlu0 %v1150, 116
      %v1194 = vpop.permute.xlu0 %1193
      %1195 = vrot.lane.b32.xlu0 %v1089, 116
      %v1196 = vpop.permute.xlu0 %1195
      %1197 = vrot.lane.b32.xlu0 %v1087, 116
      %v1198 = vpop.permute.xlu0 %1197
      %vm1199 = vcmask 949248
      %v1200 = vsel %vm1199, %v1184, %v1186
      %v1201 = vsel %vm1199, %v1188, %v1190
      %v1202 = vsel %vm1199, %v1192, %v1194
      %v1203 = vsel %vm1199, %v1196, %v1198
      %v1208 = vsel %vm657, %v1178, 0
      %v1211 = vsel %vm585, %v1203, 0
      %1213 = vmatprep.subr.bf16.mxu0 0
      %1214 = vmatpush1.bf16.msra.mxu0 %v1200
      %1215 = vmatprep.subr.bf16.mxu0 0
      %1216 = vmatpush1.bf16.msra.mxu0 %v1201
      %1217 = vmatprep.subr.bf16.mxu0 0
      %1218 = vmatpush1.bf16.msra.mxu0 %v1202
      %1219 = vmatprep.subr.bf16.mxu0 0
      %1220 = vmatpush1.bf16.msra.mxu0 %v1211
      %1221 = vmatprep.subr.bf16.mxu0 0
      %1222 = vmatpush1.bf16.msra.mxu0 0
      %1223 = vmatprep.subr.bf16.mxu0 0
      %1224 = vmatpush1.bf16.msra.mxu0 0
      %1225 = vmatprep.subr.bf16.mxu0 0
      %1226 = vmatpush1.bf16.msra.mxu0 0
      %1227 = vmatprep.subr.bf16.mxu0 0
      %1228 = vmatpush1.bf16.msra.mxu0 0
      %1229 = vmatprep.subr.bf16.mxu0 0
      %1230 = vmatpush1.bf16.msra.mxu0 0
      %1231 = vmatprep.subr.bf16.mxu0 0
      %1232 = vmatpush1.bf16.msra.mxu0 0
      %1233 = vmatprep.subr.bf16.mxu0 0
      %1234 = vmatpush1.bf16.msra.mxu0 0
      %1235 = vmatprep.subr.bf16.mxu0 0
      %1236 = vmatpush1.bf16.msra.mxu0 0
      %1237 = vmatprep.subr.bf16.mxu0 0
      %1238 = vmatpush1.bf16.msra.mxu0 0
      %1239 = vmatprep.subr.bf16.mxu0 0
      %1240 = vmatpush1.bf16.msra.mxu0 0
      %1241 = vmatprep.subr.bf16.mxu0 0
      %1242 = vmatpush1.bf16.msra.mxu0 0
      %1243 = vmatprep.subr.bf16.mxu0 0
      %1244 = vmatpush1.bf16.msra.mxu0 0
      %1245 = vmatprep.mubr.bf16.mxu0 0
      %1246 = vmatmul.mubr.bf16.gmra.mrb[0].mxu0 %v1208
      %v1247 = vpop.f32.mrb[0].mxu0
      %v1248 = vadd.f32 0.0, %v1247
      %v1249 = vpop.f32.mrb[0].mxu0
      %v1250 = vpop.f32.mrb[0].mxu0
      %v1251 = vpop.f32.mrb[0].mxu0
      %1252 = vdwg.mxu0
      %v1254 = vsel %vm704, %v1044, 0
      %v1257 = vsel %vm580, %v1128, 0
      %1259 = vmatprep.subr.bf16.mxu0 0
      %1260 = vmatpush1.bf16.msra.mxu0 %v1052
      %1261 = vmatprep.subr.bf16.mxu0 0
      %1262 = vmatpush1.bf16.msra.mxu0 %v1131
      %1263 = vmatprep.subr.bf16.mxu0 0
      %1264 = vmatpush1.bf16.msra.mxu0 %v1135
      %1265 = vmatprep.subr.bf16.mxu0 0
      %1266 = vmatpush1.bf16.msra.mxu0 %v1139
      %1267 = vmatprep.subr.bf16.mxu0 0
      %1268 = vmatpush1.bf16.msra.mxu0 %v1105
      %1269 = vmatprep.subr.bf16.mxu0 0
      %1270 = vmatpush1.bf16.msra.mxu0 %v1116
      %1271 = vmatprep.subr.bf16.mxu0 0
      %1272 = vmatpush1.bf16.msra.mxu0 %v1143
      %1273 = vmatprep.subr.bf16.mxu0 0
      %1274 = vmatpush1.bf16.msra.mxu0 %v1257
      %1275 = vmatprep.subr.bf16.mxu0 0
      %1276 = vmatpush1.bf16.msra.mxu0 0
      %1277 = vmatprep.subr.bf16.mxu0 0
      %1278 = vmatpush1.bf16.msra.mxu0 0
      %1279 = vmatprep.subr.bf16.mxu0 0
      %1280 = vmatpush1.bf16.msra.mxu0 0
      %1281 = vmatprep.subr.bf16.mxu0 0
      %1282 = vmatpush1.bf16.msra.mxu0 0
      %1283 = vmatprep.subr.bf16.mxu0 0
      %1284 = vmatpush1.bf16.msra.mxu0 0
      %1285 = vmatprep.subr.bf16.mxu0 0
      %1286 = vmatpush1.bf16.msra.mxu0 0
      %1287 = vmatprep.subr.bf16.mxu0 0
      %1288 = vmatpush1.bf16.msra.mxu0 0
      %1289 = vmatprep.subr.bf16.mxu0 0
      %1290 = vmatpush1.bf16.msra.mxu0 0
      %1291 = vmatprep.mubr.bf16.mxu0 0
      %1292 = vmatmul.mubr.bf16.gmra.mrb[0].mxu0 %v1254
      %v1293 = vpop.f32.mrb[0].mxu0
      %v1294 = vadd.f32 %v1248, %v1293
      %v1295 = vpop.f32.mrb[0].mxu0
      %v1296 = vpop.f32.mrb[0].mxu0
      %v1297 = vpop.f32.mrb[0].mxu0
      %1298 = vdwg.mxu0
      %1300 = vset.pattern.permute.xlu0 0
      %1301 = vperm.xlu0 %1300, %v1045
      %v1302 = vpop.permute.xlu0 %1301
      %v1304 = vlaneseq
      %v1305 = vshrl.u32 %v1304, 7
      %v1306 = vsub.s32 0, %v1305
      %v1307 = vrot.slane %v1302, %v1306
      %v1308 = vadd.f32 %v1294, %v1307
      %v1309 = vmax.f32 %v1308, 0.0
      %v1310 = vpack.c.bf16 %v1309, %v1309
      %v1311 = vld [vmem:[%s479 + $0x2] sm:$0x1]
      %v1312 = vsel %vm765, %v1310, %v1311
      %1313 = vst [vmem:[%s479 + $0x2] sm:$0x1] %v1312
      %v1314 = vld [vmem:[%s475] sm:$0xff]
      %v1315 = vld [vmem:[%s475 + $0x8] sm:$0xff]
      %v1316 = vld [vmem:[%s475 + $0x10] sm:$0x33]
      %v1317 = vld [vmem:[%s7] sm:$0x3]
      %v1318 = vld [vmem:[#allocation5] sm:$0x1]
      %v1322 = vunpack.c.l.b16 %v1314
      %v1323 = vunpack.c.l.b16 %v1315
      %v1324 = vunpack.c.l.b16 %v1316
      %v1325 = vpack.c.b16 %v1323, %v1322
      %v1326 = vpack.c.b16 %v1324, %v1324
      %v1328 = vunpack.c.h.b16 %v1314
      %v1329 = vunpack.c.h.b16 %v1315
      %v1330 = vunpack.c.h.b16 %v1316
      %v1331 = vpack.c.b16 %v1329, %v1328
      %v1332 = vpack.c.b16 %v1330, %v1330
      %v1333 = vrot.slane %v1325, 6
      %v1334 = vrot.slane %v1331, 6
      %v1335 = vrot.slane %v1326, 6
      %v1336 = vsel %vm500, %v1333, %v1335
      %v1337 = vrot.slane %v1332, 6
      %v1338 = vsel %vm500, %v1334, %v1337
      %1339 = vrot.lane.b32.xlu0 %v1333, 127
      %v1340 = vpop.permute.xlu0 %1339
      %1341 = vrot.lane.b32.xlu0 %v1334, 127
      %v1342 = vpop.permute.xlu0 %1341
      %1343 = vrot.lane.b32.xlu0 %v1336, 127
      %v1344 = vpop.permute.xlu0 %1343
      %1345 = vrot.lane.b32.xlu0 %v1338, 127
      %v1346 = vpop.permute.xlu0 %1345
      %v1347 = vsel %vm515, %v1340, %v1342
      %v1348 = vsel %vm515, %v1344, %v1346
      %v1349 = vpack.c.b16 %v1322, %v1322
      %v1350 = vpack.c.b16 %v1328, %v1328
      %v1351 = vpack.c.b16 %v1324, %v1323
      %v1352 = vpack.c.b16 %v1330, %v1329
      %1353 = vrot.lane.b32.xlu0 %v1349, 126
      %v1354 = vpop.permute.xlu0 %1353
      %1355 = vrot.lane.b32.xlu0 %v1350, 126
      %v1356 = vpop.permute.xlu0 %1355
      %1357 = vrot.lane.b32.xlu0 %v1351, 126
      %v1358 = vpop.permute.xlu0 %1357
      %1359 = vrot.lane.b32.xlu0 %v1352, 126
      %v1360 = vpop.permute.xlu0 %1359
      %v1361 = vsel %vm530, %v1354, %v1356
      %v1362 = vsel %vm530, %v1358, %v1360
      %v1363 = vrot.slane %v1325, 2
      %v1364 = vrot.slane %v1331, 2
      %v1365 = vrot.slane %v1326, 2
      %v1366 = vsel %vm533, %v1363, %v1365
      %v1367 = vrot.slane %v1332, 2
      %v1368 = vsel %vm533, %v1364, %v1367
      %1369 = vrot.lane.b32.xlu0 %v1363, 118
      %v1370 = vpop.permute.xlu0 %1369
      %1371 = vrot.lane.b32.xlu0 %v1364, 118
      %v1372 = vpop.permute.xlu0 %1371
      %1373 = vrot.lane.b32.xlu0 %v1366, 118
      %v1374 = vpop.permute.xlu0 %1373
      %1375 = vrot.lane.b32.xlu0 %v1368, 118
      %v1376 = vpop.permute.xlu0 %1375
      %vm1377 = vcmask 965632
      %v1378 = vsel %vm1377, %v1370, %v1372
      %v1379 = vsel %vm1377, %v1374, %v1376
      %1381 = vrot.lane.b32.xlu0 %v1325, 117
      %v1382 = vpop.permute.xlu0 %1381
      %1383 = vrot.lane.b32.xlu0 %v1331, 117
      %v1384 = vpop.permute.xlu0 %1383
      %1385 = vrot.lane.b32.xlu0 %v1326, 117
      %v1386 = vpop.permute.xlu0 %1385
      %1387 = vrot.lane.b32.xlu0 %v1332, 117
      %v1388 = vpop.permute.xlu0 %1387
      %vm1389 = vcmask 957440
      %v1390 = vsel %vm1389, %v1382, %v1384
      %v1391 = vsel %vm1389, %v1386, %v1388
      %1393 = vrot.lane.b32.xlu0 %v1333, 116
      %v1394 = vpop.permute.xlu0 %1393
      %1395 = vrot.lane.b32.xlu0 %v1334, 116
      %v1396 = vpop.permute.xlu0 %1395
      %1397 = vrot.lane.b32.xlu0 %v1336, 116
      %v1398 = vpop.permute.xlu0 %1397
      %1399 = vrot.lane.b32.xlu0 %v1338, 116
      %v1400 = vpop.permute.xlu0 %1399
      %v1401 = vsel %vm1199, %v1394, %v1396
      %v1402 = vsel %vm1199, %v1398, %v1400
      %v1405 = vsel %vm575, %v1326, %v1347
      %v1409 = vsel %vm580, %v1348, %v1361
      %v1413 = vsel %vm585, %v1362, %v1378
      %v1417 = vsel %vm575, %v1391, %v1401
      %v1421 = vsel %vm575, %v1332, %v1342
      %v1424 = vsel %vm580, %v1346, %v1356
      %v1427 = vunpack.c.l.s4 1966171168
      %v1428 = vunpack.c.0.s8 %v1427
      %v1429 = vlaneseq
      %v1430 = vshrl.u32 %v1429, 7
      %v1431 = vsub.s32 %v1428, %v1430
      %v1432 = vrot.slane %v1317, %v1431
      %v1433 = vcombine.high %v1432, %v1432
      %v1435 = vunpack.c.l.s4 1966171168
      %v1436 = vunpack.c.0.s8 %v1435
      %v1437 = vlaneseq
      %v1438 = vshrl.u32 %v1437, 7
      %v1439 = vsub.s32 %v1436, %v1438
      %v1440 = vrot.slane %v1432, %v1439
      %v1442 = vunpack.c.l.s4 1966171168
      %v1443 = vunpack.c.0.s8 %v1442
      %v1444 = vlaneseq
      %v1445 = vshrl.u32 %v1444, 7
      %v1446 = vsub.s32 %v1443, %v1445
      %v1447 = vrot.slane %v1433, %v1446
      %1448 = vrot.lane.b32.xlu0 %v1440, 8
      %v1449 = vpop.permute.xlu0 %1448
      %1450 = vrot.lane.b32.xlu0 %v1447, 8
      %v1451 = vpop.permute.xlu0 %1450
      %v1452 = vsel %vm627, %v1449, %v1451
      %1457 = vrot.lane.b32.xlu0 %v1325, 108
      %v1458 = vpop.permute.xlu0 %1457
      %1459 = vrot.lane.b32.xlu0 %v1331, 108
      %v1460 = vpop.permute.xlu0 %1459
      %1461 = vrot.lane.b32.xlu0 %v1405, 108
      %v1462 = vpop.permute.xlu0 %1461
      %1463 = vrot.lane.b32.xlu0 %v1421, 108
      %v1464 = vpop.permute.xlu0 %1463
      %1465 = vrot.lane.b32.xlu0 %v1409, 108
      %v1466 = vpop.permute.xlu0 %1465
      %1467 = vrot.lane.b32.xlu0 %v1424, 108
      %v1468 = vpop.permute.xlu0 %1467
      %1469 = vrot.lane.b32.xlu0 %v1362, 108
      %v1470 = vpop.permute.xlu0 %1469
      %1471 = vrot.lane.b32.xlu0 %v1360, 108
      %v1472 = vpop.permute.xlu0 %1471
      %vm1473 = vcmask 883712
      %v1474 = vsel %vm1473, %v1458, %v1460
      %v1475 = vsel %vm1473, %v1462, %v1464
      %v1476 = vsel %vm1473, %v1466, %v1468
      %v1477 = vsel %vm1473, %v1470, %v1472
      %v1482 = vsel %vm657, %v1452, 0
      %v1485 = vsel %vm585, %v1477, 0
      %1487 = vmatprep.subr.bf16.mxu0 0
      %1488 = vmatpush1.bf16.msra.mxu0 %v1474
      %1489 = vmatprep.subr.bf16.mxu0 0
      %1490 = vmatpush1.bf16.msra.mxu0 %v1475
      %1491 = vmatprep.subr.bf16.mxu0 0
      %1492 = vmatpush1.bf16.msra.mxu0 %v1476
      %1493 = vmatprep.subr.bf16.mxu0 0
      %1494 = vmatpush1.bf16.msra.mxu0 %v1485
      %1495 = vmatprep.subr.bf16.mxu0 0
      %1496 = vmatpush1.bf16.msra.mxu0 0
      %1497 = vmatprep.subr.bf16.mxu0 0
      %1498 = vmatpush1.bf16.msra.mxu0 0
      %1499 = vmatprep.subr.bf16.mxu0 0
      %1500 = vmatpush1.bf16.msra.mxu0 0
      %1501 = vmatprep.subr.bf16.mxu0 0
      %1502 = vmatpush1.bf16.msra.mxu0 0
      %1503 = vmatprep.subr.bf16.mxu0 0
      %1504 = vmatpush1.bf16.msra.mxu0 0
      %1505 = vmatprep.subr.bf16.mxu0 0
      %1506 = vmatpush1.bf16.msra.mxu0 0
      %1507 = vmatprep.subr.bf16.mxu0 0
      %1508 = vmatpush1.bf16.msra.mxu0 0
      %1509 = vmatprep.subr.bf16.mxu0 0
      %1510 = vmatpush1.bf16.msra.mxu0 0
      %1511 = vmatprep.subr.bf16.mxu0 0
      %1512 = vmatpush1.bf16.msra.mxu0 0
      %1513 = vmatprep.subr.bf16.mxu0 0
      %1514 = vmatpush1.bf16.msra.mxu0 0
      %1515 = vmatprep.subr.bf16.mxu0 0
      %1516 = vmatpush1.bf16.msra.mxu0 0
      %1517 = vmatprep.subr.bf16.mxu0 0
      %1518 = vmatpush1.bf16.msra.mxu0 0
      %1519 = vmatprep.mubr.bf16.mxu0 0
      %1520 = vmatmul.mubr.bf16.gmra.mrb[0].mxu0 %v1482
      %v1521 = vpop.f32.mrb[0].mxu0
      %v1522 = vadd.f32 0.0, %v1521
      %v1523 = vpop.f32.mrb[0].mxu0
      %v1524 = vpop.f32.mrb[0].mxu0
      %v1525 = vpop.f32.mrb[0].mxu0
      %1526 = vdwg.mxu0
      %v1528 = vsel %vm704, %v1317, 0
      %v1531 = vsel %vm580, %v1402, 0
      %1533 = vmatprep.subr.bf16.mxu0 0
      %1534 = vmatpush1.bf16.msra.mxu0 %v1325
      %1535 = vmatprep.subr.bf16.mxu0 0
      %1536 = vmatpush1.bf16.msra.mxu0 %v1405
      %1537 = vmatprep.subr.bf16.mxu0 0
      %1538 = vmatpush1.bf16.msra.mxu0 %v1409
      %1539 = vmatprep.subr.bf16.mxu0 0
      %1540 = vmatpush1.bf16.msra.mxu0 %v1413
      %1541 = vmatprep.subr.bf16.mxu0 0
      %1542 = vmatpush1.bf16.msra.mxu0 %v1379
      %1543 = vmatprep.subr.bf16.mxu0 0
      %1544 = vmatpush1.bf16.msra.mxu0 %v1390
      %1545 = vmatprep.subr.bf16.mxu0 0
      %1546 = vmatpush1.bf16.msra.mxu0 %v1417
      %1547 = vmatprep.subr.bf16.mxu0 0
      %1548 = vmatpush1.bf16.msra.mxu0 %v1531
      %1549 = vmatprep.subr.bf16.mxu0 0
      %1550 = vmatpush1.bf16.msra.mxu0 0
      %1551 = vmatprep.subr.bf16.mxu0 0
      %1552 = vmatpush1.bf16.msra.mxu0 0
      %1553 = vmatprep.subr.bf16.mxu0 0
      %1554 = vmatpush1.bf16.msra.mxu0 0
      %1555 = vmatprep.subr.bf16.mxu0 0
      %1556 = vmatpush1.bf16.msra.mxu0 0
      %1557 = vmatprep.subr.bf16.mxu0 0
      %1558 = vmatpush1.bf16.msra.mxu0 0
      %1559 = vmatprep.subr.bf16.mxu0 0
      %1560 = vmatpush1.bf16.msra.mxu0 0
      %1561 = vmatprep.subr.bf16.mxu0 0
      %1562 = vmatpush1.bf16.msra.mxu0 0
      %1563 = vmatprep.subr.bf16.mxu0 0
      %1564 = vmatpush1.bf16.msra.mxu0 0
      %1565 = vmatprep.mubr.bf16.mxu0 0
      %1566 = vmatmul.mubr.bf16.gmra.mrb[0].mxu0 %v1528
      %v1567 = vpop.f32.mrb[0].mxu0
      %v1568 = vadd.f32 %v1522, %v1567
      %v1569 = vpop.f32.mrb[0].mxu0
      %v1570 = vpop.f32.mrb[0].mxu0
      %v1571 = vpop.f32.mrb[0].mxu0
      %1572 = vdwg.mxu0
      %1574 = vset.pattern.permute.xlu0 0
      %1575 = vperm.xlu0 %1574, %v1318
      %v1576 = vpop.permute.xlu0 %1575
      %v1578 = vlaneseq
      %v1579 = vshrl.u32 %v1578, 7
      %v1580 = vsub.s32 0, %v1579
      %v1581 = vrot.slane %v1576, %v1580
      %v1582 = vadd.f32 %v1568, %v1581
      %v1583 = vmax.f32 %v1582, 0.0
      %v1584 = vpack.c.bf16 %v1583, %v1583
      %v1585 = vld [vmem:[%s479 + $0x3] sm:$0x1]
      %v1586 = vsel %vm765, %v1584, %v1585
      %1587 = vst [vmem:[%s479 + $0x3] sm:$0x1] %v1586
      %p1588 = scmp.lt.s32.totalorder %s31, 1
      %s1589 = scalar_select %p1588, %s31, 1
      %s1590 = smul.addr %s1589, 4
      %s1591 = scalar_lea.vmem %s12, %s1590
      // Predicated region
      $region69: #{refine_net_forward.4} parent=67 // pred_check
        %p1592 = pneg %p321
      $region70: #{refine_net_forward.4} parent=67 // pred_check_branch
        %1594 = sbr.rel (%p1592) target = $region72
      $region71: #{refine_net_forward.4} parent=67 // pred_region
        _
      $region72: #{refine_net_forward.4} parent=67 // pred_fallthru
        _
    $region68: #{refine_net_forward.4} parent=5 // pred_fallthru
      _
    %p1595 = scmp.le.s32.totalorder 2, %s26
    // Predicated region
    $region73: #{refine_net_forward.4} parent=5 // pred_check
      %p1596 = pneg %p1595
    $region74: #{refine_net_forward.4} parent=5 // pred_check_branch
      %1598 = sbr.rel (%p1596) target = $region76
    $region75: #{refine_net_forward.4} parent=5 // pred_region
      %s1599 = ssub.s32 %s26, 2
      // Predicated region
      $region77: #{refine_net_forward.4} parent=75 // pred_check
        %p1600 = pneg %p327
      $region78: #{refine_net_forward.4} parent=75 // pred_check_branch
        %1602 = sbr.rel (%p1600) target = $region80
      $region79: #{refine_net_forward.4} parent=75 // pred_region
        %p1603 = scmp.lt.s32.totalorder %s32, 1
        %s1604 = scalar_select %p1603, %s32, 1
        %s1605 = smul.addr %s1604, 4
        %s1606 = scalar_lea.vmem %s12, %s1605
      $region80: #{refine_net_forward.4} parent=75 // pred_fallthru
        _
    $region76: #{refine_net_forward.4} parent=5 // pred_fallthru
      _
  $region6: #{refine_net_forward.4} parent=0 // loop_footer
    %s30 = sadd.s32 1, %s26
  $region7: #{refine_net_forward.4} parent=0 // loop_footer_branch
    %25 = sbr.rel target = $region3
  $region8: #{refine_net_forward.4} parent=0 // loop_exit
    _

// kernel: refine_net_forward.5
$region0: #{refine_net_forward.5}
  #allocation0 [shape = 'u32[]', space=smem, size = 0x4, offset = 0x4, fixed_abs, tag = 'smem constant byte address 0x4 - core index']
  #allocation1 [shape = 'u32[144,128]{1,0:T(1,128)}', space=vmem, size = 0x12000, scoped, tag = 'internal scratch']
  #allocation2 [shape = 'f32[1,1]{1,0:T(1,128)S(1)}', space=vmem, size = 0x200, scoped, tag = 'scoped memory for refine_net_forward.5']
  %s0 = inlined_call_operand.vmem [shape: bf16[2,20,1280], index: 0, kind: input, shape index: {}]
  %s1 = inlined_call_operand.vmem [shape: bf16[2,4,1280], index: 1, kind: input, shape index: {}]
  %s2 = inlined_call_operand.vmem [shape: bf16[1,36], index: 2, kind: input, shape index: {}]
  %s3 = inlined_call_operand.vmem [shape: bf16[1,180], index: 3, kind: input, shape index: {}]
  %s4 = inlined_call_operand.<no memory space> [shape: f32[1,1], index: 4, kind: input, shape index: {}]
  %s5 = inlined_call_operand.vmem [shape: f32[2,1,1152], index: 5, kind: output, shape index: {}]
  %s6 = sld [smem:[#allocation0]]
  $region53: #{refine_net_forward.5} parent=0
    _
  %s8 = ssub.s32 1, %s6
  %s9 = scalar_select 0, %s8, %s6
  %v10 = vstv %s4
  %11 = vst [vmem:[#allocation2] sm:$0x1] %v10
  loop: start=0, step=1, limit=4
  $region2: #{refine_net_forward.5} parent=0 // loop_pre_header
    _
  $region3: #{refine_net_forward.5} parent=0 // loop_header
    %s13 = sphi 0, %s17
    %p14 = scmp.ge.s32.totalorder %s13, 4
    %s23 = sphi 0, %s25
    %s26 = sphi 0, %s23
    %s27 = sphi 0, %s26
    %s43 = sphi 0, %s27
    %s49 = sphi 0, %s51
    %s52 = sphi 0, %s49
    %s53 = sphi 0, %s52
    %s69 = sphi 0, %s53
    %s73 = sphi 0, %s73
    %s75 = sphi 0, %s73
    %s76 = sphi 0, %s75
    %s90 = sphi 0, %s76
    %s94 = sphi 0, %s94
    %s96 = sphi 0, %s94
    %s97 = sphi 0, %s96
    %s111 = sphi 0, %s97
    %s115 = sphi 0, %s115
    %s117 = sphi 0, %s115
    %s118 = sphi 0, %s117
    %s132 = sphi 0, %s118
    %s138 = sphi 0, %s140
    %s141 = sphi 0, %s138
    %s142 = sphi 0, %s141
    %s158 = sphi 0, %s142
  $region4: #{refine_net_forward.5} parent=0 // loop_header_branch
    %16 = sbr.rel (%p14) target = $region8
  $region5: #{refine_net_forward.5} parent=0 // loop_body
    %s18 = ssub.s32 %s13, 1
    %s19 = ssub.s32 %s13, 2
    %s20 = sadd.s32 %s13, 1
    %s21 = ssub.s32 %s13, %s20
    %p22 = scmp.eq.s32.totalorder %s21, 0
    %s24 = sadd.s32 %s23, 1
    %s25 = scalar_select %p22, %s23, %s24
    %p28 = pneg %p22
    %p29 = scmp.eq.s32.totalorder %s13, 1
    %p30 = por %p28, %p29
    %p31 = scmp.ne.s32.totalorder %s23, %s26
    %p32 = scmp.eq.s32.totalorder %s13, 0
    %p33 = por %p31, %p32
    %p34 = scmp.ne.s32.totalorder %s23, %s26
    %p35 = scmp.eq.s32.totalorder %s18, 1
    %p36 = por %p34, %p35
    %p37 = scmp.ne.s32.totalorder %s26, %s27
    %p38 = scmp.eq.s32.totalorder %s18, 0
    %p39 = por %p37, %p38
    %p40 = scmp.ne.s32.totalorder %s26, %s27
    %p41 = scmp.eq.s32.totalorder %s19, 1
    %p42 = por %p40, %p41
    %p44 = scmp.ne.s32.totalorder %s27, %s43
    %p45 = scmp.eq.s32.totalorder %s19, 0
    %p46 = por %p44, %p45
    %s47 = ssub.s32 %s13, %s20
    %p48 = scmp.eq.s32.totalorder %s47, 0
    %s50 = sadd.s32 %s49, 1
    %s51 = scalar_select %p48, %s49, %s50
    %p54 = pneg %p48
    %p55 = scmp.eq.s32.totalorder %s13, 1
    %p56 = por %p54, %p55
    %p57 = scmp.ne.s32.totalorder %s49, %s52
    %p58 = scmp.eq.s32.totalorder %s13, 0
    %p59 = por %p57, %p58
    %p60 = scmp.ne.s32.totalorder %s49, %s52
    %p61 = scmp.eq.s32.totalorder %s18, 1
    %p62 = por %p60, %p61
    %p63 = scmp.ne.s32.totalorder %s52, %s53
    %p64 = scmp.eq.s32.totalorder %s18, 0
    %p65 = por %p63, %p64
    %p66 = scmp.ne.s32.totalorder %s52, %s53
    %p67 = scmp.eq.s32.totalorder %s19, 1
    %p68 = por %p66, %p67
    %p70 = scmp.ne.s32.totalorder %s53, %s69
    %p71 = scmp.eq.s32.totalorder %s19, 0
    %p72 = por %p70, %p71
    %s74 = sadd.s32 %s73, 1
    %p77 = scmp.eq.s32.totalorder %s13, 1
    %p78 = scmp.ne.s32.totalorder %s73, %s75
    %p79 = scmp.eq.s32.totalorder %s13, 0
    %p80 = por %p78, %p79
    %p81 = scmp.ne.s32.totalorder %s73, %s75
    %p82 = scmp.eq.s32.totalorder %s18, 1
    %p83 = por %p81, %p82
    %p84 = scmp.ne.s32.totalorder %s75, %s76
    %p85 = scmp.eq.s32.totalorder %s18, 0
    %p86 = por %p84, %p85
    %p87 = scmp.ne.s32.totalorder %s75, %s76
    %p88 = scmp.eq.s32.totalorder %s19, 1
    %p89 = por %p87, %p88
    %p91 = scmp.ne.s32.totalorder %s76, %s90
    %p92 = scmp.eq.s32.totalorder %s19, 0
    %p93 = por %p91, %p92
    %s95 = sadd.s32 %s94, 1
    %p98 = scmp.eq.s32.totalorder %s13, 1
    %p99 = scmp.ne.s32.totalorder %s94, %s96
    %p100 = scmp.eq.s32.totalorder %s13, 0
    %p101 = por %p99, %p100
    %p102 = scmp.ne.s32.totalorder %s94, %s96
    %p103 = scmp.eq.s32.totalorder %s18, 1
    %p104 = por %p102, %p103
    %p105 = scmp.ne.s32.totalorder %s96, %s97
    %p106 = scmp.eq.s32.totalorder %s18, 0
    %p107 = por %p105, %p106
    %p108 = scmp.ne.s32.totalorder %s96, %s97
    %p109 = scmp.eq.s32.totalorder %s19, 1
    %p110 = por %p108, %p109
    %p112 = scmp.ne.s32.totalorder %s97, %s111
    %p113 = scmp.eq.s32.totalorder %s19, 0
    %p114 = por %p112, %p113
    %s116 = sadd.s32 %s115, 1
    %p119 = scmp.eq.s32.totalorder %s13, 1
    %p120 = scmp.ne.s32.totalorder %s115, %s117
    %p121 = scmp.eq.s32.totalorder %s13, 0
    %p122 = por %p120, %p121
    %p123 = scmp.ne.s32.totalorder %s115, %s117
    %p124 = scmp.eq.s32.totalorder %s18, 1
    %p125 = por %p123, %p124
    %p126 = scmp.ne.s32.totalorder %s117, %s118
    %p127 = scmp.eq.s32.totalorder %s18, 0
    %p128 = por %p126, %p127
    %p129 = scmp.ne.s32.totalorder %s117, %s118
    %p130 = scmp.eq.s32.totalorder %s19, 1
    %p131 = por %p129, %p130
    %p133 = scmp.ne.s32.totalorder %s118, %s132
    %p134 = scmp.eq.s32.totalorder %s19, 0
    %p135 = por %p133, %p134
    %s136 = ssub.s32 %s13, %s20
    %p137 = scmp.eq.s32.totalorder %s136, 0
    %s139 = sadd.s32 %s138, 1
    %s140 = scalar_select %p137, %s138, %s139
    %p143 = pneg %p137
    %p144 = scmp.eq.s32.totalorder %s13, 1
    %p145 = por %p143, %p144
    %p146 = scmp.ne.s32.totalorder %s138, %s141
    %p147 = scmp.eq.s32.totalorder %s13, 0
    %p148 = por %p146, %p147
    %p149 = scmp.ne.s32.totalorder %s138, %s141
    %p150 = scmp.eq.s32.totalorder %s18, 1
    %p151 = por %p149, %p150
    %p152 = scmp.ne.s32.totalorder %s141, %s142
    %p153 = scmp.eq.s32.totalorder %s18, 0
    %p154 = por %p152, %p153
    %p155 = scmp.ne.s32.totalorder %s141, %s142
    %p156 = scmp.eq.s32.totalorder %s19, 1
    %p157 = por %p155, %p156
    %p159 = scmp.ne.s32.totalorder %s142, %s158
    %p160 = scmp.eq.s32.totalorder %s19, 0
    %p161 = por %p159, %p160
    %p162 = scmp.le.s32.totalorder 1, %s13
    %p163 = scmp.lt.s32.totalorder %s13, 3
    %p164 = pnand %p162, %p163
    %p165 = pneg %p164
    // Predicated region
    $region9: #{refine_net_forward.5} parent=5 // pred_check
      _
    $region10: #{refine_net_forward.5} parent=5 // pred_check_branch
      %167 = sbr.rel (%p164) target = $region12
    $region11: #{refine_net_forward.5} parent=5 // pred_region
      %s168 = ssub.s32 %s13, 1
      // Predicated region
      $region13: #{refine_net_forward.5} parent=11 // pred_check
        %p169 = pneg %p86
      $region14: #{refine_net_forward.5} parent=11 // pred_check_branch
        %171 = sbr.rel (%p169) target = $region16
      $region15: #{refine_net_forward.5} parent=11 // pred_region
        _
      $region16: #{refine_net_forward.5} parent=11 // pred_fallthru
        _
      // Predicated region
      $region17: #{refine_net_forward.5} parent=11 // pred_check
        %p172 = pneg %p107
      $region18: #{refine_net_forward.5} parent=11 // pred_check_branch
        %174 = sbr.rel (%p172) target = $region20
      $region19: #{refine_net_forward.5} parent=11 // pred_region
        _
      $region20: #{refine_net_forward.5} parent=11 // pred_fallthru
        _
      // Predicated region
      $region21: #{refine_net_forward.5} parent=11 // pred_check
        %p175 = pneg %p128
      $region22: #{refine_net_forward.5} parent=11 // pred_check_branch
        %177 = sbr.rel (%p175) target = $region24
      $region23: #{refine_net_forward.5} parent=11 // pred_region
        _
      $region24: #{refine_net_forward.5} parent=11 // pred_fallthru
        _
    $region12: #{refine_net_forward.5} parent=5 // pred_fallthru
      _
    %p178 = scmp.lt.s32.totalorder %s13, 2
    // Predicated region
    $region25: #{refine_net_forward.5} parent=5 // pred_check
      %p179 = pneg %p178
    $region26: #{refine_net_forward.5} parent=5 // pred_check_branch
      %181 = sbr.rel (%p179) target = $region28
    $region27: #{refine_net_forward.5} parent=5 // pred_region
      // Predicated region
      $region29: #{refine_net_forward.5} parent=27 // pred_check
        %p182 = pneg %p33
      $region30: #{refine_net_forward.5} parent=27 // pred_check_branch
        %184 = sbr.rel (%p182) target = $region32
      $region31: #{refine_net_forward.5} parent=27 // pred_region
        %p185 = scmp.lt.s32.totalorder %s13, 1
        %s186 = scalar_select %p185, %s13, 1
        %s187 = smul.addr %s186, 30
        %s188 = smul.addr %s187, 4
        %s189 = scalar_lea.vmem %s0, %s188
      $region32: #{refine_net_forward.5} parent=27 // pred_fallthru
        _
      // Predicated region
      $region33: #{refine_net_forward.5} parent=27 // pred_check
        %p190 = pneg %p59
      $region34: #{refine_net_forward.5} parent=27 // pred_check_branch
        %192 = sbr.rel (%p190) target = $region36
      $region35: #{refine_net_forward.5} parent=27 // pred_region
        %p193 = scmp.lt.s32.totalorder %s13, 1
        %s194 = scalar_select %p193, %s13, 1
        %s195 = smul.addr %s194, 10
        %s196 = smul.addr %s195, 2
        %s197 = scalar_lea.vmem %s1, %s196
      $region36: #{refine_net_forward.5} parent=27 // pred_fallthru
        _
    $region28: #{refine_net_forward.5} parent=5 // pred_fallthru
      _
    %p198 = scmp.le.s32.totalorder 1, %s13
    %p199 = scmp.lt.s32.totalorder %s13, 3
    %p200 = pnand %p198, %p199
    %p201 = pneg %p200
    // Predicated region
    $region37: #{refine_net_forward.5} parent=5 // pred_check
      _
    $region38: #{refine_net_forward.5} parent=5 // pred_check_branch
      %203 = sbr.rel (%p200) target = $region40
    $region39: #{refine_net_forward.5} parent=5 // pred_region
      %s204 = ssub.s32 %s13, 1
      %p205 = scmp.lt.s32.totalorder %s18, 1
      %s206 = scalar_select %p205, %s18, 1
      %s207 = smul.addr %s206, 30
      %s208 = smul.addr %s207, 4
      %s209 = scalar_lea.vmem %s0, %s208
      %p210 = pneg %p39
      %p211 = pneg %p36
      %p212 = scmp.lt.s32.totalorder %s18, 1
      %s213 = scalar_select %p212, %s18, 1
      %s214 = smul.addr %s213, 10
      %s215 = smul.addr %s214, 2
      %s216 = scalar_lea.vmem %s1, %s215
      %p217 = pneg %p65
      %p218 = pneg %p62
      %p219 = pneg %p86
      %p220 = pneg %p83
      %p221 = pneg %p107
      %p222 = pneg %p104
      %p223 = pneg %p128
      %p224 = pneg %p125
      %p225 = pneg %p154
      %p226 = pneg %p151
      %p227 = scmp.lt.s32.totalorder %s18, 1
      %s228 = scalar_select %p227, %s18, 1
      %s229 = smul.addr %s228, 9
      %s230 = scalar_lea.vmem %s5, %s229
      %p231 = scmp.lt.s32.totalorder %s18, 1
      %s232 = scalar_select %p231, %s18, 1
      %s233 = smul.addr %s232, 30
      %s234 = smul.addr %s233, 4
      %s235 = scalar_lea.vmem %s0, %s234
      %p236 = scmp.lt.s32.totalorder %s18, 1
      %s237 = scalar_select %p236, %s18, 1
      %s238 = smul.addr %s237, 10
      %s239 = smul.addr %s238, 2
      %s240 = scalar_lea.vmem %s1, %s239
      %p241 = scmp.lt.s32.totalorder %s18, 1
      %s242 = scalar_select %p241, %s18, 1
      %s243 = smul.addr %s242, 9
      %s244 = scalar_lea.vmem %s5, %s243
      %v246 = vld [vmem:[%s240] sm:$0xff]
      %v247 = vld [vmem:[%s240 + $0x8] sm:$0xff]
      %v248 = vld [vmem:[%s240 + $0x10] sm:$0xf]
      %v249 = vld [vmem:[%s2] sm:$0x1]
      %v253 = vcombine.high %v246, %v246
      %v255 = vunpack.c.l.s4 1983009808
      %v256 = vunpack.c.0.s8 %v255
      %v257 = vlaneseq
      %v258 = vshrl.u32 %v257, 7
      %v259 = vsub.s32 %v256, %v258
      %v260 = vrot.slane %v246, %v259
      %v262 = vunpack.c.l.s4 1983009808
      %v263 = vunpack.c.0.s8 %v262
      %v264 = vlaneseq
      %v265 = vshrl.u32 %v264, 7
      %v266 = vsub.s32 %v263, %v265
      %v267 = vrot.slane %v253, %v266
      %v268 = vcombine.high %v260, %v260
      %v269 = vcombine.high %v267, %v267
      %v270 = vcombine.high %v247, %v247
      %v272 = vunpack.c.l.s4 1983009808
      %v273 = vunpack.c.0.s8 %v272
      %v274 = vlaneseq
      %v275 = vshrl.u32 %v274, 7
      %v276 = vsub.s32 %v273, %v275
      %v277 = vrot.slane %v247, %v276
      %v279 = vunpack.c.l.s4 1983009808
      %v280 = vunpack.c.0.s8 %v279
      %v281 = vlaneseq
      %v282 = vshrl.u32 %v281, 7
      %v283 = vsub.s32 %v280, %v282
      %v284 = vrot.slane %v270, %v283
      %v285 = vcombine.high %v277, %v277
      %v286 = vcombine.high %v284, %v284
      %v288 = vunpack.c.l.s4 1983009808
      %v289 = vunpack.c.0.s8 %v288
      %v290 = vlaneseq
      %v291 = vshrl.u32 %v290, 7
      %v292 = vsub.s32 %v289, %v291
      %v293 = vrot.slane %v248, %v292
      %v294 = vcombine.low %v246, %v246
      %v296 = vunpack.c.l.s4 1983009808
      %v297 = vunpack.c.0.s8 %v296
      %v298 = vlaneseq
      %v299 = vshrl.u32 %v298, 7
      %v300 = vsub.s32 %v297, %v299
      %v301 = vrot.slane %v294, %v300
      %v302 = vcombine.high %v301, %v301
      %v303 = vcombine.low %v247, %v247
      %v305 = vunpack.c.l.s4 1983009808
      %v306 = vunpack.c.0.s8 %v305
      %v307 = vlaneseq
      %v308 = vshrl.u32 %v307, 7
      %v309 = vsub.s32 %v306, %v308
      %v310 = vrot.slane %v303, %v309
      %v311 = vcombine.high %v310, %v310
      %v312 = vcombine.low %v248, %v248
      %v314 = vunpack.c.l.s4 1983009808
      %v315 = vunpack.c.0.s8 %v314
      %v316 = vlaneseq
      %v317 = vshrl.u32 %v316, 7
      %v318 = vsub.s32 %v315, %v317
      %v319 = vrot.slane %v312, %v318
      %v320 = vcombine.high %v319, %v319
      %321 = vrot.lane.b32.xlu0 %v301, 127
      %v322 = vpop.permute.xlu0 %321
      %323 = vrot.lane.b32.xlu0 %v302, 127
      %v324 = vpop.permute.xlu0 %323
      %325 = vrot.lane.b32.xlu0 %v260, 127
      %v326 = vpop.permute.xlu0 %325
      %327 = vrot.lane.b32.xlu0 %v268, 127
      %v328 = vpop.permute.xlu0 %327
      %329 = vrot.lane.b32.xlu0 %v310, 127
      %v330 = vpop.permute.xlu0 %329
      %331 = vrot.lane.b32.xlu0 %v311, 127
      %v332 = vpop.permute.xlu0 %331
      %333 = vrot.lane.b32.xlu0 %v277, 127
      %v334 = vpop.permute.xlu0 %333
      %335 = vrot.lane.b32.xlu0 %v285, 127
      %v336 = vpop.permute.xlu0 %335
      %337 = vrot.lane.b32.xlu0 %v319, 127
      %v338 = vpop.permute.xlu0 %337
      %339 = vrot.lane.b32.xlu0 %v320, 127
      %v340 = vpop.permute.xlu0 %339
      %vm341 = vcmask 1039360
      %v342 = vsel %vm341, %v322, %v324
      %v343 = vsel %vm341, %v324, %v326
      %v344 = vsel %vm341, %v326, %v328
      %v345 = vsel %vm341, %v328, %v330
      %v346 = vsel %vm341, %v330, %v332
      %v347 = vsel %vm341, %v332, %v334
      %v348 = vsel %vm341, %v334, %v336
      %v349 = vsel %vm341, %v336, %v338
      %v350 = vsel %vm341, %v338, %v340
      %v351 = vcombine.low %v260, %v260
      %v352 = vcombine.low %v267, %v267
      %v353 = vcombine.low %v277, %v277
      %v354 = vcombine.low %v284, %v284
      %v355 = vcombine.low %v293, %v293
      %356 = vrot.lane.b32.xlu0 %v351, 126
      %v357 = vpop.permute.xlu0 %356
      %358 = vrot.lane.b32.xlu0 %v260, 126
      %v359 = vpop.permute.xlu0 %358
      %360 = vrot.lane.b32.xlu0 %v352, 126
      %v361 = vpop.permute.xlu0 %360
      %362 = vrot.lane.b32.xlu0 %v267, 126
      %v363 = vpop.permute.xlu0 %362
      %364 = vrot.lane.b32.xlu0 %v353, 126
      %v365 = vpop.permute.xlu0 %364
      %366 = vrot.lane.b32.xlu0 %v277, 126
      %v367 = vpop.permute.xlu0 %366
      %368 = vrot.lane.b32.xlu0 %v354, 126
      %v369 = vpop.permute.xlu0 %368
      %370 = vrot.lane.b32.xlu0 %v284, 126
      %v371 = vpop.permute.xlu0 %370
      %372 = vrot.lane.b32.xlu0 %v355, 126
      %v373 = vpop.permute.xlu0 %372
      %374 = vrot.lane.b32.xlu0 %v293, 126
      %v375 = vpop.permute.xlu0 %374
      %vm376 = vcmask 1031168
      %v377 = vsel %vm376, %v357, %v359
      %v378 = vsel %vm376, %v359, %v361
      %v379 = vsel %vm376, %v361, %v363
      %v380 = vsel %vm376, %v363, %v365
      %v381 = vsel %vm376, %v365, %v367
      %v382 = vsel %vm376, %v367, %v369
      %v383 = vsel %vm376, %v369, %v371
      %v384 = vsel %vm376, %v371, %v373
      %v385 = vsel %vm376, %v373, %v375
      %v386 = vcombine.low %v301, %v301
      %v387 = vcombine.low %v310, %v310
      %v388 = vcombine.low %v319, %v319
      %389 = vrot.lane.b32.xlu0 %v386, 94
      %v390 = vpop.permute.xlu0 %389
      %391 = vrot.lane.b32.xlu0 %v301, 94
      %v392 = vpop.permute.xlu0 %391
      %393 = vrot.lane.b32.xlu0 %v351, 94
      %v394 = vpop.permute.xlu0 %393
      %395 = vrot.lane.b32.xlu0 %v260, 94
      %v396 = vpop.permute.xlu0 %395
      %397 = vrot.lane.b32.xlu0 %v387, 94
      %v398 = vpop.permute.xlu0 %397
      %399 = vrot.lane.b32.xlu0 %v310, 94
      %v400 = vpop.permute.xlu0 %399
      %401 = vrot.lane.b32.xlu0 %v353, 94
      %v402 = vpop.permute.xlu0 %401
      %403 = vrot.lane.b32.xlu0 %v277, 94
      %v404 = vpop.permute.xlu0 %403
      %405 = vrot.lane.b32.xlu0 %v388, 94
      %v406 = vpop.permute.xlu0 %405
      %407 = vrot.lane.b32.xlu0 %v319, 94
      %v408 = vpop.permute.xlu0 %407
      %vm409 = vcmask 769024
      %v410 = vsel %vm409, %v390, %v392
      %v411 = vsel %vm409, %v392, %v394
      %v412 = vsel %vm409, %v394, %v396
      %v413 = vsel %vm409, %v396, %v398
      %v414 = vsel %vm409, %v398, %v400
      %v415 = vsel %vm409, %v400, %v402
      %v416 = vsel %vm409, %v402, %v404
      %v417 = vsel %vm409, %v404, %v406
      %v418 = vsel %vm409, %v406, %v408
      %v419 = vcombine.high %v293, %v293
      %420 = vrot.lane.b32.xlu0 %v260, 93
      %v421 = vpop.permute.xlu0 %420
      %422 = vrot.lane.b32.xlu0 %v268, 93
      %v423 = vpop.permute.xlu0 %422
      %424 = vrot.lane.b32.xlu0 %v267, 93
      %v425 = vpop.permute.xlu0 %424
      %426 = vrot.lane.b32.xlu0 %v269, 93
      %v427 = vpop.permute.xlu0 %426
      %428 = vrot.lane.b32.xlu0 %v277, 93
      %v429 = vpop.permute.xlu0 %428
      %430 = vrot.lane.b32.xlu0 %v285, 93
      %v431 = vpop.permute.xlu0 %430
      %432 = vrot.lane.b32.xlu0 %v284, 93
      %v433 = vpop.permute.xlu0 %432
      %434 = vrot.lane.b32.xlu0 %v286, 93
      %v435 = vpop.permute.xlu0 %434
      %436 = vrot.lane.b32.xlu0 %v293, 93
      %v437 = vpop.permute.xlu0 %436
      %438 = vrot.lane.b32.xlu0 %v419, 93
      %v439 = vpop.permute.xlu0 %438
      %vm440 = vcmask 760832
      %v441 = vsel %vm440, %v421, %v423
      %v442 = vsel %vm440, %v423, %v425
      %v443 = vsel %vm440, %v425, %v427
      %v444 = vsel %vm440, %v427, %v429
      %v445 = vsel %vm440, %v429, %v431
      %v446 = vsel %vm440, %v431, %v433
      %v447 = vsel %vm440, %v433, %v435
      %v448 = vsel %vm440, %v435, %v437
      %v449 = vsel %vm440, %v437, %v439
      %450 = vrot.lane.b32.xlu0 %v301, 92
      %v451 = vpop.permute.xlu0 %450
      %452 = vrot.lane.b32.xlu0 %v302, 92
      %v453 = vpop.permute.xlu0 %452
      %454 = vrot.lane.b32.xlu0 %v260, 92
      %v455 = vpop.permute.xlu0 %454
      %456 = vrot.lane.b32.xlu0 %v268, 92
      %v457 = vpop.permute.xlu0 %456
      %458 = vrot.lane.b32.xlu0 %v310, 92
      %v459 = vpop.permute.xlu0 %458
      %460 = vrot.lane.b32.xlu0 %v311, 92
      %v461 = vpop.permute.xlu0 %460
      %462 = vrot.lane.b32.xlu0 %v277, 92
      %v463 = vpop.permute.xlu0 %462
      %464 = vrot.lane.b32.xlu0 %v285, 92
      %v465 = vpop.permute.xlu0 %464
      %466 = vrot.lane.b32.xlu0 %v319, 92
      %v467 = vpop.permute.xlu0 %466
      %468 = vrot.lane.b32.xlu0 %v320, 92
      %v469 = vpop.permute.xlu0 %468
      %vm470 = vcmask 752640
      %v471 = vsel %vm470, %v451, %v453
      %v472 = vsel %vm470, %v453, %v455
      %v473 = vsel %vm470, %v455, %v457
      %v474 = vsel %vm470, %v457, %v459
      %v475 = vsel %vm470, %v459, %v461
      %v476 = vsel %vm470, %v461, %v463
      %v477 = vsel %vm470, %v463, %v465
      %v478 = vsel %vm470, %v465, %v467
      %v479 = vsel %vm470, %v467, %v469
      %480 = vrot.lane.b32.xlu0 %v351, 60
      %v481 = vpop.permute.xlu0 %480
      %482 = vrot.lane.b32.xlu0 %v260, 60
      %v483 = vpop.permute.xlu0 %482
      %484 = vrot.lane.b32.xlu0 %v352, 60
      %v485 = vpop.permute.xlu0 %484
      %486 = vrot.lane.b32.xlu0 %v267, 60
      %v487 = vpop.permute.xlu0 %486
      %488 = vrot.lane.b32.xlu0 %v353, 60
      %v489 = vpop.permute.xlu0 %488
      %490 = vrot.lane.b32.xlu0 %v277, 60
      %v491 = vpop.permute.xlu0 %490
      %492 = vrot.lane.b32.xlu0 %v354, 60
      %v493 = vpop.permute.xlu0 %492
      %494 = vrot.lane.b32.xlu0 %v284, 60
      %v495 = vpop.permute.xlu0 %494
      %496 = vrot.lane.b32.xlu0 %v355, 60
      %v497 = vpop.permute.xlu0 %496
      %498 = vrot.lane.b32.xlu0 %v293, 60
      %v499 = vpop.permute.xlu0 %498
      %vm500 = vcmask 490496
      %v501 = vsel %vm500, %v481, %v483
      %v502 = vsel %vm500, %v483, %v485
      %v503 = vsel %vm500, %v485, %v487
      %v504 = vsel %vm500, %v487, %v489
      %v505 = vsel %vm500, %v489, %v491
      %v506 = vsel %vm500, %v491, %v493
      %v507 = vsel %vm500, %v493, %v495
      %v508 = vsel %vm500, %v495, %v497
      %v509 = vsel %vm500, %v497, %v499
      %510 = vrot.lane.b32.xlu0 %v386, 59
      %v511 = vpop.permute.xlu0 %510
      %512 = vrot.lane.b32.xlu0 %v301, 59
      %v513 = vpop.permute.xlu0 %512
      %514 = vrot.lane.b32.xlu0 %v351, 59
      %v515 = vpop.permute.xlu0 %514
      %516 = vrot.lane.b32.xlu0 %v260, 59
      %v517 = vpop.permute.xlu0 %516
      %518 = vrot.lane.b32.xlu0 %v387, 59
      %v519 = vpop.permute.xlu0 %518
      %520 = vrot.lane.b32.xlu0 %v310, 59
      %v521 = vpop.permute.xlu0 %520
      %522 = vrot.lane.b32.xlu0 %v353, 59
      %v523 = vpop.permute.xlu0 %522
      %524 = vrot.lane.b32.xlu0 %v277, 59
      %v525 = vpop.permute.xlu0 %524
      %526 = vrot.lane.b32.xlu0 %v388, 59
      %v527 = vpop.permute.xlu0 %526
      %528 = vrot.lane.b32.xlu0 %v319, 59
      %v529 = vpop.permute.xlu0 %528
      %vm530 = vcmask 482304
      %v531 = vsel %vm530, %v511, %v513
      %v532 = vsel %vm530, %v513, %v515
      %v533 = vsel %vm530, %v515, %v517
      %v534 = vsel %vm530, %v517, %v519
      %v535 = vsel %vm530, %v519, %v521
      %v536 = vsel %vm530, %v521, %v523
      %v537 = vsel %vm530, %v523, %v525
      %v538 = vsel %vm530, %v525, %v527
      %v539 = vsel %vm530, %v527, %v529
      %540 = vrot.lane.b32.xlu0 %v260, 58
      %v541 = vpop.permute.xlu0 %540
      %542 = vrot.lane.b32.xlu0 %v268, 58
      %v543 = vpop.permute.xlu0 %542
      %544 = vrot.lane.b32.xlu0 %v267, 58
      %v545 = vpop.permute.xlu0 %544
      %546 = vrot.lane.b32.xlu0 %v269, 58
      %v547 = vpop.permute.xlu0 %546
      %548 = vrot.lane.b32.xlu0 %v277, 58
      %v549 = vpop.permute.xlu0 %548
      %550 = vrot.lane.b32.xlu0 %v285, 58
      %v551 = vpop.permute.xlu0 %550
      %552 = vrot.lane.b32.xlu0 %v284, 58
      %v553 = vpop.permute.xlu0 %552
      %554 = vrot.lane.b32.xlu0 %v286, 58
      %v555 = vpop.permute.xlu0 %554
      %556 = vrot.lane.b32.xlu0 %v293, 58
      %v557 = vpop.permute.xlu0 %556
      %558 = vrot.lane.b32.xlu0 %v419, 58
      %v559 = vpop.permute.xlu0 %558
      %vm560 = vcmask 474112
      %v561 = vsel %vm560, %v541, %v543
      %v562 = vsel %vm560, %v543, %v545
      %v563 = vsel %vm560, %v545, %v547
      %v564 = vsel %vm560, %v547, %v549
      %v565 = vsel %vm560, %v549, %v551
      %v566 = vsel %vm560, %v551, %v553
      %v567 = vsel %vm560, %v553, %v555
      %v568 = vsel %vm560, %v555, %v557
      %v569 = vsel %vm560, %v557, %v559
      %vm570 = vcmask 1041408
      %v573 = vsel %vm570, %v260, %v342
      %v576 = vsel %vm570, %v268, %v343
      %v579 = vsel %vm570, %v267, %v344
      %v582 = vsel %vm570, %v269, %v345
      %v585 = vsel %vm570, %v277, %v346
      %v588 = vsel %vm570, %v285, %v347
      %v591 = vsel %vm570, %v284, %v348
      %v594 = vsel %vm570, %v286, %v349
      %v597 = vsel %vm570, %v293, %v350
      %vm598 = vcmask 1043456
      %v600 = vsel %vm598, %v573, %v377
      %v602 = vsel %vm598, %v576, %v378
      %v604 = vsel %vm598, %v579, %v379
      %v606 = vsel %vm598, %v582, %v380
      %v608 = vsel %vm598, %v585, %v381
      %v610 = vsel %vm598, %v588, %v382
      %v612 = vsel %vm598, %v591, %v383
      %v614 = vsel %vm598, %v594, %v384
      %v616 = vsel %vm598, %v597, %v385
      %vm617 = vcmask 1045504
      %v619 = vsel %vm617, %v600, %v410
      %v622 = vsel %vm617, %v602, %v411
      %v625 = vsel %vm617, %v604, %v412
      %v628 = vsel %vm617, %v606, %v413
      %v631 = vsel %vm617, %v608, %v414
      %v634 = vsel %vm617, %v610, %v415
      %v637 = vsel %vm617, %v612, %v416
      %v640 = vsel %vm617, %v614, %v417
      %v643 = vsel %vm617, %v616, %v418
      %v647 = vsel %vm570, %v441, %v471
      %v650 = vsel %vm570, %v442, %v472
      %v653 = vsel %vm570, %v443, %v473
      %v656 = vsel %vm570, %v444, %v474
      %v659 = vsel %vm570, %v445, %v475
      %v662 = vsel %vm570, %v446, %v476
      %v665 = vsel %vm570, %v447, %v477
      %v668 = vsel %vm570, %v448, %v478
      %v671 = vsel %vm570, %v449, %v479
      %v673 = vsel %vm598, %v647, %v501
      %v675 = vsel %vm598, %v650, %v502
      %v677 = vsel %vm598, %v653, %v503
      %v679 = vsel %vm598, %v656, %v504
      %v681 = vsel %vm598, %v659, %v505
      %v683 = vsel %vm598, %v662, %v506
      %v685 = vsel %vm598, %v665, %v507
      %v687 = vsel %vm598, %v668, %v508
      %v689 = vsel %vm598, %v671, %v509
      %v691 = vsel %vm617, %v673, %v531
      %v694 = vsel %vm617, %v675, %v532
      %v697 = vsel %vm617, %v677, %v533
      %v700 = vsel %vm617, %v679, %v534
      %v703 = vsel %vm617, %v681, %v535
      %v706 = vsel %vm617, %v683, %v536
      %v709 = vsel %vm617, %v685, %v537
      %v712 = vsel %vm617, %v687, %v538
      %v715 = vsel %vm617, %v689, %v539
      %v717 = vld [vmem:[%s235] sm:$0xff]
      %v718 = vld [vmem:[%s235 + $0x8] sm:$0xff]
      %v719 = vld [vmem:[%s235 + $0x10] sm:$0xff]
      %v720 = vld [vmem:[%s235 + $0x18] sm:$0xff]
      %v721 = vld [vmem:[%s235 + $0x20] sm:$0xff]
      %v722 = vld [vmem:[%s235 + $0x28] sm:$0xff]
      %v723 = vld [vmem:[%s235 + $0x30] sm:$0xff]
      %v724 = vld [vmem:[%s235 + $0x38] sm:$0xff]
      %v725 = vld [vmem:[%s235 + $0x40] sm:$0xff]
      %v726 = vld [vmem:[%s235 + $0x48] sm:$0xff]
      %v727 = vld [vmem:[%s235 + $0x50] sm:$0x33]
      %v728 = vld [vmem:[%s235 + $0x58] sm:$0x33]
      %v729 = vld [vmem:[%s235 + $0x60] sm:$0x33]
      %v730 = vld [vmem:[%s235 + $0x68] sm:$0x33]
      %v731 = vld [vmem:[%s235 + $0x70] sm:$0x33]
      %v732 = vld [vmem:[%s3] sm:$0x3]
      %v748 = vunpack.c.l.b16 %v717
      %v749 = vunpack.c.h.b16 %v717
      %v750 = vunpack.c.l.b16 %v718
      %v751 = vunpack.c.h.b16 %v718
      %v752 = vunpack.c.l.b16 %v719
      %v753 = vunpack.c.h.b16 %v719
      %v754 = vunpack.c.l.b16 %v720
      %v755 = vunpack.c.h.b16 %v720
      %v756 = vunpack.c.l.b16 %v721
      %v757 = vunpack.c.l.b16 %v722
      %v758 = vunpack.c.h.b16 %v722
      %v759 = vunpack.c.l.b16 %v723
      %v760 = vunpack.c.h.b16 %v723
      %v761 = vunpack.c.l.b16 %v724
      %v762 = vunpack.c.h.b16 %v724
      %v763 = vunpack.c.l.b16 %v725
      %v764 = vunpack.c.h.b16 %v725
      %v765 = vunpack.c.l.b16 %v726
      %v766 = vunpack.c.l.b16 %v727
      %v767 = vunpack.c.h.b16 %v727
      %v768 = vunpack.c.l.b16 %v728
      %v769 = vunpack.c.h.b16 %v728
      %v770 = vunpack.c.l.b16 %v729
      %v771 = vunpack.c.h.b16 %v729
      %v772 = vunpack.c.l.b16 %v730
      %v773 = vunpack.c.h.b16 %v730
      %v774 = vunpack.c.l.b16 %v731
      %v775 = vpack.c.b16 %v757, %v748
      %v776 = vpack.c.b16 %v758, %v749
      %v777 = vpack.c.b16 %v759, %v750
      %v778 = vpack.c.b16 %v760, %v751
      %v779 = vpack.c.b16 %v761, %v752
      %v780 = vpack.c.b16 %v762, %v753
      %v781 = vpack.c.b16 %v763, %v754
      %v782 = vpack.c.b16 %v764, %v755
      %v783 = vpack.c.b16 %v765, %v756
      %v784 = vpack.c.b16 %v766, %v766
      %v785 = vpack.c.b16 %v767, %v767
      %v786 = vpack.c.b16 %v768, %v768
      %v787 = vpack.c.b16 %v769, %v769
      %v788 = vpack.c.b16 %v770, %v770
      %v789 = vpack.c.b16 %v771, %v771
      %v790 = vpack.c.b16 %v772, %v772
      %v791 = vpack.c.b16 %v773, %v773
      %v792 = vpack.c.b16 %v774, %v774
      %v802 = vunpack.c.h.b16 %v721
      %v803 = vunpack.c.h.b16 %v726
      %v804 = vunpack.c.h.b16 %v731
      %v805 = vpack.c.b16 %v803, %v802
      %v806 = vpack.c.b16 %v804, %v804
      %vm807 = vcmask 1041408
      %v808 = vrot.slane %v775, 6
      %v809 = vrot.slane %v776, 6
      %v810 = vrot.slane %v777, 6
      %v811 = vrot.slane %v778, 6
      %v812 = vrot.slane %v779, 6
      %v813 = vrot.slane %v780, 6
      %v814 = vrot.slane %v781, 6
      %v815 = vrot.slane %v782, 6
      %v816 = vrot.slane %v783, 6
      %v817 = vrot.slane %v805, 6
      %v818 = vrot.slane %v784, 6
      %v819 = vsel %vm807, %v808, %v818
      %v820 = vrot.slane %v785, 6
      %v821 = vsel %vm807, %v809, %v820
      %v822 = vrot.slane %v786, 6
      %v823 = vsel %vm807, %v810, %v822
      %v824 = vrot.slane %v787, 6
      %v825 = vsel %vm807, %v811, %v824
      %v826 = vrot.slane %v788, 6
      %v827 = vsel %vm807, %v812, %v826
      %v828 = vrot.slane %v789, 6
      %v829 = vsel %vm807, %v813, %v828
      %v830 = vrot.slane %v790, 6
      %v831 = vsel %vm807, %v814, %v830
      %v832 = vrot.slane %v791, 6
      %v833 = vsel %vm807, %v815, %v832
      %v834 = vrot.slane %v792, 6
      %v835 = vsel %vm807, %v816, %v834
      %v836 = vrot.slane %v806, 6
      %v837 = vsel %vm807, %v817, %v836
      %838 = vrot.lane.b32.xlu0 %v808, 127
      %v839 = vpop.permute.xlu0 %838
      %840 = vrot.lane.b32.xlu0 %v809, 127
      %v841 = vpop.permute.xlu0 %840
      %842 = vrot.lane.b32.xlu0 %v810, 127
      %v843 = vpop.permute.xlu0 %842
      %844 = vrot.lane.b32.xlu0 %v811, 127
      %v845 = vpop.permute.xlu0 %844
      %846 = vrot.lane.b32.xlu0 %v812, 127
      %v847 = vpop.permute.xlu0 %846
      %848 = vrot.lane.b32.xlu0 %v813, 127
      %v849 = vpop.permute.xlu0 %848
      %850 = vrot.lane.b32.xlu0 %v814, 127
      %v851 = vpop.permute.xlu0 %850
      %852 = vrot.lane.b32.xlu0 %v815, 127
      %v853 = vpop.permute.xlu0 %852
      %854 = vrot.lane.b32.xlu0 %v816, 127
      %v855 = vpop.permute.xlu0 %854
      %856 = vrot.lane.b32.xlu0 %v817, 127
      %v857 = vpop.permute.xlu0 %856
      %858 = vrot.lane.b32.xlu0 %v819, 127
      %v859 = vpop.permute.xlu0 %858
      %860 = vrot.lane.b32.xlu0 %v821, 127
      %v861 = vpop.permute.xlu0 %860
      %862 = vrot.lane.b32.xlu0 %v823, 127
      %v863 = vpop.permute.xlu0 %862
      %864 = vrot.lane.b32.xlu0 %v825, 127
      %v865 = vpop.permute.xlu0 %864
      %866 = vrot.lane.b32.xlu0 %v827, 127
      %v867 = vpop.permute.xlu0 %866
      %868 = vrot.lane.b32.xlu0 %v829, 127
      %v869 = vpop.permute.xlu0 %868
      %870 = vrot.lane.b32.xlu0 %v831, 127
      %v871 = vpop.permute.xlu0 %870
      %872 = vrot.lane.b32.xlu0 %v833, 127
      %v873 = vpop.permute.xlu0 %872
      %874 = vrot.lane.b32.xlu0 %v835, 127
      %v875 = vpop.permute.xlu0 %874
      %876 = vrot.lane.b32.xlu0 %v837, 127
      %v877 = vpop.permute.xlu0 %876
      %v878 = vsel %vm341, %v839, %v841
      %v879 = vsel %vm341, %v841, %v843
      %v880 = vsel %vm341, %v843, %v845
      %v881 = vsel %vm341, %v845, %v847
      %v882 = vsel %vm341, %v847, %v849
      %v883 = vsel %vm341, %v849, %v851
      %v884 = vsel %vm341, %v851, %v853
      %v885 = vsel %vm341, %v853, %v855
      %v886 = vsel %vm341, %v855, %v857
      %v887 = vsel %vm341, %v859, %v861
      %v888 = vsel %vm341, %v861, %v863
      %v889 = vsel %vm341, %v863, %v865
      %v890 = vsel %vm341, %v865, %v867
      %v891 = vsel %vm341, %v867, %v869
      %v892 = vsel %vm341, %v869, %v871
      %v893 = vsel %vm341, %v871, %v873
      %v894 = vsel %vm341, %v873, %v875
      %v895 = vsel %vm341, %v875, %v877
      %v896 = vpack.c.b16 %v748, %v748
      %v897 = vpack.c.b16 %v749, %v749
      %v898 = vpack.c.b16 %v750, %v750
      %v899 = vpack.c.b16 %v751, %v751
      %v900 = vpack.c.b16 %v752, %v752
      %v901 = vpack.c.b16 %v753, %v753
      %v902 = vpack.c.b16 %v754, %v754
      %v903 = vpack.c.b16 %v755, %v755
      %v904 = vpack.c.b16 %v756, %v756
      %v905 = vpack.c.b16 %v802, %v802
      %v906 = vpack.c.b16 %v766, %v757
      %v907 = vpack.c.b16 %v767, %v758
      %v908 = vpack.c.b16 %v768, %v759
      %v909 = vpack.c.b16 %v769, %v760
      %v910 = vpack.c.b16 %v770, %v761
      %v911 = vpack.c.b16 %v771, %v762
      %v912 = vpack.c.b16 %v772, %v763
      %v913 = vpack.c.b16 %v773, %v764
      %v914 = vpack.c.b16 %v774, %v765
      %v915 = vpack.c.b16 %v804, %v803
      %916 = vrot.lane.b32.xlu0 %v896, 126
      %v917 = vpop.permute.xlu0 %916
      %918 = vrot.lane.b32.xlu0 %v897, 126
      %v919 = vpop.permute.xlu0 %918
      %920 = vrot.lane.b32.xlu0 %v898, 126
      %v921 = vpop.permute.xlu0 %920
      %922 = vrot.lane.b32.xlu0 %v899, 126
      %v923 = vpop.permute.xlu0 %922
      %924 = vrot.lane.b32.xlu0 %v900, 126
      %v925 = vpop.permute.xlu0 %924
      %926 = vrot.lane.b32.xlu0 %v901, 126
      %v927 = vpop.permute.xlu0 %926
      %928 = vrot.lane.b32.xlu0 %v902, 126
      %v929 = vpop.permute.xlu0 %928
      %930 = vrot.lane.b32.xlu0 %v903, 126
      %v931 = vpop.permute.xlu0 %930
      %932 = vrot.lane.b32.xlu0 %v904, 126
      %v933 = vpop.permute.xlu0 %932
      %934 = vrot.lane.b32.xlu0 %v905, 126
      %v935 = vpop.permute.xlu0 %934
      %936 = vrot.lane.b32.xlu0 %v906, 126
      %v937 = vpop.permute.xlu0 %936
      %938 = vrot.lane.b32.xlu0 %v907, 126
      %v939 = vpop.permute.xlu0 %938
      %940 = vrot.lane.b32.xlu0 %v908, 126
      %v941 = vpop.permute.xlu0 %940
      %942 = vrot.lane.b32.xlu0 %v909, 126
      %v943 = vpop.permute.xlu0 %942
      %944 = vrot.lane.b32.xlu0 %v910, 126
      %v945 = vpop.permute.xlu0 %944
      %946 = vrot.lane.b32.xlu0 %v911, 126
      %v947 = vpop.permute.xlu0 %946
      %948 = vrot.lane.b32.xlu0 %v912, 126
      %v949 = vpop.permute.xlu0 %948
      %950 = vrot.lane.b32.xlu0 %v913, 126
      %v951 = vpop.permute.xlu0 %950
      %952 = vrot.lane.b32.xlu0 %v914, 126
      %v953 = vpop.permute.xlu0 %952
      %954 = vrot.lane.b32.xlu0 %v915, 126
      %v955 = vpop.permute.xlu0 %954
      %v956 = vsel %vm376, %v917, %v919
      %v957 = vsel %vm376, %v919, %v921
      %v958 = vsel %vm376, %v921, %v923
      %v959 = vsel %vm376, %v923, %v925
      %v960 = vsel %vm376, %v925, %v927
      %v961 = vsel %vm376, %v927, %v929
      %v962 = vsel %vm376, %v929, %v931
      %v963 = vsel %vm376, %v931, %v933
      %v964 = vsel %vm376, %v933, %v935
      %v965 = vsel %vm376, %v937, %v939
      %v966 = vsel %vm376, %v939, %v941
      %v967 = vsel %vm376, %v941, %v943
      %v968 = vsel %vm376, %v943, %v945
      %v969 = vsel %vm376, %v945, %v947
      %v970 = vsel %vm376, %v947, %v949
      %v971 = vsel %vm376, %v949, %v951
      %v972 = vsel %vm376, %v951, %v953
      %v973 = vsel %vm376, %v953, %v955
      %vm974 = vcmask 1045504
      %v975 = vrot.slane %v775, 2
      %v976 = vrot.slane %v776, 2
      %v977 = vrot.slane %v777, 2
      %v978 = vrot.slane %v778, 2
      %v979 = vrot.slane %v779, 2
      %v980 = vrot.slane %v780, 2
      %v981 = vrot.slane %v781, 2
      %v982 = vrot.slane %v782, 2
      %v983 = vrot.slane %v783, 2
      %v984 = vrot.slane %v805, 2
      %v985 = vrot.slane %v784, 2
      %v986 = vsel %vm974, %v975, %v985
      %v987 = vrot.slane %v785, 2
      %v988 = vsel %vm974, %v976, %v987
      %v989 = vrot.slane %v786, 2
      %v990 = vsel %vm974, %v977, %v989
      %v991 = vrot.slane %v787, 2
      %v992 = vsel %vm974, %v978, %v991
      %v993 = vrot.slane %v788, 2
      %v994 = vsel %vm974, %v979, %v993
      %v995 = vrot.slane %v789, 2
      %v996 = vsel %vm974, %v980, %v995
      %v997 = vrot.slane %v790, 2
      %v998 = vsel %vm974, %v981, %v997
      %v999 = vrot.slane %v791, 2
      %v1000 = vsel %vm974, %v982, %v999
      %v1001 = vrot.slane %v792, 2
      %v1002 = vsel %vm974, %v983, %v1001
      %v1003 = vrot.slane %v806, 2
      %v1004 = vsel %vm974, %v984, %v1003
      %1005 = vrot.lane.b32.xlu0 %v975, 94
      %v1006 = vpop.permute.xlu0 %1005
      %1007 = vrot.lane.b32.xlu0 %v976, 94
      %v1008 = vpop.permute.xlu0 %1007
      %1009 = vrot.lane.b32.xlu0 %v977, 94
      %v1010 = vpop.permute.xlu0 %1009
      %1011 = vrot.lane.b32.xlu0 %v978, 94
      %v1012 = vpop.permute.xlu0 %1011
      %1013 = vrot.lane.b32.xlu0 %v979, 94
      %v1014 = vpop.permute.xlu0 %1013
      %1015 = vrot.lane.b32.xlu0 %v980, 94
      %v1016 = vpop.permute.xlu0 %1015
      %1017 = vrot.lane.b32.xlu0 %v981, 94
      %v1018 = vpop.permute.xlu0 %1017
      %1019 = vrot.lane.b32.xlu0 %v982, 94
      %v1020 = vpop.permute.xlu0 %1019
      %1021 = vrot.lane.b32.xlu0 %v983, 94
      %v1022 = vpop.permute.xlu0 %1021
      %1023 = vrot.lane.b32.xlu0 %v984, 94
      %v1024 = vpop.permute.xlu0 %1023
      %1025 = vrot.lane.b32.xlu0 %v986, 94
      %v1026 = vpop.permute.xlu0 %1025
      %1027 = vrot.lane.b32.xlu0 %v988, 94
      %v1028 = vpop.permute.xlu0 %1027
      %1029 = vrot.lane.b32.xlu0 %v990, 94
      %v1030 = vpop.permute.xlu0 %1029
      %1031 = vrot.lane.b32.xlu0 %v992, 94
      %v1032 = vpop.permute.xlu0 %1031
      %1033 = vrot.lane.b32.xlu0 %v994, 94
      %v1034 = vpop.permute.xlu0 %1033
      %1035 = vrot.lane.b32.xlu0 %v996, 94
      %v1036 = vpop.permute.xlu0 %1035
      %1037 = vrot.lane.b32.xlu0 %v998, 94
      %v1038 = vpop.permute.xlu0 %1037
      %1039 = vrot.lane.b32.xlu0 %v1000, 94
      %v1040 = vpop.permute.xlu0 %1039
      %1041 = vrot.lane.b32.xlu0 %v1002, 94
      %v1042 = vpop.permute.xlu0 %1041
      %1043 = vrot.lane.b32.xlu0 %v1004, 94
      %v1044 = vpop.permute.xlu0 %1043
      %v1045 = vsel %vm409, %v1006, %v1008
      %v1046 = vsel %vm409, %v1008, %v1010
      %v1047 = vsel %vm409, %v1010, %v1012
      %v1048 = vsel %vm409, %v1012, %v1014
      %v1049 = vsel %vm409, %v1014, %v1016
      %v1050 = vsel %vm409, %v1016, %v1018
      %v1051 = vsel %vm409, %v1018, %v1020
      %v1052 = vsel %vm409, %v1020, %v1022
      %v1053 = vsel %vm409, %v1022, %v1024
      %v1054 = vsel %vm409, %v1026, %v1028
      %v1055 = vsel %vm409, %v1028, %v1030
      %v1056 = vsel %vm409, %v1030, %v1032
      %v1057 = vsel %vm409, %v1032, %v1034
      %v1058 = vsel %vm409, %v1034, %v1036
      %v1059 = vsel %vm409, %v1036, %v1038
      %v1060 = vsel %vm409, %v1038, %v1040
      %v1061 = vsel %vm409, %v1040, %v1042
      %v1062 = vsel %vm409, %v1042, %v1044
      %1072 = vrot.lane.b32.xlu0 %v775, 93
      %v1073 = vpop.permute.xlu0 %1072
      %1074 = vrot.lane.b32.xlu0 %v776, 93
      %v1075 = vpop.permute.xlu0 %1074
      %1076 = vrot.lane.b32.xlu0 %v777, 93
      %v1077 = vpop.permute.xlu0 %1076
      %1078 = vrot.lane.b32.xlu0 %v778, 93
      %v1079 = vpop.permute.xlu0 %1078
      %1080 = vrot.lane.b32.xlu0 %v779, 93
      %v1081 = vpop.permute.xlu0 %1080
      %1082 = vrot.lane.b32.xlu0 %v780, 93
      %v1083 = vpop.permute.xlu0 %1082
      %1084 = vrot.lane.b32.xlu0 %v781, 93
      %v1085 = vpop.permute.xlu0 %1084
      %1086 = vrot.lane.b32.xlu0 %v782, 93
      %v1087 = vpop.permute.xlu0 %1086
      %1088 = vrot.lane.b32.xlu0 %v783, 93
      %v1089 = vpop.permute.xlu0 %1088
      %1090 = vrot.lane.b32.xlu0 %v805, 93
      %v1091 = vpop.permute.xlu0 %1090
      %1092 = vrot.lane.b32.xlu0 %v784, 93
      %v1093 = vpop.permute.xlu0 %1092
      %1094 = vrot.lane.b32.xlu0 %v785, 93
      %v1095 = vpop.permute.xlu0 %1094
      %1096 = vrot.lane.b32.xlu0 %v786, 93
      %v1097 = vpop.permute.xlu0 %1096
      %1098 = vrot.lane.b32.xlu0 %v787, 93
      %v1099 = vpop.permute.xlu0 %1098
      %1100 = vrot.lane.b32.xlu0 %v788, 93
      %v1101 = vpop.permute.xlu0 %1100
      %1102 = vrot.lane.b32.xlu0 %v789, 93
      %v1103 = vpop.permute.xlu0 %1102
      %1104 = vrot.lane.b32.xlu0 %v790, 93
      %v1105 = vpop.permute.xlu0 %1104
      %1106 = vrot.lane.b32.xlu0 %v791, 93
      %v1107 = vpop.permute.xlu0 %1106
      %1108 = vrot.lane.b32.xlu0 %v792, 93
      %v1109 = vpop.permute.xlu0 %1108
      %1110 = vrot.lane.b32.xlu0 %v806, 93
      %v1111 = vpop.permute.xlu0 %1110
      %v1112 = vsel %vm440, %v1073, %v1075
      %v1113 = vsel %vm440, %v1075, %v1077
      %v1114 = vsel %vm440, %v1077, %v1079
      %v1115 = vsel %vm440, %v1079, %v1081
      %v1116 = vsel %vm440, %v1081, %v1083
      %v1117 = vsel %vm440, %v1083, %v1085
      %v1118 = vsel %vm440, %v1085, %v1087
      %v1119 = vsel %vm440, %v1087, %v1089
      %v1120 = vsel %vm440, %v1089, %v1091
      %v1121 = vsel %vm440, %v1093, %v1095
      %v1122 = vsel %vm440, %v1095, %v1097
      %v1123 = vsel %vm440, %v1097, %v1099
      %v1124 = vsel %vm440, %v1099, %v1101
      %v1125 = vsel %vm440, %v1101, %v1103
      %v1126 = vsel %vm440, %v1103, %v1105
      %v1127 = vsel %vm440, %v1105, %v1107
      %v1128 = vsel %vm440, %v1107, %v1109
      %v1129 = vsel %vm440, %v1109, %v1111
      %1139 = vrot.lane.b32.xlu0 %v808, 92
      %v1140 = vpop.permute.xlu0 %1139
      %1141 = vrot.lane.b32.xlu0 %v809, 92
      %v1142 = vpop.permute.xlu0 %1141
      %1143 = vrot.lane.b32.xlu0 %v810, 92
      %v1144 = vpop.permute.xlu0 %1143
      %1145 = vrot.lane.b32.xlu0 %v811, 92
      %v1146 = vpop.permute.xlu0 %1145
      %1147 = vrot.lane.b32.xlu0 %v812, 92
      %v1148 = vpop.permute.xlu0 %1147
      %1149 = vrot.lane.b32.xlu0 %v813, 92
      %v1150 = vpop.permute.xlu0 %1149
      %1151 = vrot.lane.b32.xlu0 %v814, 92
      %v1152 = vpop.permute.xlu0 %1151
      %1153 = vrot.lane.b32.xlu0 %v815, 92
      %v1154 = vpop.permute.xlu0 %1153
      %1155 = vrot.lane.b32.xlu0 %v816, 92
      %v1156 = vpop.permute.xlu0 %1155
      %1157 = vrot.lane.b32.xlu0 %v817, 92
      %v1158 = vpop.permute.xlu0 %1157
      %1159 = vrot.lane.b32.xlu0 %v819, 92
      %v1160 = vpop.permute.xlu0 %1159
      %1161 = vrot.lane.b32.xlu0 %v821, 92
      %v1162 = vpop.permute.xlu0 %1161
      %1163 = vrot.lane.b32.xlu0 %v823, 92
      %v1164 = vpop.permute.xlu0 %1163
      %1165 = vrot.lane.b32.xlu0 %v825, 92
      %v1166 = vpop.permute.xlu0 %1165
      %1167 = vrot.lane.b32.xlu0 %v827, 92
      %v1168 = vpop.permute.xlu0 %1167
      %1169 = vrot.lane.b32.xlu0 %v829, 92
      %v1170 = vpop.permute.xlu0 %1169
      %1171 = vrot.lane.b32.xlu0 %v831, 92
      %v1172 = vpop.permute.xlu0 %1171
      %1173 = vrot.lane.b32.xlu0 %v833, 92
      %v1174 = vpop.permute.xlu0 %1173
      %1175 = vrot.lane.b32.xlu0 %v835, 92
      %v1176 = vpop.permute.xlu0 %1175
      %1177 = vrot.lane.b32.xlu0 %v837, 92
      %v1178 = vpop.permute.xlu0 %1177
      %v1179 = vsel %vm470, %v1140, %v1142
      %v1180 = vsel %vm470, %v1142, %v1144
      %v1181 = vsel %vm470, %v1144, %v1146
      %v1182 = vsel %vm470, %v1146, %v1148
      %v1183 = vsel %vm470, %v1148, %v1150
      %v1184 = vsel %vm470, %v1150, %v1152
      %v1185 = vsel %vm470, %v1152, %v1154
      %v1186 = vsel %vm470, %v1154, %v1156
      %v1187 = vsel %vm470, %v1156, %v1158
      %v1188 = vsel %vm470, %v1160, %v1162
      %v1189 = vsel %vm470, %v1162, %v1164
      %v1190 = vsel %vm470, %v1164, %v1166
      %v1191 = vsel %vm470, %v1166, %v1168
      %v1192 = vsel %vm470, %v1168, %v1170
      %v1193 = vsel %vm470, %v1170, %v1172
      %v1194 = vsel %vm470, %v1172, %v1174
      %v1195 = vsel %vm470, %v1174, %v1176
      %v1196 = vsel %vm470, %v1176, %v1178
      %v1199 = vsel %vm570, %v784, %v878
      %v1203 = vsel %vm570, %v785, %v879
      %v1207 = vsel %vm570, %v786, %v880
      %v1211 = vsel %vm570, %v787, %v881
      %v1215 = vsel %vm570, %v788, %v882
      %v1219 = vsel %vm570, %v789, %v883
      %v1223 = vsel %vm570, %v790, %v884
      %v1227 = vsel %vm570, %v791, %v885
      %v1231 = vsel %vm570, %v792, %v886
      %v1235 = vsel %vm598, %v887, %v956
      %v1239 = vsel %vm598, %v888, %v957
      %v1243 = vsel %vm598, %v889, %v958
      %v1247 = vsel %vm598, %v890, %v959
      %v1251 = vsel %vm598, %v891, %v960
      %v1255 = vsel %vm598, %v892, %v961
      %v1259 = vsel %vm598, %v893, %v962
      %v1263 = vsel %vm598, %v894, %v963
      %v1267 = vsel %vm598, %v895, %v964
      %v1271 = vsel %vm617, %v965, %v1045
      %v1275 = vsel %vm617, %v966, %v1046
      %v1279 = vsel %vm617, %v967, %v1047
      %v1283 = vsel %vm617, %v968, %v1048
      %v1287 = vsel %vm617, %v969, %v1049
      %v1291 = vsel %vm617, %v970, %v1050
      %v1295 = vsel %vm617, %v971, %v1051
      %v1299 = vsel %vm617, %v972, %v1052
      %v1303 = vsel %vm617, %v973, %v1053
      %v1307 = vsel %vm570, %v1121, %v1179
      %v1311 = vsel %vm570, %v1122, %v1180
      %v1315 = vsel %vm570, %v1123, %v1181
      %v1319 = vsel %vm570, %v1124, %v1182
      %v1323 = vsel %vm570, %v1125, %v1183
      %v1327 = vsel %vm570, %v1126, %v1184
      %v1331 = vsel %vm570, %v1127, %v1185
      %v1335 = vsel %vm570, %v1128, %v1186
      %v1339 = vsel %vm570, %v1129, %v1187
      %v1343 = vsel %vm570, %v806, %v857
      %v1346 = vsel %vm598, %v877, %v935
      %v1349 = vunpack.c.l.s4 1966171168
      %v1350 = vunpack.c.0.s8 %v1349
      %v1351 = vlaneseq
      %v1352 = vshrl.u32 %v1351, 7
      %v1353 = vsub.s32 %v1350, %v1352
      %v1354 = vrot.slane %v732, %v1353
      %v1355 = vcombine.high %v1354, %v1354
      %v1357 = vunpack.c.l.s4 1966171168
      %v1358 = vunpack.c.0.s8 %v1357
      %v1359 = vlaneseq
      %v1360 = vshrl.u32 %v1359, 7
      %v1361 = vsub.s32 %v1358, %v1360
      %v1362 = vrot.slane %v1354, %v1361
      %v1364 = vunpack.c.l.s4 1966171168
      %v1365 = vunpack.c.0.s8 %v1364
      %v1366 = vlaneseq
      %v1367 = vshrl.u32 %v1366, 7
      %v1368 = vsub.s32 %v1365, %v1367
      %v1369 = vrot.slane %v1355, %v1368
      %1370 = vrot.lane.b32.xlu0 %v1362, 8
      %v1371 = vpop.permute.xlu0 %1370
      %1372 = vrot.lane.b32.xlu0 %v1369, 8
      %v1373 = vpop.permute.xlu0 %1372
      %vm1374 = vcmask 64512
      %v1375 = vsel %vm1374, %v1371, %v1373
      %1396 = vrot.lane.b32.xlu0 %v775, 60
      %v1397 = vpop.permute.xlu0 %1396
      %1398 = vrot.lane.b32.xlu0 %v776, 60
      %v1399 = vpop.permute.xlu0 %1398
      %1400 = vrot.lane.b32.xlu0 %v777, 60
      %v1401 = vpop.permute.xlu0 %1400
      %1402 = vrot.lane.b32.xlu0 %v778, 60
      %v1403 = vpop.permute.xlu0 %1402
      %1404 = vrot.lane.b32.xlu0 %v779, 60
      %v1405 = vpop.permute.xlu0 %1404
      %1406 = vrot.lane.b32.xlu0 %v780, 60
      %v1407 = vpop.permute.xlu0 %1406
      %1408 = vrot.lane.b32.xlu0 %v781, 60
      %v1409 = vpop.permute.xlu0 %1408
      %1410 = vrot.lane.b32.xlu0 %v782, 60
      %v1411 = vpop.permute.xlu0 %1410
      %1412 = vrot.lane.b32.xlu0 %v783, 60
      %v1413 = vpop.permute.xlu0 %1412
      %1414 = vrot.lane.b32.xlu0 %v805, 60
      %v1415 = vpop.permute.xlu0 %1414
      %1416 = vrot.lane.b32.xlu0 %v1199, 60
      %v1417 = vpop.permute.xlu0 %1416
      %1418 = vrot.lane.b32.xlu0 %v1203, 60
      %v1419 = vpop.permute.xlu0 %1418
      %1420 = vrot.lane.b32.xlu0 %v1207, 60
      %v1421 = vpop.permute.xlu0 %1420
      %1422 = vrot.lane.b32.xlu0 %v1211, 60
      %v1423 = vpop.permute.xlu0 %1422
      %1424 = vrot.lane.b32.xlu0 %v1215, 60
      %v1425 = vpop.permute.xlu0 %1424
      %1426 = vrot.lane.b32.xlu0 %v1219, 60
      %v1427 = vpop.permute.xlu0 %1426
      %1428 = vrot.lane.b32.xlu0 %v1223, 60
      %v1429 = vpop.permute.xlu0 %1428
      %1430 = vrot.lane.b32.xlu0 %v1227, 60
      %v1431 = vpop.permute.xlu0 %1430
      %1432 = vrot.lane.b32.xlu0 %v1231, 60
      %v1433 = vpop.permute.xlu0 %1432
      %1434 = vrot.lane.b32.xlu0 %v1343, 60
      %v1435 = vpop.permute.xlu0 %1434
      %1436 = vrot.lane.b32.xlu0 %v1235, 60
      %v1437 = vpop.permute.xlu0 %1436
      %1438 = vrot.lane.b32.xlu0 %v1239, 60
      %v1439 = vpop.permute.xlu0 %1438
      %1440 = vrot.lane.b32.xlu0 %v1243, 60
      %v1441 = vpop.permute.xlu0 %1440
      %1442 = vrot.lane.b32.xlu0 %v1247, 60
      %v1443 = vpop.permute.xlu0 %1442
      %1444 = vrot.lane.b32.xlu0 %v1251, 60
      %v1445 = vpop.permute.xlu0 %1444
      %1446 = vrot.lane.b32.xlu0 %v1255, 60
      %v1447 = vpop.permute.xlu0 %1446
      %1448 = vrot.lane.b32.xlu0 %v1259, 60
      %v1449 = vpop.permute.xlu0 %1448
      %1450 = vrot.lane.b32.xlu0 %v1263, 60
      %v1451 = vpop.permute.xlu0 %1450
      %1452 = vrot.lane.b32.xlu0 %v1267, 60
      %v1453 = vpop.permute.xlu0 %1452
      %1454 = vrot.lane.b32.xlu0 %v1346, 60
      %v1455 = vpop.permute.xlu0 %1454
      %1456 = vrot.lane.b32.xlu0 %v965, 60
      %v1457 = vpop.permute.xlu0 %1456
      %1458 = vrot.lane.b32.xlu0 %v966, 60
      %v1459 = vpop.permute.xlu0 %1458
      %1460 = vrot.lane.b32.xlu0 %v967, 60
      %v1461 = vpop.permute.xlu0 %1460
      %1462 = vrot.lane.b32.xlu0 %v968, 60
      %v1463 = vpop.permute.xlu0 %1462
      %1464 = vrot.lane.b32.xlu0 %v969, 60
      %v1465 = vpop.permute.xlu0 %1464
      %1466 = vrot.lane.b32.xlu0 %v970, 60
      %v1467 = vpop.permute.xlu0 %1466
      %1468 = vrot.lane.b32.xlu0 %v971, 60
      %v1469 = vpop.permute.xlu0 %1468
      %1470 = vrot.lane.b32.xlu0 %v972, 60
      %v1471 = vpop.permute.xlu0 %1470
      %1472 = vrot.lane.b32.xlu0 %v973, 60
      %v1473 = vpop.permute.xlu0 %1472
      %1474 = vrot.lane.b32.xlu0 %v955, 60
      %v1475 = vpop.permute.xlu0 %1474
      %v1476 = vsel %vm500, %v1397, %v1399
      %v1477 = vsel %vm500, %v1399, %v1401
      %v1478 = vsel %vm500, %v1401, %v1403
      %v1479 = vsel %vm500, %v1403, %v1405
      %v1480 = vsel %vm500, %v1405, %v1407
      %v1481 = vsel %vm500, %v1407, %v1409
      %v1482 = vsel %vm500, %v1409, %v1411
      %v1483 = vsel %vm500, %v1411, %v1413
      %v1484 = vsel %vm500, %v1413, %v1415
      %v1485 = vsel %vm500, %v1417, %v1419
      %v1486 = vsel %vm500, %v1419, %v1421
      %v1487 = vsel %vm500, %v1421, %v1423
      %v1488 = vsel %vm500, %v1423, %v1425
      %v1489 = vsel %vm500, %v1425, %v1427
      %v1490 = vsel %vm500, %v1427, %v1429
      %v1491 = vsel %vm500, %v1429, %v1431
      %v1492 = vsel %vm500, %v1431, %v1433
      %v1493 = vsel %vm500, %v1433, %v1435
      %v1494 = vsel %vm500, %v1437, %v1439
      %v1495 = vsel %vm500, %v1439, %v1441
      %v1496 = vsel %vm500, %v1441, %v1443
      %v1497 = vsel %vm500, %v1443, %v1445
      %v1498 = vsel %vm500, %v1445, %v1447
      %v1499 = vsel %vm500, %v1447, %v1449
      %v1500 = vsel %vm500, %v1449, %v1451
      %v1501 = vsel %vm500, %v1451, %v1453
      %v1502 = vsel %vm500, %v1453, %v1455
      %v1503 = vsel %vm500, %v1457, %v1459
      %v1504 = vsel %vm500, %v1459, %v1461
      %v1505 = vsel %vm500, %v1461, %v1463
      %v1506 = vsel %vm500, %v1463, %v1465
      %v1507 = vsel %vm500, %v1465, %v1467
      %v1508 = vsel %vm500, %v1467, %v1469
      %v1509 = vsel %vm500, %v1469, %v1471
      %v1510 = vsel %vm500, %v1471, %v1473
      %v1511 = vsel %vm500, %v1473, %v1475
      %vm1539 = vcmask 490496
      %v1541 = vsel %vm1539, %v1375, 0
      %v1544 = vsel %vm617, %v1503, 0
      %v1547 = vsel %vm617, %v1504, 0
      %v1550 = vsel %vm617, %v1505, 0
      %v1553 = vsel %vm617, %v1506, 0
      %v1556 = vsel %vm617, %v1507, 0
      %v1559 = vsel %vm617, %v1508, 0
      %v1562 = vsel %vm617, %v1509, 0
      %v1565 = vsel %vm617, %v1510, 0
      %v1568 = vsel %vm617, %v1511, 0
      %1570 = vmatprep.subr.bf16.mxu0 %v1477
      %1571 = vmatpush1.bf16.msra.mxu0 %v1476
      %1572 = vmatprep.subr.bf16.mxu0 %v1486
      %1573 = vmatpush1.bf16.msra.mxu0 %v1485
      %1574 = vmatprep.subr.bf16.mxu0 %v1495
      %1575 = vmatpush1.bf16.msra.mxu0 %v1494
      %1576 = vmatprep.subr.bf16.mxu0 %v1547
      %1577 = vmatpush1.bf16.msra.mxu0 %v1544
      %1578 = vmatprep.subr.bf16.mxu0 0
      %1579 = vmatpush1.bf16.msra.mxu0 0
      %1580 = vmatprep.subr.bf16.mxu0 0
      %1581 = vmatpush1.bf16.msra.mxu0 0
      %1582 = vmatprep.subr.bf16.mxu0 0
      %1583 = vmatpush1.bf16.msra.mxu0 0
      %1584 = vmatprep.subr.bf16.mxu0 0
      %1585 = vmatpush1.bf16.msra.mxu0 0
      %1586 = vmatprep.subr.bf16.mxu0 0
      %1587 = vmatpush1.bf16.msra.mxu0 0
      %1588 = vmatprep.subr.bf16.mxu0 0
      %1589 = vmatpush1.bf16.msra.mxu0 0
      %1590 = vmatprep.subr.bf16.mxu0 0
      %1591 = vmatpush1.bf16.msra.mxu0 0
      %1592 = vmatprep.subr.bf16.mxu0 0
      %1593 = vmatpush1.bf16.msra.mxu0 0
      %1594 = vmatprep.subr.bf16.mxu0 0
      %1595 = vmatpush1.bf16.msra.mxu0 0
      %1596 = vmatprep.subr.bf16.mxu0 0
      %1597 = vmatpush1.bf16.msra.mxu0 0
      %1598 = vmatprep.subr.bf16.mxu0 0
      %1599 = vmatpush1.bf16.msra.mxu0 0
      %1600 = vmatprep.subr.bf16.mxu0 0
      %1601 = vmatpush1.bf16.msra.mxu0 0
      %1602 = vmatprep.mubr.bf16.mxu0 0
      %1603 = vmatmul.mubr.bf16.gmra.mrb[0].mxu0 %v1541
      %v1604 = vpop.f32.mrb[0].mxu0
      %v1605 = vadd.f32 0.0, %v1604
      %v1606 = vpop.f32.mrb[0].mxu0
      %v1607 = vadd.f32 0.0, %v1606
      %v1608 = vpop.f32.mrb[0].mxu0
      %v1609 = vpop.f32.mrb[0].mxu0
      %1610 = vdwg.mxu0
      %1611 = vmatprep.subr.bf16.mxu0 %v1479
      %1612 = vmatpush1.bf16.msra.mxu0 %v1478
      %1613 = vmatprep.subr.bf16.mxu0 %v1488
      %1614 = vmatpush1.bf16.msra.mxu0 %v1487
      %1615 = vmatprep.subr.bf16.mxu0 %v1497
      %1616 = vmatpush1.bf16.msra.mxu0 %v1496
      %1617 = vmatprep.subr.bf16.mxu0 %v1553
      %1618 = vmatpush1.bf16.msra.mxu0 %v1550
      %1619 = vmatprep.subr.bf16.mxu0 0
      %1620 = vmatpush1.bf16.msra.mxu0 0
      %1621 = vmatprep.subr.bf16.mxu0 0
      %1622 = vmatpush1.bf16.msra.mxu0 0
      %1623 = vmatprep.subr.bf16.mxu0 0
      %1624 = vmatpush1.bf16.msra.mxu0 0
      %1625 = vmatprep.subr.bf16.mxu0 0
      %1626 = vmatpush1.bf16.msra.mxu0 0
      %1627 = vmatprep.subr.bf16.mxu0 0
      %1628 = vmatpush1.bf16.msra.mxu0 0
      %1629 = vmatprep.subr.bf16.mxu0 0
      %1630 = vmatpush1.bf16.msra.mxu0 0
      %1631 = vmatprep.subr.bf16.mxu0 0
      %1632 = vmatpush1.bf16.msra.mxu0 0
      %1633 = vmatprep.subr.bf16.mxu0 0
      %1634 = vmatpush1.bf16.msra.mxu0 0
      %1635 = vmatprep.subr.bf16.mxu0 0
      %1636 = vmatpush1.bf16.msra.mxu0 0
      %1637 = vmatprep.subr.bf16.mxu0 0
      %1638 = vmatpush1.bf16.msra.mxu0 0
      %1639 = vmatprep.subr.bf16.mxu0 0
      %1640 = vmatpush1.bf16.msra.mxu0 0
      %1641 = vmatprep.subr.bf16.mxu0 0
      %1642 = vmatpush1.bf16.msra.mxu0 0
      %1643 = vmatprep.mubr.bf16.mxu0 0
      %1644 = vmatmul.mubr.bf16.gmra.mrb[0].mxu0 %v1541
      %v1645 = vpop.f32.mrb[0].mxu0
      %v1646 = vadd.f32 0.0, %v1645
      %v1647 = vpop.f32.mrb[0].mxu0
      %v1648 = vadd.f32 0.0, %v1647
      %v1649 = vpop.f32.mrb[0].mxu0
      %v1650 = vpop.f32.mrb[0].mxu0
      %1651 = vdwg.mxu0
      %1652 = vmatprep.subr.bf16.mxu0 %v1481
      %1653 = vmatpush1.bf16.msra.mxu0 %v1480
      %1654 = vmatprep.subr.bf16.mxu0 %v1490
      %1655 = vmatpush1.bf16.msra.mxu0 %v1489
      %1656 = vmatprep.subr.bf16.mxu0 %v1499
      %1657 = vmatpush1.bf16.msra.mxu0 %v1498
      %1658 = vmatprep.subr.bf16.mxu0 %v1559
      %1659 = vmatpush1.bf16.msra.mxu0 %v1556
      %1660 = vmatprep.subr.bf16.mxu0 0
      %1661 = vmatpush1.bf16.msra.mxu0 0
      %1662 = vmatprep.subr.bf16.mxu0 0
      %1663 = vmatpush1.bf16.msra.mxu0 0
      %1664 = vmatprep.subr.bf16.mxu0 0
      %1665 = vmatpush1.bf16.msra.mxu0 0
      %1666 = vmatprep.subr.bf16.mxu0 0
      %1667 = vmatpush1.bf16.msra.mxu0 0
      %1668 = vmatprep.subr.bf16.mxu0 0
      %1669 = vmatpush1.bf16.msra.mxu0 0
      %1670 = vmatprep.subr.bf16.mxu0 0
      %1671 = vmatpush1.bf16.msra.mxu0 0
      %1672 = vmatprep.subr.bf16.mxu0 0
      %1673 = vmatpush1.bf16.msra.mxu0 0
      %1674 = vmatprep.subr.bf16.mxu0 0
      %1675 = vmatpush1.bf16.msra.mxu0 0
      %1676 = vmatprep.subr.bf16.mxu0 0
      %1677 = vmatpush1.bf16.msra.mxu0 0
      %1678 = vmatprep.subr.bf16.mxu0 0
      %1679 = vmatpush1.bf16.msra.mxu0 0
      %1680 = vmatprep.subr.bf16.mxu0 0
      %1681 = vmatpush1.bf16.msra.mxu0 0
      %1682 = vmatprep.subr.bf16.mxu0 0
      %1683 = vmatpush1.bf16.msra.mxu0 0
      %1684 = vmatprep.mubr.bf16.mxu0 0
      %1685 = vmatmul.mubr.bf16.gmra.mrb[0].mxu0 %v1541
      %v1686 = vpop.f32.mrb[0].mxu0
      %v1687 = vadd.f32 0.0, %v1686
      %v1688 = vpop.f32.mrb[0].mxu0
      %v1689 = vadd.f32 0.0, %v1688
      %v1690 = vpop.f32.mrb[0].mxu0
      %v1691 = vpop.f32.mrb[0].mxu0
      %1692 = vdwg.mxu0
      %1693 = vmatprep.subr.bf16.mxu0 %v1483
      %1694 = vmatpush1.bf16.msra.mxu0 %v1482
      %1695 = vmatprep.subr.bf16.mxu0 %v1492
      %1696 = vmatpush1.bf16.msra.mxu0 %v1491
      %1697 = vmatprep.subr.bf16.mxu0 %v1501
      %1698 = vmatpush1.bf16.msra.mxu0 %v1500
      %1699 = vmatprep.subr.bf16.mxu0 %v1565
      %1700 = vmatpush1.bf16.msra.mxu0 %v1562
      %1701 = vmatprep.subr.bf16.mxu0 0
      %1702 = vmatpush1.bf16.msra.mxu0 0
      %1703 = vmatprep.subr.bf16.mxu0 0
      %1704 = vmatpush1.bf16.msra.mxu0 0
      %1705 = vmatprep.subr.bf16.mxu0 0
      %1706 = vmatpush1.bf16.msra.mxu0 0
      %1707 = vmatprep.subr.bf16.mxu0 0
      %1708 = vmatpush1.bf16.msra.mxu0 0
      %1709 = vmatprep.subr.bf16.mxu0 0
      %1710 = vmatpush1.bf16.msra.mxu0 0
      %1711 = vmatprep.subr.bf16.mxu0 0
      %1712 = vmatpush1.bf16.msra.mxu0 0
      %1713 = vmatprep.subr.bf16.mxu0 0
      %1714 = vmatpush1.bf16.msra.mxu0 0
      %1715 = vmatprep.subr.bf16.mxu0 0
      %1716 = vmatpush1.bf16.msra.mxu0 0
      %1717 = vmatprep.subr.bf16.mxu0 0
      %1718 = vmatpush1.bf16.msra.mxu0 0
      %1719 = vmatprep.subr.bf16.mxu0 0
      %1720 = vmatpush1.bf16.msra.mxu0 0
      %1721 = vmatprep.subr.bf16.mxu0 0
      %1722 = vmatpush1.bf16.msra.mxu0 0
      %1723 = vmatprep.subr.bf16.mxu0 0
      %1724 = vmatpush1.bf16.msra.mxu0 0
      %1725 = vmatprep.mubr.bf16.mxu0 0
      %1726 = vmatmul.mubr.bf16.gmra.mrb[0].mxu0 %v1541
      %v1727 = vpop.f32.mrb[0].mxu0
      %v1728 = vadd.f32 0.0, %v1727
      %v1729 = vpop.f32.mrb[0].mxu0
      %v1730 = vadd.f32 0.0, %v1729
      %v1731 = vpop.f32.mrb[0].mxu0
      %v1732 = vpop.f32.mrb[0].mxu0
      %1733 = vdwg.mxu0
      %1734 = vmatprep.subr.bf16.mxu0 0
      %1735 = vmatpush1.bf16.msra.mxu0 %v1484
      %1736 = vmatprep.subr.bf16.mxu0 0
      %1737 = vmatpush1.bf16.msra.mxu0 %v1493
      %1738 = vmatprep.subr.bf16.mxu0 0
      %1739 = vmatpush1.bf16.msra.mxu0 %v1502
      %1740 = vmatprep.subr.bf16.mxu0 0
      %1741 = vmatpush1.bf16.msra.mxu0 %v1568
      %1742 = vmatprep.subr.bf16.mxu0 0
      %1743 = vmatpush1.bf16.msra.mxu0 0
      %1744 = vmatprep.subr.bf16.mxu0 0
      %1745 = vmatpush1.bf16.msra.mxu0 0
      %1746 = vmatprep.subr.bf16.mxu0 0
      %1747 = vmatpush1.bf16.msra.mxu0 0
      %1748 = vmatprep.subr.bf16.mxu0 0
      %1749 = vmatpush1.bf16.msra.mxu0 0
      %1750 = vmatprep.subr.bf16.mxu0 0
      %1751 = vmatpush1.bf16.msra.mxu0 0
      %1752 = vmatprep.subr.bf16.mxu0 0
      %1753 = vmatpush1.bf16.msra.mxu0 0
      %1754 = vmatprep.subr.bf16.mxu0 0
      %1755 = vmatpush1.bf16.msra.mxu0 0
      %1756 = vmatprep.subr.bf16.mxu0 0
      %1757 = vmatpush1.bf16.msra.mxu0 0
      %1758 = vmatprep.subr.bf16.mxu0 0
      %1759 = vmatpush1.bf16.msra.mxu0 0
      %1760 = vmatprep.subr.bf16.mxu0 0
      %1761 = vmatpush1.bf16.msra.mxu0 0
      %1762 = vmatprep.subr.bf16.mxu0 0
      %1763 = vmatpush1.bf16.msra.mxu0 0
      %1764 = vmatprep.subr.bf16.mxu0 0
      %1765 = vmatpush1.bf16.msra.mxu0 0
      %1766 = vmatprep.mubr.bf16.mxu0 0
      %1767 = vmatmul.mubr.bf16.gmra.mrb[0].mxu0 %v1541
      %v1768 = vpop.f32.mrb[0].mxu0
      %v1769 = vadd.f32 0.0, %v1768
      %v1770 = vpop.f32.mrb[0].mxu0
      %v1771 = vpop.f32.mrb[0].mxu0
      %v1772 = vpop.f32.mrb[0].mxu0
      %1773 = vdwg.mxu0
      %vm1774 = vcmask 982016
      %v1776 = vsel %vm1774, %v732, 0
      %v1779 = vsel %vm598, %v1188, 0
      %v1782 = vsel %vm598, %v1189, 0
      %v1785 = vsel %vm598, %v1190, 0
      %v1788 = vsel %vm598, %v1191, 0
      %v1791 = vsel %vm598, %v1192, 0
      %v1794 = vsel %vm598, %v1193, 0
      %v1797 = vsel %vm598, %v1194, 0
      %v1800 = vsel %vm598, %v1195, 0
      %v1803 = vsel %vm598, %v1196, 0
      %1805 = vmatprep.subr.bf16.mxu0 %v776
      %1806 = vmatpush1.bf16.msra.mxu0 %v775
      %1807 = vmatprep.subr.bf16.mxu0 %v1203
      %1808 = vmatpush1.bf16.msra.mxu0 %v1199
      %1809 = vmatprep.subr.bf16.mxu0 %v1239
      %1810 = vmatpush1.bf16.msra.mxu0 %v1235
      %1811 = vmatprep.subr.bf16.mxu0 %v1275
      %1812 = vmatpush1.bf16.msra.mxu0 %v1271
      %1813 = vmatprep.subr.bf16.mxu0 %v1055
      %1814 = vmatpush1.bf16.msra.mxu0 %v1054
      %1815 = vmatprep.subr.bf16.mxu0 %v1113
      %1816 = vmatpush1.bf16.msra.mxu0 %v1112
      %1817 = vmatprep.subr.bf16.mxu0 %v1311
      %1818 = vmatpush1.bf16.msra.mxu0 %v1307
      %1819 = vmatprep.subr.bf16.mxu0 %v1782
      %1820 = vmatpush1.bf16.msra.mxu0 %v1779
      %1821 = vmatprep.subr.bf16.mxu0 0
      %1822 = vmatpush1.bf16.msra.mxu0 0
      %1823 = vmatprep.subr.bf16.mxu0 0
      %1824 = vmatpush1.bf16.msra.mxu0 0
      %1825 = vmatprep.subr.bf16.mxu0 0
      %1826 = vmatpush1.bf16.msra.mxu0 0
      %1827 = vmatprep.subr.bf16.mxu0 0
      %1828 = vmatpush1.bf16.msra.mxu0 0
      %1829 = vmatprep.subr.bf16.mxu0 0
      %1830 = vmatpush1.bf16.msra.mxu0 0
      %1831 = vmatprep.subr.bf16.mxu0 0
      %1832 = vmatpush1.bf16.msra.mxu0 0
      %1833 = vmatprep.subr.bf16.mxu0 0
      %1834 = vmatpush1.bf16.msra.mxu0 0
      %1835 = vmatprep.subr.bf16.mxu0 0
      %1836 = vmatpush1.bf16.msra.mxu0 0
      %1837 = vmatprep.mubr.bf16.mxu0 0
      %1838 = vmatmul.mubr.bf16.gmra.mrb[0].mxu0 %v1776
      %v1839 = vpop.f32.mrb[0].mxu0
      %v1840 = vadd.f32 %v1605, %v1839
      %v1841 = vpop.f32.mrb[0].mxu0
      %v1842 = vadd.f32 %v1607, %v1841
      %v1843 = vpop.f32.mrb[0].mxu0
      %v1844 = vpop.f32.mrb[0].mxu0
      %1845 = vdwg.mxu0
      %1846 = vmatprep.subr.bf16.mxu0 %v778
      %1847 = vmatpush1.bf16.msra.mxu0 %v777
      %1848 = vmatprep.subr.bf16.mxu0 %v1211
      %1849 = vmatpush1.bf16.msra.mxu0 %v1207
      %1850 = vmatprep.subr.bf16.mxu0 %v1247
      %1851 = vmatpush1.bf16.msra.mxu0 %v1243
      %1852 = vmatprep.subr.bf16.mxu0 %v1283
      %1853 = vmatpush1.bf16.msra.mxu0 %v1279
      %1854 = vmatprep.subr.bf16.mxu0 %v1057
      %1855 = vmatpush1.bf16.msra.mxu0 %v1056
      %1856 = vmatprep.subr.bf16.mxu0 %v1115
      %1857 = vmatpush1.bf16.msra.mxu0 %v1114
      %1858 = vmatprep.subr.bf16.mxu0 %v1319
      %1859 = vmatpush1.bf16.msra.mxu0 %v1315
      %1860 = vmatprep.subr.bf16.mxu0 %v1788
      %1861 = vmatpush1.bf16.msra.mxu0 %v1785
      %1862 = vmatprep.subr.bf16.mxu0 0
      %1863 = vmatpush1.bf16.msra.mxu0 0
      %1864 = vmatprep.subr.bf16.mxu0 0
      %1865 = vmatpush1.bf16.msra.mxu0 0
      %1866 = vmatprep.subr.bf16.mxu0 0
      %1867 = vmatpush1.bf16.msra.mxu0 0
      %1868 = vmatprep.subr.bf16.mxu0 0
      %1869 = vmatpush1.bf16.msra.mxu0 0
      %1870 = vmatprep.subr.bf16.mxu0 0
      %1871 = vmatpush1.bf16.msra.mxu0 0
      %1872 = vmatprep.subr.bf16.mxu0 0
      %1873 = vmatpush1.bf16.msra.mxu0 0
      %1874 = vmatprep.subr.bf16.mxu0 0
      %1875 = vmatpush1.bf16.msra.mxu0 0
      %1876 = vmatprep.subr.bf16.mxu0 0
      %1877 = vmatpush1.bf16.msra.mxu0 0
      %1878 = vmatprep.mubr.bf16.mxu0 0
      %1879 = vmatmul.mubr.bf16.gmra.mrb[0].mxu0 %v1776
      %v1880 = vpop.f32.mrb[0].mxu0
      %v1881 = vadd.f32 %v1646, %v1880
      %v1882 = vpop.f32.mrb[0].mxu0
      %v1883 = vadd.f32 %v1648, %v1882
      %v1884 = vpop.f32.mrb[0].mxu0
      %v1885 = vpop.f32.mrb[0].mxu0
      %1886 = vdwg.mxu0
      %1887 = vmatprep.subr.bf16.mxu0 %v780
      %1888 = vmatpush1.bf16.msra.mxu0 %v779
      %1889 = vmatprep.subr.bf16.mxu0 %v1219
      %1890 = vmatpush1.bf16.msra.mxu0 %v1215
      %1891 = vmatprep.subr.bf16.mxu0 %v1255
      %1892 = vmatpush1.bf16.msra.mxu0 %v1251
      %1893 = vmatprep.subr.bf16.mxu0 %v1291
      %1894 = vmatpush1.bf16.msra.mxu0 %v1287
      %1895 = vmatprep.subr.bf16.mxu0 %v1059
      %1896 = vmatpush1.bf16.msra.mxu0 %v1058
      %1897 = vmatprep.subr.bf16.mxu0 %v1117
      %1898 = vmatpush1.bf16.msra.mxu0 %v1116
      %1899 = vmatprep.subr.bf16.mxu0 %v1327
      %1900 = vmatpush1.bf16.msra.mxu0 %v1323
      %1901 = vmatprep.subr.bf16.mxu0 %v1794
      %1902 = vmatpush1.bf16.msra.mxu0 %v1791
      %1903 = vmatprep.subr.bf16.mxu0 0
      %1904 = vmatpush1.bf16.msra.mxu0 0
      %1905 = vmatprep.subr.bf16.mxu0 0
      %1906 = vmatpush1.bf16.msra.mxu0 0
      %1907 = vmatprep.subr.bf16.mxu0 0
      %1908 = vmatpush1.bf16.msra.mxu0 0
      %1909 = vmatprep.subr.bf16.mxu0 0
      %1910 = vmatpush1.bf16.msra.mxu0 0
      %1911 = vmatprep.subr.bf16.mxu0 0
      %1912 = vmatpush1.bf16.msra.mxu0 0
      %1913 = vmatprep.subr.bf16.mxu0 0
      %1914 = vmatpush1.bf16.msra.mxu0 0
      %1915 = vmatprep.subr.bf16.mxu0 0
      %1916 = vmatpush1.bf16.msra.mxu0 0
      %1917 = vmatprep.subr.bf16.mxu0 0
      %1918 = vmatpush1.bf16.msra.mxu0 0
      %1919 = vmatprep.mubr.bf16.mxu0 0
      %1920 = vmatmul.mubr.bf16.gmra.mrb[0].mxu0 %v1776
      %v1921 = vpop.f32.mrb[0].mxu0
      %v1922 = vadd.f32 %v1687, %v1921
      %v1923 = vpop.f32.mrb[0].mxu0
      %v1924 = vadd.f32 %v1689, %v1923
      %v1925 = vpop.f32.mrb[0].mxu0
      %v1926 = vpop.f32.mrb[0].mxu0
      %1927 = vdwg.mxu0
      %1928 = vmatprep.subr.bf16.mxu0 %v782
      %1929 = vmatpush1.bf16.msra.mxu0 %v781
      %1930 = vmatprep.subr.bf16.mxu0 %v1227
      %1931 = vmatpush1.bf16.msra.mxu0 %v1223
      %1932 = vmatprep.subr.bf16.mxu0 %v1263
      %1933 = vmatpush1.bf16.msra.mxu0 %v1259
      %1934 = vmatprep.subr.bf16.mxu0 %v1299
      %1935 = vmatpush1.bf16.msra.mxu0 %v1295
      %1936 = vmatprep.subr.bf16.mxu0 %v1061
      %1937 = vmatpush1.bf16.msra.mxu0 %v1060
      %1938 = vmatprep.subr.bf16.mxu0 %v1119
      %1939 = vmatpush1.bf16.msra.mxu0 %v1118
      %1940 = vmatprep.subr.bf16.mxu0 %v1335
      %1941 = vmatpush1.bf16.msra.mxu0 %v1331
      %1942 = vmatprep.subr.bf16.mxu0 %v1800
      %1943 = vmatpush1.bf16.msra.mxu0 %v1797
      %1944 = vmatprep.subr.bf16.mxu0 0
      %1945 = vmatpush1.bf16.msra.mxu0 0
      %1946 = vmatprep.subr.bf16.mxu0 0
      %1947 = vmatpush1.bf16.msra.mxu0 0
      %1948 = vmatprep.subr.bf16.mxu0 0
      %1949 = vmatpush1.bf16.msra.mxu0 0
      %1950 = vmatprep.subr.bf16.mxu0 0
      %1951 = vmatpush1.bf16.msra.mxu0 0
      %1952 = vmatprep.subr.bf16.mxu0 0
      %1953 = vmatpush1.bf16.msra.mxu0 0
      %1954 = vmatprep.subr.bf16.mxu0 0
      %1955 = vmatpush1.bf16.msra.mxu0 0
      %1956 = vmatprep.subr.bf16.mxu0 0
      %1957 = vmatpush1.bf16.msra.mxu0 0
      %1958 = vmatprep.subr.bf16.mxu0 0
      %1959 = vmatpush1.bf16.msra.mxu0 0
      %1960 = vmatprep.mubr.bf16.mxu0 0
      %1961 = vmatmul.mubr.bf16.gmra.mrb[0].mxu0 %v1776
      %v1962 = vpop.f32.mrb[0].mxu0
      %v1963 = vadd.f32 %v1728, %v1962
      %v1964 = vpop.f32.mrb[0].mxu0
      %v1965 = vadd.f32 %v1730, %v1964
      %v1966 = vpop.f32.mrb[0].mxu0
      %v1967 = vpop.f32.mrb[0].mxu0
      %1968 = vdwg.mxu0
      %1969 = vmatprep.subr.bf16.mxu0 0
      %1970 = vmatpush1.bf16.msra.mxu0 %v783
      %1971 = vmatprep.subr.bf16.mxu0 0
      %1972 = vmatpush1.bf16.msra.mxu0 %v1231
      %1973 = vmatprep.subr.bf16.mxu0 0
      %1974 = vmatpush1.bf16.msra.mxu0 %v1267
      %1975 = vmatprep.subr.bf16.mxu0 0
      %1976 = vmatpush1.bf16.msra.mxu0 %v1303
      %1977 = vmatprep.subr.bf16.mxu0 0
      %1978 = vmatpush1.bf16.msra.mxu0 %v1062
      %1979 = vmatprep.subr.bf16.mxu0 0
      %1980 = vmatpush1.bf16.msra.mxu0 %v1120
      %1981 = vmatprep.subr.bf16.mxu0 0
      %1982 = vmatpush1.bf16.msra.mxu0 %v1339
      %1983 = vmatprep.subr.bf16.mxu0 0
      %1984 = vmatpush1.bf16.msra.mxu0 %v1803
      %1985 = vmatprep.subr.bf16.mxu0 0
      %1986 = vmatpush1.bf16.msra.mxu0 0
      %1987 = vmatprep.subr.bf16.mxu0 0
      %1988 = vmatpush1.bf16.msra.mxu0 0
      %1989 = vmatprep.subr.bf16.mxu0 0
      %1990 = vmatpush1.bf16.msra.mxu0 0
      %1991 = vmatprep.subr.bf16.mxu0 0
      %1992 = vmatpush1.bf16.msra.mxu0 0
      %1993 = vmatprep.subr.bf16.mxu0 0
      %1994 = vmatpush1.bf16.msra.mxu0 0
      %1995 = vmatprep.subr.bf16.mxu0 0
      %1996 = vmatpush1.bf16.msra.mxu0 0
      %1997 = vmatprep.subr.bf16.mxu0 0
      %1998 = vmatpush1.bf16.msra.mxu0 0
      %1999 = vmatprep.subr.bf16.mxu0 0
      %2000 = vmatpush1.bf16.msra.mxu0 0
      %2001 = vmatprep.mubr.bf16.mxu0 0
      %2002 = vmatmul.mubr.bf16.gmra.mrb[0].mxu0 %v1776
      %v2003 = vpop.f32.mrb[0].mxu0
      %v2004 = vadd.f32 %v1769, %v2003
      %v2005 = vpop.f32.mrb[0].mxu0
      %v2006 = vpop.f32.mrb[0].mxu0
      %v2007 = vpop.f32.mrb[0].mxu0
      %2008 = vdwg.mxu0
      %vm2009 = vcmask 293888
      %v2011 = vsel %vm2009, %v249, 0
      %v2014 = vsel %vm570, %v561, 0
      %v2017 = vsel %vm570, %v562, 0
      %v2020 = vsel %vm570, %v563, 0
      %v2023 = vsel %vm570, %v564, 0
      %v2026 = vsel %vm570, %v565, 0
      %v2029 = vsel %vm570, %v566, 0
      %v2032 = vsel %vm570, %v567, 0
      %v2035 = vsel %vm570, %v568, 0
      %v2038 = vsel %vm570, %v569, 0
      %2040 = vmatprep.subr.bf16.mxu0 %v622
      %2041 = vmatpush1.bf16.msra.mxu0 %v619
      %2042 = vmatprep.subr.bf16.mxu0 %v694
      %2043 = vmatpush1.bf16.msra.mxu0 %v691
      %2044 = vmatprep.subr.bf16.mxu0 %v2017
      %2045 = vmatpush1.bf16.msra.mxu0 %v2014
      %2046 = vmatprep.subr.bf16.mxu0 0
      %2047 = vmatpush1.bf16.msra.mxu0 0
      %2048 = vmatprep.subr.bf16.mxu0 0
      %2049 = vmatpush1.bf16.msra.mxu0 0
      %2050 = vmatprep.subr.bf16.mxu0 0
      %2051 = vmatpush1.bf16.msra.mxu0 0
      %2052 = vmatprep.subr.bf16.mxu0 0
      %2053 = vmatpush1.bf16.msra.mxu0 0
      %2054 = vmatprep.subr.bf16.mxu0 0
      %2055 = vmatpush1.bf16.msra.mxu0 0
      %2056 = vmatprep.subr.bf16.mxu0 0
      %2057 = vmatpush1.bf16.msra.mxu0 0
      %2058 = vmatprep.subr.bf16.mxu0 0
      %2059 = vmatpush1.bf16.msra.mxu0 0
      %2060 = vmatprep.subr.bf16.mxu0 0
      %2061 = vmatpush1.bf16.msra.mxu0 0
      %2062 = vmatprep.subr.bf16.mxu0 0
      %2063 = vmatpush1.bf16.msra.mxu0 0
      %2064 = vmatprep.subr.bf16.mxu0 0
      %2065 = vmatpush1.bf16.msra.mxu0 0
      %2066 = vmatprep.subr.bf16.mxu0 0
      %2067 = vmatpush1.bf16.msra.mxu0 0
      %2068 = vmatprep.subr.bf16.mxu0 0
      %2069 = vmatpush1.bf16.msra.mxu0 0
      %2070 = vmatprep.subr.bf16.mxu0 0
      %2071 = vmatpush1.bf16.msra.mxu0 0
      %2072 = vmatprep.mubr.bf16.mxu0 0
      %2073 = vmatmul.mubr.bf16.gmra.mrb[0].mxu0 %v2011
      %v2074 = vpop.f32.mrb[0].mxu0
      %v2075 = vadd.f32 %v1840, %v2074
      %v2076 = vpop.f32.mrb[0].mxu0
      %v2077 = vadd.f32 %v1842, %v2076
      %v2078 = vpop.f32.mrb[0].mxu0
      %v2079 = vpop.f32.mrb[0].mxu0
      %2080 = vdwg.mxu0
      %2081 = vmatprep.subr.bf16.mxu0 %v628
      %2082 = vmatpush1.bf16.msra.mxu0 %v625
      %2083 = vmatprep.subr.bf16.mxu0 %v700
      %2084 = vmatpush1.bf16.msra.mxu0 %v697
      %2085 = vmatprep.subr.bf16.mxu0 %v2023
      %2086 = vmatpush1.bf16.msra.mxu0 %v2020
      %2087 = vmatprep.subr.bf16.mxu0 0
      %2088 = vmatpush1.bf16.msra.mxu0 0
      %2089 = vmatprep.subr.bf16.mxu0 0
      %2090 = vmatpush1.bf16.msra.mxu0 0
      %2091 = vmatprep.subr.bf16.mxu0 0
      %2092 = vmatpush1.bf16.msra.mxu0 0
      %2093 = vmatprep.subr.bf16.mxu0 0
      %2094 = vmatpush1.bf16.msra.mxu0 0
      %2095 = vmatprep.subr.bf16.mxu0 0
      %2096 = vmatpush1.bf16.msra.mxu0 0
      %2097 = vmatprep.subr.bf16.mxu0 0
      %2098 = vmatpush1.bf16.msra.mxu0 0
      %2099 = vmatprep.subr.bf16.mxu0 0
      %2100 = vmatpush1.bf16.msra.mxu0 0
      %2101 = vmatprep.subr.bf16.mxu0 0
      %2102 = vmatpush1.bf16.msra.mxu0 0
      %2103 = vmatprep.subr.bf16.mxu0 0
      %2104 = vmatpush1.bf16.msra.mxu0 0
      %2105 = vmatprep.subr.bf16.mxu0 0
      %2106 = vmatpush1.bf16.msra.mxu0 0
      %2107 = vmatprep.subr.bf16.mxu0 0
      %2108 = vmatpush1.bf16.msra.mxu0 0
      %2109 = vmatprep.subr.bf16.mxu0 0
      %2110 = vmatpush1.bf16.msra.mxu0 0
      %2111 = vmatprep.subr.bf16.mxu0 0
      %2112 = vmatpush1.bf16.msra.mxu0 0
      %2113 = vmatprep.mubr.bf16.mxu0 0
      %2114 = vmatmul.mubr.bf16.gmra.mrb[0].mxu0 %v2011
      %v2115 = vpop.f32.mrb[0].mxu0
      %v2116 = vadd.f32 %v1881, %v2115
      %v2117 = vpop.f32.mrb[0].mxu0
      %v2118 = vadd.f32 %v1883, %v2117
      %v2119 = vpop.f32.mrb[0].mxu0
      %v2120 = vpop.f32.mrb[0].mxu0
      %2121 = vdwg.mxu0
      %2122 = vmatprep.subr.bf16.mxu0 %v634
      %2123 = vmatpush1.bf16.msra.mxu0 %v631
      %2124 = vmatprep.subr.bf16.mxu0 %v706
      %2125 = vmatpush1.bf16.msra.mxu0 %v703
      %2126 = vmatprep.subr.bf16.mxu0 %v2029
      %2127 = vmatpush1.bf16.msra.mxu0 %v2026
      %2128 = vmatprep.subr.bf16.mxu0 0
      %2129 = vmatpush1.bf16.msra.mxu0 0
      %2130 = vmatprep.subr.bf16.mxu0 0
      %2131 = vmatpush1.bf16.msra.mxu0 0
      %2132 = vmatprep.subr.bf16.mxu0 0
      %2133 = vmatpush1.bf16.msra.mxu0 0
      %2134 = vmatprep.subr.bf16.mxu0 0
      %2135 = vmatpush1.bf16.msra.mxu0 0
      %2136 = vmatprep.subr.bf16.mxu0 0
      %2137 = vmatpush1.bf16.msra.mxu0 0
      %2138 = vmatprep.subr.bf16.mxu0 0
      %2139 = vmatpush1.bf16.msra.mxu0 0
      %2140 = vmatprep.subr.bf16.mxu0 0
      %2141 = vmatpush1.bf16.msra.mxu0 0
      %2142 = vmatprep.subr.bf16.mxu0 0
      %2143 = vmatpush1.bf16.msra.mxu0 0
      %2144 = vmatprep.subr.bf16.mxu0 0
      %2145 = vmatpush1.bf16.msra.mxu0 0
      %2146 = vmatprep.subr.bf16.mxu0 0
      %2147 = vmatpush1.bf16.msra.mxu0 0
      %2148 = vmatprep.subr.bf16.mxu0 0
      %2149 = vmatpush1.bf16.msra.mxu0 0
      %2150 = vmatprep.subr.bf16.mxu0 0
      %2151 = vmatpush1.bf16.msra.mxu0 0
      %2152 = vmatprep.subr.bf16.mxu0 0
      %2153 = vmatpush1.bf16.msra.mxu0 0
      %2154 = vmatprep.mubr.bf16.mxu0 0
      %2155 = vmatmul.mubr.bf16.gmra.mrb[0].mxu0 %v2011
      %v2156 = vpop.f32.mrb[0].mxu0
      %v2157 = vadd.f32 %v1922, %v2156
      %v2158 = vpop.f32.mrb[0].mxu0
      %v2159 = vadd.f32 %v1924, %v2158
      %v2160 = vpop.f32.mrb[0].mxu0
      %v2161 = vpop.f32.mrb[0].mxu0
      %2162 = vdwg.mxu0
      %2163 = vmatprep.subr.bf16.mxu0 %v640
      %2164 = vmatpush1.bf16.msra.mxu0 %v637
      %2165 = vmatprep.subr.bf16.mxu0 %v712
      %2166 = vmatpush1.bf16.msra.mxu0 %v709
      %2167 = vmatprep.subr.bf16.mxu0 %v2035
      %2168 = vmatpush1.bf16.msra.mxu0 %v2032
      %2169 = vmatprep.subr.bf16.mxu0 0
      %2170 = vmatpush1.bf16.msra.mxu0 0
      %2171 = vmatprep.subr.bf16.mxu0 0
      %2172 = vmatpush1.bf16.msra.mxu0 0
      %2173 = vmatprep.subr.bf16.mxu0 0
      %2174 = vmatpush1.bf16.msra.mxu0 0
      %2175 = vmatprep.subr.bf16.mxu0 0
      %2176 = vmatpush1.bf16.msra.mxu0 0
      %2177 = vmatprep.subr.bf16.mxu0 0
      %2178 = vmatpush1.bf16.msra.mxu0 0
      %2179 = vmatprep.subr.bf16.mxu0 0
      %2180 = vmatpush1.bf16.msra.mxu0 0
      %2181 = vmatprep.subr.bf16.mxu0 0
      %2182 = vmatpush1.bf16.msra.mxu0 0
      %2183 = vmatprep.subr.bf16.mxu0 0
      %2184 = vmatpush1.bf16.msra.mxu0 0
      %2185 = vmatprep.subr.bf16.mxu0 0
      %2186 = vmatpush1.bf16.msra.mxu0 0
      %2187 = vmatprep.subr.bf16.mxu0 0
      %2188 = vmatpush1.bf16.msra.mxu0 0
      %2189 = vmatprep.subr.bf16.mxu0 0
      %2190 = vmatpush1.bf16.msra.mxu0 0
      %2191 = vmatprep.subr.bf16.mxu0 0
      %2192 = vmatpush1.bf16.msra.mxu0 0
      %2193 = vmatprep.subr.bf16.mxu0 0
      %2194 = vmatpush1.bf16.msra.mxu0 0
      %2195 = vmatprep.mubr.bf16.mxu0 0
      %2196 = vmatmul.mubr.bf16.gmra.mrb[0].mxu0 %v2011
      %v2197 = vpop.f32.mrb[0].mxu0
      %v2198 = vadd.f32 %v1963, %v2197
      %v2199 = vpop.f32.mrb[0].mxu0
      %v2200 = vadd.f32 %v1965, %v2199
      %v2201 = vpop.f32.mrb[0].mxu0
      %v2202 = vpop.f32.mrb[0].mxu0
      %2203 = vdwg.mxu0
      %2204 = vmatprep.subr.bf16.mxu0 0
      %2205 = vmatpush1.bf16.msra.mxu0 %v643
      %2206 = vmatprep.subr.bf16.mxu0 0
      %2207 = vmatpush1.bf16.msra.mxu0 %v715
      %2208 = vmatprep.subr.bf16.mxu0 0
      %2209 = vmatpush1.bf16.msra.mxu0 %v2038
      %2210 = vmatprep.subr.bf16.mxu0 0
      %2211 = vmatpush1.bf16.msra.mxu0 0
      %2212 = vmatprep.subr.bf16.mxu0 0
      %2213 = vmatpush1.bf16.msra.mxu0 0
      %2214 = vmatprep.subr.bf16.mxu0 0
      %2215 = vmatpush1.bf16.msra.mxu0 0
      %2216 = vmatprep.subr.bf16.mxu0 0
      %2217 = vmatpush1.bf16.msra.mxu0 0
      %2218 = vmatprep.subr.bf16.mxu0 0
      %2219 = vmatpush1.bf16.msra.mxu0 0
      %2220 = vmatprep.subr.bf16.mxu0 0
      %2221 = vmatpush1.bf16.msra.mxu0 0
      %2222 = vmatprep.subr.bf16.mxu0 0
      %2223 = vmatpush1.bf16.msra.mxu0 0
      %2224 = vmatprep.subr.bf16.mxu0 0
      %2225 = vmatpush1.bf16.msra.mxu0 0
      %2226 = vmatprep.subr.bf16.mxu0 0
      %2227 = vmatpush1.bf16.msra.mxu0 0
      %2228 = vmatprep.subr.bf16.mxu0 0
      %2229 = vmatpush1.bf16.msra.mxu0 0
      %2230 = vmatprep.subr.bf16.mxu0 0
      %2231 = vmatpush1.bf16.msra.mxu0 0
      %2232 = vmatprep.subr.bf16.mxu0 0
      %2233 = vmatpush1.bf16.msra.mxu0 0
      %2234 = vmatprep.subr.bf16.mxu0 0
      %2235 = vmatpush1.bf16.msra.mxu0 0
      %2236 = vmatprep.mubr.bf16.mxu0 0
      %2237 = vmatmul.mubr.bf16.gmra.mrb[0].mxu0 %v2011
      %v2238 = vpop.f32.mrb[0].mxu0
      %v2239 = vadd.f32 %v2004, %v2238
      %v2240 = vpop.f32.mrb[0].mxu0
      %v2241 = vpop.f32.mrb[0].mxu0
      %v2242 = vpop.f32.mrb[0].mxu0
      %2243 = vdwg.mxu0
      %v2244 = vld [vmem:[#allocation2] sm:$0x1]
      %2246 = vset.pattern.permute.xlu0 0
      %2247 = vperm.xlu0 %2246, %v2244
      %v2248 = vpop.permute.xlu0 %2247
      %v2250 = vlaneseq
      %v2251 = vshrl.u32 %v2250, 7
      %v2252 = vsub.s32 0, %v2251
      %v2253 = vrot.slane %v2248, %v2252
      %v2254 = vadd.f32 %v2075, %v2253
      %v2255 = vadd.f32 %v2077, %v2253
      %v2256 = vadd.f32 %v2116, %v2253
      %v2257 = vadd.f32 %v2118, %v2253
      %v2258 = vadd.f32 %v2157, %v2253
      %v2259 = vadd.f32 %v2159, %v2253
      %v2260 = vadd.f32 %v2198, %v2253
      %v2261 = vadd.f32 %v2200, %v2253
      %v2262 = vadd.f32 %v2239, %v2253
      %v2263 = vsub.f32 0.0, %v2254
      %v2264 = vsub.f32 0.0, %v2255
      %v2265 = vsub.f32 0.0, %v2256
      %v2266 = vsub.f32 0.0, %v2257
      %v2267 = vsub.f32 0.0, %v2258
      %v2268 = vsub.f32 0.0, %v2259
      %v2269 = vsub.f32 0.0, %v2260
      %v2270 = vsub.f32 0.0, %v2261
      %v2271 = vsub.f32 0.0, %v2262
      %v2272 = vmul.f32 %v2263, 1.442695
      %v2273 = vpow.pop %v2272
      %v2274 = vmul.f32 %v2264, 1.442695
      %v2275 = vpow.pop %v2274
      %v2276 = vmul.f32 %v2265, 1.442695
      %v2277 = vpow.pop %v2276
      %v2278 = vmul.f32 %v2266, 1.442695
      %v2279 = vpow.pop %v2278
      %v2280 = vmul.f32 %v2267, 1.442695
      %v2281 = vpow.pop %v2280
      %v2282 = vmul.f32 %v2268, 1.442695
      %v2283 = vpow.pop %v2282
      %v2284 = vmul.f32 %v2269, 1.442695
      %v2285 = vpow.pop %v2284
      %v2286 = vmul.f32 %v2270, 1.442695
      %v2287 = vpow.pop %v2286
      %v2288 = vmul.f32 %v2271, 1.442695
      %v2289 = vpow.pop %v2288
      %v2290 = vadd.f32 %v2273, 1.0
      %v2291 = vadd.f32 %v2275, 1.0
      %v2292 = vadd.f32 %v2277, 1.0
      %v2293 = vadd.f32 %v2279, 1.0
      %v2294 = vadd.f32 %v2281, 1.0
      %v2295 = vadd.f32 %v2283, 1.0
      %v2296 = vadd.f32 %v2285, 1.0
      %v2297 = vadd.f32 %v2287, 1.0
      %v2298 = vadd.f32 %v2289, 1.0
      %v2299 = vrcp.pop %v2290
      %v2300 = vmul.f32 1.0, %v2299
      %v2301 = vrcp.pop %v2291
      %v2302 = vmul.f32 1.0, %v2301
      %v2303 = vrcp.pop %v2292
      %v2304 = vmul.f32 1.0, %v2303
      %v2305 = vrcp.pop %v2293
      %v2306 = vmul.f32 1.0, %v2305
      %v2307 = vrcp.pop %v2294
      %v2308 = vmul.f32 1.0, %v2307
      %v2309 = vrcp.pop %v2295
      %v2310 = vmul.f32 1.0, %v2309
      %v2311 = vrcp.pop %v2296
      %v2312 = vmul.f32 1.0, %v2311
      %v2313 = vrcp.pop %v2297
      %v2314 = vmul.f32 1.0, %v2313
      %v2315 = vrcp.pop %v2298
      %v2316 = vmul.f32 1.0, %v2315
      %v2326 = vcombine.low %v2300, %v2302
      %v2327 = vcombine.low %v2304, %v2306
      %v2328 = vcombine.low %v2308, %v2310
      %v2329 = vcombine.low %v2312, %v2314
      %v2331 = vunpack.c.l.s4 1966171168
      %v2332 = vunpack.c.0.s8 %v2331
      %v2333 = vlaneseq
      %v2334 = vshrl.u32 %v2333, 7
      %v2335 = vsub.s32 %v2332, %v2334
      %v2336 = vrot.slane %v2326, %v2335
      %v2338 = vunpack.c.l.s4 1966171168
      %v2339 = vunpack.c.0.s8 %v2338
      %v2340 = vlaneseq
      %v2341 = vshrl.u32 %v2340, 7
      %v2342 = vsub.s32 %v2339, %v2341
      %v2343 = vrot.slane %v2327, %v2342
      %v2345 = vunpack.c.l.s4 1966171168
      %v2346 = vunpack.c.0.s8 %v2345
      %v2347 = vlaneseq
      %v2348 = vshrl.u32 %v2347, 7
      %v2349 = vsub.s32 %v2346, %v2348
      %v2350 = vrot.slane %v2328, %v2349
      %v2352 = vunpack.c.l.s4 1966171168
      %v2353 = vunpack.c.0.s8 %v2352
      %v2354 = vlaneseq
      %v2355 = vshrl.u32 %v2354, 7
      %v2356 = vsub.s32 %v2353, %v2355
      %v2357 = vrot.slane %v2329, %v2356
      %v2358 = vcombine.low %v2336, %v2343
      %v2359 = vcombine.low %v2350, %v2357
      %v2361 = vunpack.c.l.s4 1966171168
      %v2362 = vunpack.c.0.s8 %v2361
      %v2363 = vlaneseq
      %v2364 = vshrl.u32 %v2363, 7
      %v2365 = vsub.s32 %v2362, %v2364
      %v2366 = vrot.slane %v2358, %v2365
      %v2368 = vunpack.c.l.s4 1966171168
      %v2369 = vunpack.c.0.s8 %v2368
      %v2370 = vlaneseq
      %v2371 = vshrl.u32 %v2370, 7
      %v2372 = vsub.s32 %v2369, %v2371
      %v2373 = vrot.slane %v2359, %v2372
      %v2374 = vcombine.low %v2366, %v2373
      %v2376 = vunpack.c.l.s4 1966171168
      %v2377 = vunpack.c.0.s8 %v2376
      %v2378 = vlaneseq
      %v2379 = vshrl.u32 %v2378, 7
      %v2380 = vsub.s32 %v2377, %v2379
      %v2381 = vrot.slane %v2316, %v2380
      %v2383 = vunpack.c.l.s4 1966171168
      %v2384 = vunpack.c.0.s8 %v2383
      %v2385 = vlaneseq
      %v2386 = vshrl.u32 %v2385, 7
      %v2387 = vsub.s32 %v2384, %v2386
      %v2388 = vrot.slane %v2381, %v2387
      %2391 = vst [vmem:[%s244] sm:$0xff] %v2374
      %v2392 = vlaneseq
      %vm2393 = vcmp.ge.s32.totalorder %v2392, 0
      %vm2394 = vcmp.lt.s32.totalorder %v2392, 128
      %vm2395 = vmand %vm2393, %vm2394
      %2396 = vst.msk [vmem:[%s244 + $0x8] sm:$0x1] %vm2395, %v2388
      %p2397 = scmp.lt.s32.totalorder %s18, 1
      %s2398 = scalar_select %p2397, %s18, 1
      %s2399 = smul.addr %s2398, 9
      %s2400 = scalar_lea.vmem %s5, %s2399
      // Predicated region
      $region41: #{refine_net_forward.5} parent=39 // pred_check
        %p2401 = pneg %p151
      $region42: #{refine_net_forward.5} parent=39 // pred_check_branch
        %2403 = sbr.rel (%p2401) target = $region44
      $region43: #{refine_net_forward.5} parent=39 // pred_region
        _
      $region44: #{refine_net_forward.5} parent=39 // pred_fallthru
        _
    $region40: #{refine_net_forward.5} parent=5 // pred_fallthru
      _
    %p2404 = scmp.le.s32.totalorder 2, %s13
    // Predicated region
    $region45: #{refine_net_forward.5} parent=5 // pred_check
      %p2405 = pneg %p2404
    $region46: #{refine_net_forward.5} parent=5 // pred_check_branch
      %2407 = sbr.rel (%p2405) target = $region48
    $region47: #{refine_net_forward.5} parent=5 // pred_region
      %s2408 = ssub.s32 %s13, 2
      // Predicated region
      $region49: #{refine_net_forward.5} parent=47 // pred_check
        %p2409 = pneg %p157
      $region50: #{refine_net_forward.5} parent=47 // pred_check_branch
        %2411 = sbr.rel (%p2409) target = $region52
      $region51: #{refine_net_forward.5} parent=47 // pred_region
        %p2412 = scmp.lt.s32.totalorder %s19, 1
        %s2413 = scalar_select %p2412, %s19, 1
        %s2414 = smul.addr %s2413, 9
        %s2415 = scalar_lea.vmem %s5, %s2414
      $region52: #{refine_net_forward.5} parent=47 // pred_fallthru
        _
    $region48: #{refine_net_forward.5} parent=5 // pred_fallthru
      _
  $region6: #{refine_net_forward.5} parent=0 // loop_footer
    %s17 = sadd.s32 1, %s13
  $region7: #{refine_net_forward.5} parent=0 // loop_footer_branch
    %12 = sbr.rel target = $region3
  $region8: #{refine_net_forward.5} parent=0 // loop_exit
    _

</llo_original>
